<compile_context>
chip_gen: v7x
topology: tpu7x:2x2x1
jax: 0.10.0
libtpu: 0.0.40
codegen_flags: <defaults>
</compile_context>

<pallas_src>
import functools
import math

import jax
import jax.numpy as jnp
from jax.experimental import pallas as pl
from jax.experimental.pallas import tpu as pltpu


_VMEM_LIMIT = 48 * 1024 * 1024   # < v7x's 64 MiB physical VMEM; plenty here


def _cparams(*sem):
    return pltpu.CompilerParams(dimension_semantics=sem,
                                vmem_limit_bytes=_VMEM_LIMIT)


# ----------------------------- in-kernel helpers -----------------------------

def _gelu_tanh(x):
    # TODO(synk): PyTorch nn.GELU defaults to exact erf-GELU; the tanh
    # approximation (EUP-friendly, guaranteed Mosaic lowering) deviates ~1e-3.
    c = math.sqrt(2.0 / math.pi)
    return 0.5 * x * (1.0 + jnp.tanh(c * (x + 0.044715 * x * x * x)))


def _layernorm(x, g, b, eps):
    mu = jnp.mean(x, axis=-1, keepdims=True)
    var = jnp.mean(jnp.square(x - mu), axis=-1, keepdims=True)
    return (x - mu) * jax.lax.rsqrt(var + eps) * g + b


# ----------------------------- Pallas kernels -----------------------------

def _linear_kernel(x_ref, w_ref, b_ref, o_ref):
    y = jnp.dot(x_ref[...].astype(jnp.bfloat16), w_ref[...],
                preferred_element_type=jnp.float32)
    o_ref[...] = y + b_ref[...]


def _block_kernel(x_ref, ln1w_ref, ln1b_ref, qkvw_ref, qkvb_ref,
                  projw_ref, projb_ref, ln2w_ref, ln2b_ref,
                  fc1w_ref, fc1b_ref, fc2w_ref, fc2b_ref,
                  o_ref, attn_sc, *, num_heads, scale, eps):
    """One full transformer block for one batch element (grid step)."""
    x = x_ref[0]                                          # (S, D) f32
    D = projw_ref.shape[0]
    Dh = D // num_heads

    # ---- attention branch: LN1 fused into the QKV matmul --------------------
    xn = _layernorm(x, ln1w_ref[...], ln1b_ref[...], eps)
    qkv = jnp.dot(xn.astype(jnp.bfloat16), qkvw_ref[...],
                  preferred_element_type=jnp.float32) + qkvb_ref[...]

    # Per-head attention; Dh is a multiple of 128 so every slice/store below
    # is lane-aligned.  PV results go straight into the VMEM scratch
    # accumulator (no concatenate).
    for h in range(num_heads):
        q = qkv[:, h * Dh:(h + 1) * Dh].astype(jnp.bfloat16)
        k = qkv[:, D + h * Dh:D + (h + 1) * Dh].astype(jnp.bfloat16)
        v = qkv[:, 2 * D + h * Dh:2 * D + (h + 1) * Dh].astype(jnp.bfloat16)
        s = jax.lax.dot_general(q, k, (((1,), (1,)), ((), ())),
                                preferred_element_type=jnp.float32) * scale
        s = s - jnp.max(s, axis=-1, keepdims=True)
        p = jnp.exp(s)
        p = p / jnp.sum(p, axis=-1, keepdims=True)        # exact softmax
        attn_sc[:, h * Dh:(h + 1) * Dh] = jnp.dot(
            p.astype(jnp.bfloat16), v, preferred_element_type=jnp.float32)

    proj = jnp.dot(attn_sc[...].astype(jnp.bfloat16), projw_ref[...],
                   preferred_element_type=jnp.float32) + projb_ref[...]
    x1 = x + proj                                         # residual 1 (f32)

    # ---- MLP branch: LN2 + FC1 + GELU + FC2 + residual, all in VMEM ---------
    xn2 = _layernorm(x1, ln2w_ref[...], ln2b_ref[...], eps)
    hmid = jnp.dot(xn2.astype(jnp.bfloat16), fc1w_ref[...],
                   preferred_element_type=jnp.float32) + fc1b_ref[...]
    hmid = _gelu_tanh(hmid)
    y = jnp.dot(hmid.astype(jnp.bfloat16), fc2w_ref[...],
                preferred_element_type=jnp.float32) + fc2b_ref[...]

    o_ref[0] = x1 + y                                     # residual 2 (f32)


def _tail_kernel(t0_ref, t1_ref, nw_ref, nb_ref, hnw_ref, hnb_ref,
                 hw_ref, hb_ref, logits_ref, emb_ref):
    # Final encoder norm (eps 1e-6) on tokens 0/1 only, mean-pool,
    # mlp_head = LayerNorm(eps 1e-5) + Linear (output padded to 128 lanes).
    x0 = _layernorm(t0_ref[...], nw_ref[...], nb_ref[...], 1e-6)
    x1 = _layernorm(t1_ref[...], nw_ref[...], nb_ref[...], 1e-6)
    pooled = (x0 + x1) * 0.5
    emb_ref[...] = pooled
    h = _layernorm(pooled, hnw_ref[...], hnb_ref[...], 1e-5)
    logits_ref[...] = jnp.dot(h.astype(jnp.bfloat16), hw_ref[...],
                              preferred_element_type=jnp.float32) + hb_ref[...]


# --------------------------- pallas_call wrappers ---------------------------

def pallas_linear(x, w, b, tm=128, tn=128):
    """Row-padded, (row, col)-tiled matmul + bias (used for the patch embed)."""
    M, K = x.shape
    N = w.shape[1]
    if N % tn != 0:
        tn = N
    Mp = ((M + tm - 1) // tm) * tm
    if Mp != M:
        x = jnp.pad(x, ((0, Mp - M), (0, 0)))
    out = pl.pallas_call(
        _linear_kernel,
        out_shape=jax.ShapeDtypeStruct((Mp, N), jnp.float32),
        grid=(Mp // tm, N // tn),
        in_specs=[pl.BlockSpec((tm, K), lambda i, j: (i, 0)),
                  pl.BlockSpec((K, tn), lambda i, j: (0, j)),
                  pl.BlockSpec((1, tn), lambda i, j: (0, j))],
        out_specs=pl.BlockSpec((tm, tn), lambda i, j: (i, j)),
        compiler_params=_cparams("parallel", "parallel"),
    )(x, w, b.reshape(1, N))
    return out[:M]


def pallas_block(x, blk, num_heads):
    """One fused transformer encoder block; grid=(B,), one batch elem/step."""
    B, S, D = x.shape
    Dm = blk["fc1_w"].shape[1]
    Dh = D // num_heads
    scale = Dh ** -0.5

    def pspec(shape):
        return pl.BlockSpec(shape, lambda b: (0, 0))

    return pl.pallas_call(
        functools.partial(_block_kernel, num_heads=num_heads, scale=scale,
                          eps=1e-6),
        out_shape=jax.ShapeDtypeStruct((B, S, D), jnp.float32),
        grid=(B,),
        in_specs=[pl.BlockSpec((1, S, D), lambda b: (b, 0, 0)),
                  pspec((1, D)), pspec((1, D)),          # ln1 w, b
                  pspec((D, 3 * D)), pspec((1, 3 * D)),  # qkv w, b
                  pspec((D, D)), pspec((1, D)),          # proj w, b
                  pspec((1, D)), pspec((1, D)),          # ln2 w, b
                  pspec((D, Dm)), pspec((1, Dm)),        # fc1 w, b
                  pspec((Dm, D)), pspec((1, D))],        # fc2 w, b
        out_specs=pl.BlockSpec((1, S, D), lambda b: (b, 0, 0)),
        scratch_shapes=[pltpu.VMEM((S, D), jnp.float32)],
        compiler_params=_cparams("parallel"),
    )(x,
      blk["norm1_w"].reshape(1, D), blk["norm1_b"].reshape(1, D),
      blk["qkv_w"], blk["qkv_b"].reshape(1, 3 * D),
      blk["proj_w"], blk["proj_b"].reshape(1, D),
      blk["norm2_w"].reshape(1, D), blk["norm2_b"].reshape(1, D),
      blk["fc1_w"], blk["fc1_b"].reshape(1, Dm),
      blk["fc2_w"], blk["fc2_b"].reshape(1, D))


def pallas_tail(t0, t1, norm_w, norm_b, hln_w, hln_b, head_w, head_b):
    B, D = t0.shape
    Lp = head_w.shape[1]

    def fspec(shape):
        return pl.BlockSpec(shape, lambda i: (0, 0))

    return pl.pallas_call(
        _tail_kernel,
        out_shape=(jax.ShapeDtypeStruct((B, Lp), jnp.float32),
                   jax.ShapeDtypeStruct((B, D), jnp.float32)),
        grid=(1,),
        in_specs=[fspec((B, D)), fspec((B, D)),
                  fspec((1, D)), fspec((1, D)),
                  fspec((1, D)), fspec((1, D)),
                  fspec((D, Lp)), fspec((1, Lp))],
        out_specs=(fspec((B, Lp)), fspec((B, D))),
        compiler_params=_cparams("arbitrary"),
    )(t0, t1, norm_w.reshape(1, D), norm_b.reshape(1, D),
      hln_w.reshape(1, D), hln_b.reshape(1, D), head_w, head_b.reshape(1, Lp))


# ----------------------------- model definition -----------------------------

def get_shape(fstride, tstride, input_fdim, input_tdim, patch=16):
    # mirrors ASTModel.get_shape (conv output spatial size)
    f_dim = (input_fdim - patch) // fstride + 1
    t_dim = (input_tdim - patch) // tstride + 1
    return f_dim, t_dim


def init_params(key, cfg):
    D = cfg["embed_dim"]
    P = cfg["patch_size"]
    L = cfg["depth"]
    Dm = cfg["mlp_ratio"] * D
    S = cfg["num_patches"] + 2          # + cls + dist tokens
    Lp = cfg["label_dim_padded"]

    keys = iter(jax.random.split(key, 16 + 8 * L))

    def nrm(shape, std=0.02):
        return std * jax.random.normal(next(keys), shape, dtype=jnp.float32)

    def bf16(x):
        return x.astype(jnp.bfloat16)

    head_w = jnp.pad(nrm((D, cfg["label_dim"])),
                     ((0, 0), (0, Lp - cfg["label_dim"])))

    params = {
        # Conv2d(1, D, 16, stride=(fs, ts)) weight flattened row-major (kh, kw)
        "patch_w": bf16(nrm((P * P, D))),
        "patch_b": jnp.zeros((D,), jnp.float32),
        "cls_token": nrm((1, 1, D)),
        "dist_token": nrm((1, 1, D)),
        "pos_embed": nrm((1, S, D), std=0.5),   # trunc_normal_(std=0.5) analogue
        "norm_w": jnp.ones((D,), jnp.float32),
        "norm_b": jnp.zeros((D,), jnp.float32),
        # mlp_head = LayerNorm(D) + Linear(D, label_dim)  (padded to Lp lanes)
        "head_ln_w": jnp.ones((D,), jnp.float32),
        "head_ln_b": jnp.zeros((D,), jnp.float32),
        "head_w": bf16(head_w),
        "head_b": jnp.zeros((Lp,), jnp.float32),
        "blocks": [],
    }
    for _ in range(L):
        params["blocks"].append({
            "norm1_w": jnp.ones((D,), jnp.float32),
            "norm1_b": jnp.zeros((D,), jnp.float32),
            "qkv_w": bf16(nrm((D, 3 * D))),
            "qkv_b": jnp.zeros((3 * D,), jnp.float32),
            "proj_w": bf16(nrm((D, D))),
            "proj_b": jnp.zeros((D,), jnp.float32),
            "norm2_w": jnp.ones((D,), jnp.float32),
            "norm2_b": jnp.zeros((D,), jnp.float32),
            "fc1_w": bf16(nrm((D, Dm))),
            "fc1_b": jnp.zeros((Dm,), jnp.float32),
            "fc2_w": bf16(nrm((Dm, D))),
            "fc2_b": jnp.zeros((D,), jnp.float32),
        })
    return params


def ast_forward(params, x, cfg):
    """x: (B, input_tdim, input_fdim) -- same convention as PyTorch ASTModel."""
    B, T, F = x.shape
    P = cfg["patch_size"]
    fs, ts = cfg["fstride"], cfg["tstride"]
    D = cfg["embed_dim"]
    H = cfg["num_heads"]

    # x.unsqueeze(1).transpose(2, 3) -> (B, 1, F, T); extract the overlapping
    # 16x16 conv windows in one fused XLA op (NHWC so the patch pixels land in
    # the trailing dim), then run the conv as a Pallas matmul + bias.
    # Note: pixel ordering within a patch is row-major (kh, kw) which matches
    # the flattened Conv2d(1, D, 16, 16) weight only because C_in == 1.
    f_dim, t_dim = get_shape(fs, ts, F, T, P)
    N = f_dim * t_dim
    x_nhwc = jnp.transpose(x, (0, 2, 1))[..., None]            # (B, F, T, 1)
    patches = jax.lax.conv_general_dilated_patches(
        x_nhwc, (P, P), (fs, ts), "VALID",
        dimension_numbers=("NHWC", "HWIO", "NHWC"))             # (B, f, t, P*P)
    patches = patches.reshape(B * N, P * P)

    tok = pallas_linear(patches, params["patch_w"],
                        params["patch_b"]).reshape(B, N, D)

    cls = jnp.broadcast_to(params["cls_token"], (B, 1, D))
    dist = jnp.broadcast_to(params["dist_token"], (B, 1, D))
    xseq = jnp.concatenate([cls, dist, tok], axis=1)            # (B, S, D)
    # pos-embed add folded into plain XLA (review: standalone kernel removed);
    # pos_drop / attn-drop / proj-drop / mlp-drop are identity at inference.
    xseq = xseq + params["pos_embed"]

    # Fully fused transformer blocks (one pallas_call each).
    for blk in params["blocks"]:
        xseq = pallas_block(xseq, blk, num_heads=H)

    # Only tokens 0 (cls) and 1 (dist) feed the pooled output, so the final
    # norm / pooling / mlp_head run on just those rows (fused tail kernel).
    logits_pad, vec_embedding = pallas_tail(
        xseq[:, 0, :], xseq[:, 1, :],
        params["norm_w"], params["norm_b"],
        params["head_ln_w"], params["head_ln_b"],
        params["head_w"], params["head_b"])
    logits = logits_pad[:, :cfg["label_dim"]]
    return logits, vec_embedding


# ----------------------------- main -----------------------------

if __name__ == "__main__":
    # Small but structurally faithful config (overlapping patch strides).
    # S = num_patches + 2 = 128; D = 256 so each head dim is 128 (lane-dense)
    # and every matmul contraction is >= 256 (fills the 256-lane MXU).
    cfg = {
        "label_dim": 10,
        "fstride": 8,
        "tstride": 8,
        "input_fdim": 64,
        "input_tdim": 152,
        "patch_size": 16,
        "embed_dim": 256,
        "depth": 2,
        "num_heads": 2,
        "mlp_ratio": 4,
    }
    f_dim, t_dim = get_shape(cfg["fstride"], cfg["tstride"],
                             cfg["input_fdim"], cfg["input_tdim"],
                             cfg["patch_size"])
    cfg["num_patches"] = f_dim * t_dim                  # 7 * 18 = 126 -> S = 128
    cfg["label_dim_padded"] = max(128, ((cfg["label_dim"] + 127) // 128) * 128)

    key = jax.random.PRNGKey(0)
    k_param, k_input = jax.random.split(key)
    params = init_params(k_param, cfg)

    # input spectrogram: (batch, time_frames, frequency_bins)
    x = jax.random.normal(k_input, (2, cfg["input_tdim"], cfg["input_fdim"]),
                          dtype=jnp.float32)

    fwd = jax.jit(functools.partial(ast_forward, cfg=cfg))
    logits, emb = fwd(params, x)
    jax.block_until_ready((logits, emb))

    assert logits.shape == (2, cfg["label_dim"])
    assert emb.shape == (2, cfg["embed_dim"])
    assert bool(jnp.all(jnp.isfinite(logits))) and bool(jnp.all(jnp.isfinite(emb)))
    print("KERNEL_OK")
</pallas_src>

<mosaic_0001>
module attributes {stable_mosaic.version = 11 : i64} {
  func.func @_linear_kernel(%arg0: i32, %arg1: i32, %arg2: memref<128x256xf32, #tpu.memory_space<vmem>>, %arg3: memref<256x128xbf16, #tpu.memory_space<vmem>>, %arg4: memref<1x128xf32, #tpu.memory_space<vmem>>, %arg5: memref<128x128xf32, #tpu.memory_space<vmem>>) attributes {dimension_semantics = [#tpu.dimension_semantics<parallel>, #tpu.dimension_semantics<parallel>], iteration_bounds = array<i64: 2, 2>, scalar_prefetch = 0 : i64, scratch_operands = 0 : i64, tpu.core_type = #tpu.core_type<tc>, window_params = [{transform_indices = @transform_0, window_bounds = array<i64: 128, 256>}, {transform_indices = @transform_1, window_bounds = array<i64: 256, 128>}, {transform_indices = @transform_2, window_bounds = array<i64: 1, 128>}, {transform_indices = @transform_3, window_bounds = array<i64: 128, 128>}]} {
    %c0 = arith.constant 0 : index
    %c0_0 = arith.constant 0 : index
    %0 = vector.load %arg2[%c0, %c0_0] : memref<128x256xf32, #tpu.memory_space<vmem>>, vector<128x256xf32>
    %1 = arith.truncf %0 : vector<128x256xf32> to vector<128x256xbf16>
    %c0_1 = arith.constant 0 : index
    %c0_2 = arith.constant 0 : index
    %2 = vector.load %arg3[%c0_1, %c0_2] : memref<256x128xbf16, #tpu.memory_space<vmem>>, vector<256x128xbf16>
    %cst = arith.constant dense<0.000000e+00> : vector<128x128xf32>
    %3 = tpu.matmul %1, %2, %cst {dimension_numbers = #tpu.dot_dimension_numbers<[1], [0], [0], [1], [0, 0, 1, 1], [], []>} : vector<128x256xbf16>, vector<256x128xbf16>, vector<128x128xf32> -> vector<128x128xf32>
    %c0_3 = arith.constant 0 : index
    %c0_4 = arith.constant 0 : index
    %4 = vector.load %arg4[%c0_3, %c0_4] : memref<1x128xf32, #tpu.memory_space<vmem>>, vector<1x128xf32>
    %5 = vector.broadcast %4 : vector<1x128xf32> to vector<128x128xf32>
    %6 = arith.addf %3, %5 : vector<128x128xf32>
    %c0_5 = arith.constant 0 : index
    %c0_6 = arith.constant 0 : index
    %7 = vector.load %arg5[%c0_5, %c0_6] : memref<128x128xf32, #tpu.memory_space<vmem>>, vector<128x128xf32>
    tpu.vector_store %arg5[%c0_5, %c0_6], %6 {strides = array<i32>} : memref<128x128xf32, #tpu.memory_space<vmem>>, vector<128x128xf32>,
    return
  }
  func.func @transform_0(%arg0: i32, %arg1: i32) -> (i32, i32) {
    %c0_i32 = arith.constant 0 : i32
    %c0_i32_0 = arith.constant 0 : i32
    return %arg0, %c0_i32 : i32, i32
  }
  func.func @transform_1(%arg0: i32, %arg1: i32) -> (i32, i32) {
    %c0_i32 = arith.constant 0 : i32
    %c0_i32_0 = arith.constant 0 : i32
    return %c0_i32, %arg1 : i32, i32
  }
  func.func @transform_2(%arg0: i32, %arg1: i32) -> (i32, i32) {
    %c0_i32 = arith.constant 0 : i32
    %c0_i32_0 = arith.constant 0 : i32
    return %c0_i32, %arg1 : i32, i32
  }
  func.func @transform_3(%arg0: i32, %arg1: i32) -> (i32, i32) {
    %c0_i32 = arith.constant 0 : i32
    return %arg0, %arg1 : i32, i32
  }
}

module attributes {stable_mosaic.version = 11 : i64} {
  func.func @_block_kernel(%arg0: i32, %arg1: memref<1x128x256xf32, #tpu.memory_space<vmem>>, %arg2: memref<1x256xf32, #tpu.memory_space<vmem>>, %arg3: memref<1x256xf32, #tpu.memory_space<vmem>>, %arg4: memref<256x768xbf16, #tpu.memory_space<vmem>>, %arg5: memref<1x768xf32, #tpu.memory_space<vmem>>, %arg6: memref<256x256xbf16, #tpu.memory_space<vmem>>, %arg7: memref<1x256xf32, #tpu.memory_space<vmem>>, %arg8: memref<1x256xf32, #tpu.memory_space<vmem>>, %arg9: memref<1x256xf32, #tpu.memory_space<vmem>>, %arg10: memref<256x1024xbf16, #tpu.memory_space<vmem>>, %arg11: memref<1x1024xf32, #tpu.memory_space<vmem>>, %arg12: memref<1024x256xbf16, #tpu.memory_space<vmem>>, %arg13: memref<1x256xf32, #tpu.memory_space<vmem>>, %arg14: memref<1x128x256xf32, #tpu.memory_space<vmem>>, %arg15: memref<128x256xf32, #tpu.memory_space<vmem>>) attributes {dimension_semantics = [#tpu.dimension_semantics<parallel>], iteration_bounds = array<i64: 2>, scalar_prefetch = 0 : i64, scratch_operands = 1 : i64, tpu.core_type = #tpu.core_type<tc>, window_params = [{transform_indices = @transform_0, window_bounds = array<i64: 1, 128, 256>}, {pipeline_mode = #tpu.pipeline_mode<synchronous>, transform_indices = @transform_1, window_bounds = array<i64: 1, 256>}, {pipeline_mode = #tpu.pipeline_mode<synchronous>, transform_indices = @transform_2, window_bounds = array<i64: 1, 256>}, {pipeline_mode = #tpu.pipeline_mode<synchronous>, transform_indices = @transform_3, window_bounds = array<i64: 256, 768>}, {pipeline_mode = #tpu.pipeline_mode<synchronous>, transform_indices = @transform_4, window_bounds = array<i64: 1, 768>}, {pipeline_mode = #tpu.pipeline_mode<synchronous>, transform_indices = @transform_5, window_bounds = array<i64: 256, 256>}, {pipeline_mode = #tpu.pipeline_mode<synchronous>, transform_indices = @transform_6, window_bounds = array<i64: 1, 256>}, {pipeline_mode = #tpu.pipeline_mode<synchronous>, transform_indices = @transform_7, window_bounds = array<i64: 1, 256>}, {pipeline_mode = #tpu.pipeline_mode<synchronous>, transform_indices = @transform_8, window_bounds = array<i64: 1, 256>}, {pipeline_mode = #tpu.pipeline_mode<synchronous>, transform_indices = @transform_9, window_bounds = array<i64: 256, 1024>}, {pipeline_mode = #tpu.pipeline_mode<synchronous>, transform_indices = @transform_10, window_bounds = array<i64: 1, 1024>}, {pipeline_mode = #tpu.pipeline_mode<synchronous>, transform_indices = @transform_11, window_bounds = array<i64: 1024, 256>}, {pipeline_mode = #tpu.pipeline_mode<synchronous>, transform_indices = @transform_12, window_bounds = array<i64: 1, 256>}, {transform_indices = @transform_13, window_bounds = array<i64: 1, 128, 256>}]} {
    %c0 = arith.constant 0 : index
    %c0_0 = arith.constant 0 : index
    %c0_1 = arith.constant 0 : index
    %0 = vector.load %arg1[%c0, %c0_0, %c0_1] : memref<1x128x256xf32, #tpu.memory_space<vmem>>, vector<1x128x256xf32>
    %1 = vector.shape_cast %0 : vector<1x128x256xf32> to vector<128x256xf32>
    %c0_2 = arith.constant 0 : index
    %c0_3 = arith.constant 0 : index
    %2 = vector.load %arg2[%c0_2, %c0_3] : memref<1x256xf32, #tpu.memory_space<vmem>>, vector<1x256xf32>
    %c0_4 = arith.constant 0 : index
    %c0_5 = arith.constant 0 : index
    %3 = vector.load %arg3[%c0_4, %c0_5] : memref<1x256xf32, #tpu.memory_space<vmem>>, vector<1x256xf32>
    %cst = arith.constant dense<0.000000e+00> : vector<128xf32>
    %4 = vector.multi_reduction <add>, %1, %cst [1] : vector<128x256xf32> to vector<128xf32>
    %5 = vector.shape_cast %4 : vector<128xf32> to vector<128x1xf32>
    %cst_6 = arith.constant 2.560000e+02 : f32
    %6 = vector.broadcast %cst_6 : f32 to vector<128x1xf32>
    %7 = arith.divf %5, %6 : vector<128x1xf32>
    %8 = vector.broadcast %7 : vector<128x1xf32> to vector<128x256xf32>
    %9 = arith.subf %1, %8 : vector<128x256xf32>
    %10 = arith.mulf %9, %9 : vector<128x256xf32>
    %cst_7 = arith.constant dense<0.000000e+00> : vector<128xf32>
    %11 = vector.multi_reduction <add>, %10, %cst_7 [1] : vector<128x256xf32> to vector<128xf32>
    %12 = vector.shape_cast %11 : vector<128xf32> to vector<128x1xf32>
    %cst_8 = arith.constant 2.560000e+02 : f32
    %13 = vector.broadcast %cst_8 : f32 to vector<128x1xf32>
    %14 = arith.divf %12, %13 : vector<128x1xf32>
    %15 = vector.broadcast %7 : vector<128x1xf32> to vector<128x256xf32>
    %16 = arith.subf %1, %15 : vector<128x256xf32>
    %cst_9 = arith.constant 9.99999997E-7 : f32
    %17 = vector.broadcast %cst_9 : f32 to vector<128x1xf32>
    %18 = arith.addf %14, %17 : vector<128x1xf32>
    %19 = math.rsqrt %18 : vector<128x1xf32>
    %20 = vector.broadcast %19 : vector<128x1xf32> to vector<128x256xf32>
    %21 = arith.mulf %16, %20 : vector<128x256xf32>
    %22 = vector.broadcast %2 : vector<1x256xf32> to vector<128x256xf32>
    %23 = arith.mulf %21, %22 : vector<128x256xf32>
    %24 = vector.broadcast %3 : vector<1x256xf32> to vector<128x256xf32>
    %25 = arith.addf %23, %24 : vector<128x256xf32>
    %26 = arith.truncf %25 : vector<128x256xf32> to vector<128x256xbf16>
    %c0_10 = arith.constant 0 : index
    %c0_11 = arith.constant 0 : index
    %27 = vector.load %arg4[%c0_10, %c0_11] : memref<256x768xbf16, #tpu.memory_space<vmem>>, vector<256x768xbf16>
    %cst_12 = arith.constant dense<0.000000e+00> : vector<128x768xf32>
    %28 = tpu.matmul %26, %27, %cst_12 {dimension_numbers = #tpu.dot_dimension_numbers<[1], [0], [0], [1], [0, 0, 1, 1], [], []>} : vector<128x256xbf16>, vector<256x768xbf16>, vector<128x768xf32> -> vector<128x768xf32>
    %c0_13 = arith.constant 0 : index
    %c0_14 = arith.constant 0 : index
    %29 = vector.load %arg5[%c0_13, %c0_14] : memref<1x768xf32, #tpu.memory_space<vmem>>, vector<1x768xf32>
    %30 = vector.broadcast %29 : vector<1x768xf32> to vector<128x768xf32>
    %31 = arith.addf %28, %30 : vector<128x768xf32>
    %32 = vector.extract_strided_slice %31 {offsets = [0, 0], sizes = [128, 128], strides = [1, 1]} : vector<128x768xf32> to vector<128x128xf32>
    %33 = arith.truncf %32 : vector<128x128xf32> to vector<128x128xbf16>
    %34 = vector.extract_strided_slice %31 {offsets = [0, 256], sizes = [128, 128], strides = [1, 1]} : vector<128x768xf32> to vector<128x128xf32>
    %35 = arith.truncf %34 : vector<128x128xf32> to vector<128x128xbf16>
    %36 = vector.extract_strided_slice %31 {offsets = [0, 512], sizes = [128, 128], strides = [1, 1]} : vector<128x768xf32> to vector<128x128xf32>
    %37 = arith.truncf %36 : vector<128x128xf32> to vector<128x128xbf16>
    %cst_15 = arith.constant dense<0.000000e+00> : vector<128x128xf32>
    %38 = tpu.matmul %33, %35, %cst_15 {dimension_numbers = #tpu.dot_dimension_numbers<[1], [1], [0], [0], [0, 0, 1, 0], [], []>} : vector<128x128xbf16>, vector<128x128xbf16>, vector<128x128xf32> -> vector<128x128xf32>
    %cst_16 = arith.constant 0.0883883461 : f32
    %39 = vector.broadcast %cst_16 : f32 to vector<128x128xf32>
    %40 = arith.mulf %38, %39 : vector<128x128xf32>
    %cst_17 = arith.constant dense<0xFF800000> : vector<128xf32>
    %41 = vector.multi_reduction <maximumf>, %40, %cst_17 [1] : vector<128x128xf32> to vector<128xf32>
    %42 = vector.shape_cast %41 : vector<128xf32> to vector<128x1xf32>
    %43 = vector.broadcast %42 : vector<128x1xf32> to vector<128x128xf32>
    %44 = arith.subf %40, %43 : vector<128x128xf32>
    %45 = math.exp %44 : vector<128x128xf32>
    %cst_18 = arith.constant dense<0.000000e+00> : vector<128xf32>
    %46 = vector.multi_reduction <add>, %45, %cst_18 [1] : vector<128x128xf32> to vector<128xf32>
    %47 = vector.shape_cast %46 : vector<128xf32> to vector<128x1xf32>
    %48 = vector.broadcast %47 : vector<128x1xf32> to vector<128x128xf32>
    %49 = arith.divf %45, %48 : vector<128x128xf32>
    %50 = arith.truncf %49 : vector<128x128xf32> to vector<128x128xbf16>
    %cst_19 = arith.constant dense<0.000000e+00> : vector<128x128xf32>
    %51 = tpu.matmul %50, %37, %cst_19 {dimension_numbers = #tpu.dot_dimension_numbers<[1], [0], [0], [1], [0, 0, 1, 1], [], []>} : vector<128x128xbf16>, vector<128x128xbf16>, vector<128x128xf32> -> vector<128x128xf32>
    %c0_20 = arith.constant 0 : index
    %c0_21 = arith.constant 0 : index
    %52 = vector.load %arg15[%c0_20, %c0_21] : memref<128x256xf32, #tpu.memory_space<vmem>>, vector<128x128xf32>
    tpu.vector_store %arg15[%c0_20, %c0_21], %51 {strides = array<i32>} : memref<128x256xf32, #tpu.memory_space<vmem>>, vector<128x128xf32>,
    %53 = vector.extract_strided_slice %31 {offsets = [0, 128], sizes = [128, 128], strides = [1, 1]} : vector<128x768xf32> to vector<128x128xf32>
    %54 = arith.truncf %53 : vector<128x128xf32> to vector<128x128xbf16>
    %55 = vector.extract_strided_slice %31 {offsets = [0, 384], sizes = [128, 128], strides = [1, 1]} : vector<128x768xf32> to vector<128x128xf32>
    %56 = arith.truncf %55 : vector<128x128xf32> to vector<128x128xbf16>
    %57 = vector.extract_strided_slice %31 {offsets = [0, 640], sizes = [128, 128], strides = [1, 1]} : vector<128x768xf32> to vector<128x128xf32>
    %58 = arith.truncf %57 : vector<128x128xf32> to vector<128x128xbf16>
    %cst_22 = arith.constant dense<0.000000e+00> : vector<128x128xf32>
    %59 = tpu.matmul %54, %56, %cst_22 {dimension_numbers = #tpu.dot_dimension_numbers<[1], [1], [0], [0], [0, 0, 1, 0], [], []>} : vector<128x128xbf16>, vector<128x128xbf16>, vector<128x128xf32> -> vector<128x128xf32>
    %cst_23 = arith.constant 0.0883883461 : f32
    %60 = vector.broadcast %cst_23 : f32 to vector<128x128xf32>
    %61 = arith.mulf %59, %60 : vector<128x128xf32>
    %cst_24 = arith.constant dense<0xFF800000> : vector<128xf32>
    %62 = vector.multi_reduction <maximumf>, %61, %cst_24 [1] : vector<128x128xf32> to vector<128xf32>
    %63 = vector.shape_cast %62 : vector<128xf32> to vector<128x1xf32>
    %64 = vector.broadcast %63 : vector<128x1xf32> to vector<128x128xf32>
    %65 = arith.subf %61, %64 : vector<128x128xf32>
    %66 = math.exp %65 : vector<128x128xf32>
    %cst_25 = arith.constant dense<0.000000e+00> : vector<128xf32>
    %67 = vector.multi_reduction <add>, %66, %cst_25 [1] : vector<128x128xf32> to vector<128xf32>
    %68 = vector.shape_cast %67 : vector<128xf32> to vector<128x1xf32>
    %69 = vector.broadcast %68 : vector<128x1xf32> to vector<128x128xf32>
    %70 = arith.divf %66, %69 : vector<128x128xf32>
    %71 = arith.truncf %70 : vector<128x128xf32> to vector<128x128xbf16>
    %cst_26 = arith.constant dense<0.000000e+00> : vector<128x128xf32>
    %72 = tpu.matmul %71, %58, %cst_26 {dimension_numbers = #tpu.dot_dimension_numbers<[1], [0], [0], [1], [0, 0, 1, 1], [], []>} : vector<128x128xbf16>, vector<128x128xbf16>, vector<128x128xf32> -> vector<128x128xf32>
    %c0_27 = arith.constant 0 : index
    %c128 = arith.constant 128 : index
    %73 = vector.load %arg15[%c0_27, %c128] : memref<128x256xf32, #tpu.memory_space<vmem>>, vector<128x128xf32>
    tpu.vector_store %arg15[%c0_27, %c128], %72 {strides = array<i32>} : memref<128x256xf32, #tpu.memory_space<vmem>>, vector<128x128xf32>,
    %c0_28 = arith.constant 0 : index
    %c0_29 = arith.constant 0 : index
    %74 = vector.load %arg15[%c0_28, %c0_29] : memref<128x256xf32, #tpu.memory_space<vmem>>, vector<128x256xf32>
    %75 = arith.truncf %74 : vector<128x256xf32> to vector<128x256xbf16>
    %c0_30 = arith.constant 0 : index
    %c0_31 = arith.constant 0 : index
    %76 = vector.load %arg6[%c0_30, %c0_31] : memref<256x256xbf16, #tpu.memory_space<vmem>>, vector<256x256xbf16>
    %cst_32 = arith.constant dense<0.000000e+00> : vector<128x256xf32>
    %77 = tpu.matmul %75, %76, %cst_32 {dimension_numbers = #tpu.dot_dimension_numbers<[1], [0], [0], [1], [0, 0, 1, 1], [], []>} : vector<128x256xbf16>, vector<256x256xbf16>, vector<128x256xf32> -> vector<128x256xf32>
    %c0_33 = arith.constant 0 : index
    %c0_34 = arith.constant 0 : index
    %78 = vector.load %arg7[%c0_33, %c0_34] : memref<1x256xf32, #tpu.memory_space<vmem>>, vector<1x256xf32>
    %79 = vector.broadcast %78 : vector<1x256xf32> to vector<128x256xf32>
    %80 = arith.addf %77, %79 : vector<128x256xf32>
    %81 = arith.addf %1, %80 : vector<128x256xf32>
    %c0_35 = arith.constant 0 : index
    %c0_36 = arith.constant 0 : index
    %82 = vector.load %arg8[%c0_35, %c0_36] : memref<1x256xf32, #tpu.memory_space<vmem>>, vector<1x256xf32>
    %c0_37 = arith.constant 0 : index
    %c0_38 = arith.constant 0 : index
    %83 = vector.load %arg9[%c0_37, %c0_38] : memref<1x256xf32, #tpu.memory_space<vmem>>, vector<1x256xf32>
    %cst_39 = arith.constant dense<0.000000e+00> : vector<128xf32>
    %84 = vector.multi_reduction <add>, %81, %cst_39 [1] : vector<128x256xf32> to vector<128xf32>
    %85 = vector.shape_cast %84 : vector<128xf32> to vector<128x1xf32>
    %cst_40 = arith.constant 2.560000e+02 : f32
    %86 = vector.broadcast %cst_40 : f32 to vector<128x1xf32>
    %87 = arith.divf %85, %86 : vector<128x1xf32>
    %88 = vector.broadcast %87 : vector<128x1xf32> to vector<128x256xf32>
    %89 = arith.subf %81, %88 : vector<128x256xf32>
    %90 = arith.mulf %89, %89 : vector<128x256xf32>
    %cst_41 = arith.constant dense<0.000000e+00> : vector<128xf32>
    %91 = vector.multi_reduction <add>, %90, %cst_41 [1] : vector<128x256xf32> to vector<128xf32>
    %92 = vector.shape_cast %91 : vector<128xf32> to vector<128x1xf32>
    %cst_42 = arith.constant 2.560000e+02 : f32
    %93 = vector.broadcast %cst_42 : f32 to vector<128x1xf32>
    %94 = arith.divf %92, %93 : vector<128x1xf32>
    %95 = vector.broadcast %87 : vector<128x1xf32> to vector<128x256xf32>
    %96 = arith.subf %81, %95 : vector<128x256xf32>
    %cst_43 = arith.constant 9.99999997E-7 : f32
    %97 = vector.broadcast %cst_43 : f32 to vector<128x1xf32>
    %98 = arith.addf %94, %97 : vector<128x1xf32>
    %99 = math.rsqrt %98 : vector<128x1xf32>
    %100 = vector.broadcast %99 : vector<128x1xf32> to vector<128x256xf32>
    %101 = arith.mulf %96, %100 : vector<128x256xf32>
    %102 = vector.broadcast %82 : vector<1x256xf32> to vector<128x256xf32>
    %103 = arith.mulf %101, %102 : vector<128x256xf32>
    %104 = vector.broadcast %83 : vector<1x256xf32> to vector<128x256xf32>
    %105 = arith.addf %103, %104 : vector<128x256xf32>
    %106 = arith.truncf %105 : vector<128x256xf32> to vector<128x256xbf16>
    %c0_44 = arith.constant 0 : index
    %c0_45 = arith.constant 0 : index
    %107 = vector.load %arg10[%c0_44, %c0_45] : memref<256x1024xbf16, #tpu.memory_space<vmem>>, vector<256x1024xbf16>
    %cst_46 = arith.constant dense<0.000000e+00> : vector<128x1024xf32>
    %108 = tpu.matmul %106, %107, %cst_46 {dimension_numbers = #tpu.dot_dimension_numbers<[1], [0], [0], [1], [0, 0, 1, 1], [], []>} : vector<128x256xbf16>, vector<256x1024xbf16>, vector<128x1024xf32> -> vector<128x1024xf32>
    %c0_47 = arith.constant 0 : index
    %c0_48 = arith.constant 0 : index
    %109 = vector.load %arg11[%c0_47, %c0_48] : memref<1x1024xf32, #tpu.memory_space<vmem>>, vector<1x1024xf32>
    %110 = vector.broadcast %109 : vector<1x1024xf32> to vector<128x1024xf32>
    %111 = arith.addf %108, %110 : vector<128x1024xf32>
    %cst_49 = arith.constant 5.000000e-01 : f32
    %112 = vector.broadcast %cst_49 : f32 to vector<128x1024xf32>
    %113 = arith.mulf %112, %111 : vector<128x1024xf32>
    %cst_50 = arith.constant 4.471500e-02 : f32
    %114 = vector.broadcast %cst_50 : f32 to vector<128x1024xf32>
    %115 = arith.mulf %114, %111 : vector<128x1024xf32>
    %116 = arith.mulf %115, %111 : vector<128x1024xf32>
    %117 = arith.mulf %116, %111 : vector<128x1024xf32>
    %118 = arith.addf %111, %117 : vector<128x1024xf32>
    %cst_51 = arith.constant 0.797884583 : f32
    %119 = vector.broadcast %cst_51 : f32 to vector<128x1024xf32>
    %120 = arith.mulf %119, %118 : vector<128x1024xf32>
    %121 = math.tanh %120 : vector<128x1024xf32>
    %cst_52 = arith.constant 1.000000e+00 : f32
    %122 = vector.broadcast %cst_52 : f32 to vector<128x1024xf32>
    %123 = arith.addf %122, %121 : vector<128x1024xf32>
    %124 = arith.mulf %113, %123 : vector<128x1024xf32>
    %125 = arith.truncf %124 : vector<128x1024xf32> to vector<128x1024xbf16>
    %c0_53 = arith.constant 0 : index
    %c0_54 = arith.constant 0 : index
    %126 = vector.load %arg12[%c0_53, %c0_54] : memref<1024x256xbf16, #tpu.memory_space<vmem>>, vector<1024x256xbf16>
    %cst_55 = arith.constant dense<0.000000e+00> : vector<128x256xf32>
    %127 = tpu.matmul %125, %126, %cst_55 {dimension_numbers = #tpu.dot_dimension_numbers<[1], [0], [0], [1], [0, 0, 1, 1], [], []>} : vector<128x1024xbf16>, vector<1024x256xbf16>, vector<128x256xf32> -> vector<128x256xf32>
    %c0_56 = arith.constant 0 : index
    %c0_57 = arith.constant 0 : index
    %128 = vector.load %arg13[%c0_56, %c0_57] : memref<1x256xf32, #tpu.memory_space<vmem>>, vector<1x256xf32>
    %129 = vector.broadcast %128 : vector<1x256xf32> to vector<128x256xf32>
    %130 = arith.addf %127, %129 : vector<128x256xf32>
    %131 = arith.addf %81, %130 : vector<128x256xf32>
    %c0_58 = arith.constant 0 : index
    %c0_59 = arith.constant 0 : index
    %c0_60 = arith.constant 0 : index
    %132 = vector.load %arg14[%c0_58, %c0_59, %c0_60] : memref<1x128x256xf32, #tpu.memory_space<vmem>>, vector<1x128x256xf32>
    %133 = vector.shape_cast %132 : vector<1x128x256xf32> to vector<128x256xf32>
    %134 = vector.shape_cast %131 : vector<128x256xf32> to vector<1x128x256xf32>
    tpu.vector_store %arg14[%c0_58, %c0_59, %c0_60], %134 {strides = array<i32>} : memref<1x128x256xf32, #tpu.memory_space<vmem>>, vector<1x128x256xf32>,
    return
  }
  func.func @transform_0(%arg0: i32) -> (i32, i32, i32) {
    %c0_i32 = arith.constant 0 : i32
    %c0_i32_0 = arith.constant 0 : i32
    %c0_i32_1 = arith.constant 0 : i32
    return %arg0, %c0_i32, %c0_i32_0 : i32, i32, i32
  }
  func.func @transform_1(%arg0: i32) -> (i32, i32) {
    %c0_i32 = arith.constant 0 : i32
    %c0_i32_0 = arith.constant 0 : i32
    %c0_i32_1 = arith.constant 0 : i32
    return %c0_i32, %c0_i32_0 : i32, i32
  }
  func.func @transform_2(%arg0: i32) -> (i32, i32) {
    %c0_i32 = arith.constant 0 : i32
    %c0_i32_0 = arith.constant 0 : i32
    %c0_i32_1 = arith.constant 0 : i32
    return %c0_i32, %c0_i32_0 : i32, i32
  }
  func.func @transform_3(%arg0: i32) -> (i32, i32) {
    %c0_i32 = arith.constant 0 : i32
    %c0_i32_0 = arith.constant 0 : i32
    %c0_i32_1 = arith.constant 0 : i32
    return %c0_i32, %c0_i32_0 : i32, i32
  }
  func.func @transform_4(%arg0: i32) -> (i32, i32) {
    %c0_i32 = arith.constant 0 : i32
    %c0_i32_0 = arith.constant 0 : i32
    %c0_i32_1 = arith.constant 0 : i32
    return %c0_i32, %c0_i32_0 : i32, i32
  }
  func.func @transform_5(%arg0: i32) -> (i32, i32) {
    %c0_i32 = arith.constant 0 : i32
    %c0_i32_0 = arith.constant 0 : i32
    %c0_i32_1 = arith.constant 0 : i32
    return %c0_i32, %c0_i32_0 : i32, i32
  }
  func.func @transform_6(%arg0: i32) -> (i32, i32) {
    %c0_i32 = arith.constant 0 : i32
    %c0_i32_0 = arith.constant 0 : i32
    %c0_i32_1 = arith.constant 0 : i32
    return %c0_i32, %c0_i32_0 : i32, i32
  }
  func.func @transform_7(%arg0: i32) -> (i32, i32) {
    %c0_i32 = arith.constant 0 : i32
    %c0_i32_0 = arith.constant 0 : i32
    %c0_i32_1 = arith.constant 0 : i32
    return %c0_i32, %c0_i32_0 : i32, i32
  }
  func.func @transform_8(%arg0: i32) -> (i32, i32) {
    %c0_i32 = arith.constant 0 : i32
    %c0_i32_0 = arith.constant 0 : i32
    %c0_i32_1 = arith.constant 0 : i32
    return %c0_i32, %c0_i32_0 : i32, i32
  }
  func.func @transform_9(%arg0: i32) -> (i32, i32) {
    %c0_i32 = arith.constant 0 : i32
    %c0_i32_0 = arith.constant 0 : i32
    %c0_i32_1 = arith.constant 0 : i32
    return %c0_i32, %c0_i32_0 : i32, i32
  }
  func.func @transform_10(%arg0: i32) -> (i32, i32) {
    %c0_i32 = arith.constant 0 : i32
    %c0_i32_0 = arith.constant 0 : i32
    %c0_i32_1 = arith.constant 0 : i32
    return %c0_i32, %c0_i32_0 : i32, i32
  }
  func.func @transform_11(%arg0: i32) -> (i32, i32) {
    %c0_i32 = arith.constant 0 : i32
    %c0_i32_0 = arith.constant 0 : i32
    %c0_i32_1 = arith.constant 0 : i32
    return %c0_i32, %c0_i32_0 : i32, i32
  }
  func.func @transform_12(%arg0: i32) -> (i32, i32) {
    %c0_i32 = arith.constant 0 : i32
    %c0_i32_0 = arith.constant 0 : i32
    %c0_i32_1 = arith.constant 0 : i32
    return %c0_i32, %c0_i32_0 : i32, i32
  }
  func.func @transform_13(%arg0: i32) -> (i32, i32, i32) {
    %c0_i32 = arith.constant 0 : i32
    %c0_i32_0 = arith.constant 0 : i32
    %c0_i32_1 = arith.constant 0 : i32
    return %arg0, %c0_i32, %c0_i32_0 : i32, i32, i32
  }
}

module attributes {stable_mosaic.version = 11 : i64} {
  func.func @_tail_kernel(%arg0: i32, %arg1: memref<2x256xf32, #tpu.memory_space<vmem>>, %arg2: memref<2x256xf32, #tpu.memory_space<vmem>>, %arg3: memref<1x256xf32, #tpu.memory_space<vmem>>, %arg4: memref<1x256xf32, #tpu.memory_space<vmem>>, %arg5: memref<1x256xf32, #tpu.memory_space<vmem>>, %arg6: memref<1x256xf32, #tpu.memory_space<vmem>>, %arg7: memref<256x128xbf16, #tpu.memory_space<vmem>>, %arg8: memref<1x128xf32, #tpu.memory_space<vmem>>, %arg9: memref<2x128xf32, #tpu.memory_space<vmem>>, %arg10: memref<2x256xf32, #tpu.memory_space<vmem>>) attributes {dimension_semantics = [#tpu.dimension_semantics<arbitrary>], iteration_bounds = array<i64: 1>, scalar_prefetch = 0 : i64, scratch_operands = 0 : i64, tpu.core_type = #tpu.core_type<tc>, window_params = [{pipeline_mode = #tpu.pipeline_mode<synchronous>, transform_indices = @transform_0, window_bounds = array<i64: 2, 256>}, {pipeline_mode = #tpu.pipeline_mode<synchronous>, transform_indices = @transform_1, window_bounds = array<i64: 2, 256>}, {pipeline_mode = #tpu.pipeline_mode<synchronous>, transform_indices = @transform_2, window_bounds = array<i64: 1, 256>}, {pipeline_mode = #tpu.pipeline_mode<synchronous>, transform_indices = @transform_3, window_bounds = array<i64: 1, 256>}, {pipeline_mode = #tpu.pipeline_mode<synchronous>, transform_indices = @transform_4, window_bounds = array<i64: 1, 256>}, {pipeline_mode = #tpu.pipeline_mode<synchronous>, transform_indices = @transform_5, window_bounds = array<i64: 1, 256>}, {pipeline_mode = #tpu.pipeline_mode<synchronous>, transform_indices = @transform_6, window_bounds = array<i64: 256, 128>}, {pipeline_mode = #tpu.pipeline_mode<synchronous>, transform_indices = @transform_7, window_bounds = array<i64: 1, 128>}, {pipeline_mode = #tpu.pipeline_mode<synchronous>, transform_indices = @transform_8, window_bounds = array<i64: 2, 128>}, {pipeline_mode = #tpu.pipeline_mode<synchronous>, transform_indices = @transform_9, window_bounds = array<i64: 2, 256>}]} {
    %c0 = arith.constant 0 : index
    %c0_0 = arith.constant 0 : index
    %0 = vector.load %arg1[%c0, %c0_0] : memref<2x256xf32, #tpu.memory_space<vmem>>, vector<2x256xf32>
    %c0_1 = arith.constant 0 : index
    %c0_2 = arith.constant 0 : index
    %1 = vector.load %arg3[%c0_1, %c0_2] : memref<1x256xf32, #tpu.memory_space<vmem>>, vector<1x256xf32>
    %c0_3 = arith.constant 0 : index
    %c0_4 = arith.constant 0 : index
    %2 = vector.load %arg4[%c0_3, %c0_4] : memref<1x256xf32, #tpu.memory_space<vmem>>, vector<1x256xf32>
    %cst = arith.constant dense<0.000000e+00> : vector<2xf32>
    %3 = vector.multi_reduction <add>, %0, %cst [1] : vector<2x256xf32> to vector<2xf32>
    %4 = vector.shape_cast %3 : vector<2xf32> to vector<2x1xf32>
    %cst_5 = arith.constant 2.560000e+02 : f32
    %5 = vector.broadcast %cst_5 : f32 to vector<2x1xf32>
    %6 = arith.divf %4, %5 : vector<2x1xf32>
    %7 = vector.broadcast %6 : vector<2x1xf32> to vector<2x256xf32>
    %8 = arith.subf %0, %7 : vector<2x256xf32>
    %9 = arith.mulf %8, %8 : vector<2x256xf32>
    %cst_6 = arith.constant dense<0.000000e+00> : vector<2xf32>
    %10 = vector.multi_reduction <add>, %9, %cst_6 [1] : vector<2x256xf32> to vector<2xf32>
    %11 = vector.shape_cast %10 : vector<2xf32> to vector<2x1xf32>
    %cst_7 = arith.constant 2.560000e+02 : f32
    %12 = vector.broadcast %cst_7 : f32 to vector<2x1xf32>
    %13 = arith.divf %11, %12 : vector<2x1xf32>
    %14 = vector.broadcast %6 : vector<2x1xf32> to vector<2x256xf32>
    %15 = arith.subf %0, %14 : vector<2x256xf32>
    %cst_8 = arith.constant 9.99999997E-7 : f32
    %16 = vector.broadcast %cst_8 : f32 to vector<2x1xf32>
    %17 = arith.addf %13, %16 : vector<2x1xf32>
    %18 = math.rsqrt %17 : vector<2x1xf32>
    %19 = vector.broadcast %18 : vector<2x1xf32> to vector<2x256xf32>
    %20 = arith.mulf %15, %19 : vector<2x256xf32>
    %21 = vector.broadcast %1 : vector<1x256xf32> to vector<2x256xf32>
    %22 = arith.mulf %20, %21 : vector<2x256xf32>
    %23 = vector.broadcast %2 : vector<1x256xf32> to vector<2x256xf32>
    %24 = arith.addf %22, %23 : vector<2x256xf32>
    %c0_9 = arith.constant 0 : index
    %c0_10 = arith.constant 0 : index
    %25 = vector.load %arg2[%c0_9, %c0_10] : memref<2x256xf32, #tpu.memory_space<vmem>>, vector<2x256xf32>
    %c0_11 = arith.constant 0 : index
    %c0_12 = arith.constant 0 : index
    %26 = vector.load %arg3[%c0_11, %c0_12] : memref<1x256xf32, #tpu.memory_space<vmem>>, vector<1x256xf32>
    %c0_13 = arith.constant 0 : index
    %c0_14 = arith.constant 0 : index
    %27 = vector.load %arg4[%c0_13, %c0_14] : memref<1x256xf32, #tpu.memory_space<vmem>>, vector<1x256xf32>
    %cst_15 = arith.constant dense<0.000000e+00> : vector<2xf32>
    %28 = vector.multi_reduction <add>, %25, %cst_15 [1] : vector<2x256xf32> to vector<2xf32>
    %29 = vector.shape_cast %28 : vector<2xf32> to vector<2x1xf32>
    %cst_16 = arith.constant 2.560000e+02 : f32
    %30 = vector.broadcast %cst_16 : f32 to vector<2x1xf32>
    %31 = arith.divf %29, %30 : vector<2x1xf32>
    %32 = vector.broadcast %31 : vector<2x1xf32> to vector<2x256xf32>
    %33 = arith.subf %25, %32 : vector<2x256xf32>
    %34 = arith.mulf %33, %33 : vector<2x256xf32>
    %cst_17 = arith.constant dense<0.000000e+00> : vector<2xf32>
    %35 = vector.multi_reduction <add>, %34, %cst_17 [1] : vector<2x256xf32> to vector<2xf32>
    %36 = vector.shape_cast %35 : vector<2xf32> to vector<2x1xf32>
    %cst_18 = arith.constant 2.560000e+02 : f32
    %37 = vector.broadcast %cst_18 : f32 to vector<2x1xf32>
    %38 = arith.divf %36, %37 : vector<2x1xf32>
    %39 = vector.broadcast %31 : vector<2x1xf32> to vector<2x256xf32>
    %40 = arith.subf %25, %39 : vector<2x256xf32>
    %cst_19 = arith.constant 9.99999997E-7 : f32
    %41 = vector.broadcast %cst_19 : f32 to vector<2x1xf32>
    %42 = arith.addf %38, %41 : vector<2x1xf32>
    %43 = math.rsqrt %42 : vector<2x1xf32>
    %44 = vector.broadcast %43 : vector<2x1xf32> to vector<2x256xf32>
    %45 = arith.mulf %40, %44 : vector<2x256xf32>
    %46 = vector.broadcast %26 : vector<1x256xf32> to vector<2x256xf32>
    %47 = arith.mulf %45, %46 : vector<2x256xf32>
    %48 = vector.broadcast %27 : vector<1x256xf32> to vector<2x256xf32>
    %49 = arith.addf %47, %48 : vector<2x256xf32>
    %50 = arith.addf %24, %49 : vector<2x256xf32>
    %cst_20 = arith.constant 5.000000e-01 : f32
    %51 = vector.broadcast %cst_20 : f32 to vector<2x256xf32>
    %52 = arith.mulf %50, %51 : vector<2x256xf32>
    %c0_21 = arith.constant 0 : index
    %c0_22 = arith.constant 0 : index
    %53 = vector.load %arg10[%c0_21, %c0_22] : memref<2x256xf32, #tpu.memory_space<vmem>>, vector<2x256xf32>
    tpu.vector_store %arg10[%c0_21, %c0_22], %52 {strides = array<i32>} : memref<2x256xf32, #tpu.memory_space<vmem>>, vector<2x256xf32>,
    %c0_23 = arith.constant 0 : index
    %c0_24 = arith.constant 0 : index
    %54 = vector.load %arg5[%c0_23, %c0_24] : memref<1x256xf32, #tpu.memory_space<vmem>>, vector<1x256xf32>
    %c0_25 = arith.constant 0 : index
    %c0_26 = arith.constant 0 : index
    %55 = vector.load %arg6[%c0_25, %c0_26] : memref<1x256xf32, #tpu.memory_space<vmem>>, vector<1x256xf32>
    %cst_27 = arith.constant dense<0.000000e+00> : vector<2xf32>
    %56 = vector.multi_reduction <add>, %52, %cst_27 [1] : vector<2x256xf32> to vector<2xf32>
    %57 = vector.shape_cast %56 : vector<2xf32> to vector<2x1xf32>
    %cst_28 = arith.constant 2.560000e+02 : f32
    %58 = vector.broadcast %cst_28 : f32 to vector<2x1xf32>
    %59 = arith.divf %57, %58 : vector<2x1xf32>
    %60 = vector.broadcast %59 : vector<2x1xf32> to vector<2x256xf32>
    %61 = arith.subf %52, %60 : vector<2x256xf32>
    %62 = arith.mulf %61, %61 : vector<2x256xf32>
    %cst_29 = arith.constant dense<0.000000e+00> : vector<2xf32>
    %63 = vector.multi_reduction <add>, %62, %cst_29 [1] : vector<2x256xf32> to vector<2xf32>
    %64 = vector.shape_cast %63 : vector<2xf32> to vector<2x1xf32>
    %cst_30 = arith.constant 2.560000e+02 : f32
    %65 = vector.broadcast %cst_30 : f32 to vector<2x1xf32>
    %66 = arith.divf %64, %65 : vector<2x1xf32>
    %67 = vector.broadcast %59 : vector<2x1xf32> to vector<2x256xf32>
    %68 = arith.subf %52, %67 : vector<2x256xf32>
    %cst_31 = arith.constant 9.99999974E-6 : f32
    %69 = vector.broadcast %cst_31 : f32 to vector<2x1xf32>
    %70 = arith.addf %66, %69 : vector<2x1xf32>
    %71 = math.rsqrt %70 : vector<2x1xf32>
    %72 = vector.broadcast %71 : vector<2x1xf32> to vector<2x256xf32>
    %73 = arith.mulf %68, %72 : vector<2x256xf32>
    %74 = vector.broadcast %54 : vector<1x256xf32> to vector<2x256xf32>
    %75 = arith.mulf %73, %74 : vector<2x256xf32>
    %76 = vector.broadcast %55 : vector<1x256xf32> to vector<2x256xf32>
    %77 = arith.addf %75, %76 : vector<2x256xf32>
    %78 = arith.truncf %77 : vector<2x256xf32> to vector<2x256xbf16>
    %c0_32 = arith.constant 0 : index
    %c0_33 = arith.constant 0 : index
    %79 = vector.load %arg7[%c0_32, %c0_33] : memref<256x128xbf16, #tpu.memory_space<vmem>>, vector<256x128xbf16>
    %cst_34 = arith.constant dense<0.000000e+00> : vector<2x128xf32>
    %80 = tpu.matmul %78, %79, %cst_34 {dimension_numbers = #tpu.dot_dimension_numbers<[1], [0], [0], [1], [0, 0, 1, 1], [], []>} : vector<2x256xbf16>, vector<256x128xbf16>, vector<2x128xf32> -> vector<2x128xf32>
    %c0_35 = arith.constant 0 : index
    %c0_36 = arith.constant 0 : index
    %81 = vector.load %arg8[%c0_35, %c0_36] : memref<1x128xf32, #tpu.memory_space<vmem>>, vector<1x128xf32>
    %82 = vector.broadcast %81 : vector<1x128xf32> to vector<2x128xf32>
    %83 = arith.addf %80, %82 : vector<2x128xf32>
    %c0_37 = arith.constant 0 : index
    %c0_38 = arith.constant 0 : index
    %84 = vector.load %arg9[%c0_37, %c0_38] : memref<2x128xf32, #tpu.memory_space<vmem>>, vector<2x128xf32>
    tpu.vector_store %arg9[%c0_37, %c0_38], %83 {strides = array<i32>} : memref<2x128xf32, #tpu.memory_space<vmem>>, vector<2x128xf32>,
    return
  }
  func.func @transform_0(%arg0: i32) -> (i32, i32) {
    %c0_i32 = arith.constant 0 : i32
    %c0_i32_0 = arith.constant 0 : i32
    %c0_i32_1 = arith.constant 0 : i32
    return %c0_i32, %c0_i32_0 : i32, i32
  }
  func.func @transform_1(%arg0: i32) -> (i32, i32) {
    %c0_i32 = arith.constant 0 : i32
    %c0_i32_0 = arith.constant 0 : i32
    %c0_i32_1 = arith.constant 0 : i32
    return %c0_i32, %c0_i32_0 : i32, i32
  }
  func.func @transform_2(%arg0: i32) -> (i32, i32) {
    %c0_i32 = arith.constant 0 : i32
    %c0_i32_0 = arith.constant 0 : i32
    %c0_i32_1 = arith.constant 0 : i32
    return %c0_i32, %c0_i32_0 : i32, i32
  }
  func.func @transform_3(%arg0: i32) -> (i32, i32) {
    %c0_i32 = arith.constant 0 : i32
    %c0_i32_0 = arith.constant 0 : i32
    %c0_i32_1 = arith.constant 0 : i32
    return %c0_i32, %c0_i32_0 : i32, i32
  }
  func.func @transform_4(%arg0: i32) -> (i32, i32) {
    %c0_i32 = arith.constant 0 : i32
    %c0_i32_0 = arith.constant 0 : i32
    %c0_i32_1 = arith.constant 0 : i32
    return %c0_i32, %c0_i32_0 : i32, i32
  }
  func.func @transform_5(%arg0: i32) -> (i32, i32) {
    %c0_i32 = arith.constant 0 : i32
    %c0_i32_0 = arith.constant 0 : i32
    %c0_i32_1 = arith.constant 0 : i32
    return %c0_i32, %c0_i32_0 : i32, i32
  }
  func.func @transform_6(%arg0: i32) -> (i32, i32) {
    %c0_i32 = arith.constant 0 : i32
    %c0_i32_0 = arith.constant 0 : i32
    %c0_i32_1 = arith.constant 0 : i32
    return %c0_i32, %c0_i32_0 : i32, i32
  }
  func.func @transform_7(%arg0: i32) -> (i32, i32) {
    %c0_i32 = arith.constant 0 : i32
    %c0_i32_0 = arith.constant 0 : i32
    %c0_i32_1 = arith.constant 0 : i32
    return %c0_i32, %c0_i32_0 : i32, i32
  }
  func.func @transform_8(%arg0: i32) -> (i32, i32) {
    %c0_i32 = arith.constant 0 : i32
    %c0_i32_0 = arith.constant 0 : i32
    %c0_i32_1 = arith.constant 0 : i32
    return %c0_i32, %c0_i32_0 : i32, i32
  }
  func.func @transform_9(%arg0: i32) -> (i32, i32) {
    %c0_i32 = arith.constant 0 : i32
    %c0_i32_0 = arith.constant 0 : i32
    %c0_i32_1 = arith.constant 0 : i32
    return %c0_i32, %c0_i32_0 : i32, i32
  }
}

</mosaic_0001>

<llo_original>
// kernel: ast_forward.4
$region0: #{ast_forward.4}
  #allocation0 [shape = 'u32[]', space=smem, size = 0x4, offset = 0x4, fixed_abs, tag = 'smem constant byte address 0x4 - core index']
  #allocation1 [shape = 'u32[144,128]{1,0:T(1,128)}', space=vmem, size = 0x12000, scoped, tag = 'internal scratch']
  %s0 = inlined_call_operand.vmem [shape: f32[256,256], index: 0, kind: input, shape index: {}]
  %s1 = inlined_call_operand.vmem [shape: bf16[256,256], index: 1, kind: input, shape index: {}]
  %s2 = inlined_call_operand.vmem [shape: f32[1,256], index: 2, kind: input, shape index: {}]
  %s3 = inlined_call_operand.vmem [shape: f32[256,256], index: 3, kind: output, shape index: {}]
  %s4 = sld [smem:[#allocation0]]
  $region120: #{ast_forward.4} parent=0
    _
  %s6 = ssub.s32 1, %s4
  %s7 = scalar_select 0, %s6, %s4
  $region1: #{ast_forward.4} parent=0
    #allocation2 [shape = 'u8[131072]{0}', space=vmem, size = 0x20000, scoped, tag = 'input window, operand 1']
    #allocation3 [shape = 'u8[131072]{0}', space=vmem, size = 0x20000, scoped, tag = 'output window, operand 0']
    loop: start=0, step=1, limit=6
    $region2: #{ast_forward.4} parent=1 // loop_pre_header
      _
    $region3: #{ast_forward.4} parent=1 // loop_header
      %s9 = sphi 0, %s13
      %p10 = scmp.ge.s32.totalorder %s9, 6
      %s16 = sphi 0, %s28
      %s17 = sphi 0, %s24
      %s18 = sphi 0, %s16
      %s19 = sphi 0, %s17
      %s20 = sphi 0, %s18
      %s21 = sphi 0, %s19
      %s31 = sphi 0, %s33
      %s34 = sphi 0, %s31
      %s35 = sphi 0, %s34
      %s51 = sphi 0, %s35
      %s57 = sphi 0, %s59
      %s60 = sphi 0, %s57
      %s61 = sphi 0, %s60
      %s77 = sphi 0, %s61
      %s83 = sphi 0, %s85
      %s86 = sphi 0, %s83
      %s87 = sphi 0, %s86
      %s103 = sphi 0, %s87
      %s111 = sphi 0, %s113
      %s114 = sphi 0, %s111
      %s115 = sphi 0, %s114
      %s131 = sphi 0, %s115
    $region4: #{ast_forward.4} parent=1 // loop_header_branch
      %12 = sbr.rel (%p10) target = $region8
    $region5: #{ast_forward.4} parent=1 // loop_body
      %s14 = ssub.s32 %s9, 1
      %s15 = ssub.s32 %s9, 2
      %s22 = sadd.s32 1, %s17
      %p23 = scmp.ge.s32.totalorder %s22, 2
      %s24 = scalar_select %p23, 0, %s22
      %s25 = sadd.s32 1, %s16
      %s26 = scalar_select %p23, %s25, %s16
      %p27 = scmp.ge.s32.totalorder %s26, 2
      %s28 = scalar_select %p27, 0, %s26
      %s29 = ssub.s32 %s16, %s28
      %p30 = scmp.eq.s32.totalorder %s29, 0
      %s32 = sadd.s32 %s31, 1
      %s33 = scalar_select %p30, %s31, %s32
      %p36 = pneg %p30
      %p37 = scmp.eq.s32.totalorder %s9, 3
      %p38 = por %p36, %p37
      %p39 = scmp.ne.s32.totalorder %s31, %s34
      %p40 = scmp.eq.s32.totalorder %s9, 0
      %p41 = por %p39, %p40
      %p42 = scmp.ne.s32.totalorder %s31, %s34
      %p43 = scmp.eq.s32.totalorder %s14, 3
      %p44 = por %p42, %p43
      %p45 = scmp.ne.s32.totalorder %s34, %s35
      %p46 = scmp.eq.s32.totalorder %s14, 0
      %p47 = por %p45, %p46
      %p48 = scmp.ne.s32.totalorder %s34, %s35
      %p49 = scmp.eq.s32.totalorder %s15, 3
      %p50 = por %p48, %p49
      %p52 = scmp.ne.s32.totalorder %s35, %s51
      %p53 = scmp.eq.s32.totalorder %s15, 0
      %p54 = por %p52, %p53
      %s55 = ssub.s32 %s17, %s24
      %p56 = scmp.eq.s32.totalorder %s55, 0
      %s58 = sadd.s32 %s57, 1
      %s59 = scalar_select %p56, %s57, %s58
      %p62 = pneg %p56
      %p63 = scmp.eq.s32.totalorder %s9, 3
      %p64 = por %p62, %p63
      %p65 = scmp.ne.s32.totalorder %s57, %s60
      %p66 = scmp.eq.s32.totalorder %s9, 0
      %p67 = por %p65, %p66
      %p68 = scmp.ne.s32.totalorder %s57, %s60
      %p69 = scmp.eq.s32.totalorder %s14, 3
      %p70 = por %p68, %p69
      %p71 = scmp.ne.s32.totalorder %s60, %s61
      %p72 = scmp.eq.s32.totalorder %s14, 0
      %p73 = por %p71, %p72
      %p74 = scmp.ne.s32.totalorder %s60, %s61
      %p75 = scmp.eq.s32.totalorder %s15, 3
      %p76 = por %p74, %p75
      %p78 = scmp.ne.s32.totalorder %s61, %s77
      %p79 = scmp.eq.s32.totalorder %s15, 0
      %p80 = por %p78, %p79
      %s81 = ssub.s32 %s17, %s24
      %p82 = scmp.eq.s32.totalorder %s81, 0
      %s84 = sadd.s32 %s83, 1
      %s85 = scalar_select %p82, %s83, %s84
      %p88 = pneg %p82
      %p89 = scmp.eq.s32.totalorder %s9, 3
      %p90 = por %p88, %p89
      %p91 = scmp.ne.s32.totalorder %s83, %s86
      %p92 = scmp.eq.s32.totalorder %s9, 0
      %p93 = por %p91, %p92
      %p94 = scmp.ne.s32.totalorder %s83, %s86
      %p95 = scmp.eq.s32.totalorder %s14, 3
      %p96 = por %p94, %p95
      %p97 = scmp.ne.s32.totalorder %s86, %s87
      %p98 = scmp.eq.s32.totalorder %s14, 0
      %p99 = por %p97, %p98
      %p100 = scmp.ne.s32.totalorder %s86, %s87
      %p101 = scmp.eq.s32.totalorder %s15, 3
      %p102 = por %p100, %p101
      %p104 = scmp.ne.s32.totalorder %s87, %s103
      %p105 = scmp.eq.s32.totalorder %s15, 0
      %p106 = por %p104, %p105
      %s107 = ssub.s32 %s16, %s28
      %s108 = ssub.s32 %s17, %s24
      %s109 = sor.u32 %s107, %s108
      %p110 = scmp.eq.s32.totalorder %s109, 0
      %s112 = sadd.s32 %s111, 1
      %s113 = scalar_select %p110, %s111, %s112
      %p116 = pneg %p110
      %p117 = scmp.eq.s32.totalorder %s9, 3
      %p118 = por %p116, %p117
      %p119 = scmp.ne.s32.totalorder %s111, %s114
      %p120 = scmp.eq.s32.totalorder %s9, 0
      %p121 = por %p119, %p120
      %p122 = scmp.ne.s32.totalorder %s111, %s114
      %p123 = scmp.eq.s32.totalorder %s14, 3
      %p124 = por %p122, %p123
      %p125 = scmp.ne.s32.totalorder %s114, %s115
      %p126 = scmp.eq.s32.totalorder %s14, 0
      %p127 = por %p125, %p126
      %p128 = scmp.ne.s32.totalorder %s114, %s115
      %p129 = scmp.eq.s32.totalorder %s15, 3
      %p130 = por %p128, %p129
      %p132 = scmp.ne.s32.totalorder %s115, %s131
      %p133 = scmp.eq.s32.totalorder %s15, 0
      %p134 = por %p132, %p133
      %p135 = scmp.le.s32.totalorder 1, %s9
      %p136 = scmp.lt.s32.totalorder %s9, 5
      %p137 = pnand %p135, %p136
      %p138 = pneg %p137
      // Predicated region
      $region9: #{ast_forward.4} parent=5 // pred_check
        _
      $region10: #{ast_forward.4} parent=5 // pred_check_branch
        %140 = sbr.rel (%p137) target = $region12
      $region11: #{ast_forward.4} parent=5 // pred_region
        %s141 = ssub.s32 %s9, 1
      $region12: #{ast_forward.4} parent=5 // pred_fallthru
        _
      %p142 = scmp.lt.s32.totalorder %s9, 4
      // Predicated region
      $region13: #{ast_forward.4} parent=5 // pred_check
        %p143 = pneg %p142
      $region14: #{ast_forward.4} parent=5 // pred_check_branch
        %145 = sbr.rel (%p143) target = $region16
      $region15: #{ast_forward.4} parent=5 // pred_region
        // Predicated region
        $region17: #{ast_forward.4} parent=15 // pred_check
          %p146 = pneg %p41
        $region18: #{ast_forward.4} parent=15 // pred_check_branch
          %148 = sbr.rel (%p146) target = $region20
        $region19: #{ast_forward.4} parent=15 // pred_region
          %s149 = smul.u32 16, %s16
          %p150 = scmp.lt.s32.totalorder %s149, 31
          %s151 = scalar_select %p150, %s149, 31
          %s152 = smul.addr %s151, 2
          %s153 = smul.addr %s152, 8
          %s154 = scalar_lea.vmem %s0, %s153
          %s155 = smul.u32 16, %s16
        $region20: #{ast_forward.4} parent=15 // pred_fallthru
          _
        // Predicated region
        $region21: #{ast_forward.4} parent=15 // pred_check
          %p156 = pneg %p67
        $region22: #{ast_forward.4} parent=15 // pred_check_branch
          %158 = sbr.rel (%p156) target = $region24
        $region23: #{ast_forward.4} parent=15 // pred_region
          %s159 = sand.u32 %s57, 1
          %s160 = sand.u32 %s57, 1
          %s161 = smul.addr %s160, 128
          %s162 = scalar_lea.vmem [#allocation2], %s161
          %s163 = smul.addr %s17, 4
          %s164 = scalar_lea.vmem %s1, %s163
          // Predicated region
          $region25: #{ast_forward.4} parent=23 // pred_check
            _
          $region26: #{ast_forward.4} parent=23 // pred_check_branch
            %166 = sbr.rel (0) target = $region28
          $region27: #{ast_forward.4} parent=23 // pred_region
            // Predicated region
            $region29: #{ast_forward.4} parent=27 // pred_check
              _
            $region30: #{ast_forward.4} parent=27 // pred_check_branch
              %168 = sbr.rel target = $region32
            $region31: #{ast_forward.4} parent=27 // pred_region
              // Predicated region
              $region44: #{ast_forward.4} parent=31 // pred_check
                _
              $region45: #{ast_forward.4} parent=31 // pred_check_branch
                %245 = sbr.rel (0) target = $region47
              $region46: #{ast_forward.4} parent=31 // pred_region
                loop: start=0, step=1, limit=1
                $region48: #{ast_forward.4} parent=46 // loop_pre_header
                  _
                $region49: #{ast_forward.4} parent=46 // loop_header
                  %s247 = sphi 0, %s251
                  %p248 = scmp.ge.s32.totalorder %s247, 1
                  %s252 = sphi %s164, %s164
                  %s253 = sphi %s162, %s162
                $region50: #{ast_forward.4} parent=46 // loop_header_branch
                  %250 = sbr.rel (%p248) target = $region54
                $region51: #{ast_forward.4} parent=46 // loop_body
                  _
                $region52: #{ast_forward.4} parent=46 // loop_footer
                  %s251 = sadd.s32 1, %s247
                $region53: #{ast_forward.4} parent=46 // loop_footer_branch
                  %246 = sbr.rel target = $region49
                $region54: #{ast_forward.4} parent=46 // loop_exit
                  _
                loop: start=0, step=1, limit=1
                $region55: #{ast_forward.4} parent=46 // loop_pre_header
                  _
                $region56: #{ast_forward.4} parent=46 // loop_header
                  %s256 = sphi 0, %s260
                  %p257 = scmp.ge.s32.totalorder %s256, 1
                  %s261 = sphi %s164, %s164
                  %s262 = sphi %s162, %s162
                $region57: #{ast_forward.4} parent=46 // loop_header_branch
                  %259 = sbr.rel (%p257) target = $region61
                $region58: #{ast_forward.4} parent=46 // loop_body
                  %v263 = vld [vmem:[%s261] sm:$0xf]
                  %264 = vst [vmem:[%s262] sm:$0xf] %v263
                  %v265 = vld [vmem:[%s261 + $0x8] sm:$0xf]
                  %266 = vst [vmem:[%s262 + $0x4] sm:$0xf] %v265
                  %v267 = vld [vmem:[%s261 + $0x10] sm:$0xf]
                  %268 = vst [vmem:[%s262 + $0x8] sm:$0xf] %v267
                  %v269 = vld [vmem:[%s261 + $0x18] sm:$0xf]
                  %270 = vst [vmem:[%s262 + $0xc] sm:$0xf] %v269
                  %v271 = vld [vmem:[%s261 + $0x20] sm:$0xf]
                  %272 = vst [vmem:[%s262 + $0x10] sm:$0xf] %v271
                  %v273 = vld [vmem:[%s261 + $0x28] sm:$0xf]
                  %274 = vst [vmem:[%s262 + $0x14] sm:$0xf] %v273
                  %v275 = vld [vmem:[%s261 + $0x30] sm:$0xf]
                  %276 = vst [vmem:[%s262 + $0x18] sm:$0xf] %v275
                  %v277 = vld [vmem:[%s261 + $0x38] sm:$0xf]
                  %278 = vst [vmem:[%s262 + $0x1c] sm:$0xf] %v277
                  %v279 = vld [vmem:[%s261 + $0x40] sm:$0xf]
                  %280 = vst [vmem:[%s262 + $0x20] sm:$0xf] %v279
                  %v281 = vld [vmem:[%s261 + $0x48] sm:$0xf]
                  %282 = vst [vmem:[%s262 + $0x24] sm:$0xf] %v281
                  %v283 = vld [vmem:[%s261 + $0x50] sm:$0xf]
                  %284 = vst [vmem:[%s262 + $0x28] sm:$0xf] %v283
                  %v285 = vld [vmem:[%s261 + $0x58] sm:$0xf]
                  %286 = vst [vmem:[%s262 + $0x2c] sm:$0xf] %v285
                  %v287 = vld [vmem:[%s261 + $0x60] sm:$0xf]
                  %288 = vst [vmem:[%s262 + $0x30] sm:$0xf] %v287
                  %v289 = vld [vmem:[%s261 + $0x68] sm:$0xf]
                  %290 = vst [vmem:[%s262 + $0x34] sm:$0xf] %v289
                  %v291 = vld [vmem:[%s261 + $0x70] sm:$0xf]
                  %292 = vst [vmem:[%s262 + $0x38] sm:$0xf] %v291
                  %v293 = vld [vmem:[%s261 + $0x78] sm:$0xf]
                  %294 = vst [vmem:[%s262 + $0x3c] sm:$0xf] %v293
                  %v295 = vld [vmem:[%s261 + $0x80] sm:$0xf]
                  %296 = vst [vmem:[%s262 + $0x40] sm:$0xf] %v295
                  %v297 = vld [vmem:[%s261 + $0x88] sm:$0xf]
                  %298 = vst [vmem:[%s262 + $0x44] sm:$0xf] %v297
                  %v299 = vld [vmem:[%s261 + $0x90] sm:$0xf]
                  %300 = vst [vmem:[%s262 + $0x48] sm:$0xf] %v299
                  %v301 = vld [vmem:[%s261 + $0x98] sm:$0xf]
                  %302 = vst [vmem:[%s262 + $0x4c] sm:$0xf] %v301
                  %v303 = vld [vmem:[%s261 + $0xa0] sm:$0xf]
                  %304 = vst [vmem:[%s262 + $0x50] sm:$0xf] %v303
                  %v305 = vld [vmem:[%s261 + $0xa8] sm:$0xf]
                  %306 = vst [vmem:[%s262 + $0x54] sm:$0xf] %v305
                  %v307 = vld [vmem:[%s261 + $0xb0] sm:$0xf]
                  %308 = vst [vmem:[%s262 + $0x58] sm:$0xf] %v307
                  %v309 = vld [vmem:[%s261 + $0xb8] sm:$0xf]
                  %310 = vst [vmem:[%s262 + $0x5c] sm:$0xf] %v309
                  %v311 = vld [vmem:[%s261 + $0xc0] sm:$0xf]
                  %312 = vst [vmem:[%s262 + $0x60] sm:$0xf] %v311
                  %v313 = vld [vmem:[%s261 + $0xc8] sm:$0xf]
                  %314 = vst [vmem:[%s262 + $0x64] sm:$0xf] %v313
                  %v315 = vld [vmem:[%s261 + $0xd0] sm:$0xf]
                  %316 = vst [vmem:[%s262 + $0x68] sm:$0xf] %v315
                  %v317 = vld [vmem:[%s261 + $0xd8] sm:$0xf]
                  %318 = vst [vmem:[%s262 + $0x6c] sm:$0xf] %v317
                  %v319 = vld [vmem:[%s261 + $0xe0] sm:$0xf]
                  %320 = vst [vmem:[%s262 + $0x70] sm:$0xf] %v319
                  %v321 = vld [vmem:[%s261 + $0xe8] sm:$0xf]
                  %322 = vst [vmem:[%s262 + $0x74] sm:$0xf] %v321
                  %v323 = vld [vmem:[%s261 + $0xf0] sm:$0xf]
                  %324 = vst [vmem:[%s262 + $0x78] sm:$0xf] %v323
                  %v325 = vld [vmem:[%s261 + $0xf8] sm:$0xf]
                  %326 = vst [vmem:[%s262 + $0x7c] sm:$0xf] %v325
                $region59: #{ast_forward.4} parent=46 // loop_footer
                  %s260 = sadd.s32 1, %s256
                $region60: #{ast_forward.4} parent=46 // loop_footer_branch
                  %255 = sbr.rel target = $region56
                $region61: #{ast_forward.4} parent=46 // loop_exit
                  _
              $region47: #{ast_forward.4} parent=31 // pred_fallthru
                _
            $region32: #{ast_forward.4} parent=27 // pred_fallthru
              _
            // Predicated region
            $region33: #{ast_forward.4} parent=27 // pred_check
              _
            $region34: #{ast_forward.4} parent=27 // pred_check_branch
              %170 = sbr.rel (0) target = $region36
            $region35: #{ast_forward.4} parent=27 // pred_region
              loop: start=0, step=1, limit=1
              $region37: #{ast_forward.4} parent=35 // loop_pre_header
                _
              $region38: #{ast_forward.4} parent=35 // loop_header
                %s173 = sphi 0, %s177
                %p174 = scmp.ge.s32.totalorder %s173, 1
                %s178 = sphi %s164, %s164
                %s179 = sphi %s162, %s162
              $region39: #{ast_forward.4} parent=35 // loop_header_branch
                %176 = sbr.rel (%p174) target = $region43
              $region40: #{ast_forward.4} parent=35 // loop_body
                %v180 = vld [vmem:[%s178] sm:$0xf]
                %181 = vst [vmem:[%s179] sm:$0xf] %v180
                %v182 = vld [vmem:[%s178 + $0x8] sm:$0xf]
                %183 = vst [vmem:[%s179 + $0x4] sm:$0xf] %v182
                %v184 = vld [vmem:[%s178 + $0x10] sm:$0xf]
                %185 = vst [vmem:[%s179 + $0x8] sm:$0xf] %v184
                %v186 = vld [vmem:[%s178 + $0x18] sm:$0xf]
                %187 = vst [vmem:[%s179 + $0xc] sm:$0xf] %v186
                %v188 = vld [vmem:[%s178 + $0x20] sm:$0xf]
                %189 = vst [vmem:[%s179 + $0x10] sm:$0xf] %v188
                %v190 = vld [vmem:[%s178 + $0x28] sm:$0xf]
                %191 = vst [vmem:[%s179 + $0x14] sm:$0xf] %v190
                %v192 = vld [vmem:[%s178 + $0x30] sm:$0xf]
                %193 = vst [vmem:[%s179 + $0x18] sm:$0xf] %v192
                %v194 = vld [vmem:[%s178 + $0x38] sm:$0xf]
                %195 = vst [vmem:[%s179 + $0x1c] sm:$0xf] %v194
                %v196 = vld [vmem:[%s178 + $0x40] sm:$0xf]
                %197 = vst [vmem:[%s179 + $0x20] sm:$0xf] %v196
                %v198 = vld [vmem:[%s178 + $0x48] sm:$0xf]
                %199 = vst [vmem:[%s179 + $0x24] sm:$0xf] %v198
                %v200 = vld [vmem:[%s178 + $0x50] sm:$0xf]
                %201 = vst [vmem:[%s179 + $0x28] sm:$0xf] %v200
                %v202 = vld [vmem:[%s178 + $0x58] sm:$0xf]
                %203 = vst [vmem:[%s179 + $0x2c] sm:$0xf] %v202
                %v204 = vld [vmem:[%s178 + $0x60] sm:$0xf]
                %205 = vst [vmem:[%s179 + $0x30] sm:$0xf] %v204
                %v206 = vld [vmem:[%s178 + $0x68] sm:$0xf]
                %207 = vst [vmem:[%s179 + $0x34] sm:$0xf] %v206
                %v208 = vld [vmem:[%s178 + $0x70] sm:$0xf]
                %209 = vst [vmem:[%s179 + $0x38] sm:$0xf] %v208
                %v210 = vld [vmem:[%s178 + $0x78] sm:$0xf]
                %211 = vst [vmem:[%s179 + $0x3c] sm:$0xf] %v210
                %v212 = vld [vmem:[%s178 + $0x80] sm:$0xf]
                %213 = vst [vmem:[%s179 + $0x40] sm:$0xf] %v212
                %v214 = vld [vmem:[%s178 + $0x88] sm:$0xf]
                %215 = vst [vmem:[%s179 + $0x44] sm:$0xf] %v214
                %v216 = vld [vmem:[%s178 + $0x90] sm:$0xf]
                %217 = vst [vmem:[%s179 + $0x48] sm:$0xf] %v216
                %v218 = vld [vmem:[%s178 + $0x98] sm:$0xf]
                %219 = vst [vmem:[%s179 + $0x4c] sm:$0xf] %v218
                %v220 = vld [vmem:[%s178 + $0xa0] sm:$0xf]
                %221 = vst [vmem:[%s179 + $0x50] sm:$0xf] %v220
                %v222 = vld [vmem:[%s178 + $0xa8] sm:$0xf]
                %223 = vst [vmem:[%s179 + $0x54] sm:$0xf] %v222
                %v224 = vld [vmem:[%s178 + $0xb0] sm:$0xf]
                %225 = vst [vmem:[%s179 + $0x58] sm:$0xf] %v224
                %v226 = vld [vmem:[%s178 + $0xb8] sm:$0xf]
                %227 = vst [vmem:[%s179 + $0x5c] sm:$0xf] %v226
                %v228 = vld [vmem:[%s178 + $0xc0] sm:$0xf]
                %229 = vst [vmem:[%s179 + $0x60] sm:$0xf] %v228
                %v230 = vld [vmem:[%s178 + $0xc8] sm:$0xf]
                %231 = vst [vmem:[%s179 + $0x64] sm:$0xf] %v230
                %v232 = vld [vmem:[%s178 + $0xd0] sm:$0xf]
                %233 = vst [vmem:[%s179 + $0x68] sm:$0xf] %v232
                %v234 = vld [vmem:[%s178 + $0xd8] sm:$0xf]
                %235 = vst [vmem:[%s179 + $0x6c] sm:$0xf] %v234
                %v236 = vld [vmem:[%s178 + $0xe0] sm:$0xf]
                %237 = vst [vmem:[%s179 + $0x70] sm:$0xf] %v236
                %v238 = vld [vmem:[%s178 + $0xe8] sm:$0xf]
                %239 = vst [vmem:[%s179 + $0x74] sm:$0xf] %v238
                %v240 = vld [vmem:[%s178 + $0xf0] sm:$0xf]
                %241 = vst [vmem:[%s179 + $0x78] sm:$0xf] %v240
                %v242 = vld [vmem:[%s178 + $0xf8] sm:$0xf]
                %243 = vst [vmem:[%s179 + $0x7c] sm:$0xf] %v242
              $region41: #{ast_forward.4} parent=35 // loop_footer
                %s177 = sadd.s32 1, %s173
              $region42: #{ast_forward.4} parent=35 // loop_footer_branch
                %172 = sbr.rel target = $region38
              $region43: #{ast_forward.4} parent=35 // loop_exit
                _
            $region36: #{ast_forward.4} parent=27 // pred_fallthru
              _
          $region28: #{ast_forward.4} parent=23 // pred_fallthru
            _
          %327 = vnop
        $region24: #{ast_forward.4} parent=15 // pred_fallthru
          _
        // Predicated region
        $region62: #{ast_forward.4} parent=15 // pred_check
          %p328 = pneg %p93
        $region63: #{ast_forward.4} parent=15 // pred_check_branch
          %330 = sbr.rel (%p328) target = $region65
        $region64: #{ast_forward.4} parent=15 // pred_region
          %p331 = scmp.lt.s32.totalorder %s17, 1
          %s332 = scalar_select %p331, %s17, 1
          %s333 = scalar_lea.vmem %s2, %s332
        $region65: #{ast_forward.4} parent=15 // pred_fallthru
          _
      $region16: #{ast_forward.4} parent=5 // pred_fallthru
        _
      %p334 = scmp.le.s32.totalorder 1, %s9
      %p335 = scmp.lt.s32.totalorder %s9, 5
      %p336 = pnand %p334, %p335
      %p337 = pneg %p336
      // Predicated region
      $region66: #{ast_forward.4} parent=5 // pred_check
        _
      $region67: #{ast_forward.4} parent=5 // pred_check_branch
        %339 = sbr.rel (%p336) target = $region69
      $region68: #{ast_forward.4} parent=5 // pred_region
        %s340 = ssub.s32 %s9, 1
        %s341 = sand.u32 %s60, 1
        %s342 = sand.u32 %s60, 1
        %s343 = smul.addr %s342, 128
        %s344 = scalar_lea.vmem [#allocation2], %s343
        // Predicated region
        $region70: #{ast_forward.4} parent=68 // pred_check
          %p345 = pneg %p73
        $region71: #{ast_forward.4} parent=68 // pred_check_branch
          %347 = sbr.rel (%p345) target = $region73
        $region72: #{ast_forward.4} parent=68 // pred_region
          _
        $region73: #{ast_forward.4} parent=68 // pred_fallthru
          _
        %s348 = smul.u32 16, %s18
        %p349 = scmp.lt.s32.totalorder %s348, 31
        %s350 = scalar_select %p349, %s348, 31
        %s351 = smul.addr %s350, 2
        %s352 = smul.addr %s351, 8
        %s353 = scalar_lea.vmem %s0, %s352
        %p354 = pneg %p47
        %p355 = pneg %p44
        %s356 = sand.u32 %s60, 1
        %s357 = sand.u32 %s60, 1
        %s358 = smul.addr %s357, 128
        %s359 = scalar_lea.vmem [#allocation2], %s358
        %p360 = pneg %p73
        %p361 = pneg %p70
        %p362 = scmp.lt.s32.totalorder %s19, 1
        %s363 = scalar_select %p362, %s19, 1
        %s364 = scalar_lea.vmem %s2, %s363
        %p365 = pneg %p99
        %p366 = pneg %p96
        %p367 = pneg %p127
        %p368 = pneg %p124
        %s369 = sand.u32 %s114, 1
        %s370 = sand.u32 %s114, 1
        %s371 = smul.addr %s370, 128
        %s372 = scalar_lea.vmem [#allocation3], %s371
        %s373 = smul.u32 16, %s18
        %p374 = scmp.lt.s32.totalorder %s373, 31
        %s375 = scalar_select %p374, %s373, 31
        %s376 = smul.addr %s375, 2
        %s377 = smul.addr %s376, 8
        %s378 = scalar_lea.vmem %s0, %s377
        %s379 = smul.u32 16, %s18
        %p380 = scmp.lt.s32.totalorder %s19, 1
        %s381 = scalar_select %p380, %s19, 1
        %s382 = scalar_lea.vmem %s2, %s381
        %s383 = smul.u32 16, %s18
        %v385 = vld [vmem:[%s378] sm:$0xff]
        %v386 = vld [vmem:[%s378 + $0x8] sm:$0xff]
        %v387 = vld [vmem:[%s378 + $0x10] sm:$0xff]
        %v388 = vld [vmem:[%s378 + $0x18] sm:$0xff]
        %v389 = vld [vmem:[%s378 + $0x20] sm:$0xff]
        %v390 = vld [vmem:[%s378 + $0x28] sm:$0xff]
        %v391 = vld [vmem:[%s378 + $0x30] sm:$0xff]
        %v392 = vld [vmem:[%s378 + $0x38] sm:$0xff]
        %v393 = vld [vmem:[%s378 + $0x40] sm:$0xff]
        %v394 = vld [vmem:[%s378 + $0x48] sm:$0xff]
        %v395 = vld [vmem:[%s378 + $0x50] sm:$0xff]
        %v396 = vld [vmem:[%s378 + $0x58] sm:$0xff]
        %v397 = vld [vmem:[%s378 + $0x60] sm:$0xff]
        %v398 = vld [vmem:[%s378 + $0x68] sm:$0xff]
        %v399 = vld [vmem:[%s378 + $0x70] sm:$0xff]
        %v400 = vld [vmem:[%s378 + $0x78] sm:$0xff]
        %v401 = vld [vmem:[%s378 + $0x80] sm:$0xff]
        %v402 = vld [vmem:[%s378 + $0x88] sm:$0xff]
        %v403 = vld [vmem:[%s378 + $0x90] sm:$0xff]
        %v404 = vld [vmem:[%s378 + $0x98] sm:$0xff]
        %v405 = vld [vmem:[%s378 + $0xa0] sm:$0xff]
        %v406 = vld [vmem:[%s378 + $0xa8] sm:$0xff]
        %v407 = vld [vmem:[%s378 + $0xb0] sm:$0xff]
        %v408 = vld [vmem:[%s378 + $0xb8] sm:$0xff]
        %v409 = vld [vmem:[%s378 + $0xc0] sm:$0xff]
        %v410 = vld [vmem:[%s378 + $0xc8] sm:$0xff]
        %v411 = vld [vmem:[%s378 + $0xd0] sm:$0xff]
        %v412 = vld [vmem:[%s378 + $0xd8] sm:$0xff]
        %v413 = vld [vmem:[%s378 + $0xe0] sm:$0xff]
        %v414 = vld [vmem:[%s378 + $0xe8] sm:$0xff]
        %v415 = vld [vmem:[%s378 + $0xf0] sm:$0xff]
        %v416 = vld [vmem:[%s378 + $0xf8] sm:$0xff]
        %v417 = vpack.c.bf16 %v387, %v385
        %v418 = vpack.c.bf16 %v388, %v386
        %v419 = vpack.c.bf16 %v391, %v389
        %v420 = vpack.c.bf16 %v392, %v390
        %v421 = vpack.c.bf16 %v395, %v393
        %v422 = vpack.c.bf16 %v396, %v394
        %v423 = vpack.c.bf16 %v399, %v397
        %v424 = vpack.c.bf16 %v400, %v398
        %v425 = vpack.c.bf16 %v403, %v401
        %v426 = vpack.c.bf16 %v404, %v402
        %v427 = vpack.c.bf16 %v407, %v405
        %v428 = vpack.c.bf16 %v408, %v406
        %v429 = vpack.c.bf16 %v411, %v409
        %v430 = vpack.c.bf16 %v412, %v410
        %v431 = vpack.c.bf16 %v415, %v413
        %v432 = vpack.c.bf16 %v416, %v414
        %v433 = vld [vmem:[%s344] sm:$0xf]
        %v434 = vld [vmem:[%s344 + $0x4] sm:$0xf]
        %v435 = vld [vmem:[%s344 + $0x8] sm:$0xf]
        %v436 = vld [vmem:[%s344 + $0xc] sm:$0xf]
        %v437 = vld [vmem:[%s344 + $0x10] sm:$0xf]
        %v438 = vld [vmem:[%s344 + $0x14] sm:$0xf]
        %v439 = vld [vmem:[%s344 + $0x18] sm:$0xf]
        %v440 = vld [vmem:[%s344 + $0x1c] sm:$0xf]
        %v441 = vld [vmem:[%s344 + $0x20] sm:$0xf]
        %v442 = vld [vmem:[%s344 + $0x24] sm:$0xf]
        %v443 = vld [vmem:[%s344 + $0x28] sm:$0xf]
        %v444 = vld [vmem:[%s344 + $0x2c] sm:$0xf]
        %v445 = vld [vmem:[%s344 + $0x30] sm:$0xf]
        %v446 = vld [vmem:[%s344 + $0x34] sm:$0xf]
        %v447 = vld [vmem:[%s344 + $0x38] sm:$0xf]
        %v448 = vld [vmem:[%s344 + $0x3c] sm:$0xf]
        %v449 = vld [vmem:[%s344 + $0x40] sm:$0xf]
        %v450 = vld [vmem:[%s344 + $0x44] sm:$0xf]
        %v451 = vld [vmem:[%s344 + $0x48] sm:$0xf]
        %v452 = vld [vmem:[%s344 + $0x4c] sm:$0xf]
        %v453 = vld [vmem:[%s344 + $0x50] sm:$0xf]
        %v454 = vld [vmem:[%s344 + $0x54] sm:$0xf]
        %v455 = vld [vmem:[%s344 + $0x58] sm:$0xf]
        %v456 = vld [vmem:[%s344 + $0x5c] sm:$0xf]
        %v457 = vld [vmem:[%s344 + $0x60] sm:$0xf]
        %v458 = vld [vmem:[%s344 + $0x64] sm:$0xf]
        %v459 = vld [vmem:[%s344 + $0x68] sm:$0xf]
        %v460 = vld [vmem:[%s344 + $0x6c] sm:$0xf]
        %v461 = vld [vmem:[%s344 + $0x70] sm:$0xf]
        %v462 = vld [vmem:[%s344 + $0x74] sm:$0xf]
        %v463 = vld [vmem:[%s344 + $0x78] sm:$0xf]
        %v464 = vld [vmem:[%s344 + $0x7c] sm:$0xf]
        %v465 = vld [vmem:[%s382] sm:$0x1]
        %v467 = vlaneseq
        %v468 = vshrl.u32 %v467, 7
        %v469 = vsub.s32 0, %v468
        %v470 = vrot.slane %v465, %v469
        %v504 = vunpack.c.l.b16 %v433
        %v505 = vunpack.c.l.b16 %v434
        %v506 = vunpack.c.l.b16 %v435
        %v507 = vunpack.c.l.b16 %v436
        %v508 = vunpack.c.l.b16 %v437
        %v509 = vunpack.c.l.b16 %v438
        %v510 = vunpack.c.l.b16 %v439
        %v511 = vunpack.c.l.b16 %v440
        %v512 = vunpack.c.l.b16 %v441
        %v513 = vunpack.c.l.b16 %v442
        %v514 = vunpack.c.l.b16 %v443
        %v515 = vunpack.c.l.b16 %v444
        %v516 = vunpack.c.l.b16 %v445
        %v517 = vunpack.c.l.b16 %v446
        %v518 = vunpack.c.l.b16 %v447
        %v519 = vunpack.c.l.b16 %v448
        %v520 = vunpack.c.l.b16 %v449
        %v521 = vunpack.c.l.b16 %v450
        %v522 = vunpack.c.l.b16 %v451
        %v523 = vunpack.c.l.b16 %v452
        %v524 = vunpack.c.l.b16 %v453
        %v525 = vunpack.c.l.b16 %v454
        %v526 = vunpack.c.l.b16 %v455
        %v527 = vunpack.c.l.b16 %v456
        %v528 = vunpack.c.l.b16 %v457
        %v529 = vunpack.c.l.b16 %v458
        %v530 = vunpack.c.l.b16 %v459
        %v531 = vunpack.c.l.b16 %v460
        %v532 = vunpack.c.l.b16 %v461
        %v533 = vunpack.c.l.b16 %v462
        %v534 = vunpack.c.l.b16 %v463
        %v535 = vunpack.c.l.b16 %v464
        %v536 = vpack.c.b16 %v505, %v504
        %v537 = vpack.c.b16 %v507, %v506
        %v538 = vpack.c.b16 %v509, %v508
        %v539 = vpack.c.b16 %v511, %v510
        %v540 = vpack.c.b16 %v513, %v512
        %v541 = vpack.c.b16 %v515, %v514
        %v542 = vpack.c.b16 %v517, %v516
        %v543 = vpack.c.b16 %v519, %v518
        %v544 = vpack.c.b16 %v521, %v520
        %v545 = vpack.c.b16 %v523, %v522
        %v546 = vpack.c.b16 %v525, %v524
        %v547 = vpack.c.b16 %v527, %v526
        %v548 = vpack.c.b16 %v529, %v528
        %v549 = vpack.c.b16 %v531, %v530
        %v550 = vpack.c.b16 %v533, %v532
        %v551 = vpack.c.b16 %v535, %v534
        %568 = vmatprep.subr.bf16.mxu0 0
        %569 = vmatpush1.bf16.msra.mxu0 %v536
        %570 = vmatprep.subr.bf16.mxu0 0
        %571 = vmatpush1.bf16.msra.mxu0 %v537
        %572 = vmatprep.subr.bf16.mxu0 0
        %573 = vmatpush1.bf16.msra.mxu0 %v538
        %574 = vmatprep.subr.bf16.mxu0 0
        %575 = vmatpush1.bf16.msra.mxu0 %v539
        %576 = vmatprep.subr.bf16.mxu0 0
        %577 = vmatpush1.bf16.msra.mxu0 %v540
        %578 = vmatprep.subr.bf16.mxu0 0
        %579 = vmatpush1.bf16.msra.mxu0 %v541
        %580 = vmatprep.subr.bf16.mxu0 0
        %581 = vmatpush1.bf16.msra.mxu0 %v542
        %582 = vmatprep.subr.bf16.mxu0 0
        %583 = vmatpush1.bf16.msra.mxu0 %v543
        %584 = vmatprep.subr.bf16.mxu0 0
        %585 = vmatpush1.bf16.msra.mxu0 %v544
        %586 = vmatprep.subr.bf16.mxu0 0
        %587 = vmatpush1.bf16.msra.mxu0 %v545
        %588 = vmatprep.subr.bf16.mxu0 0
        %589 = vmatpush1.bf16.msra.mxu0 %v546
        %590 = vmatprep.subr.bf16.mxu0 0
        %591 = vmatpush1.bf16.msra.mxu0 %v547
        %592 = vmatprep.subr.bf16.mxu0 0
        %593 = vmatpush1.bf16.msra.mxu0 %v548
        %594 = vmatprep.subr.bf16.mxu0 0
        %595 = vmatpush1.bf16.msra.mxu0 %v549
        %596 = vmatprep.subr.bf16.mxu0 0
        %597 = vmatpush1.bf16.msra.mxu0 %v550
        %598 = vmatprep.subr.bf16.mxu0 0
        %599 = vmatpush1.bf16.msra.mxu0 %v551
        %600 = vmatprep.mubr.bf16.mxu0 %v418
        %601 = vmatmul.mubr.bf16.gmra.mrb[0].mxu0 %v417
        %v602 = vpop.f32.mrb[0].mxu0
        %v603 = vadd.f32 %v470, %v602
        %v604 = vpop.f32.mrb[0].mxu0
        %v605 = vpop.f32.mrb[0].mxu0
        %v606 = vadd.f32 %v470, %v605
        %v607 = vpop.f32.mrb[0].mxu0
        %608 = vmatprep.mubr.bf16.mxu0 %v420
        %609 = vmatmul.mubr.bf16.gmra.mrb[0].mxu0 %v419
        %v610 = vpop.f32.mrb[0].mxu0
        %v611 = vadd.f32 %v470, %v610
        %v612 = vpop.f32.mrb[0].mxu0
        %v613 = vpop.f32.mrb[0].mxu0
        %v614 = vadd.f32 %v470, %v613
        %v615 = vpop.f32.mrb[0].mxu0
        %616 = vmatprep.mubr.bf16.mxu0 %v422
        %617 = vmatmul.mubr.bf16.gmra.mrb[0].mxu0 %v421
        %v618 = vpop.f32.mrb[0].mxu0
        %v619 = vadd.f32 %v470, %v618
        %v620 = vpop.f32.mrb[0].mxu0
        %v621 = vpop.f32.mrb[0].mxu0
        %v622 = vadd.f32 %v470, %v621
        %v623 = vpop.f32.mrb[0].mxu0
        %624 = vmatprep.mubr.bf16.mxu0 %v424
        %625 = vmatmul.mubr.bf16.gmra.mrb[0].mxu0 %v423
        %v626 = vpop.f32.mrb[0].mxu0
        %v627 = vadd.f32 %v470, %v626
        %v628 = vpop.f32.mrb[0].mxu0
        %v629 = vpop.f32.mrb[0].mxu0
        %v630 = vadd.f32 %v470, %v629
        %v631 = vpop.f32.mrb[0].mxu0
        %632 = vmatprep.mubr.bf16.mxu0 %v426
        %633 = vmatmul.mubr.bf16.gmra.mrb[0].mxu0 %v425
        %v634 = vpop.f32.mrb[0].mxu0
        %v635 = vadd.f32 %v470, %v634
        %v636 = vpop.f32.mrb[0].mxu0
        %v637 = vpop.f32.mrb[0].mxu0
        %v638 = vadd.f32 %v470, %v637
        %v639 = vpop.f32.mrb[0].mxu0
        %640 = vmatprep.mubr.bf16.mxu0 %v428
        %641 = vmatmul.mubr.bf16.gmra.mrb[0].mxu0 %v427
        %v642 = vpop.f32.mrb[0].mxu0
        %v643 = vadd.f32 %v470, %v642
        %v644 = vpop.f32.mrb[0].mxu0
        %v645 = vpop.f32.mrb[0].mxu0
        %v646 = vadd.f32 %v470, %v645
        %v647 = vpop.f32.mrb[0].mxu0
        %648 = vmatprep.mubr.bf16.mxu0 %v430
        %649 = vmatmul.mubr.bf16.gmra.mrb[0].mxu0 %v429
        %v650 = vpop.f32.mrb[0].mxu0
        %v651 = vadd.f32 %v470, %v650
        %v652 = vpop.f32.mrb[0].mxu0
        %v653 = vpop.f32.mrb[0].mxu0
        %v654 = vadd.f32 %v470, %v653
        %v655 = vpop.f32.mrb[0].mxu0
        %656 = vmatprep.mubr.bf16.mxu0 %v432
        %657 = vmatmul.mubr.bf16.gmra.mrb[0].mxu0 %v431
        %v658 = vpop.f32.mrb[0].mxu0
        %v659 = vadd.f32 %v470, %v658
        %v660 = vpop.f32.mrb[0].mxu0
        %v661 = vpop.f32.mrb[0].mxu0
        %v662 = vadd.f32 %v470, %v661
        %v663 = vpop.f32.mrb[0].mxu0
        %664 = vdwg.mxu0
        %665 = vst [vmem:[%s372] sm:$0xff] %v603
        %666 = vst [vmem:[%s372 + $0x8] sm:$0xff] %v606
        %667 = vst [vmem:[%s372 + $0x10] sm:$0xff] %v611
        %668 = vst [vmem:[%s372 + $0x18] sm:$0xff] %v614
        %669 = vst [vmem:[%s372 + $0x20] sm:$0xff] %v619
        %670 = vst [vmem:[%s372 + $0x28] sm:$0xff] %v622
        %671 = vst [vmem:[%s372 + $0x30] sm:$0xff] %v627
        %672 = vst [vmem:[%s372 + $0x38] sm:$0xff] %v630
        %673 = vst [vmem:[%s372 + $0x40] sm:$0xff] %v635
        %674 = vst [vmem:[%s372 + $0x48] sm:$0xff] %v638
        %675 = vst [vmem:[%s372 + $0x50] sm:$0xff] %v643
        %676 = vst [vmem:[%s372 + $0x58] sm:$0xff] %v646
        %677 = vst [vmem:[%s372 + $0x60] sm:$0xff] %v651
        %678 = vst [vmem:[%s372 + $0x68] sm:$0xff] %v654
        %679 = vst [vmem:[%s372 + $0x70] sm:$0xff] %v659
        %680 = vst [vmem:[%s372 + $0x78] sm:$0xff] %v662
        %s681 = sand.u32 %s114, 1
        %s682 = sand.u32 %s114, 1
        %s683 = smul.addr %s682, 128
        %s684 = scalar_lea.vmem [#allocation3], %s683
        // Predicated region
        $region74: #{ast_forward.4} parent=68 // pred_check
          %p685 = pneg %p124
        $region75: #{ast_forward.4} parent=68 // pred_check_branch
          %687 = sbr.rel (%p685) target = $region77
        $region76: #{ast_forward.4} parent=68 // pred_region
          %s688 = smul.u32 16, %s18
          %s689 = smul.addr %s688, 2
          %s690 = sadd.s32 %s19, %s689
          %s691 = smul.addr %s690, 8
          %s692 = scalar_lea.vmem %s3, %s691
          // Predicated region
          $region78: #{ast_forward.4} parent=76 // pred_check
            _
          $region79: #{ast_forward.4} parent=76 // pred_check_branch
            %694 = sbr.rel (0) target = $region81
          $region80: #{ast_forward.4} parent=76 // pred_region
            // Predicated region
            $region82: #{ast_forward.4} parent=80 // pred_check
              _
            $region83: #{ast_forward.4} parent=80 // pred_check_branch
              %696 = sbr.rel (0) target = $region85
            $region84: #{ast_forward.4} parent=80 // pred_region
              // Predicated region
              $region97: #{ast_forward.4} parent=84 // pred_check
                _
              $region98: #{ast_forward.4} parent=84 // pred_check_branch
                %741 = sbr.rel (0) target = $region100
              $region99: #{ast_forward.4} parent=84 // pred_region
                loop: start=0, step=1, limit=1
                $region101: #{ast_forward.4} parent=99 // loop_pre_header
                  _
                $region102: #{ast_forward.4} parent=99 // loop_header
                  %s743 = sphi 0, %s747
                  %p744 = scmp.ge.s32.totalorder %s743, 1
                  %s748 = sphi %s684, %s684
                  %s749 = sphi %s692, %s692
                $region103: #{ast_forward.4} parent=99 // loop_header_branch
                  %746 = sbr.rel (%p744) target = $region107
                $region104: #{ast_forward.4} parent=99 // loop_body
                  %v750 = vld [vmem:[%s748] sm:$0xff]
                  %751 = vst [vmem:[%s749] sm:$0xff] %v750
                  %v752 = vld [vmem:[%s748 + $0x8] sm:$0xff]
                  %753 = vst [vmem:[%s749 + $0x10] sm:$0xff] %v752
                  %v754 = vld [vmem:[%s748 + $0x10] sm:$0xff]
                  %755 = vst [vmem:[%s749 + $0x20] sm:$0xff] %v754
                  %v756 = vld [vmem:[%s748 + $0x18] sm:$0xff]
                  %757 = vst [vmem:[%s749 + $0x30] sm:$0xff] %v756
                  %v758 = vld [vmem:[%s748 + $0x20] sm:$0xff]
                  %759 = vst [vmem:[%s749 + $0x40] sm:$0xff] %v758
                  %v760 = vld [vmem:[%s748 + $0x28] sm:$0xff]
                  %761 = vst [vmem:[%s749 + $0x50] sm:$0xff] %v760
                  %v762 = vld [vmem:[%s748 + $0x30] sm:$0xff]
                  %763 = vst [vmem:[%s749 + $0x60] sm:$0xff] %v762
                  %v764 = vld [vmem:[%s748 + $0x38] sm:$0xff]
                  %765 = vst [vmem:[%s749 + $0x70] sm:$0xff] %v764
                  %v766 = vld [vmem:[%s748 + $0x40] sm:$0xff]
                  %767 = vst [vmem:[%s749 + $0x80] sm:$0xff] %v766
                  %v768 = vld [vmem:[%s748 + $0x48] sm:$0xff]
                  %769 = vst [vmem:[%s749 + $0x90] sm:$0xff] %v768
                  %v770 = vld [vmem:[%s748 + $0x50] sm:$0xff]
                  %771 = vst [vmem:[%s749 + $0xa0] sm:$0xff] %v770
                  %v772 = vld [vmem:[%s748 + $0x58] sm:$0xff]
                  %773 = vst [vmem:[%s749 + $0xb0] sm:$0xff] %v772
                  %v774 = vld [vmem:[%s748 + $0x60] sm:$0xff]
                  %775 = vst [vmem:[%s749 + $0xc0] sm:$0xff] %v774
                  %v776 = vld [vmem:[%s748 + $0x68] sm:$0xff]
                  %777 = vst [vmem:[%s749 + $0xd0] sm:$0xff] %v776
                  %v778 = vld [vmem:[%s748 + $0x70] sm:$0xff]
                  %779 = vst [vmem:[%s749 + $0xe0] sm:$0xff] %v778
                  %v780 = vld [vmem:[%s748 + $0x78] sm:$0xff]
                  %781 = vst [vmem:[%s749 + $0xf0] sm:$0xff] %v780
                $region105: #{ast_forward.4} parent=99 // loop_footer
                  %s747 = sadd.s32 1, %s743
                $region106: #{ast_forward.4} parent=99 // loop_footer_branch
                  %742 = sbr.rel target = $region102
                $region107: #{ast_forward.4} parent=99 // loop_exit
                  _
              $region100: #{ast_forward.4} parent=84 // pred_fallthru
                _
              // Predicated region
              $region108: #{ast_forward.4} parent=84 // pred_check
                _
              $region109: #{ast_forward.4} parent=84 // pred_check_branch
                %783 = sbr.rel target = $region111
              $region110: #{ast_forward.4} parent=84 // pred_region
                _
              $region111: #{ast_forward.4} parent=84 // pred_fallthru
                _
            $region85: #{ast_forward.4} parent=80 // pred_fallthru
              _
            // Predicated region
            $region86: #{ast_forward.4} parent=80 // pred_check
              _
            $region87: #{ast_forward.4} parent=80 // pred_check_branch
              %698 = sbr.rel target = $region89
            $region88: #{ast_forward.4} parent=80 // pred_region
              loop: start=0, step=1, limit=1
              $region90: #{ast_forward.4} parent=88 // loop_pre_header
                _
              $region91: #{ast_forward.4} parent=88 // loop_header
                %s701 = sphi 0, %s705
                %p702 = scmp.ge.s32.totalorder %s701, 1
                %s706 = sphi %s684, %s684
                %s707 = sphi %s692, %s692
              $region92: #{ast_forward.4} parent=88 // loop_header_branch
                %704 = sbr.rel (%p702) target = $region96
              $region93: #{ast_forward.4} parent=88 // loop_body
                %v708 = vld [vmem:[%s706] sm:$0xff]
                %709 = vst [vmem:[%s707] sm:$0xff] %v708
                %v710 = vld [vmem:[%s706 + $0x8] sm:$0xff]
                %711 = vst [vmem:[%s707 + $0x10] sm:$0xff] %v710
                %v712 = vld [vmem:[%s706 + $0x10] sm:$0xff]
                %713 = vst [vmem:[%s707 + $0x20] sm:$0xff] %v712
                %v714 = vld [vmem:[%s706 + $0x18] sm:$0xff]
                %715 = vst [vmem:[%s707 + $0x30] sm:$0xff] %v714
                %v716 = vld [vmem:[%s706 + $0x20] sm:$0xff]
                %717 = vst [vmem:[%s707 + $0x40] sm:$0xff] %v716
                %v718 = vld [vmem:[%s706 + $0x28] sm:$0xff]
                %719 = vst [vmem:[%s707 + $0x50] sm:$0xff] %v718
                %v720 = vld [vmem:[%s706 + $0x30] sm:$0xff]
                %721 = vst [vmem:[%s707 + $0x60] sm:$0xff] %v720
                %v722 = vld [vmem:[%s706 + $0x38] sm:$0xff]
                %723 = vst [vmem:[%s707 + $0x70] sm:$0xff] %v722
                %v724 = vld [vmem:[%s706 + $0x40] sm:$0xff]
                %725 = vst [vmem:[%s707 + $0x80] sm:$0xff] %v724
                %v726 = vld [vmem:[%s706 + $0x48] sm:$0xff]
                %727 = vst [vmem:[%s707 + $0x90] sm:$0xff] %v726
                %v728 = vld [vmem:[%s706 + $0x50] sm:$0xff]
                %729 = vst [vmem:[%s707 + $0xa0] sm:$0xff] %v728
                %v730 = vld [vmem:[%s706 + $0x58] sm:$0xff]
                %731 = vst [vmem:[%s707 + $0xb0] sm:$0xff] %v730
                %v732 = vld [vmem:[%s706 + $0x60] sm:$0xff]
                %733 = vst [vmem:[%s707 + $0xc0] sm:$0xff] %v732
                %v734 = vld [vmem:[%s706 + $0x68] sm:$0xff]
                %735 = vst [vmem:[%s707 + $0xd0] sm:$0xff] %v734
                %v736 = vld [vmem:[%s706 + $0x70] sm:$0xff]
                %737 = vst [vmem:[%s707 + $0xe0] sm:$0xff] %v736
                %v738 = vld [vmem:[%s706 + $0x78] sm:$0xff]
                %739 = vst [vmem:[%s707 + $0xf0] sm:$0xff] %v738
              $region94: #{ast_forward.4} parent=88 // loop_footer
                %s705 = sadd.s32 1, %s701
              $region95: #{ast_forward.4} parent=88 // loop_footer_branch
                %700 = sbr.rel target = $region91
              $region96: #{ast_forward.4} parent=88 // loop_exit
                _
            $region89: #{ast_forward.4} parent=80 // pred_fallthru
              _
          $region81: #{ast_forward.4} parent=76 // pred_fallthru
            _
          %784 = vnop
        $region77: #{ast_forward.4} parent=68 // pred_fallthru
          _
      $region69: #{ast_forward.4} parent=5 // pred_fallthru
        _
      %p785 = scmp.le.s32.totalorder 2, %s9
      // Predicated region
      $region112: #{ast_forward.4} parent=5 // pred_check
        %p786 = pneg %p785
      $region113: #{ast_forward.4} parent=5 // pred_check_branch
        %788 = sbr.rel (%p786) target = $region115
      $region114: #{ast_forward.4} parent=5 // pred_region
        %s789 = ssub.s32 %s9, 2
        // Predicated region
        $region116: #{ast_forward.4} parent=114 // pred_check
          %p790 = pneg %p130
        $region117: #{ast_forward.4} parent=114 // pred_check_branch
          %792 = sbr.rel (%p790) target = $region119
        $region118: #{ast_forward.4} parent=114 // pred_region
          %s793 = sand.u32 %s115, 1
          %s794 = sand.u32 %s115, 1
          %s795 = smul.addr %s794, 128
          %s796 = scalar_lea.vmem [#allocation3], %s795
        $region119: #{ast_forward.4} parent=114 // pred_fallthru
          _
      $region115: #{ast_forward.4} parent=5 // pred_fallthru
        _
    $region6: #{ast_forward.4} parent=1 // loop_footer
      %s13 = sadd.s32 1, %s9
    $region7: #{ast_forward.4} parent=1 // loop_footer_branch
      %8 = sbr.rel target = $region3
    $region8: #{ast_forward.4} parent=1 // loop_exit
      _

// kernel: ast_forward.7
$region0: #{ast_forward.7}
  #allocation0 [shape = 'u32[]', space=smem, size = 0x4, offset = 0x4, fixed_abs, tag = 'smem constant byte address 0x4 - core index']
  #allocation1 [shape = 'u32[144,128]{1,0:T(1,128)}', space=vmem, size = 0x12000, scoped, tag = 'internal scratch']
  %s0 = inlined_call_operand.vmem [shape: f32[2,256], index: 0, kind: input, shape index: {}]
  %s1 = inlined_call_operand.vmem [shape: f32[2,256], index: 1, kind: input, shape index: {}]
  %s2 = inlined_call_operand.vmem [shape: f32[1,256], index: 2, kind: input, shape index: {}]
  %s3 = inlined_call_operand.vmem [shape: f32[1,256], index: 3, kind: input, shape index: {}]
  %s4 = inlined_call_operand.vmem [shape: f32[1,256], index: 4, kind: input, shape index: {}]
  %s5 = inlined_call_operand.vmem [shape: f32[1,256], index: 5, kind: input, shape index: {}]
  %s6 = inlined_call_operand.vmem [shape: bf16[256,128], index: 6, kind: input, shape index: {}]
  %s7 = inlined_call_operand.vmem [shape: f32[1,128], index: 7, kind: input, shape index: {}]
  %s8 = inlined_call_operand.hbm [shape: f32[2,128], index: 8, kind: output, shape index: {0}]
  %s9 = inlined_call_operand.hbm [shape: f32[2,256], index: 9, kind: output, shape index: {1}]
  %10 = xla_tuple %s8, %s9
  %s11 = sld [smem:[#allocation0]]
  $region50: #{ast_forward.7} parent=0
    _
  %s13 = ssub.s32 1, %s11
  %s14 = scalar_select 0, %s13, %s11
  $region1: #{ast_forward.7} parent=0
    #allocation2 [shape = 'u8[1024]{0}', space=vmem, size = 0x400, scoped, tag = 'output window, operand 0, single buffered']
    #allocation3 [shape = 's32[1]{0}', space=sflag, size = 0x4, scoped, tag = 'scoped memory for ast_forward.7']
    #allocation4 [shape = 'u8[2048]{0}', space=vmem, size = 0x800, scoped, tag = 'output window, operand 1, single buffered']
    #allocation5 [shape = 's32[1]{0}', space=sflag, size = 0x4, scoped, tag = 'scoped memory for ast_forward.7']
    %15 = vsyncpa [#allocation3], 0
    %16 = vsyncpa [#allocation5], 0
    // Predicated region
    $region2: #{ast_forward.7} parent=1 // pred_check
      _
    $region3: #{ast_forward.7} parent=1 // pred_check_branch
      %18 = sbr.rel (0) target = $region5
    $region4: #{ast_forward.7} parent=1 // pred_region
      _
    $region5: #{ast_forward.7} parent=1 // pred_fallthru
      _
    // Predicated region
    $region6: #{ast_forward.7} parent=1 // pred_check
      _
    $region7: #{ast_forward.7} parent=1 // pred_check_branch
      %20 = sbr.rel (0) target = $region9
    $region8: #{ast_forward.7} parent=1 // pred_region
      _
    $region9: #{ast_forward.7} parent=1 // pred_fallthru
      _
    // Predicated region
    $region10: #{ast_forward.7} parent=1 // pred_check
      _
    $region11: #{ast_forward.7} parent=1 // pred_check_branch
      %22 = sbr.rel (0) target = $region13
    $region12: #{ast_forward.7} parent=1 // pred_region
      _
    $region13: #{ast_forward.7} parent=1 // pred_fallthru
      _
    // Predicated region
    $region14: #{ast_forward.7} parent=1 // pred_check
      _
    $region15: #{ast_forward.7} parent=1 // pred_check_branch
      %24 = sbr.rel (0) target = $region17
    $region16: #{ast_forward.7} parent=1 // pred_region
      _
    $region17: #{ast_forward.7} parent=1 // pred_fallthru
      _
    // Predicated region
    $region18: #{ast_forward.7} parent=1 // pred_check
      _
    $region19: #{ast_forward.7} parent=1 // pred_check_branch
      %26 = sbr.rel (0) target = $region21
    $region20: #{ast_forward.7} parent=1 // pred_region
      _
    $region21: #{ast_forward.7} parent=1 // pred_fallthru
      _
    // Predicated region
    $region22: #{ast_forward.7} parent=1 // pred_check
      _
    $region23: #{ast_forward.7} parent=1 // pred_check_branch
      %28 = sbr.rel (0) target = $region25
    $region24: #{ast_forward.7} parent=1 // pred_region
      _
    $region25: #{ast_forward.7} parent=1 // pred_fallthru
      _
    // Predicated region
    $region26: #{ast_forward.7} parent=1 // pred_check
      _
    $region27: #{ast_forward.7} parent=1 // pred_check_branch
      %30 = sbr.rel (0) target = $region29
    $region28: #{ast_forward.7} parent=1 // pred_region
      _
    $region29: #{ast_forward.7} parent=1 // pred_fallthru
      _
    // Predicated region
    $region30: #{ast_forward.7} parent=1 // pred_check
      _
    $region31: #{ast_forward.7} parent=1 // pred_check_branch
      %32 = sbr.rel (0) target = $region33
    $region32: #{ast_forward.7} parent=1 // pred_region
      _
    $region33: #{ast_forward.7} parent=1 // pred_fallthru
      _
    %v34 = vld [vmem:[%s0] sm:$0xf]
    %v35 = vld [vmem:[%s2] sm:$0x3]
    %v36 = vld [vmem:[%s3] sm:$0x3]
    %v39 = vunpack.c.l.s4 1983009808
    %v40 = vunpack.c.0.s8 %v39
    %v41 = vlaneseq
    %v42 = vshrl.u32 %v41, 7
    %v43 = vsub.s32 %v40, %v42
    %v44 = vrot.slane %v34, %v43
    %v45 = vcombine.high %v44, %v44
    %vm48 = vcmask 1041408
    %v49 = vsel %vm48, %v44, 0.0
    %v50 = vsel %vm48, %v45, 0.0
    %v51 = vadd.f32 %v49, %v50
    %52 = vadd.xlane.f32.xlu0 %v51
    %v53 = vpop.xlane.xlu0 %52
    %v54 = vrcp.pop 256.0
    %v55 = vmul.f32 %v53, %v54
    %v58 = vunpack.c.l.s4 269488144
    %v59 = vunpack.c.0.s8 %v58
    %v60 = vlaneseq
    %v61 = vshrl.u32 %v60, 7
    %v62 = vsub.s32 %v59, %v61
    %v63 = vrot.slane %v55, %v62
    %v65 = vsub.f32 %v34, %v63
    %v66 = vmul.f32 %v65, %v65
    %v69 = vunpack.c.l.s4 1983009808
    %v70 = vunpack.c.0.s8 %v69
    %v71 = vlaneseq
    %v72 = vshrl.u32 %v71, 7
    %v73 = vsub.s32 %v70, %v72
    %v74 = vrot.slane %v66, %v73
    %v75 = vcombine.high %v74, %v74
    %v78 = vsel %vm48, %v74, 0.0
    %v79 = vsel %vm48, %v75, 0.0
    %v80 = vadd.f32 %v78, %v79
    %81 = vadd.xlane.f32.xlu0 %v80
    %v82 = vpop.xlane.xlu0 %81
    %v83 = vmul.f32 %v82, %v54
    %v84 = vadd.f32 %v83, 1e-06
    %v85 = vrsqrt.pop %v84
    %v88 = vunpack.c.l.s4 269488144
    %v89 = vunpack.c.0.s8 %v88
    %v90 = vlaneseq
    %v91 = vshrl.u32 %v90, 7
    %v92 = vsub.s32 %v89, %v91
    %v93 = vrot.slane %v85, %v92
    %v95 = vmul.f32 %v65, %v93
    %v97 = vlaneseq
    %v98 = vshrl.u32 %v97, 7
    %v99 = vsub.s32 0, %v98
    %v100 = vrot.slane %v35, %v99
    %v101 = vlaneseq
    %v102 = vshrl.u32 %v101, 7
    %v103 = vsub.s32 1, %v102
    %v104 = vrot.slane %v35, %v103
    %v105 = vcombine.low %v100, %v104
    %v107 = vunpack.c.l.s4 1983009808
    %v108 = vunpack.c.0.s8 %v107
    %v109 = vlaneseq
    %v110 = vshrl.u32 %v109, 7
    %v111 = vsub.s32 %v108, %v110
    %v112 = vrot.slane %v105, %v111
    %v114 = vmul.f32 %v95, %v112
    %v116 = vlaneseq
    %v117 = vshrl.u32 %v116, 7
    %v118 = vsub.s32 0, %v117
    %v119 = vrot.slane %v36, %v118
    %v120 = vlaneseq
    %v121 = vshrl.u32 %v120, 7
    %v122 = vsub.s32 1, %v121
    %v123 = vrot.slane %v36, %v122
    %v124 = vcombine.low %v119, %v123
    %v126 = vunpack.c.l.s4 1983009808
    %v127 = vunpack.c.0.s8 %v126
    %v128 = vlaneseq
    %v129 = vshrl.u32 %v128, 7
    %v130 = vsub.s32 %v127, %v129
    %v131 = vrot.slane %v124, %v130
    %v133 = vadd.f32 %v114, %v131
    %v134 = vld [vmem:[%s1] sm:$0xf]
    %v137 = vunpack.c.l.s4 1983009808
    %v138 = vunpack.c.0.s8 %v137
    %v139 = vlaneseq
    %v140 = vshrl.u32 %v139, 7
    %v141 = vsub.s32 %v138, %v140
    %v142 = vrot.slane %v134, %v141
    %v143 = vcombine.high %v142, %v142
    %v146 = vsel %vm48, %v142, 0.0
    %v147 = vsel %vm48, %v143, 0.0
    %v148 = vadd.f32 %v146, %v147
    %149 = vadd.xlane.f32.xlu0 %v148
    %v150 = vpop.xlane.xlu0 %149
    %v151 = vmul.f32 %v150, %v54
    %v154 = vunpack.c.l.s4 269488144
    %v155 = vunpack.c.0.s8 %v154
    %v156 = vlaneseq
    %v157 = vshrl.u32 %v156, 7
    %v158 = vsub.s32 %v155, %v157
    %v159 = vrot.slane %v151, %v158
    %v161 = vsub.f32 %v134, %v159
    %v162 = vmul.f32 %v161, %v161
    %v165 = vunpack.c.l.s4 1983009808
    %v166 = vunpack.c.0.s8 %v165
    %v167 = vlaneseq
    %v168 = vshrl.u32 %v167, 7
    %v169 = vsub.s32 %v166, %v168
    %v170 = vrot.slane %v162, %v169
    %v171 = vcombine.high %v170, %v170
    %v174 = vsel %vm48, %v170, 0.0
    %v175 = vsel %vm48, %v171, 0.0
    %v176 = vadd.f32 %v174, %v175
    %177 = vadd.xlane.f32.xlu0 %v176
    %v178 = vpop.xlane.xlu0 %177
    %v179 = vmul.f32 %v178, %v54
    %v180 = vadd.f32 %v179, 1e-06
    %v181 = vrsqrt.pop %v180
    %v184 = vunpack.c.l.s4 269488144
    %v185 = vunpack.c.0.s8 %v184
    %v186 = vlaneseq
    %v187 = vshrl.u32 %v186, 7
    %v188 = vsub.s32 %v185, %v187
    %v189 = vrot.slane %v181, %v188
    %v191 = vmul.f32 %v161, %v189
    %v192 = vmul.f32 %v191, %v112
    %v193 = vadd.f32 %v192, %v131
    %v194 = vadd.f32 %v133, %v193
    %v195 = vmul.f32 %v194, 0.5
    %196 = vst [vmem:[#allocation4] sm:$0xf] %v195
    %v197 = vld [vmem:[%s4] sm:$0x3]
    %v198 = vld [vmem:[%s5] sm:$0x3]
    %v201 = vunpack.c.l.s4 1983009808
    %v202 = vunpack.c.0.s8 %v201
    %v203 = vlaneseq
    %v204 = vshrl.u32 %v203, 7
    %v205 = vsub.s32 %v202, %v204
    %v206 = vrot.slane %v195, %v205
    %v207 = vcombine.high %v206, %v206
    %v210 = vsel %vm48, %v206, 0.0
    %v211 = vsel %vm48, %v207, 0.0
    %v212 = vadd.f32 %v210, %v211
    %213 = vadd.xlane.f32.xlu0 %v212
    %v214 = vpop.xlane.xlu0 %213
    %v215 = vmul.f32 %v214, %v54
    %v218 = vunpack.c.l.s4 269488144
    %v219 = vunpack.c.0.s8 %v218
    %v220 = vlaneseq
    %v221 = vshrl.u32 %v220, 7
    %v222 = vsub.s32 %v219, %v221
    %v223 = vrot.slane %v215, %v222
    %v225 = vsub.f32 %v195, %v223
    %v226 = vmul.f32 %v225, %v225
    %v229 = vunpack.c.l.s4 1983009808
    %v230 = vunpack.c.0.s8 %v229
    %v231 = vlaneseq
    %v232 = vshrl.u32 %v231, 7
    %v233 = vsub.s32 %v230, %v232
    %v234 = vrot.slane %v226, %v233
    %v235 = vcombine.high %v234, %v234
    %v238 = vsel %vm48, %v234, 0.0
    %v239 = vsel %vm48, %v235, 0.0
    %v240 = vadd.f32 %v238, %v239
    %241 = vadd.xlane.f32.xlu0 %v240
    %v242 = vpop.xlane.xlu0 %241
    %v243 = vmul.f32 %v242, %v54
    %v244 = vadd.f32 %v243, 1e-05
    %v245 = vrsqrt.pop %v244
    %v248 = vunpack.c.l.s4 269488144
    %v249 = vunpack.c.0.s8 %v248
    %v250 = vlaneseq
    %v251 = vshrl.u32 %v250, 7
    %v252 = vsub.s32 %v249, %v251
    %v253 = vrot.slane %v245, %v252
    %v255 = vmul.f32 %v225, %v253
    %v257 = vlaneseq
    %v258 = vshrl.u32 %v257, 7
    %v259 = vsub.s32 0, %v258
    %v260 = vrot.slane %v197, %v259
    %v261 = vlaneseq
    %v262 = vshrl.u32 %v261, 7
    %v263 = vsub.s32 1, %v262
    %v264 = vrot.slane %v197, %v263
    %v265 = vcombine.low %v260, %v264
    %v267 = vunpack.c.l.s4 1983009808
    %v268 = vunpack.c.0.s8 %v267
    %v269 = vlaneseq
    %v270 = vshrl.u32 %v269, 7
    %v271 = vsub.s32 %v268, %v270
    %v272 = vrot.slane %v265, %v271
    %v274 = vmul.f32 %v255, %v272
    %v276 = vlaneseq
    %v277 = vshrl.u32 %v276, 7
    %v278 = vsub.s32 0, %v277
    %v279 = vrot.slane %v198, %v278
    %v280 = vlaneseq
    %v281 = vshrl.u32 %v280, 7
    %v282 = vsub.s32 1, %v281
    %v283 = vrot.slane %v198, %v282
    %v284 = vcombine.low %v279, %v283
    %v286 = vunpack.c.l.s4 1983009808
    %v287 = vunpack.c.0.s8 %v286
    %v288 = vlaneseq
    %v289 = vshrl.u32 %v288, 7
    %v290 = vsub.s32 %v287, %v289
    %v291 = vrot.slane %v284, %v290
    %v293 = vadd.f32 %v274, %v291
    %v296 = vunpack.c.l.s4 1983009808
    %v297 = vunpack.c.0.s8 %v296
    %v298 = vlaneseq
    %v299 = vshrl.u32 %v298, 7
    %v300 = vsub.s32 %v297, %v299
    %v301 = vrot.slane %v293, %v300
    %v302 = vcombine.high %v301, %v301
    %v305 = vpack.c.bf16 %v301, %v301
    %v306 = vpack.c.bf16 %v302, %v302
    %v307 = vld [vmem:[%s6] sm:$0xf]
    %v308 = vld [vmem:[%s6 + $0x4] sm:$0xf]
    %v309 = vld [vmem:[%s6 + $0x8] sm:$0xf]
    %v310 = vld [vmem:[%s6 + $0xc] sm:$0xf]
    %v311 = vld [vmem:[%s6 + $0x10] sm:$0xf]
    %v312 = vld [vmem:[%s6 + $0x14] sm:$0xf]
    %v313 = vld [vmem:[%s6 + $0x18] sm:$0xf]
    %v314 = vld [vmem:[%s6 + $0x1c] sm:$0xf]
    %v315 = vld [vmem:[%s6 + $0x20] sm:$0xf]
    %v316 = vld [vmem:[%s6 + $0x24] sm:$0xf]
    %v317 = vld [vmem:[%s6 + $0x28] sm:$0xf]
    %v318 = vld [vmem:[%s6 + $0x2c] sm:$0xf]
    %v319 = vld [vmem:[%s6 + $0x30] sm:$0xf]
    %v320 = vld [vmem:[%s6 + $0x34] sm:$0xf]
    %v321 = vld [vmem:[%s6 + $0x38] sm:$0xf]
    %v322 = vld [vmem:[%s6 + $0x3c] sm:$0xf]
    %v323 = vld [vmem:[%s6 + $0x40] sm:$0xf]
    %v324 = vld [vmem:[%s6 + $0x44] sm:$0xf]
    %v325 = vld [vmem:[%s6 + $0x48] sm:$0xf]
    %v326 = vld [vmem:[%s6 + $0x4c] sm:$0xf]
    %v327 = vld [vmem:[%s6 + $0x50] sm:$0xf]
    %v328 = vld [vmem:[%s6 + $0x54] sm:$0xf]
    %v329 = vld [vmem:[%s6 + $0x58] sm:$0xf]
    %v330 = vld [vmem:[%s6 + $0x5c] sm:$0xf]
    %v331 = vld [vmem:[%s6 + $0x60] sm:$0xf]
    %v332 = vld [vmem:[%s6 + $0x64] sm:$0xf]
    %v333 = vld [vmem:[%s6 + $0x68] sm:$0xf]
    %v334 = vld [vmem:[%s6 + $0x6c] sm:$0xf]
    %v335 = vld [vmem:[%s6 + $0x70] sm:$0xf]
    %v336 = vld [vmem:[%s6 + $0x74] sm:$0xf]
    %v337 = vld [vmem:[%s6 + $0x78] sm:$0xf]
    %v338 = vld [vmem:[%s6 + $0x7c] sm:$0xf]
    %v339 = vld [vmem:[%s7] sm:$0x1]
    %v341 = vlaneseq
    %v342 = vshrl.u32 %v341, 7
    %v343 = vsub.s32 0, %v342
    %v344 = vrot.slane %v339, %v343
    %v378 = vunpack.c.l.b16 %v307
    %v379 = vunpack.c.l.b16 %v308
    %v380 = vunpack.c.l.b16 %v309
    %v381 = vunpack.c.l.b16 %v310
    %v382 = vunpack.c.l.b16 %v311
    %v383 = vunpack.c.l.b16 %v312
    %v384 = vunpack.c.l.b16 %v313
    %v385 = vunpack.c.l.b16 %v314
    %v386 = vunpack.c.l.b16 %v315
    %v387 = vunpack.c.l.b16 %v316
    %v388 = vunpack.c.l.b16 %v317
    %v389 = vunpack.c.l.b16 %v318
    %v390 = vunpack.c.l.b16 %v319
    %v391 = vunpack.c.l.b16 %v320
    %v392 = vunpack.c.l.b16 %v321
    %v393 = vunpack.c.l.b16 %v322
    %v394 = vunpack.c.l.b16 %v323
    %v395 = vunpack.c.l.b16 %v324
    %v396 = vunpack.c.l.b16 %v325
    %v397 = vunpack.c.l.b16 %v326
    %v398 = vunpack.c.l.b16 %v327
    %v399 = vunpack.c.l.b16 %v328
    %v400 = vunpack.c.l.b16 %v329
    %v401 = vunpack.c.l.b16 %v330
    %v402 = vunpack.c.l.b16 %v331
    %v403 = vunpack.c.l.b16 %v332
    %v404 = vunpack.c.l.b16 %v333
    %v405 = vunpack.c.l.b16 %v334
    %v406 = vunpack.c.l.b16 %v335
    %v407 = vunpack.c.l.b16 %v336
    %v408 = vunpack.c.l.b16 %v337
    %v409 = vunpack.c.l.b16 %v338
    %v410 = vpack.c.b16 %v379, %v378
    %v411 = vpack.c.b16 %v381, %v380
    %v412 = vpack.c.b16 %v383, %v382
    %v413 = vpack.c.b16 %v385, %v384
    %v414 = vpack.c.b16 %v387, %v386
    %v415 = vpack.c.b16 %v389, %v388
    %v416 = vpack.c.b16 %v391, %v390
    %v417 = vpack.c.b16 %v393, %v392
    %v418 = vpack.c.b16 %v395, %v394
    %v419 = vpack.c.b16 %v397, %v396
    %v420 = vpack.c.b16 %v399, %v398
    %v421 = vpack.c.b16 %v401, %v400
    %v422 = vpack.c.b16 %v403, %v402
    %v423 = vpack.c.b16 %v405, %v404
    %v424 = vpack.c.b16 %v407, %v406
    %v425 = vpack.c.b16 %v409, %v408
    %442 = vmatprep.subr.bf16.mxu0 0
    %443 = vmatpush1.bf16.msra.mxu0 %v410
    %444 = vmatprep.subr.bf16.mxu0 0
    %445 = vmatpush1.bf16.msra.mxu0 %v411
    %446 = vmatprep.subr.bf16.mxu0 0
    %447 = vmatpush1.bf16.msra.mxu0 %v412
    %448 = vmatprep.subr.bf16.mxu0 0
    %449 = vmatpush1.bf16.msra.mxu0 %v413
    %450 = vmatprep.subr.bf16.mxu0 0
    %451 = vmatpush1.bf16.msra.mxu0 %v414
    %452 = vmatprep.subr.bf16.mxu0 0
    %453 = vmatpush1.bf16.msra.mxu0 %v415
    %454 = vmatprep.subr.bf16.mxu0 0
    %455 = vmatpush1.bf16.msra.mxu0 %v416
    %456 = vmatprep.subr.bf16.mxu0 0
    %457 = vmatpush1.bf16.msra.mxu0 %v417
    %458 = vmatprep.subr.bf16.mxu0 0
    %459 = vmatpush1.bf16.msra.mxu0 %v418
    %460 = vmatprep.subr.bf16.mxu0 0
    %461 = vmatpush1.bf16.msra.mxu0 %v419
    %462 = vmatprep.subr.bf16.mxu0 0
    %463 = vmatpush1.bf16.msra.mxu0 %v420
    %464 = vmatprep.subr.bf16.mxu0 0
    %465 = vmatpush1.bf16.msra.mxu0 %v421
    %466 = vmatprep.subr.bf16.mxu0 0
    %467 = vmatpush1.bf16.msra.mxu0 %v422
    %468 = vmatprep.subr.bf16.mxu0 0
    %469 = vmatpush1.bf16.msra.mxu0 %v423
    %470 = vmatprep.subr.bf16.mxu0 0
    %471 = vmatpush1.bf16.msra.mxu0 %v424
    %472 = vmatprep.subr.bf16.mxu0 0
    %473 = vmatpush1.bf16.msra.mxu0 %v425
    %474 = vmatprep.mubr.bf16.mxu0 %v306
    %475 = vmatmul.mubr.bf16.gmra.mrb[0].mxu0 %v305
    %v476 = vpop.f32.mrb[0].mxu0
    %v477 = vadd.f32 %v344, %v476
    %v478 = vpop.f32.mrb[0].mxu0
    %v479 = vpop.f32.mrb[0].mxu0
    %v480 = vpop.f32.mrb[0].mxu0
    %481 = vdwg.mxu0
    %482 = vst [vmem:[#allocation2] sm:$0x3] %v477
    // Predicated region
    $region34: #{ast_forward.7} parent=1 // pred_check
      _
    $region35: #{ast_forward.7} parent=1 // pred_check_branch
      %484 = sbr.rel (0) target = $region37
    $region36: #{ast_forward.7} parent=1 // pred_region
      %s486 = ssub.s32 32, 32
      %487 = vsyncadd [#allocation3], %s486
      %s489 = sshll.u32 [#allocation2], 4
      %s490 = int_to_ptr.vmem [resolvable:$true] %s489
      %492 = dma.vmem_to_hbm [thread:$0]  %s490, 32, %s8, [#allocation3]
    $region37: #{ast_forward.7} parent=1 // pred_fallthru
      _
    // Predicated region
    $region38: #{ast_forward.7} parent=1 // pred_check
      _
    $region39: #{ast_forward.7} parent=1 // pred_check_branch
      %494 = sbr.rel (0) target = $region41
    $region40: #{ast_forward.7} parent=1 // pred_region
      %s496 = ssub.s32 64, 64
      %497 = vsyncadd [#allocation5], %s496
      %s499 = sshll.u32 [#allocation4], 4
      %s500 = int_to_ptr.vmem [resolvable:$true] %s499
      %502 = dma.vmem_to_hbm [thread:$0]  %s500, 64, %s9, [#allocation5]
    $region41: #{ast_forward.7} parent=1 // pred_fallthru
      _
    // Predicated region
    $region42: #{ast_forward.7} parent=1 // pred_check
      _
    $region43: #{ast_forward.7} parent=1 // pred_check_branch
      %504 = sbr.rel (0) target = $region45
    $region44: #{ast_forward.7} parent=1 // pred_region
      %505 = dma.done [#allocation3], 32
    $region45: #{ast_forward.7} parent=1 // pred_fallthru
      _
    // Predicated region
    $region46: #{ast_forward.7} parent=1 // pred_check
      _
    $region47: #{ast_forward.7} parent=1 // pred_check_branch
      %507 = sbr.rel (0) target = $region49
    $region48: #{ast_forward.7} parent=1 // pred_region
      %508 = dma.done [#allocation5], 64
    $region49: #{ast_forward.7} parent=1 // pred_fallthru
      _
    %509 = vsyncpa [#allocation3], 1
    %510 = vsyncpa [#allocation5], 1

// kernel: ast_forward.5
$region0: #{ast_forward.5}
  #allocation0 [shape = 'u32[]', space=smem, size = 0x4, offset = 0x4, fixed_abs, tag = 'smem constant byte address 0x4 - core index']
  #allocation1 [shape = 'u32[144,128]{1,0:T(1,128)}', space=vmem, size = 0x12000, scoped, tag = 'internal scratch']
  #allocation2 [shape = 'f32[128,256]{1,0:T(8,128)}', space=vmem, size = 0x20000, scoped, tag = 'scratch operand']
  %s0 = inlined_call_operand.vmem [shape: f32[2,128,256], index: 0, kind: input, shape index: {}]
  %s1 = inlined_call_operand.vmem [shape: f32[1,256], index: 1, kind: input, shape index: {}]
  %s2 = inlined_call_operand.vmem [shape: f32[1,256], index: 2, kind: input, shape index: {}]
  %s3 = inlined_call_operand.vmem [shape: bf16[256,768], index: 3, kind: input, shape index: {}]
  %s4 = inlined_call_operand.vmem [shape: f32[1,768], index: 4, kind: input, shape index: {}]
  %s5 = inlined_call_operand.vmem [shape: bf16[256,256], index: 5, kind: input, shape index: {}]
  %s6 = inlined_call_operand.vmem [shape: f32[1,256], index: 6, kind: input, shape index: {}]
  %s7 = inlined_call_operand.vmem [shape: f32[1,256], index: 7, kind: input, shape index: {}]
  %s8 = inlined_call_operand.vmem [shape: f32[1,256], index: 8, kind: input, shape index: {}]
  %s9 = inlined_call_operand.vmem [shape: bf16[256,1024], index: 9, kind: input, shape index: {}]
  %s10 = inlined_call_operand.vmem [shape: f32[1,1024], index: 10, kind: input, shape index: {}]
  %s11 = inlined_call_operand.vmem [shape: bf16[1024,256], index: 11, kind: input, shape index: {}]
  %s12 = inlined_call_operand.vmem [shape: f32[1,256], index: 12, kind: input, shape index: {}]
  %s13 = inlined_call_operand.vmem [shape: f32[2,128,256], index: 13, kind: output, shape index: {}]
  %s14 = sld [smem:[#allocation0]]
  $region85: #{ast_forward.5} parent=0
    _
  %s16 = ssub.s32 1, %s14
  %s17 = scalar_select 0, %s16, %s14
  loop: start=0, step=1, limit=4
  $region2: #{ast_forward.5} parent=0 // loop_pre_header
    _
  $region3: #{ast_forward.5} parent=0 // loop_header
    %s19 = sphi 0, %s23
    %p20 = scmp.ge.s32.totalorder %s19, 4
    %s29 = sphi 0, %s31
    %s32 = sphi 0, %s29
    %s33 = sphi 0, %s32
    %s49 = sphi 0, %s33
    %s53 = sphi 0, %s53
    %s55 = sphi 0, %s53
    %s56 = sphi 0, %s55
    %s70 = sphi 0, %s56
    %s74 = sphi 0, %s74
    %s76 = sphi 0, %s74
    %s77 = sphi 0, %s76
    %s91 = sphi 0, %s77
    %s95 = sphi 0, %s95
    %s97 = sphi 0, %s95
    %s98 = sphi 0, %s97
    %s112 = sphi 0, %s98
    %s116 = sphi 0, %s116
    %s118 = sphi 0, %s116
    %s119 = sphi 0, %s118
    %s133 = sphi 0, %s119
    %s137 = sphi 0, %s137
    %s139 = sphi 0, %s137
    %s140 = sphi 0, %s139
    %s154 = sphi 0, %s140
    %s158 = sphi 0, %s158
    %s160 = sphi 0, %s158
    %s161 = sphi 0, %s160
    %s175 = sphi 0, %s161
    %s179 = sphi 0, %s179
    %s181 = sphi 0, %s179
    %s182 = sphi 0, %s181
    %s196 = sphi 0, %s182
    %s200 = sphi 0, %s200
    %s202 = sphi 0, %s200
    %s203 = sphi 0, %s202
    %s217 = sphi 0, %s203
    %s221 = sphi 0, %s221
    %s223 = sphi 0, %s221
    %s224 = sphi 0, %s223
    %s238 = sphi 0, %s224
    %s242 = sphi 0, %s242
    %s244 = sphi 0, %s242
    %s245 = sphi 0, %s244
    %s259 = sphi 0, %s245
    %s263 = sphi 0, %s263
    %s265 = sphi 0, %s263
    %s266 = sphi 0, %s265
    %s280 = sphi 0, %s266
    %s284 = sphi 0, %s284
    %s286 = sphi 0, %s284
    %s287 = sphi 0, %s286
    %s301 = sphi 0, %s287
    %s307 = sphi 0, %s309
    %s310 = sphi 0, %s307
    %s311 = sphi 0, %s310
    %s327 = sphi 0, %s311
  $region4: #{ast_forward.5} parent=0 // loop_header_branch
    %22 = sbr.rel (%p20) target = $region8
  $region5: #{ast_forward.5} parent=0 // loop_body
    %s24 = ssub.s32 %s19, 1
    %s25 = ssub.s32 %s19, 2
    %s26 = sadd.s32 %s19, 1
    %s27 = ssub.s32 %s19, %s26
    %p28 = scmp.eq.s32.totalorder %s27, 0
    %s30 = sadd.s32 %s29, 1
    %s31 = scalar_select %p28, %s29, %s30
    %p34 = pneg %p28
    %p35 = scmp.eq.s32.totalorder %s19, 1
    %p36 = por %p34, %p35
    %p37 = scmp.ne.s32.totalorder %s29, %s32
    %p38 = scmp.eq.s32.totalorder %s19, 0
    %p39 = por %p37, %p38
    %p40 = scmp.ne.s32.totalorder %s29, %s32
    %p41 = scmp.eq.s32.totalorder %s24, 1
    %p42 = por %p40, %p41
    %p43 = scmp.ne.s32.totalorder %s32, %s33
    %p44 = scmp.eq.s32.totalorder %s24, 0
    %p45 = por %p43, %p44
    %p46 = scmp.ne.s32.totalorder %s32, %s33
    %p47 = scmp.eq.s32.totalorder %s25, 1
    %p48 = por %p46, %p47
    %p50 = scmp.ne.s32.totalorder %s33, %s49
    %p51 = scmp.eq.s32.totalorder %s25, 0
    %p52 = por %p50, %p51
    %s54 = sadd.s32 %s53, 1
    %p57 = scmp.eq.s32.totalorder %s19, 1
    %p58 = scmp.ne.s32.totalorder %s53, %s55
    %p59 = scmp.eq.s32.totalorder %s19, 0
    %p60 = por %p58, %p59
    %p61 = scmp.ne.s32.totalorder %s53, %s55
    %p62 = scmp.eq.s32.totalorder %s24, 1
    %p63 = por %p61, %p62
    %p64 = scmp.ne.s32.totalorder %s55, %s56
    %p65 = scmp.eq.s32.totalorder %s24, 0
    %p66 = por %p64, %p65
    %p67 = scmp.ne.s32.totalorder %s55, %s56
    %p68 = scmp.eq.s32.totalorder %s25, 1
    %p69 = por %p67, %p68
    %p71 = scmp.ne.s32.totalorder %s56, %s70
    %p72 = scmp.eq.s32.totalorder %s25, 0
    %p73 = por %p71, %p72
    %s75 = sadd.s32 %s74, 1
    %p78 = scmp.eq.s32.totalorder %s19, 1
    %p79 = scmp.ne.s32.totalorder %s74, %s76
    %p80 = scmp.eq.s32.totalorder %s19, 0
    %p81 = por %p79, %p80
    %p82 = scmp.ne.s32.totalorder %s74, %s76
    %p83 = scmp.eq.s32.totalorder %s24, 1
    %p84 = por %p82, %p83
    %p85 = scmp.ne.s32.totalorder %s76, %s77
    %p86 = scmp.eq.s32.totalorder %s24, 0
    %p87 = por %p85, %p86
    %p88 = scmp.ne.s32.totalorder %s76, %s77
    %p89 = scmp.eq.s32.totalorder %s25, 1
    %p90 = por %p88, %p89
    %p92 = scmp.ne.s32.totalorder %s77, %s91
    %p93 = scmp.eq.s32.totalorder %s25, 0
    %p94 = por %p92, %p93
    %s96 = sadd.s32 %s95, 1
    %p99 = scmp.eq.s32.totalorder %s19, 1
    %p100 = scmp.ne.s32.totalorder %s95, %s97
    %p101 = scmp.eq.s32.totalorder %s19, 0
    %p102 = por %p100, %p101
    %p103 = scmp.ne.s32.totalorder %s95, %s97
    %p104 = scmp.eq.s32.totalorder %s24, 1
    %p105 = por %p103, %p104
    %p106 = scmp.ne.s32.totalorder %s97, %s98
    %p107 = scmp.eq.s32.totalorder %s24, 0
    %p108 = por %p106, %p107
    %p109 = scmp.ne.s32.totalorder %s97, %s98
    %p110 = scmp.eq.s32.totalorder %s25, 1
    %p111 = por %p109, %p110
    %p113 = scmp.ne.s32.totalorder %s98, %s112
    %p114 = scmp.eq.s32.totalorder %s25, 0
    %p115 = por %p113, %p114
    %s117 = sadd.s32 %s116, 1
    %p120 = scmp.eq.s32.totalorder %s19, 1
    %p121 = scmp.ne.s32.totalorder %s116, %s118
    %p122 = scmp.eq.s32.totalorder %s19, 0
    %p123 = por %p121, %p122
    %p124 = scmp.ne.s32.totalorder %s116, %s118
    %p125 = scmp.eq.s32.totalorder %s24, 1
    %p126 = por %p124, %p125
    %p127 = scmp.ne.s32.totalorder %s118, %s119
    %p128 = scmp.eq.s32.totalorder %s24, 0
    %p129 = por %p127, %p128
    %p130 = scmp.ne.s32.totalorder %s118, %s119
    %p131 = scmp.eq.s32.totalorder %s25, 1
    %p132 = por %p130, %p131
    %p134 = scmp.ne.s32.totalorder %s119, %s133
    %p135 = scmp.eq.s32.totalorder %s25, 0
    %p136 = por %p134, %p135
    %s138 = sadd.s32 %s137, 1
    %p141 = scmp.eq.s32.totalorder %s19, 1
    %p142 = scmp.ne.s32.totalorder %s137, %s139
    %p143 = scmp.eq.s32.totalorder %s19, 0
    %p144 = por %p142, %p143
    %p145 = scmp.ne.s32.totalorder %s137, %s139
    %p146 = scmp.eq.s32.totalorder %s24, 1
    %p147 = por %p145, %p146
    %p148 = scmp.ne.s32.totalorder %s139, %s140
    %p149 = scmp.eq.s32.totalorder %s24, 0
    %p150 = por %p148, %p149
    %p151 = scmp.ne.s32.totalorder %s139, %s140
    %p152 = scmp.eq.s32.totalorder %s25, 1
    %p153 = por %p151, %p152
    %p155 = scmp.ne.s32.totalorder %s140, %s154
    %p156 = scmp.eq.s32.totalorder %s25, 0
    %p157 = por %p155, %p156
    %s159 = sadd.s32 %s158, 1
    %p162 = scmp.eq.s32.totalorder %s19, 1
    %p163 = scmp.ne.s32.totalorder %s158, %s160
    %p164 = scmp.eq.s32.totalorder %s19, 0
    %p165 = por %p163, %p164
    %p166 = scmp.ne.s32.totalorder %s158, %s160
    %p167 = scmp.eq.s32.totalorder %s24, 1
    %p168 = por %p166, %p167
    %p169 = scmp.ne.s32.totalorder %s160, %s161
    %p170 = scmp.eq.s32.totalorder %s24, 0
    %p171 = por %p169, %p170
    %p172 = scmp.ne.s32.totalorder %s160, %s161
    %p173 = scmp.eq.s32.totalorder %s25, 1
    %p174 = por %p172, %p173
    %p176 = scmp.ne.s32.totalorder %s161, %s175
    %p177 = scmp.eq.s32.totalorder %s25, 0
    %p178 = por %p176, %p177
    %s180 = sadd.s32 %s179, 1
    %p183 = scmp.eq.s32.totalorder %s19, 1
    %p184 = scmp.ne.s32.totalorder %s179, %s181
    %p185 = scmp.eq.s32.totalorder %s19, 0
    %p186 = por %p184, %p185
    %p187 = scmp.ne.s32.totalorder %s179, %s181
    %p188 = scmp.eq.s32.totalorder %s24, 1
    %p189 = por %p187, %p188
    %p190 = scmp.ne.s32.totalorder %s181, %s182
    %p191 = scmp.eq.s32.totalorder %s24, 0
    %p192 = por %p190, %p191
    %p193 = scmp.ne.s32.totalorder %s181, %s182
    %p194 = scmp.eq.s32.totalorder %s25, 1
    %p195 = por %p193, %p194
    %p197 = scmp.ne.s32.totalorder %s182, %s196
    %p198 = scmp.eq.s32.totalorder %s25, 0
    %p199 = por %p197, %p198
    %s201 = sadd.s32 %s200, 1
    %p204 = scmp.eq.s32.totalorder %s19, 1
    %p205 = scmp.ne.s32.totalorder %s200, %s202
    %p206 = scmp.eq.s32.totalorder %s19, 0
    %p207 = por %p205, %p206
    %p208 = scmp.ne.s32.totalorder %s200, %s202
    %p209 = scmp.eq.s32.totalorder %s24, 1
    %p210 = por %p208, %p209
    %p211 = scmp.ne.s32.totalorder %s202, %s203
    %p212 = scmp.eq.s32.totalorder %s24, 0
    %p213 = por %p211, %p212
    %p214 = scmp.ne.s32.totalorder %s202, %s203
    %p215 = scmp.eq.s32.totalorder %s25, 1
    %p216 = por %p214, %p215
    %p218 = scmp.ne.s32.totalorder %s203, %s217
    %p219 = scmp.eq.s32.totalorder %s25, 0
    %p220 = por %p218, %p219
    %s222 = sadd.s32 %s221, 1
    %p225 = scmp.eq.s32.totalorder %s19, 1
    %p226 = scmp.ne.s32.totalorder %s221, %s223
    %p227 = scmp.eq.s32.totalorder %s19, 0
    %p228 = por %p226, %p227
    %p229 = scmp.ne.s32.totalorder %s221, %s223
    %p230 = scmp.eq.s32.totalorder %s24, 1
    %p231 = por %p229, %p230
    %p232 = scmp.ne.s32.totalorder %s223, %s224
    %p233 = scmp.eq.s32.totalorder %s24, 0
    %p234 = por %p232, %p233
    %p235 = scmp.ne.s32.totalorder %s223, %s224
    %p236 = scmp.eq.s32.totalorder %s25, 1
    %p237 = por %p235, %p236
    %p239 = scmp.ne.s32.totalorder %s224, %s238
    %p240 = scmp.eq.s32.totalorder %s25, 0
    %p241 = por %p239, %p240
    %s243 = sadd.s32 %s242, 1
    %p246 = scmp.eq.s32.totalorder %s19, 1
    %p247 = scmp.ne.s32.totalorder %s242, %s244
    %p248 = scmp.eq.s32.totalorder %s19, 0
    %p249 = por %p247, %p248
    %p250 = scmp.ne.s32.totalorder %s242, %s244
    %p251 = scmp.eq.s32.totalorder %s24, 1
    %p252 = por %p250, %p251
    %p253 = scmp.ne.s32.totalorder %s244, %s245
    %p254 = scmp.eq.s32.totalorder %s24, 0
    %p255 = por %p253, %p254
    %p256 = scmp.ne.s32.totalorder %s244, %s245
    %p257 = scmp.eq.s32.totalorder %s25, 1
    %p258 = por %p256, %p257
    %p260 = scmp.ne.s32.totalorder %s245, %s259
    %p261 = scmp.eq.s32.totalorder %s25, 0
    %p262 = por %p260, %p261
    %s264 = sadd.s32 %s263, 1
    %p267 = scmp.eq.s32.totalorder %s19, 1
    %p268 = scmp.ne.s32.totalorder %s263, %s265
    %p269 = scmp.eq.s32.totalorder %s19, 0
    %p270 = por %p268, %p269
    %p271 = scmp.ne.s32.totalorder %s263, %s265
    %p272 = scmp.eq.s32.totalorder %s24, 1
    %p273 = por %p271, %p272
    %p274 = scmp.ne.s32.totalorder %s265, %s266
    %p275 = scmp.eq.s32.totalorder %s24, 0
    %p276 = por %p274, %p275
    %p277 = scmp.ne.s32.totalorder %s265, %s266
    %p278 = scmp.eq.s32.totalorder %s25, 1
    %p279 = por %p277, %p278
    %p281 = scmp.ne.s32.totalorder %s266, %s280
    %p282 = scmp.eq.s32.totalorder %s25, 0
    %p283 = por %p281, %p282
    %s285 = sadd.s32 %s284, 1
    %p288 = scmp.eq.s32.totalorder %s19, 1
    %p289 = scmp.ne.s32.totalorder %s284, %s286
    %p290 = scmp.eq.s32.totalorder %s19, 0
    %p291 = por %p289, %p290
    %p292 = scmp.ne.s32.totalorder %s284, %s286
    %p293 = scmp.eq.s32.totalorder %s24, 1
    %p294 = por %p292, %p293
    %p295 = scmp.ne.s32.totalorder %s286, %s287
    %p296 = scmp.eq.s32.totalorder %s24, 0
    %p297 = por %p295, %p296
    %p298 = scmp.ne.s32.totalorder %s286, %s287
    %p299 = scmp.eq.s32.totalorder %s25, 1
    %p300 = por %p298, %p299
    %p302 = scmp.ne.s32.totalorder %s287, %s301
    %p303 = scmp.eq.s32.totalorder %s25, 0
    %p304 = por %p302, %p303
    %s305 = ssub.s32 %s19, %s26
    %p306 = scmp.eq.s32.totalorder %s305, 0
    %s308 = sadd.s32 %s307, 1
    %s309 = scalar_select %p306, %s307, %s308
    %p312 = pneg %p306
    %p313 = scmp.eq.s32.totalorder %s19, 1
    %p314 = por %p312, %p313
    %p315 = scmp.ne.s32.totalorder %s307, %s310
    %p316 = scmp.eq.s32.totalorder %s19, 0
    %p317 = por %p315, %p316
    %p318 = scmp.ne.s32.totalorder %s307, %s310
    %p319 = scmp.eq.s32.totalorder %s24, 1
    %p320 = por %p318, %p319
    %p321 = scmp.ne.s32.totalorder %s310, %s311
    %p322 = scmp.eq.s32.totalorder %s24, 0
    %p323 = por %p321, %p322
    %p324 = scmp.ne.s32.totalorder %s310, %s311
    %p325 = scmp.eq.s32.totalorder %s25, 1
    %p326 = por %p324, %p325
    %p328 = scmp.ne.s32.totalorder %s311, %s327
    %p329 = scmp.eq.s32.totalorder %s25, 0
    %p330 = por %p328, %p329
    %p331 = scmp.le.s32.totalorder 1, %s19
    %p332 = scmp.lt.s32.totalorder %s19, 3
    %p333 = pnand %p331, %p332
    %p334 = pneg %p333
    // Predicated region
    $region9: #{ast_forward.5} parent=5 // pred_check
      _
    $region10: #{ast_forward.5} parent=5 // pred_check_branch
      %336 = sbr.rel (%p333) target = $region12
    $region11: #{ast_forward.5} parent=5 // pred_region
      %s337 = ssub.s32 %s19, 1
      // Predicated region
      $region13: #{ast_forward.5} parent=11 // pred_check
        %p338 = pneg %p66
      $region14: #{ast_forward.5} parent=11 // pred_check_branch
        %340 = sbr.rel (%p338) target = $region16
      $region15: #{ast_forward.5} parent=11 // pred_region
        _
      $region16: #{ast_forward.5} parent=11 // pred_fallthru
        _
      // Predicated region
      $region17: #{ast_forward.5} parent=11 // pred_check
        %p341 = pneg %p87
      $region18: #{ast_forward.5} parent=11 // pred_check_branch
        %343 = sbr.rel (%p341) target = $region20
      $region19: #{ast_forward.5} parent=11 // pred_region
        _
      $region20: #{ast_forward.5} parent=11 // pred_fallthru
        _
      // Predicated region
      $region21: #{ast_forward.5} parent=11 // pred_check
        %p344 = pneg %p108
      $region22: #{ast_forward.5} parent=11 // pred_check_branch
        %346 = sbr.rel (%p344) target = $region24
      $region23: #{ast_forward.5} parent=11 // pred_region
        _
      $region24: #{ast_forward.5} parent=11 // pred_fallthru
        _
      // Predicated region
      $region25: #{ast_forward.5} parent=11 // pred_check
        %p347 = pneg %p129
      $region26: #{ast_forward.5} parent=11 // pred_check_branch
        %349 = sbr.rel (%p347) target = $region28
      $region27: #{ast_forward.5} parent=11 // pred_region
        _
      $region28: #{ast_forward.5} parent=11 // pred_fallthru
        _
      // Predicated region
      $region29: #{ast_forward.5} parent=11 // pred_check
        %p350 = pneg %p150
      $region30: #{ast_forward.5} parent=11 // pred_check_branch
        %352 = sbr.rel (%p350) target = $region32
      $region31: #{ast_forward.5} parent=11 // pred_region
        _
      $region32: #{ast_forward.5} parent=11 // pred_fallthru
        _
      // Predicated region
      $region33: #{ast_forward.5} parent=11 // pred_check
        %p353 = pneg %p171
      $region34: #{ast_forward.5} parent=11 // pred_check_branch
        %355 = sbr.rel (%p353) target = $region36
      $region35: #{ast_forward.5} parent=11 // pred_region
        _
      $region36: #{ast_forward.5} parent=11 // pred_fallthru
        _
      // Predicated region
      $region37: #{ast_forward.5} parent=11 // pred_check
        %p356 = pneg %p192
      $region38: #{ast_forward.5} parent=11 // pred_check_branch
        %358 = sbr.rel (%p356) target = $region40
      $region39: #{ast_forward.5} parent=11 // pred_region
        _
      $region40: #{ast_forward.5} parent=11 // pred_fallthru
        _
      // Predicated region
      $region41: #{ast_forward.5} parent=11 // pred_check
        %p359 = pneg %p213
      $region42: #{ast_forward.5} parent=11 // pred_check_branch
        %361 = sbr.rel (%p359) target = $region44
      $region43: #{ast_forward.5} parent=11 // pred_region
        _
      $region44: #{ast_forward.5} parent=11 // pred_fallthru
        _
      // Predicated region
      $region45: #{ast_forward.5} parent=11 // pred_check
        %p362 = pneg %p234
      $region46: #{ast_forward.5} parent=11 // pred_check_branch
        %364 = sbr.rel (%p362) target = $region48
      $region47: #{ast_forward.5} parent=11 // pred_region
        _
      $region48: #{ast_forward.5} parent=11 // pred_fallthru
        _
      // Predicated region
      $region49: #{ast_forward.5} parent=11 // pred_check
        %p365 = pneg %p255
      $region50: #{ast_forward.5} parent=11 // pred_check_branch
        %367 = sbr.rel (%p365) target = $region52
      $region51: #{ast_forward.5} parent=11 // pred_region
        _
      $region52: #{ast_forward.5} parent=11 // pred_fallthru
        _
      // Predicated region
      $region53: #{ast_forward.5} parent=11 // pred_check
        %p368 = pneg %p276
      $region54: #{ast_forward.5} parent=11 // pred_check_branch
        %370 = sbr.rel (%p368) target = $region56
      $region55: #{ast_forward.5} parent=11 // pred_region
        _
      $region56: #{ast_forward.5} parent=11 // pred_fallthru
        _
      // Predicated region
      $region57: #{ast_forward.5} parent=11 // pred_check
        %p371 = pneg %p297
      $region58: #{ast_forward.5} parent=11 // pred_check_branch
        %373 = sbr.rel (%p371) target = $region60
      $region59: #{ast_forward.5} parent=11 // pred_region
        _
      $region60: #{ast_forward.5} parent=11 // pred_fallthru
        _
    $region12: #{ast_forward.5} parent=5 // pred_fallthru
      _
    %p374 = scmp.lt.s32.totalorder %s19, 2
    // Predicated region
    $region61: #{ast_forward.5} parent=5 // pred_check
      %p375 = pneg %p374
    $region62: #{ast_forward.5} parent=5 // pred_check_branch
      %377 = sbr.rel (%p375) target = $region64
    $region63: #{ast_forward.5} parent=5 // pred_region
      // Predicated region
      $region65: #{ast_forward.5} parent=63 // pred_check
        %p378 = pneg %p39
      $region66: #{ast_forward.5} parent=63 // pred_check_branch
        %380 = sbr.rel (%p378) target = $region68
      $region67: #{ast_forward.5} parent=63 // pred_region
        %p381 = scmp.lt.s32.totalorder %s19, 1
        %s382 = scalar_select %p381, %s19, 1
        %s383 = smul.addr %s382, 32
        %s384 = smul.addr %s383, 8
        %s385 = scalar_lea.vmem %s0, %s384
      $region68: #{ast_forward.5} parent=63 // pred_fallthru
        _
    $region64: #{ast_forward.5} parent=5 // pred_fallthru
      _
    %p386 = scmp.le.s32.totalorder 1, %s19
    %p387 = scmp.lt.s32.totalorder %s19, 3
    %p388 = pnand %p386, %p387
    %p389 = pneg %p388
    // Predicated region
    $region69: #{ast_forward.5} parent=5 // pred_check
      _
    $region70: #{ast_forward.5} parent=5 // pred_check_branch
      %391 = sbr.rel (%p388) target = $region72
    $region71: #{ast_forward.5} parent=5 // pred_region
      %s392 = ssub.s32 %s19, 1
      %p393 = scmp.lt.s32.totalorder %s24, 1
      %s394 = scalar_select %p393, %s24, 1
      %s395 = smul.addr %s394, 32
      %s396 = smul.addr %s395, 8
      %s397 = scalar_lea.vmem %s0, %s396
      %p398 = pneg %p45
      %p399 = pneg %p42
      %p400 = pneg %p66
      %p401 = pneg %p63
      %p402 = pneg %p87
      %p403 = pneg %p84
      %p404 = pneg %p108
      %p405 = pneg %p105
      %p406 = pneg %p129
      %p407 = pneg %p126
      %p408 = pneg %p150
      %p409 = pneg %p147
      %p410 = pneg %p171
      %p411 = pneg %p168
      %p412 = pneg %p192
      %p413 = pneg %p189
      %p414 = pneg %p213
      %p415 = pneg %p210
      %p416 = pneg %p234
      %p417 = pneg %p231
      %p418 = pneg %p255
      %p419 = pneg %p252
      %p420 = pneg %p276
      %p421 = pneg %p273
      %p422 = pneg %p297
      %p423 = pneg %p294
      %p424 = pneg %p323
      %p425 = pneg %p320
      %p426 = scmp.lt.s32.totalorder %s24, 1
      %s427 = scalar_select %p426, %s24, 1
      %s428 = smul.addr %s427, 32
      %s429 = smul.addr %s428, 8
      %s430 = scalar_lea.vmem %s13, %s429
      %p431 = scmp.lt.s32.totalorder %s24, 1
      %s432 = scalar_select %p431, %s24, 1
      %s433 = smul.addr %s432, 32
      %s434 = smul.addr %s433, 8
      %s435 = scalar_lea.vmem %s0, %s434
      %p436 = scmp.lt.s32.totalorder %s24, 1
      %s437 = scalar_select %p436, %s24, 1
      %s438 = smul.addr %s437, 32
      %s439 = smul.addr %s438, 8
      %s440 = scalar_lea.vmem %s13, %s439
      %v442 = vld [vmem:[%s435] sm:$0xff]
      %v443 = vld [vmem:[%s435 + $0x8] sm:$0xff]
      %v444 = vld [vmem:[%s435 + $0x10] sm:$0xff]
      %v445 = vld [vmem:[%s435 + $0x18] sm:$0xff]
      %v446 = vld [vmem:[%s435 + $0x20] sm:$0xff]
      %v447 = vld [vmem:[%s435 + $0x28] sm:$0xff]
      %v448 = vld [vmem:[%s435 + $0x30] sm:$0xff]
      %v449 = vld [vmem:[%s435 + $0x38] sm:$0xff]
      %v450 = vld [vmem:[%s435 + $0x40] sm:$0xff]
      %v451 = vld [vmem:[%s435 + $0x48] sm:$0xff]
      %v452 = vld [vmem:[%s435 + $0x50] sm:$0xff]
      %v453 = vld [vmem:[%s435 + $0x58] sm:$0xff]
      %v454 = vld [vmem:[%s435 + $0x60] sm:$0xff]
      %v455 = vld [vmem:[%s435 + $0x68] sm:$0xff]
      %v456 = vld [vmem:[%s435 + $0x70] sm:$0xff]
      %v457 = vld [vmem:[%s435 + $0x78] sm:$0xff]
      %v458 = vld [vmem:[%s435 + $0x80] sm:$0xff]
      %v459 = vld [vmem:[%s435 + $0x88] sm:$0xff]
      %v460 = vld [vmem:[%s435 + $0x90] sm:$0xff]
      %v461 = vld [vmem:[%s435 + $0x98] sm:$0xff]
      %v462 = vld [vmem:[%s435 + $0xa0] sm:$0xff]
      %v463 = vld [vmem:[%s435 + $0xa8] sm:$0xff]
      %v464 = vld [vmem:[%s435 + $0xb0] sm:$0xff]
      %v465 = vld [vmem:[%s435 + $0xb8] sm:$0xff]
      %v466 = vld [vmem:[%s435 + $0xc0] sm:$0xff]
      %v467 = vld [vmem:[%s435 + $0xc8] sm:$0xff]
      %v468 = vld [vmem:[%s435 + $0xd0] sm:$0xff]
      %v469 = vld [vmem:[%s435 + $0xd8] sm:$0xff]
      %v470 = vld [vmem:[%s435 + $0xe0] sm:$0xff]
      %v471 = vld [vmem:[%s435 + $0xe8] sm:$0xff]
      %v472 = vld [vmem:[%s435 + $0xf0] sm:$0xff]
      %v473 = vld [vmem:[%s435 + $0xf8] sm:$0xff]
      %v474 = vld [vmem:[%s1] sm:$0x3]
      %v475 = vld [vmem:[%s2] sm:$0x3]
      %v476 = vadd.f32 %v442, %v443
      %477 = vadd.xlane.f32.xlu0 %v476
      %v478 = vpop.xlane.xlu0 %477
      %v479 = vadd.f32 %v444, %v445
      %480 = vadd.xlane.f32.xlu0 %v479
      %v481 = vpop.xlane.xlu0 %480
      %v482 = vadd.f32 %v446, %v447
      %483 = vadd.xlane.f32.xlu0 %v482
      %v484 = vpop.xlane.xlu0 %483
      %v485 = vadd.f32 %v448, %v449
      %486 = vadd.xlane.f32.xlu0 %v485
      %v487 = vpop.xlane.xlu0 %486
      %v488 = vadd.f32 %v450, %v451
      %489 = vadd.xlane.f32.xlu0 %v488
      %v490 = vpop.xlane.xlu0 %489
      %v491 = vadd.f32 %v452, %v453
      %492 = vadd.xlane.f32.xlu0 %v491
      %v493 = vpop.xlane.xlu0 %492
      %v494 = vadd.f32 %v454, %v455
      %495 = vadd.xlane.f32.xlu0 %v494
      %v496 = vpop.xlane.xlu0 %495
      %v497 = vadd.f32 %v456, %v457
      %498 = vadd.xlane.f32.xlu0 %v497
      %v499 = vpop.xlane.xlu0 %498
      %v500 = vadd.f32 %v458, %v459
      %501 = vadd.xlane.f32.xlu0 %v500
      %v502 = vpop.xlane.xlu0 %501
      %v503 = vadd.f32 %v460, %v461
      %504 = vadd.xlane.f32.xlu0 %v503
      %v505 = vpop.xlane.xlu0 %504
      %v506 = vadd.f32 %v462, %v463
      %507 = vadd.xlane.f32.xlu0 %v506
      %v508 = vpop.xlane.xlu0 %507
      %v509 = vadd.f32 %v464, %v465
      %510 = vadd.xlane.f32.xlu0 %v509
      %v511 = vpop.xlane.xlu0 %510
      %v512 = vadd.f32 %v466, %v467
      %513 = vadd.xlane.f32.xlu0 %v512
      %v514 = vpop.xlane.xlu0 %513
      %v515 = vadd.f32 %v468, %v469
      %516 = vadd.xlane.f32.xlu0 %v515
      %v517 = vpop.xlane.xlu0 %516
      %v518 = vadd.f32 %v470, %v471
      %519 = vadd.xlane.f32.xlu0 %v518
      %v520 = vpop.xlane.xlu0 %519
      %v521 = vadd.f32 %v472, %v473
      %522 = vadd.xlane.f32.xlu0 %v521
      %v523 = vpop.xlane.xlu0 %522
      %v524 = vrcp.pop 256.0
      %v525 = vmul.f32 %v478, %v524
      %v526 = vmul.f32 %v481, %v524
      %v527 = vmul.f32 %v484, %v524
      %v528 = vmul.f32 %v487, %v524
      %v529 = vmul.f32 %v490, %v524
      %v530 = vmul.f32 %v493, %v524
      %v531 = vmul.f32 %v496, %v524
      %v532 = vmul.f32 %v499, %v524
      %v533 = vmul.f32 %v502, %v524
      %v534 = vmul.f32 %v505, %v524
      %v535 = vmul.f32 %v508, %v524
      %v536 = vmul.f32 %v511, %v524
      %v537 = vmul.f32 %v514, %v524
      %v538 = vmul.f32 %v517, %v524
      %v539 = vmul.f32 %v520, %v524
      %v540 = vmul.f32 %v523, %v524
      %v541 = vsub.f32 %v442, %v525
      %v542 = vsub.f32 %v443, %v525
      %v543 = vsub.f32 %v444, %v526
      %v544 = vsub.f32 %v445, %v526
      %v545 = vsub.f32 %v446, %v527
      %v546 = vsub.f32 %v447, %v527
      %v547 = vsub.f32 %v448, %v528
      %v548 = vsub.f32 %v449, %v528
      %v549 = vsub.f32 %v450, %v529
      %v550 = vsub.f32 %v451, %v529
      %v551 = vsub.f32 %v452, %v530
      %v552 = vsub.f32 %v453, %v530
      %v553 = vsub.f32 %v454, %v531
      %v554 = vsub.f32 %v455, %v531
      %v555 = vsub.f32 %v456, %v532
      %v556 = vsub.f32 %v457, %v532
      %v557 = vsub.f32 %v458, %v533
      %v558 = vsub.f32 %v459, %v533
      %v559 = vsub.f32 %v460, %v534
      %v560 = vsub.f32 %v461, %v534
      %v561 = vsub.f32 %v462, %v535
      %v562 = vsub.f32 %v463, %v535
      %v563 = vsub.f32 %v464, %v536
      %v564 = vsub.f32 %v465, %v536
      %v565 = vsub.f32 %v466, %v537
      %v566 = vsub.f32 %v467, %v537
      %v567 = vsub.f32 %v468, %v538
      %v568 = vsub.f32 %v469, %v538
      %v569 = vsub.f32 %v470, %v539
      %v570 = vsub.f32 %v471, %v539
      %v571 = vsub.f32 %v472, %v540
      %v572 = vsub.f32 %v473, %v540
      %v573 = vmul.f32 %v541, %v541
      %v574 = vmul.f32 %v542, %v542
      %v575 = vmul.f32 %v543, %v543
      %v576 = vmul.f32 %v544, %v544
      %v577 = vmul.f32 %v545, %v545
      %v578 = vmul.f32 %v546, %v546
      %v579 = vmul.f32 %v547, %v547
      %v580 = vmul.f32 %v548, %v548
      %v581 = vmul.f32 %v549, %v549
      %v582 = vmul.f32 %v550, %v550
      %v583 = vmul.f32 %v551, %v551
      %v584 = vmul.f32 %v552, %v552
      %v585 = vmul.f32 %v553, %v553
      %v586 = vmul.f32 %v554, %v554
      %v587 = vmul.f32 %v555, %v555
      %v588 = vmul.f32 %v556, %v556
      %v589 = vmul.f32 %v557, %v557
      %v590 = vmul.f32 %v558, %v558
      %v591 = vmul.f32 %v559, %v559
      %v592 = vmul.f32 %v560, %v560
      %v593 = vmul.f32 %v561, %v561
      %v594 = vmul.f32 %v562, %v562
      %v595 = vmul.f32 %v563, %v563
      %v596 = vmul.f32 %v564, %v564
      %v597 = vmul.f32 %v565, %v565
      %v598 = vmul.f32 %v566, %v566
      %v599 = vmul.f32 %v567, %v567
      %v600 = vmul.f32 %v568, %v568
      %v601 = vmul.f32 %v569, %v569
      %v602 = vmul.f32 %v570, %v570
      %v603 = vmul.f32 %v571, %v571
      %v604 = vmul.f32 %v572, %v572
      %v605 = vadd.f32 %v573, %v574
      %606 = vadd.xlane.f32.xlu0 %v605
      %v607 = vpop.xlane.xlu0 %606
      %v608 = vadd.f32 %v575, %v576
      %609 = vadd.xlane.f32.xlu0 %v608
      %v610 = vpop.xlane.xlu0 %609
      %v611 = vadd.f32 %v577, %v578
      %612 = vadd.xlane.f32.xlu0 %v611
      %v613 = vpop.xlane.xlu0 %612
      %v614 = vadd.f32 %v579, %v580
      %615 = vadd.xlane.f32.xlu0 %v614
      %v616 = vpop.xlane.xlu0 %615
      %v617 = vadd.f32 %v581, %v582
      %618 = vadd.xlane.f32.xlu0 %v617
      %v619 = vpop.xlane.xlu0 %618
      %v620 = vadd.f32 %v583, %v584
      %621 = vadd.xlane.f32.xlu0 %v620
      %v622 = vpop.xlane.xlu0 %621
      %v623 = vadd.f32 %v585, %v586
      %624 = vadd.xlane.f32.xlu0 %v623
      %v625 = vpop.xlane.xlu0 %624
      %v626 = vadd.f32 %v587, %v588
      %627 = vadd.xlane.f32.xlu0 %v626
      %v628 = vpop.xlane.xlu0 %627
      %v629 = vadd.f32 %v589, %v590
      %630 = vadd.xlane.f32.xlu0 %v629
      %v631 = vpop.xlane.xlu0 %630
      %v632 = vadd.f32 %v591, %v592
      %633 = vadd.xlane.f32.xlu0 %v632
      %v634 = vpop.xlane.xlu0 %633
      %v635 = vadd.f32 %v593, %v594
      %636 = vadd.xlane.f32.xlu0 %v635
      %v637 = vpop.xlane.xlu0 %636
      %v638 = vadd.f32 %v595, %v596
      %639 = vadd.xlane.f32.xlu0 %v638
      %v640 = vpop.xlane.xlu0 %639
      %v641 = vadd.f32 %v597, %v598
      %642 = vadd.xlane.f32.xlu0 %v641
      %v643 = vpop.xlane.xlu0 %642
      %v644 = vadd.f32 %v599, %v600
      %645 = vadd.xlane.f32.xlu0 %v644
      %v646 = vpop.xlane.xlu0 %645
      %v647 = vadd.f32 %v601, %v602
      %648 = vadd.xlane.f32.xlu0 %v647
      %v649 = vpop.xlane.xlu0 %648
      %v650 = vadd.f32 %v603, %v604
      %651 = vadd.xlane.f32.xlu0 %v650
      %v652 = vpop.xlane.xlu0 %651
      %v653 = vmul.f32 %v607, %v524
      %v654 = vmul.f32 %v610, %v524
      %v655 = vmul.f32 %v613, %v524
      %v656 = vmul.f32 %v616, %v524
      %v657 = vmul.f32 %v619, %v524
      %v658 = vmul.f32 %v622, %v524
      %v659 = vmul.f32 %v625, %v524
      %v660 = vmul.f32 %v628, %v524
      %v661 = vmul.f32 %v631, %v524
      %v662 = vmul.f32 %v634, %v524
      %v663 = vmul.f32 %v637, %v524
      %v664 = vmul.f32 %v640, %v524
      %v665 = vmul.f32 %v643, %v524
      %v666 = vmul.f32 %v646, %v524
      %v667 = vmul.f32 %v649, %v524
      %v668 = vmul.f32 %v652, %v524
      %v669 = vadd.f32 %v653, 1e-06
      %v670 = vadd.f32 %v654, 1e-06
      %v671 = vadd.f32 %v655, 1e-06
      %v672 = vadd.f32 %v656, 1e-06
      %v673 = vadd.f32 %v657, 1e-06
      %v674 = vadd.f32 %v658, 1e-06
      %v675 = vadd.f32 %v659, 1e-06
      %v676 = vadd.f32 %v660, 1e-06
      %v677 = vadd.f32 %v661, 1e-06
      %v678 = vadd.f32 %v662, 1e-06
      %v679 = vadd.f32 %v663, 1e-06
      %v680 = vadd.f32 %v664, 1e-06
      %v681 = vadd.f32 %v665, 1e-06
      %v682 = vadd.f32 %v666, 1e-06
      %v683 = vadd.f32 %v667, 1e-06
      %v684 = vadd.f32 %v668, 1e-06
      %v685 = vrsqrt.pop %v669
      %v686 = vrsqrt.pop %v670
      %v687 = vrsqrt.pop %v671
      %v688 = vrsqrt.pop %v672
      %v689 = vrsqrt.pop %v673
      %v690 = vrsqrt.pop %v674
      %v691 = vrsqrt.pop %v675
      %v692 = vrsqrt.pop %v676
      %v693 = vrsqrt.pop %v677
      %v694 = vrsqrt.pop %v678
      %v695 = vrsqrt.pop %v679
      %v696 = vrsqrt.pop %v680
      %v697 = vrsqrt.pop %v681
      %v698 = vrsqrt.pop %v682
      %v699 = vrsqrt.pop %v683
      %v700 = vrsqrt.pop %v684
      %v701 = vmul.f32 %v541, %v685
      %v702 = vmul.f32 %v542, %v685
      %v703 = vmul.f32 %v543, %v686
      %v704 = vmul.f32 %v544, %v686
      %v705 = vmul.f32 %v545, %v687
      %v706 = vmul.f32 %v546, %v687
      %v707 = vmul.f32 %v547, %v688
      %v708 = vmul.f32 %v548, %v688
      %v709 = vmul.f32 %v549, %v689
      %v710 = vmul.f32 %v550, %v689
      %v711 = vmul.f32 %v551, %v690
      %v712 = vmul.f32 %v552, %v690
      %v713 = vmul.f32 %v553, %v691
      %v714 = vmul.f32 %v554, %v691
      %v715 = vmul.f32 %v555, %v692
      %v716 = vmul.f32 %v556, %v692
      %v717 = vmul.f32 %v557, %v693
      %v718 = vmul.f32 %v558, %v693
      %v719 = vmul.f32 %v559, %v694
      %v720 = vmul.f32 %v560, %v694
      %v721 = vmul.f32 %v561, %v695
      %v722 = vmul.f32 %v562, %v695
      %v723 = vmul.f32 %v563, %v696
      %v724 = vmul.f32 %v564, %v696
      %v725 = vmul.f32 %v565, %v697
      %v726 = vmul.f32 %v566, %v697
      %v727 = vmul.f32 %v567, %v698
      %v728 = vmul.f32 %v568, %v698
      %v729 = vmul.f32 %v569, %v699
      %v730 = vmul.f32 %v570, %v699
      %v731 = vmul.f32 %v571, %v700
      %v732 = vmul.f32 %v572, %v700
      %v734 = vlaneseq
      %v735 = vshrl.u32 %v734, 7
      %v736 = vsub.s32 0, %v735
      %v737 = vrot.slane %v474, %v736
      %v738 = vlaneseq
      %v739 = vshrl.u32 %v738, 7
      %v740 = vsub.s32 1, %v739
      %v741 = vrot.slane %v474, %v740
      %v744 = vmul.f32 %v701, %v737
      %v745 = vmul.f32 %v702, %v741
      %v746 = vmul.f32 %v703, %v737
      %v747 = vmul.f32 %v704, %v741
      %v748 = vmul.f32 %v705, %v737
      %v749 = vmul.f32 %v706, %v741
      %v750 = vmul.f32 %v707, %v737
      %v751 = vmul.f32 %v708, %v741
      %v752 = vmul.f32 %v709, %v737
      %v753 = vmul.f32 %v710, %v741
      %v754 = vmul.f32 %v711, %v737
      %v755 = vmul.f32 %v712, %v741
      %v756 = vmul.f32 %v713, %v737
      %v757 = vmul.f32 %v714, %v741
      %v758 = vmul.f32 %v715, %v737
      %v759 = vmul.f32 %v716, %v741
      %v760 = vmul.f32 %v717, %v737
      %v761 = vmul.f32 %v718, %v741
      %v762 = vmul.f32 %v719, %v737
      %v763 = vmul.f32 %v720, %v741
      %v764 = vmul.f32 %v721, %v737
      %v765 = vmul.f32 %v722, %v741
      %v766 = vmul.f32 %v723, %v737
      %v767 = vmul.f32 %v724, %v741
      %v768 = vmul.f32 %v725, %v737
      %v769 = vmul.f32 %v726, %v741
      %v770 = vmul.f32 %v727, %v737
      %v771 = vmul.f32 %v728, %v741
      %v772 = vmul.f32 %v729, %v737
      %v773 = vmul.f32 %v730, %v741
      %v774 = vmul.f32 %v731, %v737
      %v775 = vmul.f32 %v732, %v741
      %v777 = vlaneseq
      %v778 = vshrl.u32 %v777, 7
      %v779 = vsub.s32 0, %v778
      %v780 = vrot.slane %v475, %v779
      %v781 = vlaneseq
      %v782 = vshrl.u32 %v781, 7
      %v783 = vsub.s32 1, %v782
      %v784 = vrot.slane %v475, %v783
      %v787 = vadd.f32 %v744, %v780
      %v788 = vadd.f32 %v745, %v784
      %v789 = vadd.f32 %v746, %v780
      %v790 = vadd.f32 %v747, %v784
      %v791 = vadd.f32 %v748, %v780
      %v792 = vadd.f32 %v749, %v784
      %v793 = vadd.f32 %v750, %v780
      %v794 = vadd.f32 %v751, %v784
      %v795 = vadd.f32 %v752, %v780
      %v796 = vadd.f32 %v753, %v784
      %v797 = vadd.f32 %v754, %v780
      %v798 = vadd.f32 %v755, %v784
      %v799 = vadd.f32 %v756, %v780
      %v800 = vadd.f32 %v757, %v784
      %v801 = vadd.f32 %v758, %v780
      %v802 = vadd.f32 %v759, %v784
      %v803 = vadd.f32 %v760, %v780
      %v804 = vadd.f32 %v761, %v784
      %v805 = vadd.f32 %v762, %v780
      %v806 = vadd.f32 %v763, %v784
      %v807 = vadd.f32 %v764, %v780
      %v808 = vadd.f32 %v765, %v784
      %v809 = vadd.f32 %v766, %v780
      %v810 = vadd.f32 %v767, %v784
      %v811 = vadd.f32 %v768, %v780
      %v812 = vadd.f32 %v769, %v784
      %v813 = vadd.f32 %v770, %v780
      %v814 = vadd.f32 %v771, %v784
      %v815 = vadd.f32 %v772, %v780
      %v816 = vadd.f32 %v773, %v784
      %v817 = vadd.f32 %v774, %v780
      %v818 = vadd.f32 %v775, %v784
      %v819 = vpack.c.bf16 %v789, %v787
      %v820 = vpack.c.bf16 %v790, %v788
      %v821 = vpack.c.bf16 %v793, %v791
      %v822 = vpack.c.bf16 %v794, %v792
      %v823 = vpack.c.bf16 %v797, %v795
      %v824 = vpack.c.bf16 %v798, %v796
      %v825 = vpack.c.bf16 %v801, %v799
      %v826 = vpack.c.bf16 %v802, %v800
      %v827 = vpack.c.bf16 %v805, %v803
      %v828 = vpack.c.bf16 %v806, %v804
      %v829 = vpack.c.bf16 %v809, %v807
      %v830 = vpack.c.bf16 %v810, %v808
      %v831 = vpack.c.bf16 %v813, %v811
      %v832 = vpack.c.bf16 %v814, %v812
      %v833 = vpack.c.bf16 %v817, %v815
      %v834 = vpack.c.bf16 %v818, %v816
      %v835 = vld [vmem:[%s3] sm:$0xff]
      %v836 = vld [vmem:[%s3 + $0x8] sm:$0xff]
      %v837 = vld [vmem:[%s3 + $0x10] sm:$0xff]
      %v838 = vld [vmem:[%s3 + $0x18] sm:$0xff]
      %v839 = vld [vmem:[%s3 + $0x20] sm:$0xff]
      %v840 = vld [vmem:[%s3 + $0x28] sm:$0xff]
      %v841 = vld [vmem:[%s3 + $0x30] sm:$0xff]
      %v842 = vld [vmem:[%s3 + $0x38] sm:$0xff]
      %v843 = vld [vmem:[%s3 + $0x40] sm:$0xff]
      %v844 = vld [vmem:[%s3 + $0x48] sm:$0xff]
      %v845 = vld [vmem:[%s3 + $0x50] sm:$0xff]
      %v846 = vld [vmem:[%s3 + $0x58] sm:$0xff]
      %v847 = vld [vmem:[%s3 + $0x60] sm:$0xff]
      %v848 = vld [vmem:[%s3 + $0x68] sm:$0xff]
      %v849 = vld [vmem:[%s3 + $0x70] sm:$0xff]
      %v850 = vld [vmem:[%s3 + $0x78] sm:$0xff]
      %v851 = vld [vmem:[%s3 + $0x80] sm:$0xff]
      %v852 = vld [vmem:[%s3 + $0x88] sm:$0xff]
      %v853 = vld [vmem:[%s3 + $0x90] sm:$0xff]
      %v854 = vld [vmem:[%s3 + $0x98] sm:$0xff]
      %v855 = vld [vmem:[%s3 + $0xa0] sm:$0xff]
      %v856 = vld [vmem:[%s3 + $0xa8] sm:$0xff]
      %v857 = vld [vmem:[%s3 + $0xb0] sm:$0xff]
      %v858 = vld [vmem:[%s3 + $0xb8] sm:$0xff]
      %v859 = vld [vmem:[%s3 + $0xc0] sm:$0xff]
      %v860 = vld [vmem:[%s3 + $0xc8] sm:$0xff]
      %v861 = vld [vmem:[%s3 + $0xd0] sm:$0xff]
      %v862 = vld [vmem:[%s3 + $0xd8] sm:$0xff]
      %v863 = vld [vmem:[%s3 + $0xe0] sm:$0xff]
      %v864 = vld [vmem:[%s3 + $0xe8] sm:$0xff]
      %v865 = vld [vmem:[%s3 + $0xf0] sm:$0xff]
      %v866 = vld [vmem:[%s3 + $0xf8] sm:$0xff]
      %v867 = vld [vmem:[%s3 + $0x100] sm:$0xff]
      %v868 = vld [vmem:[%s3 + $0x108] sm:$0xff]
      %v869 = vld [vmem:[%s3 + $0x110] sm:$0xff]
      %v870 = vld [vmem:[%s3 + $0x118] sm:$0xff]
      %v871 = vld [vmem:[%s3 + $0x120] sm:$0xff]
      %v872 = vld [vmem:[%s3 + $0x128] sm:$0xff]
      %v873 = vld [vmem:[%s3 + $0x130] sm:$0xff]
      %v874 = vld [vmem:[%s3 + $0x138] sm:$0xff]
      %v875 = vld [vmem:[%s3 + $0x140] sm:$0xff]
      %v876 = vld [vmem:[%s3 + $0x148] sm:$0xff]
      %v877 = vld [vmem:[%s3 + $0x150] sm:$0xff]
      %v878 = vld [vmem:[%s3 + $0x158] sm:$0xff]
      %v879 = vld [vmem:[%s3 + $0x160] sm:$0xff]
      %v880 = vld [vmem:[%s3 + $0x168] sm:$0xff]
      %v881 = vld [vmem:[%s3 + $0x170] sm:$0xff]
      %v882 = vld [vmem:[%s3 + $0x178] sm:$0xff]
      %v883 = vld [vmem:[%s3 + $0x180] sm:$0xff]
      %v884 = vld [vmem:[%s3 + $0x188] sm:$0xff]
      %v885 = vld [vmem:[%s3 + $0x190] sm:$0xff]
      %v886 = vld [vmem:[%s3 + $0x198] sm:$0xff]
      %v887 = vld [vmem:[%s3 + $0x1a0] sm:$0xff]
      %v888 = vld [vmem:[%s3 + $0x1a8] sm:$0xff]
      %v889 = vld [vmem:[%s3 + $0x1b0] sm:$0xff]
      %v890 = vld [vmem:[%s3 + $0x1b8] sm:$0xff]
      %v891 = vld [vmem:[%s3 + $0x1c0] sm:$0xff]
      %v892 = vld [vmem:[%s3 + $0x1c8] sm:$0xff]
      %v893 = vld [vmem:[%s3 + $0x1d0] sm:$0xff]
      %v894 = vld [vmem:[%s3 + $0x1d8] sm:$0xff]
      %v895 = vld [vmem:[%s3 + $0x1e0] sm:$0xff]
      %v896 = vld [vmem:[%s3 + $0x1e8] sm:$0xff]
      %v897 = vld [vmem:[%s3 + $0x1f0] sm:$0xff]
      %v898 = vld [vmem:[%s3 + $0x1f8] sm:$0xff]
      %v899 = vld [vmem:[%s3 + $0x200] sm:$0xff]
      %v900 = vld [vmem:[%s3 + $0x208] sm:$0xff]
      %v901 = vld [vmem:[%s3 + $0x210] sm:$0xff]
      %v902 = vld [vmem:[%s3 + $0x218] sm:$0xff]
      %v903 = vld [vmem:[%s3 + $0x220] sm:$0xff]
      %v904 = vld [vmem:[%s3 + $0x228] sm:$0xff]
      %v905 = vld [vmem:[%s3 + $0x230] sm:$0xff]
      %v906 = vld [vmem:[%s3 + $0x238] sm:$0xff]
      %v907 = vld [vmem:[%s3 + $0x240] sm:$0xff]
      %v908 = vld [vmem:[%s3 + $0x248] sm:$0xff]
      %v909 = vld [vmem:[%s3 + $0x250] sm:$0xff]
      %v910 = vld [vmem:[%s3 + $0x258] sm:$0xff]
      %v911 = vld [vmem:[%s3 + $0x260] sm:$0xff]
      %v912 = vld [vmem:[%s3 + $0x268] sm:$0xff]
      %v913 = vld [vmem:[%s3 + $0x270] sm:$0xff]
      %v914 = vld [vmem:[%s3 + $0x278] sm:$0xff]
      %v915 = vld [vmem:[%s3 + $0x280] sm:$0xff]
      %v916 = vld [vmem:[%s3 + $0x288] sm:$0xff]
      %v917 = vld [vmem:[%s3 + $0x290] sm:$0xff]
      %v918 = vld [vmem:[%s3 + $0x298] sm:$0xff]
      %v919 = vld [vmem:[%s3 + $0x2a0] sm:$0xff]
      %v920 = vld [vmem:[%s3 + $0x2a8] sm:$0xff]
      %v921 = vld [vmem:[%s3 + $0x2b0] sm:$0xff]
      %v922 = vld [vmem:[%s3 + $0x2b8] sm:$0xff]
      %v923 = vld [vmem:[%s3 + $0x2c0] sm:$0xff]
      %v924 = vld [vmem:[%s3 + $0x2c8] sm:$0xff]
      %v925 = vld [vmem:[%s3 + $0x2d0] sm:$0xff]
      %v926 = vld [vmem:[%s3 + $0x2d8] sm:$0xff]
      %v927 = vld [vmem:[%s3 + $0x2e0] sm:$0xff]
      %v928 = vld [vmem:[%s3 + $0x2e8] sm:$0xff]
      %v929 = vld [vmem:[%s3 + $0x2f0] sm:$0xff]
      %v930 = vld [vmem:[%s3 + $0x2f8] sm:$0xff]
      %v931 = vld [vmem:[%s4] sm:$0x3f]
      %v933 = vlaneseq
      %v934 = vshrl.u32 %v933, 7
      %v935 = vsub.s32 0, %v934
      %v936 = vrot.slane %v931, %v935
      %v937 = vlaneseq
      %v938 = vshrl.u32 %v937, 7
      %v939 = vsub.s32 1, %v938
      %v940 = vrot.slane %v931, %v939
      %v941 = vlaneseq
      %v942 = vshrl.u32 %v941, 7
      %v943 = vsub.s32 2, %v942
      %v944 = vrot.slane %v931, %v943
      %v945 = vlaneseq
      %v946 = vshrl.u32 %v945, 7
      %v947 = vsub.s32 3, %v946
      %v948 = vrot.slane %v931, %v947
      %v949 = vlaneseq
      %v950 = vshrl.u32 %v949, 7
      %v951 = vsub.s32 4, %v950
      %v952 = vrot.slane %v931, %v951
      %v953 = vlaneseq
      %v954 = vshrl.u32 %v953, 7
      %v955 = vsub.s32 5, %v954
      %v956 = vrot.slane %v931, %v955
      %v1059 = vunpack.c.l.b16 %v835
      %v1060 = vunpack.c.h.b16 %v835
      %v1061 = vunpack.c.l.b16 %v836
      %v1062 = vunpack.c.h.b16 %v836
      %v1063 = vunpack.c.l.b16 %v837
      %v1064 = vunpack.c.h.b16 %v837
      %v1065 = vunpack.c.l.b16 %v838
      %v1066 = vunpack.c.h.b16 %v838
      %v1067 = vunpack.c.l.b16 %v839
      %v1068 = vunpack.c.h.b16 %v839
      %v1069 = vunpack.c.l.b16 %v840
      %v1070 = vunpack.c.h.b16 %v840
      %v1071 = vunpack.c.l.b16 %v841
      %v1072 = vunpack.c.h.b16 %v841
      %v1073 = vunpack.c.l.b16 %v842
      %v1074 = vunpack.c.h.b16 %v842
      %v1075 = vunpack.c.l.b16 %v843
      %v1076 = vunpack.c.h.b16 %v843
      %v1077 = vunpack.c.l.b16 %v844
      %v1078 = vunpack.c.h.b16 %v844
      %v1079 = vunpack.c.l.b16 %v845
      %v1080 = vunpack.c.h.b16 %v845
      %v1081 = vunpack.c.l.b16 %v846
      %v1082 = vunpack.c.h.b16 %v846
      %v1083 = vunpack.c.l.b16 %v847
      %v1084 = vunpack.c.h.b16 %v847
      %v1085 = vunpack.c.l.b16 %v848
      %v1086 = vunpack.c.h.b16 %v848
      %v1087 = vunpack.c.l.b16 %v849
      %v1088 = vunpack.c.h.b16 %v849
      %v1089 = vunpack.c.l.b16 %v850
      %v1090 = vunpack.c.h.b16 %v850
      %v1091 = vunpack.c.l.b16 %v851
      %v1092 = vunpack.c.h.b16 %v851
      %v1093 = vunpack.c.l.b16 %v852
      %v1094 = vunpack.c.h.b16 %v852
      %v1095 = vunpack.c.l.b16 %v853
      %v1096 = vunpack.c.h.b16 %v853
      %v1097 = vunpack.c.l.b16 %v854
      %v1098 = vunpack.c.h.b16 %v854
      %v1099 = vunpack.c.l.b16 %v855
      %v1100 = vunpack.c.h.b16 %v855
      %v1101 = vunpack.c.l.b16 %v856
      %v1102 = vunpack.c.h.b16 %v856
      %v1103 = vunpack.c.l.b16 %v857
      %v1104 = vunpack.c.h.b16 %v857
      %v1105 = vunpack.c.l.b16 %v858
      %v1106 = vunpack.c.h.b16 %v858
      %v1107 = vunpack.c.l.b16 %v859
      %v1108 = vunpack.c.h.b16 %v859
      %v1109 = vunpack.c.l.b16 %v860
      %v1110 = vunpack.c.h.b16 %v860
      %v1111 = vunpack.c.l.b16 %v861
      %v1112 = vunpack.c.h.b16 %v861
      %v1113 = vunpack.c.l.b16 %v862
      %v1114 = vunpack.c.h.b16 %v862
      %v1115 = vunpack.c.l.b16 %v863
      %v1116 = vunpack.c.h.b16 %v863
      %v1117 = vunpack.c.l.b16 %v864
      %v1118 = vunpack.c.h.b16 %v864
      %v1119 = vunpack.c.l.b16 %v865
      %v1120 = vunpack.c.h.b16 %v865
      %v1121 = vunpack.c.l.b16 %v866
      %v1122 = vunpack.c.h.b16 %v866
      %v1123 = vunpack.c.l.b16 %v867
      %v1124 = vunpack.c.h.b16 %v867
      %v1125 = vunpack.c.l.b16 %v868
      %v1126 = vunpack.c.h.b16 %v868
      %v1127 = vunpack.c.l.b16 %v869
      %v1128 = vunpack.c.h.b16 %v869
      %v1129 = vunpack.c.l.b16 %v870
      %v1130 = vunpack.c.h.b16 %v870
      %v1131 = vunpack.c.l.b16 %v871
      %v1132 = vunpack.c.h.b16 %v871
      %v1133 = vunpack.c.l.b16 %v872
      %v1134 = vunpack.c.h.b16 %v872
      %v1135 = vunpack.c.l.b16 %v873
      %v1136 = vunpack.c.h.b16 %v873
      %v1137 = vunpack.c.l.b16 %v874
      %v1138 = vunpack.c.h.b16 %v874
      %v1139 = vunpack.c.l.b16 %v875
      %v1140 = vunpack.c.h.b16 %v875
      %v1141 = vunpack.c.l.b16 %v876
      %v1142 = vunpack.c.h.b16 %v876
      %v1143 = vunpack.c.l.b16 %v877
      %v1144 = vunpack.c.h.b16 %v877
      %v1145 = vunpack.c.l.b16 %v878
      %v1146 = vunpack.c.h.b16 %v878
      %v1147 = vunpack.c.l.b16 %v879
      %v1148 = vunpack.c.h.b16 %v879
      %v1149 = vunpack.c.l.b16 %v880
      %v1150 = vunpack.c.h.b16 %v880
      %v1151 = vunpack.c.l.b16 %v881
      %v1152 = vunpack.c.h.b16 %v881
      %v1153 = vunpack.c.l.b16 %v882
      %v1154 = vunpack.c.h.b16 %v882
      %v1155 = vunpack.c.l.b16 %v883
      %v1156 = vunpack.c.h.b16 %v883
      %v1157 = vunpack.c.l.b16 %v884
      %v1158 = vunpack.c.h.b16 %v884
      %v1159 = vunpack.c.l.b16 %v885
      %v1160 = vunpack.c.h.b16 %v885
      %v1161 = vunpack.c.l.b16 %v886
      %v1162 = vunpack.c.h.b16 %v886
      %v1163 = vunpack.c.l.b16 %v887
      %v1164 = vunpack.c.h.b16 %v887
      %v1165 = vunpack.c.l.b16 %v888
      %v1166 = vunpack.c.h.b16 %v888
      %v1167 = vunpack.c.l.b16 %v889
      %v1168 = vunpack.c.h.b16 %v889
      %v1169 = vunpack.c.l.b16 %v890
      %v1170 = vunpack.c.h.b16 %v890
      %v1171 = vunpack.c.l.b16 %v891
      %v1172 = vunpack.c.h.b16 %v891
      %v1173 = vunpack.c.l.b16 %v892
      %v1174 = vunpack.c.h.b16 %v892
      %v1175 = vunpack.c.l.b16 %v893
      %v1176 = vunpack.c.h.b16 %v893
      %v1177 = vunpack.c.l.b16 %v894
      %v1178 = vunpack.c.h.b16 %v894
      %v1179 = vunpack.c.l.b16 %v895
      %v1180 = vunpack.c.h.b16 %v895
      %v1181 = vunpack.c.l.b16 %v896
      %v1182 = vunpack.c.h.b16 %v896
      %v1183 = vunpack.c.l.b16 %v897
      %v1184 = vunpack.c.h.b16 %v897
      %v1185 = vunpack.c.l.b16 %v898
      %v1186 = vunpack.c.h.b16 %v898
      %v1187 = vunpack.c.l.b16 %v899
      %v1188 = vunpack.c.h.b16 %v899
      %v1189 = vunpack.c.l.b16 %v900
      %v1190 = vunpack.c.h.b16 %v900
      %v1191 = vunpack.c.l.b16 %v901
      %v1192 = vunpack.c.h.b16 %v901
      %v1193 = vunpack.c.l.b16 %v902
      %v1194 = vunpack.c.h.b16 %v902
      %v1195 = vunpack.c.l.b16 %v903
      %v1196 = vunpack.c.h.b16 %v903
      %v1197 = vunpack.c.l.b16 %v904
      %v1198 = vunpack.c.h.b16 %v904
      %v1199 = vunpack.c.l.b16 %v905
      %v1200 = vunpack.c.h.b16 %v905
      %v1201 = vunpack.c.l.b16 %v906
      %v1202 = vunpack.c.h.b16 %v906
      %v1203 = vunpack.c.l.b16 %v907
      %v1204 = vunpack.c.h.b16 %v907
      %v1205 = vunpack.c.l.b16 %v908
      %v1206 = vunpack.c.h.b16 %v908
      %v1207 = vunpack.c.l.b16 %v909
      %v1208 = vunpack.c.h.b16 %v909
      %v1209 = vunpack.c.l.b16 %v910
      %v1210 = vunpack.c.h.b16 %v910
      %v1211 = vunpack.c.l.b16 %v911
      %v1212 = vunpack.c.h.b16 %v911
      %v1213 = vunpack.c.l.b16 %v912
      %v1214 = vunpack.c.h.b16 %v912
      %v1215 = vunpack.c.l.b16 %v913
      %v1216 = vunpack.c.h.b16 %v913
      %v1217 = vunpack.c.l.b16 %v914
      %v1218 = vunpack.c.h.b16 %v914
      %v1219 = vunpack.c.l.b16 %v915
      %v1220 = vunpack.c.h.b16 %v915
      %v1221 = vunpack.c.l.b16 %v916
      %v1222 = vunpack.c.h.b16 %v916
      %v1223 = vunpack.c.l.b16 %v917
      %v1224 = vunpack.c.h.b16 %v917
      %v1225 = vunpack.c.l.b16 %v918
      %v1226 = vunpack.c.h.b16 %v918
      %v1227 = vunpack.c.l.b16 %v919
      %v1228 = vunpack.c.h.b16 %v919
      %v1229 = vunpack.c.l.b16 %v920
      %v1230 = vunpack.c.h.b16 %v920
      %v1231 = vunpack.c.l.b16 %v921
      %v1232 = vunpack.c.h.b16 %v921
      %v1233 = vunpack.c.l.b16 %v922
      %v1234 = vunpack.c.h.b16 %v922
      %v1235 = vunpack.c.l.b16 %v923
      %v1236 = vunpack.c.h.b16 %v923
      %v1237 = vunpack.c.l.b16 %v924
      %v1238 = vunpack.c.h.b16 %v924
      %v1239 = vunpack.c.l.b16 %v925
      %v1240 = vunpack.c.h.b16 %v925
      %v1241 = vunpack.c.l.b16 %v926
      %v1242 = vunpack.c.h.b16 %v926
      %v1243 = vunpack.c.l.b16 %v927
      %v1244 = vunpack.c.h.b16 %v927
      %v1245 = vunpack.c.l.b16 %v928
      %v1246 = vunpack.c.h.b16 %v928
      %v1247 = vunpack.c.l.b16 %v929
      %v1248 = vunpack.c.h.b16 %v929
      %v1249 = vunpack.c.l.b16 %v930
      %v1250 = vunpack.c.h.b16 %v930
      %v1251 = vpack.c.b16 %v1065, %v1059
      %v1252 = vpack.c.b16 %v1066, %v1060
      %v1253 = vpack.c.b16 %v1067, %v1061
      %v1254 = vpack.c.b16 %v1068, %v1062
      %v1255 = vpack.c.b16 %v1069, %v1063
      %v1256 = vpack.c.b16 %v1070, %v1064
      %v1257 = vpack.c.b16 %v1077, %v1071
      %v1258 = vpack.c.b16 %v1078, %v1072
      %v1259 = vpack.c.b16 %v1079, %v1073
      %v1260 = vpack.c.b16 %v1080, %v1074
      %v1261 = vpack.c.b16 %v1081, %v1075
      %v1262 = vpack.c.b16 %v1082, %v1076
      %v1263 = vpack.c.b16 %v1089, %v1083
      %v1264 = vpack.c.b16 %v1090, %v1084
      %v1265 = vpack.c.b16 %v1091, %v1085
      %v1266 = vpack.c.b16 %v1092, %v1086
      %v1267 = vpack.c.b16 %v1093, %v1087
      %v1268 = vpack.c.b16 %v1094, %v1088
      %v1269 = vpack.c.b16 %v1101, %v1095
      %v1270 = vpack.c.b16 %v1102, %v1096
      %v1271 = vpack.c.b16 %v1103, %v1097
      %v1272 = vpack.c.b16 %v1104, %v1098
      %v1273 = vpack.c.b16 %v1105, %v1099
      %v1274 = vpack.c.b16 %v1106, %v1100
      %v1275 = vpack.c.b16 %v1113, %v1107
      %v1276 = vpack.c.b16 %v1114, %v1108
      %v1277 = vpack.c.b16 %v1115, %v1109
      %v1278 = vpack.c.b16 %v1116, %v1110
      %v1279 = vpack.c.b16 %v1117, %v1111
      %v1280 = vpack.c.b16 %v1118, %v1112
      %v1281 = vpack.c.b16 %v1125, %v1119
      %v1282 = vpack.c.b16 %v1126, %v1120
      %v1283 = vpack.c.b16 %v1127, %v1121
      %v1284 = vpack.c.b16 %v1128, %v1122
      %v1285 = vpack.c.b16 %v1129, %v1123
      %v1286 = vpack.c.b16 %v1130, %v1124
      %v1287 = vpack.c.b16 %v1137, %v1131
      %v1288 = vpack.c.b16 %v1138, %v1132
      %v1289 = vpack.c.b16 %v1139, %v1133
      %v1290 = vpack.c.b16 %v1140, %v1134
      %v1291 = vpack.c.b16 %v1141, %v1135
      %v1292 = vpack.c.b16 %v1142, %v1136
      %v1293 = vpack.c.b16 %v1149, %v1143
      %v1294 = vpack.c.b16 %v1150, %v1144
      %v1295 = vpack.c.b16 %v1151, %v1145
      %v1296 = vpack.c.b16 %v1152, %v1146
      %v1297 = vpack.c.b16 %v1153, %v1147
      %v1298 = vpack.c.b16 %v1154, %v1148
      %v1299 = vpack.c.b16 %v1161, %v1155
      %v1300 = vpack.c.b16 %v1162, %v1156
      %v1301 = vpack.c.b16 %v1163, %v1157
      %v1302 = vpack.c.b16 %v1164, %v1158
      %v1303 = vpack.c.b16 %v1165, %v1159
      %v1304 = vpack.c.b16 %v1166, %v1160
      %v1305 = vpack.c.b16 %v1173, %v1167
      %v1306 = vpack.c.b16 %v1174, %v1168
      %v1307 = vpack.c.b16 %v1175, %v1169
      %v1308 = vpack.c.b16 %v1176, %v1170
      %v1309 = vpack.c.b16 %v1177, %v1171
      %v1310 = vpack.c.b16 %v1178, %v1172
      %v1311 = vpack.c.b16 %v1185, %v1179
      %v1312 = vpack.c.b16 %v1186, %v1180
      %v1313 = vpack.c.b16 %v1187, %v1181
      %v1314 = vpack.c.b16 %v1188, %v1182
      %v1315 = vpack.c.b16 %v1189, %v1183
      %v1316 = vpack.c.b16 %v1190, %v1184
      %v1317 = vpack.c.b16 %v1197, %v1191
      %v1318 = vpack.c.b16 %v1198, %v1192
      %v1319 = vpack.c.b16 %v1199, %v1193
      %v1320 = vpack.c.b16 %v1200, %v1194
      %v1321 = vpack.c.b16 %v1201, %v1195
      %v1322 = vpack.c.b16 %v1202, %v1196
      %v1323 = vpack.c.b16 %v1209, %v1203
      %v1324 = vpack.c.b16 %v1210, %v1204
      %v1325 = vpack.c.b16 %v1211, %v1205
      %v1326 = vpack.c.b16 %v1212, %v1206
      %v1327 = vpack.c.b16 %v1213, %v1207
      %v1328 = vpack.c.b16 %v1214, %v1208
      %v1329 = vpack.c.b16 %v1221, %v1215
      %v1330 = vpack.c.b16 %v1222, %v1216
      %v1331 = vpack.c.b16 %v1223, %v1217
      %v1332 = vpack.c.b16 %v1224, %v1218
      %v1333 = vpack.c.b16 %v1225, %v1219
      %v1334 = vpack.c.b16 %v1226, %v1220
      %v1335 = vpack.c.b16 %v1233, %v1227
      %v1336 = vpack.c.b16 %v1234, %v1228
      %v1337 = vpack.c.b16 %v1235, %v1229
      %v1338 = vpack.c.b16 %v1236, %v1230
      %v1339 = vpack.c.b16 %v1237, %v1231
      %v1340 = vpack.c.b16 %v1238, %v1232
      %v1341 = vpack.c.b16 %v1245, %v1239
      %v1342 = vpack.c.b16 %v1246, %v1240
      %v1343 = vpack.c.b16 %v1247, %v1241
      %v1344 = vpack.c.b16 %v1248, %v1242
      %v1345 = vpack.c.b16 %v1249, %v1243
      %v1346 = vpack.c.b16 %v1250, %v1244
      %1443 = vmatprep.subr.bf16.mxu0 %v1252
      %1444 = vmatpush1.bf16.msra.mxu0 %v1251
      %1445 = vmatprep.subr.bf16.mxu0 %v1258
      %1446 = vmatpush1.bf16.msra.mxu0 %v1257
      %1447 = vmatprep.subr.bf16.mxu0 %v1264
      %1448 = vmatpush1.bf16.msra.mxu0 %v1263
      %1449 = vmatprep.subr.bf16.mxu0 %v1270
      %1450 = vmatpush1.bf16.msra.mxu0 %v1269
      %1451 = vmatprep.subr.bf16.mxu0 %v1276
      %1452 = vmatpush1.bf16.msra.mxu0 %v1275
      %1453 = vmatprep.subr.bf16.mxu0 %v1282
      %1454 = vmatpush1.bf16.msra.mxu0 %v1281
      %1455 = vmatprep.subr.bf16.mxu0 %v1288
      %1456 = vmatpush1.bf16.msra.mxu0 %v1287
      %1457 = vmatprep.subr.bf16.mxu0 %v1294
      %1458 = vmatpush1.bf16.msra.mxu0 %v1293
      %1459 = vmatprep.subr.bf16.mxu0 %v1300
      %1460 = vmatpush1.bf16.msra.mxu0 %v1299
      %1461 = vmatprep.subr.bf16.mxu0 %v1306
      %1462 = vmatpush1.bf16.msra.mxu0 %v1305
      %1463 = vmatprep.subr.bf16.mxu0 %v1312
      %1464 = vmatpush1.bf16.msra.mxu0 %v1311
      %1465 = vmatprep.subr.bf16.mxu0 %v1318
      %1466 = vmatpush1.bf16.msra.mxu0 %v1317
      %1467 = vmatprep.subr.bf16.mxu0 %v1324
      %1468 = vmatpush1.bf16.msra.mxu0 %v1323
      %1469 = vmatprep.subr.bf16.mxu0 %v1330
      %1470 = vmatpush1.bf16.msra.mxu0 %v1329
      %1471 = vmatprep.subr.bf16.mxu0 %v1336
      %1472 = vmatpush1.bf16.msra.mxu0 %v1335
      %1473 = vmatprep.subr.bf16.mxu0 %v1342
      %1474 = vmatpush1.bf16.msra.mxu0 %v1341
      %1475 = vmatprep.mubr.bf16.mxu0 %v820
      %1476 = vmatmul.mubr.bf16.gmra.mrb[0].mxu0 %v819
      %v1477 = vpop.f32.mrb[0].mxu0
      %v1478 = vadd.f32 %v936, %v1477
      %v1479 = vpop.f32.mrb[0].mxu0
      %v1480 = vadd.f32 %v940, %v1479
      %v1481 = vpop.f32.mrb[0].mxu0
      %v1482 = vadd.f32 %v936, %v1481
      %v1483 = vpop.f32.mrb[0].mxu0
      %v1484 = vadd.f32 %v940, %v1483
      %1485 = vmatprep.mubr.bf16.mxu0 %v822
      %1486 = vmatmul.mubr.bf16.gmra.mrb[0].mxu0 %v821
      %v1487 = vpop.f32.mrb[0].mxu0
      %v1488 = vadd.f32 %v936, %v1487
      %v1489 = vpop.f32.mrb[0].mxu0
      %v1490 = vadd.f32 %v940, %v1489
      %v1491 = vpop.f32.mrb[0].mxu0
      %v1492 = vadd.f32 %v936, %v1491
      %v1493 = vpop.f32.mrb[0].mxu0
      %v1494 = vadd.f32 %v940, %v1493
      %1495 = vmatprep.mubr.bf16.mxu0 %v824
      %1496 = vmatmul.mubr.bf16.gmra.mrb[0].mxu0 %v823
      %v1497 = vpop.f32.mrb[0].mxu0
      %v1498 = vadd.f32 %v936, %v1497
      %v1499 = vpop.f32.mrb[0].mxu0
      %v1500 = vadd.f32 %v940, %v1499
      %v1501 = vpop.f32.mrb[0].mxu0
      %v1502 = vadd.f32 %v936, %v1501
      %v1503 = vpop.f32.mrb[0].mxu0
      %v1504 = vadd.f32 %v940, %v1503
      %1505 = vmatprep.mubr.bf16.mxu0 %v826
      %1506 = vmatmul.mubr.bf16.gmra.mrb[0].mxu0 %v825
      %v1507 = vpop.f32.mrb[0].mxu0
      %v1508 = vadd.f32 %v936, %v1507
      %v1509 = vpop.f32.mrb[0].mxu0
      %v1510 = vadd.f32 %v940, %v1509
      %v1511 = vpop.f32.mrb[0].mxu0
      %v1512 = vadd.f32 %v936, %v1511
      %v1513 = vpop.f32.mrb[0].mxu0
      %v1514 = vadd.f32 %v940, %v1513
      %1515 = vmatprep.mubr.bf16.mxu0 %v828
      %1516 = vmatmul.mubr.bf16.gmra.mrb[0].mxu0 %v827
      %v1517 = vpop.f32.mrb[0].mxu0
      %v1518 = vadd.f32 %v936, %v1517
      %v1519 = vpop.f32.mrb[0].mxu0
      %v1520 = vadd.f32 %v940, %v1519
      %v1521 = vpop.f32.mrb[0].mxu0
      %v1522 = vadd.f32 %v936, %v1521
      %v1523 = vpop.f32.mrb[0].mxu0
      %v1524 = vadd.f32 %v940, %v1523
      %1525 = vmatprep.mubr.bf16.mxu0 %v830
      %1526 = vmatmul.mubr.bf16.gmra.mrb[0].mxu0 %v829
      %v1527 = vpop.f32.mrb[0].mxu0
      %v1528 = vadd.f32 %v936, %v1527
      %v1529 = vpop.f32.mrb[0].mxu0
      %v1530 = vadd.f32 %v940, %v1529
      %v1531 = vpop.f32.mrb[0].mxu0
      %v1532 = vadd.f32 %v936, %v1531
      %v1533 = vpop.f32.mrb[0].mxu0
      %v1534 = vadd.f32 %v940, %v1533
      %1535 = vmatprep.mubr.bf16.mxu0 %v832
      %1536 = vmatmul.mubr.bf16.gmra.mrb[0].mxu0 %v831
      %v1537 = vpop.f32.mrb[0].mxu0
      %v1538 = vadd.f32 %v936, %v1537
      %v1539 = vpop.f32.mrb[0].mxu0
      %v1540 = vadd.f32 %v940, %v1539
      %v1541 = vpop.f32.mrb[0].mxu0
      %v1542 = vadd.f32 %v936, %v1541
      %v1543 = vpop.f32.mrb[0].mxu0
      %v1544 = vadd.f32 %v940, %v1543
      %1545 = vmatprep.mubr.bf16.mxu0 %v834
      %1546 = vmatmul.mubr.bf16.gmra.mrb[0].mxu0 %v833
      %v1547 = vpop.f32.mrb[0].mxu0
      %v1548 = vadd.f32 %v936, %v1547
      %v1549 = vpop.f32.mrb[0].mxu0
      %v1550 = vadd.f32 %v940, %v1549
      %v1551 = vpop.f32.mrb[0].mxu0
      %v1552 = vadd.f32 %v936, %v1551
      %v1553 = vpop.f32.mrb[0].mxu0
      %v1554 = vadd.f32 %v940, %v1553
      %1555 = vdwg.mxu0
      %1556 = vmatprep.subr.bf16.mxu0 %v1254
      %1557 = vmatpush1.bf16.msra.mxu0 %v1253
      %1558 = vmatprep.subr.bf16.mxu0 %v1260
      %1559 = vmatpush1.bf16.msra.mxu0 %v1259
      %1560 = vmatprep.subr.bf16.mxu0 %v1266
      %1561 = vmatpush1.bf16.msra.mxu0 %v1265
      %1562 = vmatprep.subr.bf16.mxu0 %v1272
      %1563 = vmatpush1.bf16.msra.mxu0 %v1271
      %1564 = vmatprep.subr.bf16.mxu0 %v1278
      %1565 = vmatpush1.bf16.msra.mxu0 %v1277
      %1566 = vmatprep.subr.bf16.mxu0 %v1284
      %1567 = vmatpush1.bf16.msra.mxu0 %v1283
      %1568 = vmatprep.subr.bf16.mxu0 %v1290
      %1569 = vmatpush1.bf16.msra.mxu0 %v1289
      %1570 = vmatprep.subr.bf16.mxu0 %v1296
      %1571 = vmatpush1.bf16.msra.mxu0 %v1295
      %1572 = vmatprep.subr.bf16.mxu0 %v1302
      %1573 = vmatpush1.bf16.msra.mxu0 %v1301
      %1574 = vmatprep.subr.bf16.mxu0 %v1308
      %1575 = vmatpush1.bf16.msra.mxu0 %v1307
      %1576 = vmatprep.subr.bf16.mxu0 %v1314
      %1577 = vmatpush1.bf16.msra.mxu0 %v1313
      %1578 = vmatprep.subr.bf16.mxu0 %v1320
      %1579 = vmatpush1.bf16.msra.mxu0 %v1319
      %1580 = vmatprep.subr.bf16.mxu0 %v1326
      %1581 = vmatpush1.bf16.msra.mxu0 %v1325
      %1582 = vmatprep.subr.bf16.mxu0 %v1332
      %1583 = vmatpush1.bf16.msra.mxu0 %v1331
      %1584 = vmatprep.subr.bf16.mxu0 %v1338
      %1585 = vmatpush1.bf16.msra.mxu0 %v1337
      %1586 = vmatprep.subr.bf16.mxu0 %v1344
      %1587 = vmatpush1.bf16.msra.mxu0 %v1343
      %1588 = vmatprep.mubr.bf16.mxu0 %v820
      %1589 = vmatmul.mubr.bf16.gmra.mrb[0].mxu0 %v819
      %v1590 = vpop.f32.mrb[0].mxu0
      %v1591 = vadd.f32 %v944, %v1590
      %v1592 = vpop.f32.mrb[0].mxu0
      %v1593 = vadd.f32 %v948, %v1592
      %v1594 = vpop.f32.mrb[0].mxu0
      %v1595 = vadd.f32 %v944, %v1594
      %v1596 = vpop.f32.mrb[0].mxu0
      %v1597 = vadd.f32 %v948, %v1596
      %1598 = vmatprep.mubr.bf16.mxu0 %v822
      %1599 = vmatmul.mubr.bf16.gmra.mrb[0].mxu0 %v821
      %v1600 = vpop.f32.mrb[0].mxu0
      %v1601 = vadd.f32 %v944, %v1600
      %v1602 = vpop.f32.mrb[0].mxu0
      %v1603 = vadd.f32 %v948, %v1602
      %v1604 = vpop.f32.mrb[0].mxu0
      %v1605 = vadd.f32 %v944, %v1604
      %v1606 = vpop.f32.mrb[0].mxu0
      %v1607 = vadd.f32 %v948, %v1606
      %1608 = vmatprep.mubr.bf16.mxu0 %v824
      %1609 = vmatmul.mubr.bf16.gmra.mrb[0].mxu0 %v823
      %v1610 = vpop.f32.mrb[0].mxu0
      %v1611 = vadd.f32 %v944, %v1610
      %v1612 = vpop.f32.mrb[0].mxu0
      %v1613 = vadd.f32 %v948, %v1612
      %v1614 = vpop.f32.mrb[0].mxu0
      %v1615 = vadd.f32 %v944, %v1614
      %v1616 = vpop.f32.mrb[0].mxu0
      %v1617 = vadd.f32 %v948, %v1616
      %1618 = vmatprep.mubr.bf16.mxu0 %v826
      %1619 = vmatmul.mubr.bf16.gmra.mrb[0].mxu0 %v825
      %v1620 = vpop.f32.mrb[0].mxu0
      %v1621 = vadd.f32 %v944, %v1620
      %v1622 = vpop.f32.mrb[0].mxu0
      %v1623 = vadd.f32 %v948, %v1622
      %v1624 = vpop.f32.mrb[0].mxu0
      %v1625 = vadd.f32 %v944, %v1624
      %v1626 = vpop.f32.mrb[0].mxu0
      %v1627 = vadd.f32 %v948, %v1626
      %1628 = vmatprep.mubr.bf16.mxu0 %v828
      %1629 = vmatmul.mubr.bf16.gmra.mrb[0].mxu0 %v827
      %v1630 = vpop.f32.mrb[0].mxu0
      %v1631 = vadd.f32 %v944, %v1630
      %v1632 = vpop.f32.mrb[0].mxu0
      %v1633 = vadd.f32 %v948, %v1632
      %v1634 = vpop.f32.mrb[0].mxu0
      %v1635 = vadd.f32 %v944, %v1634
      %v1636 = vpop.f32.mrb[0].mxu0
      %v1637 = vadd.f32 %v948, %v1636
      %1638 = vmatprep.mubr.bf16.mxu0 %v830
      %1639 = vmatmul.mubr.bf16.gmra.mrb[0].mxu0 %v829
      %v1640 = vpop.f32.mrb[0].mxu0
      %v1641 = vadd.f32 %v944, %v1640
      %v1642 = vpop.f32.mrb[0].mxu0
      %v1643 = vadd.f32 %v948, %v1642
      %v1644 = vpop.f32.mrb[0].mxu0
      %v1645 = vadd.f32 %v944, %v1644
      %v1646 = vpop.f32.mrb[0].mxu0
      %v1647 = vadd.f32 %v948, %v1646
      %1648 = vmatprep.mubr.bf16.mxu0 %v832
      %1649 = vmatmul.mubr.bf16.gmra.mrb[0].mxu0 %v831
      %v1650 = vpop.f32.mrb[0].mxu0
      %v1651 = vadd.f32 %v944, %v1650
      %v1652 = vpop.f32.mrb[0].mxu0
      %v1653 = vadd.f32 %v948, %v1652
      %v1654 = vpop.f32.mrb[0].mxu0
      %v1655 = vadd.f32 %v944, %v1654
      %v1656 = vpop.f32.mrb[0].mxu0
      %v1657 = vadd.f32 %v948, %v1656
      %1658 = vmatprep.mubr.bf16.mxu0 %v834
      %1659 = vmatmul.mubr.bf16.gmra.mrb[0].mxu0 %v833
      %v1660 = vpop.f32.mrb[0].mxu0
      %v1661 = vadd.f32 %v944, %v1660
      %v1662 = vpop.f32.mrb[0].mxu0
      %v1663 = vadd.f32 %v948, %v1662
      %v1664 = vpop.f32.mrb[0].mxu0
      %v1665 = vadd.f32 %v944, %v1664
      %v1666 = vpop.f32.mrb[0].mxu0
      %v1667 = vadd.f32 %v948, %v1666
      %1668 = vdwg.mxu0
      %1669 = vmatprep.subr.bf16.mxu0 %v1256
      %1670 = vmatpush1.bf16.msra.mxu0 %v1255
      %1671 = vmatprep.subr.bf16.mxu0 %v1262
      %1672 = vmatpush1.bf16.msra.mxu0 %v1261
      %1673 = vmatprep.subr.bf16.mxu0 %v1268
      %1674 = vmatpush1.bf16.msra.mxu0 %v1267
      %1675 = vmatprep.subr.bf16.mxu0 %v1274
      %1676 = vmatpush1.bf16.msra.mxu0 %v1273
      %1677 = vmatprep.subr.bf16.mxu0 %v1280
      %1678 = vmatpush1.bf16.msra.mxu0 %v1279
      %1679 = vmatprep.subr.bf16.mxu0 %v1286
      %1680 = vmatpush1.bf16.msra.mxu0 %v1285
      %1681 = vmatprep.subr.bf16.mxu0 %v1292
      %1682 = vmatpush1.bf16.msra.mxu0 %v1291
      %1683 = vmatprep.subr.bf16.mxu0 %v1298
      %1684 = vmatpush1.bf16.msra.mxu0 %v1297
      %1685 = vmatprep.subr.bf16.mxu0 %v1304
      %1686 = vmatpush1.bf16.msra.mxu0 %v1303
      %1687 = vmatprep.subr.bf16.mxu0 %v1310
      %1688 = vmatpush1.bf16.msra.mxu0 %v1309
      %1689 = vmatprep.subr.bf16.mxu0 %v1316
      %1690 = vmatpush1.bf16.msra.mxu0 %v1315
      %1691 = vmatprep.subr.bf16.mxu0 %v1322
      %1692 = vmatpush1.bf16.msra.mxu0 %v1321
      %1693 = vmatprep.subr.bf16.mxu0 %v1328
      %1694 = vmatpush1.bf16.msra.mxu0 %v1327
      %1695 = vmatprep.subr.bf16.mxu0 %v1334
      %1696 = vmatpush1.bf16.msra.mxu0 %v1333
      %1697 = vmatprep.subr.bf16.mxu0 %v1340
      %1698 = vmatpush1.bf16.msra.mxu0 %v1339
      %1699 = vmatprep.subr.bf16.mxu0 %v1346
      %1700 = vmatpush1.bf16.msra.mxu0 %v1345
      %1701 = vmatprep.mubr.bf16.mxu0 %v820
      %1702 = vmatmul.mubr.bf16.gmra.mrb[0].mxu0 %v819
      %v1703 = vpop.f32.mrb[0].mxu0
      %v1704 = vadd.f32 %v952, %v1703
      %v1705 = vpop.f32.mrb[0].mxu0
      %v1706 = vadd.f32 %v956, %v1705
      %v1707 = vpop.f32.mrb[0].mxu0
      %v1708 = vadd.f32 %v952, %v1707
      %v1709 = vpop.f32.mrb[0].mxu0
      %v1710 = vadd.f32 %v956, %v1709
      %1711 = vmatprep.mubr.bf16.mxu0 %v822
      %1712 = vmatmul.mubr.bf16.gmra.mrb[0].mxu0 %v821
      %v1713 = vpop.f32.mrb[0].mxu0
      %v1714 = vadd.f32 %v952, %v1713
      %v1715 = vpop.f32.mrb[0].mxu0
      %v1716 = vadd.f32 %v956, %v1715
      %v1717 = vpop.f32.mrb[0].mxu0
      %v1718 = vadd.f32 %v952, %v1717
      %v1719 = vpop.f32.mrb[0].mxu0
      %v1720 = vadd.f32 %v956, %v1719
      %1721 = vmatprep.mubr.bf16.mxu0 %v824
      %1722 = vmatmul.mubr.bf16.gmra.mrb[0].mxu0 %v823
      %v1723 = vpop.f32.mrb[0].mxu0
      %v1724 = vadd.f32 %v952, %v1723
      %v1725 = vpop.f32.mrb[0].mxu0
      %v1726 = vadd.f32 %v956, %v1725
      %v1727 = vpop.f32.mrb[0].mxu0
      %v1728 = vadd.f32 %v952, %v1727
      %v1729 = vpop.f32.mrb[0].mxu0
      %v1730 = vadd.f32 %v956, %v1729
      %1731 = vmatprep.mubr.bf16.mxu0 %v826
      %1732 = vmatmul.mubr.bf16.gmra.mrb[0].mxu0 %v825
      %v1733 = vpop.f32.mrb[0].mxu0
      %v1734 = vadd.f32 %v952, %v1733
      %v1735 = vpop.f32.mrb[0].mxu0
      %v1736 = vadd.f32 %v956, %v1735
      %v1737 = vpop.f32.mrb[0].mxu0
      %v1738 = vadd.f32 %v952, %v1737
      %v1739 = vpop.f32.mrb[0].mxu0
      %v1740 = vadd.f32 %v956, %v1739
      %1741 = vmatprep.mubr.bf16.mxu0 %v828
      %1742 = vmatmul.mubr.bf16.gmra.mrb[0].mxu0 %v827
      %v1743 = vpop.f32.mrb[0].mxu0
      %v1744 = vadd.f32 %v952, %v1743
      %v1745 = vpop.f32.mrb[0].mxu0
      %v1746 = vadd.f32 %v956, %v1745
      %v1747 = vpop.f32.mrb[0].mxu0
      %v1748 = vadd.f32 %v952, %v1747
      %v1749 = vpop.f32.mrb[0].mxu0
      %v1750 = vadd.f32 %v956, %v1749
      %1751 = vmatprep.mubr.bf16.mxu0 %v830
      %1752 = vmatmul.mubr.bf16.gmra.mrb[0].mxu0 %v829
      %v1753 = vpop.f32.mrb[0].mxu0
      %v1754 = vadd.f32 %v952, %v1753
      %v1755 = vpop.f32.mrb[0].mxu0
      %v1756 = vadd.f32 %v956, %v1755
      %v1757 = vpop.f32.mrb[0].mxu0
      %v1758 = vadd.f32 %v952, %v1757
      %v1759 = vpop.f32.mrb[0].mxu0
      %v1760 = vadd.f32 %v956, %v1759
      %1761 = vmatprep.mubr.bf16.mxu0 %v832
      %1762 = vmatmul.mubr.bf16.gmra.mrb[0].mxu0 %v831
      %v1763 = vpop.f32.mrb[0].mxu0
      %v1764 = vadd.f32 %v952, %v1763
      %v1765 = vpop.f32.mrb[0].mxu0
      %v1766 = vadd.f32 %v956, %v1765
      %v1767 = vpop.f32.mrb[0].mxu0
      %v1768 = vadd.f32 %v952, %v1767
      %v1769 = vpop.f32.mrb[0].mxu0
      %v1770 = vadd.f32 %v956, %v1769
      %1771 = vmatprep.mubr.bf16.mxu0 %v834
      %1772 = vmatmul.mubr.bf16.gmra.mrb[0].mxu0 %v833
      %v1773 = vpop.f32.mrb[0].mxu0
      %v1774 = vadd.f32 %v952, %v1773
      %v1775 = vpop.f32.mrb[0].mxu0
      %v1776 = vadd.f32 %v956, %v1775
      %v1777 = vpop.f32.mrb[0].mxu0
      %v1778 = vadd.f32 %v952, %v1777
      %v1779 = vpop.f32.mrb[0].mxu0
      %v1780 = vadd.f32 %v956, %v1779
      %1781 = vdwg.mxu0
      %v1782 = vpack.c.bf16 %v1482, %v1478
      %v1783 = vpack.c.bf16 %v1492, %v1488
      %v1784 = vpack.c.bf16 %v1502, %v1498
      %v1785 = vpack.c.bf16 %v1512, %v1508
      %v1786 = vpack.c.bf16 %v1522, %v1518
      %v1787 = vpack.c.bf16 %v1532, %v1528
      %v1788 = vpack.c.bf16 %v1542, %v1538
      %v1789 = vpack.c.bf16 %v1552, %v1548
      %v1790 = vpack.c.bf16 %v1595, %v1591
      %v1791 = vpack.c.bf16 %v1605, %v1601
      %v1792 = vpack.c.bf16 %v1615, %v1611
      %v1793 = vpack.c.bf16 %v1625, %v1621
      %v1794 = vpack.c.bf16 %v1635, %v1631
      %v1795 = vpack.c.bf16 %v1645, %v1641
      %v1796 = vpack.c.bf16 %v1655, %v1651
      %v1797 = vpack.c.bf16 %v1665, %v1661
      %v1798 = vpack.c.bf16 %v1708, %v1704
      %v1799 = vpack.c.bf16 %v1718, %v1714
      %v1800 = vpack.c.bf16 %v1728, %v1724
      %v1801 = vpack.c.bf16 %v1738, %v1734
      %v1802 = vpack.c.bf16 %v1748, %v1744
      %v1803 = vpack.c.bf16 %v1758, %v1754
      %v1804 = vpack.c.bf16 %v1768, %v1764
      %v1805 = vpack.c.bf16 %v1778, %v1774
      %1806 = vmatprep.subr.bf16.mxu0 0
      %1807 = vmatpush1.bf16.xpose.msra.mxu0 %v1790
      %1808 = vmatprep.subr.bf16.mxu0 0
      %1809 = vmatpush1.bf16.xpose.msra.mxu0 %v1791
      %1810 = vmatprep.subr.bf16.mxu0 0
      %1811 = vmatpush1.bf16.xpose.msra.mxu0 %v1792
      %1812 = vmatprep.subr.bf16.mxu0 0
      %1813 = vmatpush1.bf16.xpose.msra.mxu0 %v1793
      %1814 = vmatprep.subr.bf16.mxu0 0
      %1815 = vmatpush1.bf16.xpose.msra.mxu0 %v1794
      %1816 = vmatprep.subr.bf16.mxu0 0
      %1817 = vmatpush1.bf16.xpose.msra.mxu0 %v1795
      %1818 = vmatprep.subr.bf16.mxu0 0
      %1819 = vmatpush1.bf16.xpose.msra.mxu0 %v1796
      %1820 = vmatprep.subr.bf16.mxu0 0
      %1821 = vmatpush1.bf16.xpose.msra.mxu0 %v1797
      %1822 = vmatprep.subr.bf16.mxu0 0
      %1823 = vmatpush1.bf16.xpose.msra.mxu0 0
      %1824 = vmatprep.subr.bf16.mxu0 0
      %1825 = vmatpush1.bf16.xpose.msra.mxu0 0
      %1826 = vmatprep.subr.bf16.mxu0 0
      %1827 = vmatpush1.bf16.xpose.msra.mxu0 0
      %1828 = vmatprep.subr.bf16.mxu0 0
      %1829 = vmatpush1.bf16.xpose.msra.mxu0 0
      %1830 = vmatprep.subr.bf16.mxu0 0
      %1831 = vmatpush1.bf16.xpose.msra.mxu0 0
      %1832 = vmatprep.subr.bf16.mxu0 0
      %1833 = vmatpush1.bf16.xpose.msra.mxu0 0
      %1834 = vmatprep.subr.bf16.mxu0 0
      %1835 = vmatpush1.bf16.xpose.msra.mxu0 0
      %1836 = vmatprep.subr.bf16.mxu0 0
      %1837 = vmatpush1.bf16.xpose.msra.mxu0 0
      %1838 = vmatprep.mubr.bf16.mxu0 0
      %1839 = vmatmul.mubr.bf16.gmra.mrb[0].mxu0 %v1782
      %v1840 = vpop.f32.mrb[0].mxu0
      %v1841 = vadd.f32 0.0, %v1840
      %v1842 = vpop.f32.mrb[0].mxu0
      %v1843 = vpop.f32.mrb[0].mxu0
      %v1844 = vadd.f32 0.0, %v1843
      %v1845 = vpop.f32.mrb[0].mxu0
      %1846 = vmatprep.mubr.bf16.mxu0 0
      %1847 = vmatmul.mubr.bf16.gmra.mrb[0].mxu0 %v1783
      %v1848 = vpop.f32.mrb[0].mxu0
      %v1849 = vadd.f32 0.0, %v1848
      %v1850 = vpop.f32.mrb[0].mxu0
      %v1851 = vpop.f32.mrb[0].mxu0
      %v1852 = vadd.f32 0.0, %v1851
      %v1853 = vpop.f32.mrb[0].mxu0
      %1854 = vmatprep.mubr.bf16.mxu0 0
      %1855 = vmatmul.mubr.bf16.gmra.mrb[0].mxu0 %v1784
      %v1856 = vpop.f32.mrb[0].mxu0
      %v1857 = vadd.f32 0.0, %v1856
      %v1858 = vpop.f32.mrb[0].mxu0
      %v1859 = vpop.f32.mrb[0].mxu0
      %v1860 = vadd.f32 0.0, %v1859
      %v1861 = vpop.f32.mrb[0].mxu0
      %1862 = vmatprep.mubr.bf16.mxu0 0
      %1863 = vmatmul.mubr.bf16.gmra.mrb[0].mxu0 %v1785
      %v1864 = vpop.f32.mrb[0].mxu0
      %v1865 = vadd.f32 0.0, %v1864
      %v1866 = vpop.f32.mrb[0].mxu0
      %v1867 = vpop.f32.mrb[0].mxu0
      %v1868 = vadd.f32 0.0, %v1867
      %v1869 = vpop.f32.mrb[0].mxu0
      %1870 = vmatprep.mubr.bf16.mxu0 0
      %1871 = vmatmul.mubr.bf16.gmra.mrb[0].mxu0 %v1786
      %v1872 = vpop.f32.mrb[0].mxu0
      %v1873 = vadd.f32 0.0, %v1872
      %v1874 = vpop.f32.mrb[0].mxu0
      %v1875 = vpop.f32.mrb[0].mxu0
      %v1876 = vadd.f32 0.0, %v1875
      %v1877 = vpop.f32.mrb[0].mxu0
      %1878 = vmatprep.mubr.bf16.mxu0 0
      %1879 = vmatmul.mubr.bf16.gmra.mrb[0].mxu0 %v1787
      %v1880 = vpop.f32.mrb[0].mxu0
      %v1881 = vadd.f32 0.0, %v1880
      %v1882 = vpop.f32.mrb[0].mxu0
      %v1883 = vpop.f32.mrb[0].mxu0
      %v1884 = vadd.f32 0.0, %v1883
      %v1885 = vpop.f32.mrb[0].mxu0
      %1886 = vmatprep.mubr.bf16.mxu0 0
      %1887 = vmatmul.mubr.bf16.gmra.mrb[0].mxu0 %v1788
      %v1888 = vpop.f32.mrb[0].mxu0
      %v1889 = vadd.f32 0.0, %v1888
      %v1890 = vpop.f32.mrb[0].mxu0
      %v1891 = vpop.f32.mrb[0].mxu0
      %v1892 = vadd.f32 0.0, %v1891
      %v1893 = vpop.f32.mrb[0].mxu0
      %1894 = vmatprep.mubr.bf16.mxu0 0
      %1895 = vmatmul.mubr.bf16.gmra.mrb[0].mxu0 %v1789
      %v1896 = vpop.f32.mrb[0].mxu0
      %v1897 = vadd.f32 0.0, %v1896
      %v1898 = vpop.f32.mrb[0].mxu0
      %v1899 = vpop.f32.mrb[0].mxu0
      %v1900 = vadd.f32 0.0, %v1899
      %v1901 = vpop.f32.mrb[0].mxu0
      %1902 = vdwg.mxu0
      %v1903 = vmul.f32 %v1841, 0.088388346
      %v1904 = vmul.f32 %v1844, 0.088388346
      %v1905 = vmul.f32 %v1849, 0.088388346
      %v1906 = vmul.f32 %v1852, 0.088388346
      %v1907 = vmul.f32 %v1857, 0.088388346
      %v1908 = vmul.f32 %v1860, 0.088388346
      %v1909 = vmul.f32 %v1865, 0.088388346
      %v1910 = vmul.f32 %v1868, 0.088388346
      %v1911 = vmul.f32 %v1873, 0.088388346
      %v1912 = vmul.f32 %v1876, 0.088388346
      %v1913 = vmul.f32 %v1881, 0.088388346
      %v1914 = vmul.f32 %v1884, 0.088388346
      %v1915 = vmul.f32 %v1889, 0.088388346
      %v1916 = vmul.f32 %v1892, 0.088388346
      %v1917 = vmul.f32 %v1897, 0.088388346
      %v1918 = vmul.f32 %v1900, 0.088388346
      %1919 = vmax.xlane.f32.xlu0 %v1903
      %v1920 = vpop.xlane.xlu0 %1919
      %1921 = vmax.xlane.f32.xlu0 %v1904
      %v1922 = vpop.xlane.xlu0 %1921
      %1923 = vmax.xlane.f32.xlu0 %v1905
      %v1924 = vpop.xlane.xlu0 %1923
      %1925 = vmax.xlane.f32.xlu0 %v1906
      %v1926 = vpop.xlane.xlu0 %1925
      %1927 = vmax.xlane.f32.xlu0 %v1907
      %v1928 = vpop.xlane.xlu0 %1927
      %1929 = vmax.xlane.f32.xlu0 %v1908
      %v1930 = vpop.xlane.xlu0 %1929
      %1931 = vmax.xlane.f32.xlu0 %v1909
      %v1932 = vpop.xlane.xlu0 %1931
      %1933 = vmax.xlane.f32.xlu0 %v1910
      %v1934 = vpop.xlane.xlu0 %1933
      %1935 = vmax.xlane.f32.xlu0 %v1911
      %v1936 = vpop.xlane.xlu0 %1935
      %1937 = vmax.xlane.f32.xlu0 %v1912
      %v1938 = vpop.xlane.xlu0 %1937
      %1939 = vmax.xlane.f32.xlu0 %v1913
      %v1940 = vpop.xlane.xlu0 %1939
      %1941 = vmax.xlane.f32.xlu0 %v1914
      %v1942 = vpop.xlane.xlu0 %1941
      %1943 = vmax.xlane.f32.xlu0 %v1915
      %v1944 = vpop.xlane.xlu0 %1943
      %1945 = vmax.xlane.f32.xlu0 %v1916
      %v1946 = vpop.xlane.xlu0 %1945
      %1947 = vmax.xlane.f32.xlu0 %v1917
      %v1948 = vpop.xlane.xlu0 %1947
      %1949 = vmax.xlane.f32.xlu0 %v1918
      %v1950 = vpop.xlane.xlu0 %1949
      %v1951 = vsub.f32 %v1903, %v1920
      %v1952 = vsub.f32 %v1904, %v1922
      %v1953 = vsub.f32 %v1905, %v1924
      %v1954 = vsub.f32 %v1906, %v1926
      %v1955 = vsub.f32 %v1907, %v1928
      %v1956 = vsub.f32 %v1908, %v1930
      %v1957 = vsub.f32 %v1909, %v1932
      %v1958 = vsub.f32 %v1910, %v1934
      %v1959 = vsub.f32 %v1911, %v1936
      %v1960 = vsub.f32 %v1912, %v1938
      %v1961 = vsub.f32 %v1913, %v1940
      %v1962 = vsub.f32 %v1914, %v1942
      %v1963 = vsub.f32 %v1915, %v1944
      %v1964 = vsub.f32 %v1916, %v1946
      %v1965 = vsub.f32 %v1917, %v1948
      %v1966 = vsub.f32 %v1918, %v1950
      %v1967 = vmul.f32 %v1951, 1.442695
      %v1968 = vpow.pop %v1967
      %v1969 = vmul.f32 %v1952, 1.442695
      %v1970 = vpow.pop %v1969
      %v1971 = vmul.f32 %v1953, 1.442695
      %v1972 = vpow.pop %v1971
      %v1973 = vmul.f32 %v1954, 1.442695
      %v1974 = vpow.pop %v1973
      %v1975 = vmul.f32 %v1955, 1.442695
      %v1976 = vpow.pop %v1975
      %v1977 = vmul.f32 %v1956, 1.442695
      %v1978 = vpow.pop %v1977
      %v1979 = vmul.f32 %v1957, 1.442695
      %v1980 = vpow.pop %v1979
      %v1981 = vmul.f32 %v1958, 1.442695
      %v1982 = vpow.pop %v1981
      %v1983 = vmul.f32 %v1959, 1.442695
      %v1984 = vpow.pop %v1983
      %v1985 = vmul.f32 %v1960, 1.442695
      %v1986 = vpow.pop %v1985
      %v1987 = vmul.f32 %v1961, 1.442695
      %v1988 = vpow.pop %v1987
      %v1989 = vmul.f32 %v1962, 1.442695
      %v1990 = vpow.pop %v1989
      %v1991 = vmul.f32 %v1963, 1.442695
      %v1992 = vpow.pop %v1991
      %v1993 = vmul.f32 %v1964, 1.442695
      %v1994 = vpow.pop %v1993
      %v1995 = vmul.f32 %v1965, 1.442695
      %v1996 = vpow.pop %v1995
      %v1997 = vmul.f32 %v1966, 1.442695
      %v1998 = vpow.pop %v1997
      %1999 = vadd.xlane.f32.xlu0 %v1968
      %v2000 = vpop.xlane.xlu0 %1999
      %2001 = vadd.xlane.f32.xlu0 %v1970
      %v2002 = vpop.xlane.xlu0 %2001
      %2003 = vadd.xlane.f32.xlu0 %v1972
      %v2004 = vpop.xlane.xlu0 %2003
      %2005 = vadd.xlane.f32.xlu0 %v1974
      %v2006 = vpop.xlane.xlu0 %2005
      %2007 = vadd.xlane.f32.xlu0 %v1976
      %v2008 = vpop.xlane.xlu0 %2007
      %2009 = vadd.xlane.f32.xlu0 %v1978
      %v2010 = vpop.xlane.xlu0 %2009
      %2011 = vadd.xlane.f32.xlu0 %v1980
      %v2012 = vpop.xlane.xlu0 %2011
      %2013 = vadd.xlane.f32.xlu0 %v1982
      %v2014 = vpop.xlane.xlu0 %2013
      %2015 = vadd.xlane.f32.xlu0 %v1984
      %v2016 = vpop.xlane.xlu0 %2015
      %2017 = vadd.xlane.f32.xlu0 %v1986
      %v2018 = vpop.xlane.xlu0 %2017
      %2019 = vadd.xlane.f32.xlu0 %v1988
      %v2020 = vpop.xlane.xlu0 %2019
      %2021 = vadd.xlane.f32.xlu0 %v1990
      %v2022 = vpop.xlane.xlu0 %2021
      %2023 = vadd.xlane.f32.xlu0 %v1992
      %v2024 = vpop.xlane.xlu0 %2023
      %2025 = vadd.xlane.f32.xlu0 %v1994
      %v2026 = vpop.xlane.xlu0 %2025
      %2027 = vadd.xlane.f32.xlu0 %v1996
      %v2028 = vpop.xlane.xlu0 %2027
      %2029 = vadd.xlane.f32.xlu0 %v1998
      %v2030 = vpop.xlane.xlu0 %2029
      %v2031 = vrcp.pop %v2000
      %v2032 = vmul.f32 %v1968, %v2031
      %v2033 = vrcp.pop %v2002
      %v2034 = vmul.f32 %v1970, %v2033
      %v2035 = vrcp.pop %v2004
      %v2036 = vmul.f32 %v1972, %v2035
      %v2037 = vrcp.pop %v2006
      %v2038 = vmul.f32 %v1974, %v2037
      %v2039 = vrcp.pop %v2008
      %v2040 = vmul.f32 %v1976, %v2039
      %v2041 = vrcp.pop %v2010
      %v2042 = vmul.f32 %v1978, %v2041
      %v2043 = vrcp.pop %v2012
      %v2044 = vmul.f32 %v1980, %v2043
      %v2045 = vrcp.pop %v2014
      %v2046 = vmul.f32 %v1982, %v2045
      %v2047 = vrcp.pop %v2016
      %v2048 = vmul.f32 %v1984, %v2047
      %v2049 = vrcp.pop %v2018
      %v2050 = vmul.f32 %v1986, %v2049
      %v2051 = vrcp.pop %v2020
      %v2052 = vmul.f32 %v1988, %v2051
      %v2053 = vrcp.pop %v2022
      %v2054 = vmul.f32 %v1990, %v2053
      %v2055 = vrcp.pop %v2024
      %v2056 = vmul.f32 %v1992, %v2055
      %v2057 = vrcp.pop %v2026
      %v2058 = vmul.f32 %v1994, %v2057
      %v2059 = vrcp.pop %v2028
      %v2060 = vmul.f32 %v1996, %v2059
      %v2061 = vrcp.pop %v2030
      %v2062 = vmul.f32 %v1998, %v2061
      %v2063 = vpack.c.bf16 %v2034, %v2032
      %v2064 = vpack.c.bf16 %v2038, %v2036
      %v2065 = vpack.c.bf16 %v2042, %v2040
      %v2066 = vpack.c.bf16 %v2046, %v2044
      %v2067 = vpack.c.bf16 %v2050, %v2048
      %v2068 = vpack.c.bf16 %v2054, %v2052
      %v2069 = vpack.c.bf16 %v2058, %v2056
      %v2070 = vpack.c.bf16 %v2062, %v2060
      %2071 = vmatprep.subr.bf16.mxu0 0
      %2072 = vmatpush1.bf16.msra.mxu0 %v1798
      %2073 = vmatprep.subr.bf16.mxu0 0
      %2074 = vmatpush1.bf16.msra.mxu0 %v1799
      %2075 = vmatprep.subr.bf16.mxu0 0
      %2076 = vmatpush1.bf16.msra.mxu0 %v1800
      %2077 = vmatprep.subr.bf16.mxu0 0
      %2078 = vmatpush1.bf16.msra.mxu0 %v1801
      %2079 = vmatprep.subr.bf16.mxu0 0
      %2080 = vmatpush1.bf16.msra.mxu0 %v1802
      %2081 = vmatprep.subr.bf16.mxu0 0
      %2082 = vmatpush1.bf16.msra.mxu0 %v1803
      %2083 = vmatprep.subr.bf16.mxu0 0
      %2084 = vmatpush1.bf16.msra.mxu0 %v1804
      %2085 = vmatprep.subr.bf16.mxu0 0
      %2086 = vmatpush1.bf16.msra.mxu0 %v1805
      %2087 = vmatprep.subr.bf16.mxu0 0
      %2088 = vmatpush1.bf16.msra.mxu0 0
      %2089 = vmatprep.subr.bf16.mxu0 0
      %2090 = vmatpush1.bf16.msra.mxu0 0
      %2091 = vmatprep.subr.bf16.mxu0 0
      %2092 = vmatpush1.bf16.msra.mxu0 0
      %2093 = vmatprep.subr.bf16.mxu0 0
      %2094 = vmatpush1.bf16.msra.mxu0 0
      %2095 = vmatprep.subr.bf16.mxu0 0
      %2096 = vmatpush1.bf16.msra.mxu0 0
      %2097 = vmatprep.subr.bf16.mxu0 0
      %2098 = vmatpush1.bf16.msra.mxu0 0
      %2099 = vmatprep.subr.bf16.mxu0 0
      %2100 = vmatpush1.bf16.msra.mxu0 0
      %2101 = vmatprep.subr.bf16.mxu0 0
      %2102 = vmatpush1.bf16.msra.mxu0 0
      %2103 = vmatprep.mubr.bf16.mxu0 0
      %2104 = vmatmul.mubr.bf16.gmra.mrb[0].mxu0 %v2063
      %v2105 = vpop.f32.mrb[0].mxu0
      %v2106 = vadd.f32 0.0, %v2105
      %v2107 = vpop.f32.mrb[0].mxu0
      %v2108 = vpop.f32.mrb[0].mxu0
      %v2109 = vadd.f32 0.0, %v2108
      %v2110 = vpop.f32.mrb[0].mxu0
      %2111 = vmatprep.mubr.bf16.mxu0 0
      %2112 = vmatmul.mubr.bf16.gmra.mrb[0].mxu0 %v2064
      %v2113 = vpop.f32.mrb[0].mxu0
      %v2114 = vadd.f32 0.0, %v2113
      %v2115 = vpop.f32.mrb[0].mxu0
      %v2116 = vpop.f32.mrb[0].mxu0
      %v2117 = vadd.f32 0.0, %v2116
      %v2118 = vpop.f32.mrb[0].mxu0
      %2119 = vmatprep.mubr.bf16.mxu0 0
      %2120 = vmatmul.mubr.bf16.gmra.mrb[0].mxu0 %v2065
      %v2121 = vpop.f32.mrb[0].mxu0
      %v2122 = vadd.f32 0.0, %v2121
      %v2123 = vpop.f32.mrb[0].mxu0
      %v2124 = vpop.f32.mrb[0].mxu0
      %v2125 = vadd.f32 0.0, %v2124
      %v2126 = vpop.f32.mrb[0].mxu0
      %2127 = vmatprep.mubr.bf16.mxu0 0
      %2128 = vmatmul.mubr.bf16.gmra.mrb[0].mxu0 %v2066
      %v2129 = vpop.f32.mrb[0].mxu0
      %v2130 = vadd.f32 0.0, %v2129
      %v2131 = vpop.f32.mrb[0].mxu0
      %v2132 = vpop.f32.mrb[0].mxu0
      %v2133 = vadd.f32 0.0, %v2132
      %v2134 = vpop.f32.mrb[0].mxu0
      %2135 = vmatprep.mubr.bf16.mxu0 0
      %2136 = vmatmul.mubr.bf16.gmra.mrb[0].mxu0 %v2067
      %v2137 = vpop.f32.mrb[0].mxu0
      %v2138 = vadd.f32 0.0, %v2137
      %v2139 = vpop.f32.mrb[0].mxu0
      %v2140 = vpop.f32.mrb[0].mxu0
      %v2141 = vadd.f32 0.0, %v2140
      %v2142 = vpop.f32.mrb[0].mxu0
      %2143 = vmatprep.mubr.bf16.mxu0 0
      %2144 = vmatmul.mubr.bf16.gmra.mrb[0].mxu0 %v2068
      %v2145 = vpop.f32.mrb[0].mxu0
      %v2146 = vadd.f32 0.0, %v2145
      %v2147 = vpop.f32.mrb[0].mxu0
      %v2148 = vpop.f32.mrb[0].mxu0
      %v2149 = vadd.f32 0.0, %v2148
      %v2150 = vpop.f32.mrb[0].mxu0
      %2151 = vmatprep.mubr.bf16.mxu0 0
      %2152 = vmatmul.mubr.bf16.gmra.mrb[0].mxu0 %v2069
      %v2153 = vpop.f32.mrb[0].mxu0
      %v2154 = vadd.f32 0.0, %v2153
      %v2155 = vpop.f32.mrb[0].mxu0
      %v2156 = vpop.f32.mrb[0].mxu0
      %v2157 = vadd.f32 0.0, %v2156
      %v2158 = vpop.f32.mrb[0].mxu0
      %2159 = vmatprep.mubr.bf16.mxu0 0
      %2160 = vmatmul.mubr.bf16.gmra.mrb[0].mxu0 %v2070
      %v2161 = vpop.f32.mrb[0].mxu0
      %v2162 = vadd.f32 0.0, %v2161
      %v2163 = vpop.f32.mrb[0].mxu0
      %v2164 = vpop.f32.mrb[0].mxu0
      %v2165 = vadd.f32 0.0, %v2164
      %v2166 = vpop.f32.mrb[0].mxu0
      %2167 = vdwg.mxu0
      %2168 = vst [vmem:[#allocation2] sm:$0xff] %v2106
      %2169 = vst [vmem:[#allocation2 + $0x10] sm:$0xff] %v2109
      %2170 = vst [vmem:[#allocation2 + $0x20] sm:$0xff] %v2114
      %2171 = vst [vmem:[#allocation2 + $0x30] sm:$0xff] %v2117
      %2172 = vst [vmem:[#allocation2 + $0x40] sm:$0xff] %v2122
      %2173 = vst [vmem:[#allocation2 + $0x50] sm:$0xff] %v2125
      %2174 = vst [vmem:[#allocation2 + $0x60] sm:$0xff] %v2130
      %2175 = vst [vmem:[#allocation2 + $0x70] sm:$0xff] %v2133
      %2176 = vst [vmem:[#allocation2 + $0x80] sm:$0xff] %v2138
      %2177 = vst [vmem:[#allocation2 + $0x90] sm:$0xff] %v2141
      %2178 = vst [vmem:[#allocation2 + $0xa0] sm:$0xff] %v2146
      %2179 = vst [vmem:[#allocation2 + $0xb0] sm:$0xff] %v2149
      %2180 = vst [vmem:[#allocation2 + $0xc0] sm:$0xff] %v2154
      %2181 = vst [vmem:[#allocation2 + $0xd0] sm:$0xff] %v2157
      %2182 = vst [vmem:[#allocation2 + $0xe0] sm:$0xff] %v2162
      %2183 = vst [vmem:[#allocation2 + $0xf0] sm:$0xff] %v2165
      %v2184 = vpack.c.bf16 %v1484, %v1480
      %v2185 = vpack.c.bf16 %v1494, %v1490
      %v2186 = vpack.c.bf16 %v1504, %v1500
      %v2187 = vpack.c.bf16 %v1514, %v1510
      %v2188 = vpack.c.bf16 %v1524, %v1520
      %v2189 = vpack.c.bf16 %v1534, %v1530
      %v2190 = vpack.c.bf16 %v1544, %v1540
      %v2191 = vpack.c.bf16 %v1554, %v1550
      %v2192 = vpack.c.bf16 %v1597, %v1593
      %v2193 = vpack.c.bf16 %v1607, %v1603
      %v2194 = vpack.c.bf16 %v1617, %v1613
      %v2195 = vpack.c.bf16 %v1627, %v1623
      %v2196 = vpack.c.bf16 %v1637, %v1633
      %v2197 = vpack.c.bf16 %v1647, %v1643
      %v2198 = vpack.c.bf16 %v1657, %v1653
      %v2199 = vpack.c.bf16 %v1667, %v1663
      %v2200 = vpack.c.bf16 %v1710, %v1706
      %v2201 = vpack.c.bf16 %v1720, %v1716
      %v2202 = vpack.c.bf16 %v1730, %v1726
      %v2203 = vpack.c.bf16 %v1740, %v1736
      %v2204 = vpack.c.bf16 %v1750, %v1746
      %v2205 = vpack.c.bf16 %v1760, %v1756
      %v2206 = vpack.c.bf16 %v1770, %v1766
      %v2207 = vpack.c.bf16 %v1780, %v1776
      %2208 = vmatprep.subr.bf16.mxu0 0
      %2209 = vmatpush1.bf16.xpose.msra.mxu0 %v2192
      %2210 = vmatprep.subr.bf16.mxu0 0
      %2211 = vmatpush1.bf16.xpose.msra.mxu0 %v2193
      %2212 = vmatprep.subr.bf16.mxu0 0
      %2213 = vmatpush1.bf16.xpose.msra.mxu0 %v2194
      %2214 = vmatprep.subr.bf16.mxu0 0
      %2215 = vmatpush1.bf16.xpose.msra.mxu0 %v2195
      %2216 = vmatprep.subr.bf16.mxu0 0
      %2217 = vmatpush1.bf16.xpose.msra.mxu0 %v2196
      %2218 = vmatprep.subr.bf16.mxu0 0
      %2219 = vmatpush1.bf16.xpose.msra.mxu0 %v2197
      %2220 = vmatprep.subr.bf16.mxu0 0
      %2221 = vmatpush1.bf16.xpose.msra.mxu0 %v2198
      %2222 = vmatprep.subr.bf16.mxu0 0
      %2223 = vmatpush1.bf16.xpose.msra.mxu0 %v2199
      %2224 = vmatprep.subr.bf16.mxu0 0
      %2225 = vmatpush1.bf16.xpose.msra.mxu0 0
      %2226 = vmatprep.subr.bf16.mxu0 0
      %2227 = vmatpush1.bf16.xpose.msra.mxu0 0
      %2228 = vmatprep.subr.bf16.mxu0 0
      %2229 = vmatpush1.bf16.xpose.msra.mxu0 0
      %2230 = vmatprep.subr.bf16.mxu0 0
      %2231 = vmatpush1.bf16.xpose.msra.mxu0 0
      %2232 = vmatprep.subr.bf16.mxu0 0
      %2233 = vmatpush1.bf16.xpose.msra.mxu0 0
      %2234 = vmatprep.subr.bf16.mxu0 0
      %2235 = vmatpush1.bf16.xpose.msra.mxu0 0
      %2236 = vmatprep.subr.bf16.mxu0 0
      %2237 = vmatpush1.bf16.xpose.msra.mxu0 0
      %2238 = vmatprep.subr.bf16.mxu0 0
      %2239 = vmatpush1.bf16.xpose.msra.mxu0 0
      %2240 = vmatprep.mubr.bf16.mxu0 0
      %2241 = vmatmul.mubr.bf16.gmra.mrb[0].mxu0 %v2184
      %v2242 = vpop.f32.mrb[0].mxu0
      %v2243 = vadd.f32 0.0, %v2242
      %v2244 = vpop.f32.mrb[0].mxu0
      %v2245 = vpop.f32.mrb[0].mxu0
      %v2246 = vadd.f32 0.0, %v2245
      %v2247 = vpop.f32.mrb[0].mxu0
      %2248 = vmatprep.mubr.bf16.mxu0 0
      %2249 = vmatmul.mubr.bf16.gmra.mrb[0].mxu0 %v2185
      %v2250 = vpop.f32.mrb[0].mxu0
      %v2251 = vadd.f32 0.0, %v2250
      %v2252 = vpop.f32.mrb[0].mxu0
      %v2253 = vpop.f32.mrb[0].mxu0
      %v2254 = vadd.f32 0.0, %v2253
      %v2255 = vpop.f32.mrb[0].mxu0
      %2256 = vmatprep.mubr.bf16.mxu0 0
      %2257 = vmatmul.mubr.bf16.gmra.mrb[0].mxu0 %v2186
      %v2258 = vpop.f32.mrb[0].mxu0
      %v2259 = vadd.f32 0.0, %v2258
      %v2260 = vpop.f32.mrb[0].mxu0
      %v2261 = vpop.f32.mrb[0].mxu0
      %v2262 = vadd.f32 0.0, %v2261
      %v2263 = vpop.f32.mrb[0].mxu0
      %2264 = vmatprep.mubr.bf16.mxu0 0
      %2265 = vmatmul.mubr.bf16.gmra.mrb[0].mxu0 %v2187
      %v2266 = vpop.f32.mrb[0].mxu0
      %v2267 = vadd.f32 0.0, %v2266
      %v2268 = vpop.f32.mrb[0].mxu0
      %v2269 = vpop.f32.mrb[0].mxu0
      %v2270 = vadd.f32 0.0, %v2269
      %v2271 = vpop.f32.mrb[0].mxu0
      %2272 = vmatprep.mubr.bf16.mxu0 0
      %2273 = vmatmul.mubr.bf16.gmra.mrb[0].mxu0 %v2188
      %v2274 = vpop.f32.mrb[0].mxu0
      %v2275 = vadd.f32 0.0, %v2274
      %v2276 = vpop.f32.mrb[0].mxu0
      %v2277 = vpop.f32.mrb[0].mxu0
      %v2278 = vadd.f32 0.0, %v2277
      %v2279 = vpop.f32.mrb[0].mxu0
      %2280 = vmatprep.mubr.bf16.mxu0 0
      %2281 = vmatmul.mubr.bf16.gmra.mrb[0].mxu0 %v2189
      %v2282 = vpop.f32.mrb[0].mxu0
      %v2283 = vadd.f32 0.0, %v2282
      %v2284 = vpop.f32.mrb[0].mxu0
      %v2285 = vpop.f32.mrb[0].mxu0
      %v2286 = vadd.f32 0.0, %v2285
      %v2287 = vpop.f32.mrb[0].mxu0
      %2288 = vmatprep.mubr.bf16.mxu0 0
      %2289 = vmatmul.mubr.bf16.gmra.mrb[0].mxu0 %v2190
      %v2290 = vpop.f32.mrb[0].mxu0
      %v2291 = vadd.f32 0.0, %v2290
      %v2292 = vpop.f32.mrb[0].mxu0
      %v2293 = vpop.f32.mrb[0].mxu0
      %v2294 = vadd.f32 0.0, %v2293
      %v2295 = vpop.f32.mrb[0].mxu0
      %2296 = vmatprep.mubr.bf16.mxu0 0
      %2297 = vmatmul.mubr.bf16.gmra.mrb[0].mxu0 %v2191
      %v2298 = vpop.f32.mrb[0].mxu0
      %v2299 = vadd.f32 0.0, %v2298
      %v2300 = vpop.f32.mrb[0].mxu0
      %v2301 = vpop.f32.mrb[0].mxu0
      %v2302 = vadd.f32 0.0, %v2301
      %v2303 = vpop.f32.mrb[0].mxu0
      %2304 = vdwg.mxu0
      %v2305 = vmul.f32 %v2243, 0.088388346
      %v2306 = vmul.f32 %v2246, 0.088388346
      %v2307 = vmul.f32 %v2251, 0.088388346
      %v2308 = vmul.f32 %v2254, 0.088388346
      %v2309 = vmul.f32 %v2259, 0.088388346
      %v2310 = vmul.f32 %v2262, 0.088388346
      %v2311 = vmul.f32 %v2267, 0.088388346
      %v2312 = vmul.f32 %v2270, 0.088388346
      %v2313 = vmul.f32 %v2275, 0.088388346
      %v2314 = vmul.f32 %v2278, 0.088388346
      %v2315 = vmul.f32 %v2283, 0.088388346
      %v2316 = vmul.f32 %v2286, 0.088388346
      %v2317 = vmul.f32 %v2291, 0.088388346
      %v2318 = vmul.f32 %v2294, 0.088388346
      %v2319 = vmul.f32 %v2299, 0.088388346
      %v2320 = vmul.f32 %v2302, 0.088388346
      %2321 = vmax.xlane.f32.xlu0 %v2305
      %v2322 = vpop.xlane.xlu0 %2321
      %2323 = vmax.xlane.f32.xlu0 %v2306
      %v2324 = vpop.xlane.xlu0 %2323
      %2325 = vmax.xlane.f32.xlu0 %v2307
      %v2326 = vpop.xlane.xlu0 %2325
      %2327 = vmax.xlane.f32.xlu0 %v2308
      %v2328 = vpop.xlane.xlu0 %2327
      %2329 = vmax.xlane.f32.xlu0 %v2309
      %v2330 = vpop.xlane.xlu0 %2329
      %2331 = vmax.xlane.f32.xlu0 %v2310
      %v2332 = vpop.xlane.xlu0 %2331
      %2333 = vmax.xlane.f32.xlu0 %v2311
      %v2334 = vpop.xlane.xlu0 %2333
      %2335 = vmax.xlane.f32.xlu0 %v2312
      %v2336 = vpop.xlane.xlu0 %2335
      %2337 = vmax.xlane.f32.xlu0 %v2313
      %v2338 = vpop.xlane.xlu0 %2337
      %2339 = vmax.xlane.f32.xlu0 %v2314
      %v2340 = vpop.xlane.xlu0 %2339
      %2341 = vmax.xlane.f32.xlu0 %v2315
      %v2342 = vpop.xlane.xlu0 %2341
      %2343 = vmax.xlane.f32.xlu0 %v2316
      %v2344 = vpop.xlane.xlu0 %2343
      %2345 = vmax.xlane.f32.xlu0 %v2317
      %v2346 = vpop.xlane.xlu0 %2345
      %2347 = vmax.xlane.f32.xlu0 %v2318
      %v2348 = vpop.xlane.xlu0 %2347
      %2349 = vmax.xlane.f32.xlu0 %v2319
      %v2350 = vpop.xlane.xlu0 %2349
      %2351 = vmax.xlane.f32.xlu0 %v2320
      %v2352 = vpop.xlane.xlu0 %2351
      %v2353 = vsub.f32 %v2305, %v2322
      %v2354 = vsub.f32 %v2306, %v2324
      %v2355 = vsub.f32 %v2307, %v2326
      %v2356 = vsub.f32 %v2308, %v2328
      %v2357 = vsub.f32 %v2309, %v2330
      %v2358 = vsub.f32 %v2310, %v2332
      %v2359 = vsub.f32 %v2311, %v2334
      %v2360 = vsub.f32 %v2312, %v2336
      %v2361 = vsub.f32 %v2313, %v2338
      %v2362 = vsub.f32 %v2314, %v2340
      %v2363 = vsub.f32 %v2315, %v2342
      %v2364 = vsub.f32 %v2316, %v2344
      %v2365 = vsub.f32 %v2317, %v2346
      %v2366 = vsub.f32 %v2318, %v2348
      %v2367 = vsub.f32 %v2319, %v2350
      %v2368 = vsub.f32 %v2320, %v2352
      %v2369 = vmul.f32 %v2353, 1.442695
      %v2370 = vpow.pop %v2369
      %v2371 = vmul.f32 %v2354, 1.442695
      %v2372 = vpow.pop %v2371
      %v2373 = vmul.f32 %v2355, 1.442695
      %v2374 = vpow.pop %v2373
      %v2375 = vmul.f32 %v2356, 1.442695
      %v2376 = vpow.pop %v2375
      %v2377 = vmul.f32 %v2357, 1.442695
      %v2378 = vpow.pop %v2377
      %v2379 = vmul.f32 %v2358, 1.442695
      %v2380 = vpow.pop %v2379
      %v2381 = vmul.f32 %v2359, 1.442695
      %v2382 = vpow.pop %v2381
      %v2383 = vmul.f32 %v2360, 1.442695
      %v2384 = vpow.pop %v2383
      %v2385 = vmul.f32 %v2361, 1.442695
      %v2386 = vpow.pop %v2385
      %v2387 = vmul.f32 %v2362, 1.442695
      %v2388 = vpow.pop %v2387
      %v2389 = vmul.f32 %v2363, 1.442695
      %v2390 = vpow.pop %v2389
      %v2391 = vmul.f32 %v2364, 1.442695
      %v2392 = vpow.pop %v2391
      %v2393 = vmul.f32 %v2365, 1.442695
      %v2394 = vpow.pop %v2393
      %v2395 = vmul.f32 %v2366, 1.442695
      %v2396 = vpow.pop %v2395
      %v2397 = vmul.f32 %v2367, 1.442695
      %v2398 = vpow.pop %v2397
      %v2399 = vmul.f32 %v2368, 1.442695
      %v2400 = vpow.pop %v2399
      %2401 = vadd.xlane.f32.xlu0 %v2370
      %v2402 = vpop.xlane.xlu0 %2401
      %2403 = vadd.xlane.f32.xlu0 %v2372
      %v2404 = vpop.xlane.xlu0 %2403
      %2405 = vadd.xlane.f32.xlu0 %v2374
      %v2406 = vpop.xlane.xlu0 %2405
      %2407 = vadd.xlane.f32.xlu0 %v2376
      %v2408 = vpop.xlane.xlu0 %2407
      %2409 = vadd.xlane.f32.xlu0 %v2378
      %v2410 = vpop.xlane.xlu0 %2409
      %2411 = vadd.xlane.f32.xlu0 %v2380
      %v2412 = vpop.xlane.xlu0 %2411
      %2413 = vadd.xlane.f32.xlu0 %v2382
      %v2414 = vpop.xlane.xlu0 %2413
      %2415 = vadd.xlane.f32.xlu0 %v2384
      %v2416 = vpop.xlane.xlu0 %2415
      %2417 = vadd.xlane.f32.xlu0 %v2386
      %v2418 = vpop.xlane.xlu0 %2417
      %2419 = vadd.xlane.f32.xlu0 %v2388
      %v2420 = vpop.xlane.xlu0 %2419
      %2421 = vadd.xlane.f32.xlu0 %v2390
      %v2422 = vpop.xlane.xlu0 %2421
      %2423 = vadd.xlane.f32.xlu0 %v2392
      %v2424 = vpop.xlane.xlu0 %2423
      %2425 = vadd.xlane.f32.xlu0 %v2394
      %v2426 = vpop.xlane.xlu0 %2425
      %2427 = vadd.xlane.f32.xlu0 %v2396
      %v2428 = vpop.xlane.xlu0 %2427
      %2429 = vadd.xlane.f32.xlu0 %v2398
      %v2430 = vpop.xlane.xlu0 %2429
      %2431 = vadd.xlane.f32.xlu0 %v2400
      %v2432 = vpop.xlane.xlu0 %2431
      %v2433 = vrcp.pop %v2402
      %v2434 = vmul.f32 %v2370, %v2433
      %v2435 = vrcp.pop %v2404
      %v2436 = vmul.f32 %v2372, %v2435
      %v2437 = vrcp.pop %v2406
      %v2438 = vmul.f32 %v2374, %v2437
      %v2439 = vrcp.pop %v2408
      %v2440 = vmul.f32 %v2376, %v2439
      %v2441 = vrcp.pop %v2410
      %v2442 = vmul.f32 %v2378, %v2441
      %v2443 = vrcp.pop %v2412
      %v2444 = vmul.f32 %v2380, %v2443
      %v2445 = vrcp.pop %v2414
      %v2446 = vmul.f32 %v2382, %v2445
      %v2447 = vrcp.pop %v2416
      %v2448 = vmul.f32 %v2384, %v2447
      %v2449 = vrcp.pop %v2418
      %v2450 = vmul.f32 %v2386, %v2449
      %v2451 = vrcp.pop %v2420
      %v2452 = vmul.f32 %v2388, %v2451
      %v2453 = vrcp.pop %v2422
      %v2454 = vmul.f32 %v2390, %v2453
      %v2455 = vrcp.pop %v2424
      %v2456 = vmul.f32 %v2392, %v2455
      %v2457 = vrcp.pop %v2426
      %v2458 = vmul.f32 %v2394, %v2457
      %v2459 = vrcp.pop %v2428
      %v2460 = vmul.f32 %v2396, %v2459
      %v2461 = vrcp.pop %v2430
      %v2462 = vmul.f32 %v2398, %v2461
      %v2463 = vrcp.pop %v2432
      %v2464 = vmul.f32 %v2400, %v2463
      %v2465 = vpack.c.bf16 %v2436, %v2434
      %v2466 = vpack.c.bf16 %v2440, %v2438
      %v2467 = vpack.c.bf16 %v2444, %v2442
      %v2468 = vpack.c.bf16 %v2448, %v2446
      %v2469 = vpack.c.bf16 %v2452, %v2450
      %v2470 = vpack.c.bf16 %v2456, %v2454
      %v2471 = vpack.c.bf16 %v2460, %v2458
      %v2472 = vpack.c.bf16 %v2464, %v2462
      %2473 = vmatprep.subr.bf16.mxu0 0
      %2474 = vmatpush1.bf16.msra.mxu0 %v2200
      %2475 = vmatprep.subr.bf16.mxu0 0
      %2476 = vmatpush1.bf16.msra.mxu0 %v2201
      %2477 = vmatprep.subr.bf16.mxu0 0
      %2478 = vmatpush1.bf16.msra.mxu0 %v2202
      %2479 = vmatprep.subr.bf16.mxu0 0
      %2480 = vmatpush1.bf16.msra.mxu0 %v2203
      %2481 = vmatprep.subr.bf16.mxu0 0
      %2482 = vmatpush1.bf16.msra.mxu0 %v2204
      %2483 = vmatprep.subr.bf16.mxu0 0
      %2484 = vmatpush1.bf16.msra.mxu0 %v2205
      %2485 = vmatprep.subr.bf16.mxu0 0
      %2486 = vmatpush1.bf16.msra.mxu0 %v2206
      %2487 = vmatprep.subr.bf16.mxu0 0
      %2488 = vmatpush1.bf16.msra.mxu0 %v2207
      %2489 = vmatprep.subr.bf16.mxu0 0
      %2490 = vmatpush1.bf16.msra.mxu0 0
      %2491 = vmatprep.subr.bf16.mxu0 0
      %2492 = vmatpush1.bf16.msra.mxu0 0
      %2493 = vmatprep.subr.bf16.mxu0 0
      %2494 = vmatpush1.bf16.msra.mxu0 0
      %2495 = vmatprep.subr.bf16.mxu0 0
      %2496 = vmatpush1.bf16.msra.mxu0 0
      %2497 = vmatprep.subr.bf16.mxu0 0
      %2498 = vmatpush1.bf16.msra.mxu0 0
      %2499 = vmatprep.subr.bf16.mxu0 0
      %2500 = vmatpush1.bf16.msra.mxu0 0
      %2501 = vmatprep.subr.bf16.mxu0 0
      %2502 = vmatpush1.bf16.msra.mxu0 0
      %2503 = vmatprep.subr.bf16.mxu0 0
      %2504 = vmatpush1.bf16.msra.mxu0 0
      %2505 = vmatprep.mubr.bf16.mxu0 0
      %2506 = vmatmul.mubr.bf16.gmra.mrb[0].mxu0 %v2465
      %v2507 = vpop.f32.mrb[0].mxu0
      %v2508 = vadd.f32 0.0, %v2507
      %v2509 = vpop.f32.mrb[0].mxu0
      %v2510 = vpop.f32.mrb[0].mxu0
      %v2511 = vadd.f32 0.0, %v2510
      %v2512 = vpop.f32.mrb[0].mxu0
      %2513 = vmatprep.mubr.bf16.mxu0 0
      %2514 = vmatmul.mubr.bf16.gmra.mrb[0].mxu0 %v2466
      %v2515 = vpop.f32.mrb[0].mxu0
      %v2516 = vadd.f32 0.0, %v2515
      %v2517 = vpop.f32.mrb[0].mxu0
      %v2518 = vpop.f32.mrb[0].mxu0
      %v2519 = vadd.f32 0.0, %v2518
      %v2520 = vpop.f32.mrb[0].mxu0
      %2521 = vmatprep.mubr.bf16.mxu0 0
      %2522 = vmatmul.mubr.bf16.gmra.mrb[0].mxu0 %v2467
      %v2523 = vpop.f32.mrb[0].mxu0
      %v2524 = vadd.f32 0.0, %v2523
      %v2525 = vpop.f32.mrb[0].mxu0
      %v2526 = vpop.f32.mrb[0].mxu0
      %v2527 = vadd.f32 0.0, %v2526
      %v2528 = vpop.f32.mrb[0].mxu0
      %2529 = vmatprep.mubr.bf16.mxu0 0
      %2530 = vmatmul.mubr.bf16.gmra.mrb[0].mxu0 %v2468
      %v2531 = vpop.f32.mrb[0].mxu0
      %v2532 = vadd.f32 0.0, %v2531
      %v2533 = vpop.f32.mrb[0].mxu0
      %v2534 = vpop.f32.mrb[0].mxu0
      %v2535 = vadd.f32 0.0, %v2534
      %v2536 = vpop.f32.mrb[0].mxu0
      %2537 = vmatprep.mubr.bf16.mxu0 0
      %2538 = vmatmul.mubr.bf16.gmra.mrb[0].mxu0 %v2469
      %v2539 = vpop.f32.mrb[0].mxu0
      %v2540 = vadd.f32 0.0, %v2539
      %v2541 = vpop.f32.mrb[0].mxu0
      %v2542 = vpop.f32.mrb[0].mxu0
      %v2543 = vadd.f32 0.0, %v2542
      %v2544 = vpop.f32.mrb[0].mxu0
      %2545 = vmatprep.mubr.bf16.mxu0 0
      %2546 = vmatmul.mubr.bf16.gmra.mrb[0].mxu0 %v2470
      %v2547 = vpop.f32.mrb[0].mxu0
      %v2548 = vadd.f32 0.0, %v2547
      %v2549 = vpop.f32.mrb[0].mxu0
      %v2550 = vpop.f32.mrb[0].mxu0
      %v2551 = vadd.f32 0.0, %v2550
      %v2552 = vpop.f32.mrb[0].mxu0
      %2553 = vmatprep.mubr.bf16.mxu0 0
      %2554 = vmatmul.mubr.bf16.gmra.mrb[0].mxu0 %v2471
      %v2555 = vpop.f32.mrb[0].mxu0
      %v2556 = vadd.f32 0.0, %v2555
      %v2557 = vpop.f32.mrb[0].mxu0
      %v2558 = vpop.f32.mrb[0].mxu0
      %v2559 = vadd.f32 0.0, %v2558
      %v2560 = vpop.f32.mrb[0].mxu0
      %2561 = vmatprep.mubr.bf16.mxu0 0
      %2562 = vmatmul.mubr.bf16.gmra.mrb[0].mxu0 %v2472
      %v2563 = vpop.f32.mrb[0].mxu0
      %v2564 = vadd.f32 0.0, %v2563
      %v2565 = vpop.f32.mrb[0].mxu0
      %v2566 = vpop.f32.mrb[0].mxu0
      %v2567 = vadd.f32 0.0, %v2566
      %v2568 = vpop.f32.mrb[0].mxu0
      %2569 = vdwg.mxu0
      %2570 = vst [vmem:[#allocation2 + $0x8] sm:$0xff] %v2508
      %2571 = vst [vmem:[#allocation2 + $0x18] sm:$0xff] %v2511
      %2572 = vst [vmem:[#allocation2 + $0x28] sm:$0xff] %v2516
      %2573 = vst [vmem:[#allocation2 + $0x38] sm:$0xff] %v2519
      %2574 = vst [vmem:[#allocation2 + $0x48] sm:$0xff] %v2524
      %2575 = vst [vmem:[#allocation2 + $0x58] sm:$0xff] %v2527
      %2576 = vst [vmem:[#allocation2 + $0x68] sm:$0xff] %v2532
      %2577 = vst [vmem:[#allocation2 + $0x78] sm:$0xff] %v2535
      %2578 = vst [vmem:[#allocation2 + $0x88] sm:$0xff] %v2540
      %2579 = vst [vmem:[#allocation2 + $0x98] sm:$0xff] %v2543
      %2580 = vst [vmem:[#allocation2 + $0xa8] sm:$0xff] %v2548
      %2581 = vst [vmem:[#allocation2 + $0xb8] sm:$0xff] %v2551
      %2582 = vst [vmem:[#allocation2 + $0xc8] sm:$0xff] %v2556
      %2583 = vst [vmem:[#allocation2 + $0xd8] sm:$0xff] %v2559
      %2584 = vst [vmem:[#allocation2 + $0xe8] sm:$0xff] %v2564
      %2585 = vst [vmem:[#allocation2 + $0xf8] sm:$0xff] %v2567
      %v2586 = vld [vmem:[#allocation2] sm:$0xff]
      %v2587 = vld [vmem:[#allocation2 + $0x8] sm:$0xff]
      %v2588 = vld [vmem:[#allocation2 + $0x10] sm:$0xff]
      %v2589 = vld [vmem:[#allocation2 + $0x18] sm:$0xff]
      %v2590 = vld [vmem:[#allocation2 + $0x20] sm:$0xff]
      %v2591 = vld [vmem:[#allocation2 + $0x28] sm:$0xff]
      %v2592 = vld [vmem:[#allocation2 + $0x30] sm:$0xff]
      %v2593 = vld [vmem:[#allocation2 + $0x38] sm:$0xff]
      %v2594 = vld [vmem:[#allocation2 + $0x40] sm:$0xff]
      %v2595 = vld [vmem:[#allocation2 + $0x48] sm:$0xff]
      %v2596 = vld [vmem:[#allocation2 + $0x50] sm:$0xff]
      %v2597 = vld [vmem:[#allocation2 + $0x58] sm:$0xff]
      %v2598 = vld [vmem:[#allocation2 + $0x60] sm:$0xff]
      %v2599 = vld [vmem:[#allocation2 + $0x68] sm:$0xff]
      %v2600 = vld [vmem:[#allocation2 + $0x70] sm:$0xff]
      %v2601 = vld [vmem:[#allocation2 + $0x78] sm:$0xff]
      %v2602 = vld [vmem:[#allocation2 + $0x80] sm:$0xff]
      %v2603 = vld [vmem:[#allocation2 + $0x88] sm:$0xff]
      %v2604 = vld [vmem:[#allocation2 + $0x90] sm:$0xff]
      %v2605 = vld [vmem:[#allocation2 + $0x98] sm:$0xff]
      %v2606 = vld [vmem:[#allocation2 + $0xa0] sm:$0xff]
      %v2607 = vld [vmem:[#allocation2 + $0xa8] sm:$0xff]
      %v2608 = vld [vmem:[#allocation2 + $0xb0] sm:$0xff]
      %v2609 = vld [vmem:[#allocation2 + $0xb8] sm:$0xff]
      %v2610 = vld [vmem:[#allocation2 + $0xc0] sm:$0xff]
      %v2611 = vld [vmem:[#allocation2 + $0xc8] sm:$0xff]
      %v2612 = vld [vmem:[#allocation2 + $0xd0] sm:$0xff]
      %v2613 = vld [vmem:[#allocation2 + $0xd8] sm:$0xff]
      %v2614 = vld [vmem:[#allocation2 + $0xe0] sm:$0xff]
      %v2615 = vld [vmem:[#allocation2 + $0xe8] sm:$0xff]
      %v2616 = vld [vmem:[#allocation2 + $0xf0] sm:$0xff]
      %v2617 = vld [vmem:[#allocation2 + $0xf8] sm:$0xff]
      %v2618 = vpack.c.bf16 %v2588, %v2586
      %v2619 = vpack.c.bf16 %v2589, %v2587
      %v2620 = vpack.c.bf16 %v2592, %v2590
      %v2621 = vpack.c.bf16 %v2593, %v2591
      %v2622 = vpack.c.bf16 %v2596, %v2594
      %v2623 = vpack.c.bf16 %v2597, %v2595
      %v2624 = vpack.c.bf16 %v2600, %v2598
      %v2625 = vpack.c.bf16 %v2601, %v2599
      %v2626 = vpack.c.bf16 %v2604, %v2602
      %v2627 = vpack.c.bf16 %v2605, %v2603
      %v2628 = vpack.c.bf16 %v2608, %v2606
      %v2629 = vpack.c.bf16 %v2609, %v2607
      %v2630 = vpack.c.bf16 %v2612, %v2610
      %v2631 = vpack.c.bf16 %v2613, %v2611
      %v2632 = vpack.c.bf16 %v2616, %v2614
      %v2633 = vpack.c.bf16 %v2617, %v2615
      %v2634 = vld [vmem:[%s5] sm:$0xff]
      %v2635 = vld [vmem:[%s5 + $0x8] sm:$0xff]
      %v2636 = vld [vmem:[%s5 + $0x10] sm:$0xff]
      %v2637 = vld [vmem:[%s5 + $0x18] sm:$0xff]
      %v2638 = vld [vmem:[%s5 + $0x20] sm:$0xff]
      %v2639 = vld [vmem:[%s5 + $0x28] sm:$0xff]
      %v2640 = vld [vmem:[%s5 + $0x30] sm:$0xff]
      %v2641 = vld [vmem:[%s5 + $0x38] sm:$0xff]
      %v2642 = vld [vmem:[%s5 + $0x40] sm:$0xff]
      %v2643 = vld [vmem:[%s5 + $0x48] sm:$0xff]
      %v2644 = vld [vmem:[%s5 + $0x50] sm:$0xff]
      %v2645 = vld [vmem:[%s5 + $0x58] sm:$0xff]
      %v2646 = vld [vmem:[%s5 + $0x60] sm:$0xff]
      %v2647 = vld [vmem:[%s5 + $0x68] sm:$0xff]
      %v2648 = vld [vmem:[%s5 + $0x70] sm:$0xff]
      %v2649 = vld [vmem:[%s5 + $0x78] sm:$0xff]
      %v2650 = vld [vmem:[%s5 + $0x80] sm:$0xff]
      %v2651 = vld [vmem:[%s5 + $0x88] sm:$0xff]
      %v2652 = vld [vmem:[%s5 + $0x90] sm:$0xff]
      %v2653 = vld [vmem:[%s5 + $0x98] sm:$0xff]
      %v2654 = vld [vmem:[%s5 + $0xa0] sm:$0xff]
      %v2655 = vld [vmem:[%s5 + $0xa8] sm:$0xff]
      %v2656 = vld [vmem:[%s5 + $0xb0] sm:$0xff]
      %v2657 = vld [vmem:[%s5 + $0xb8] sm:$0xff]
      %v2658 = vld [vmem:[%s5 + $0xc0] sm:$0xff]
      %v2659 = vld [vmem:[%s5 + $0xc8] sm:$0xff]
      %v2660 = vld [vmem:[%s5 + $0xd0] sm:$0xff]
      %v2661 = vld [vmem:[%s5 + $0xd8] sm:$0xff]
      %v2662 = vld [vmem:[%s5 + $0xe0] sm:$0xff]
      %v2663 = vld [vmem:[%s5 + $0xe8] sm:$0xff]
      %v2664 = vld [vmem:[%s5 + $0xf0] sm:$0xff]
      %v2665 = vld [vmem:[%s5 + $0xf8] sm:$0xff]
      %v2666 = vld [vmem:[%s6] sm:$0x3]
      %v2668 = vlaneseq
      %v2669 = vshrl.u32 %v2668, 7
      %v2670 = vsub.s32 0, %v2669
      %v2671 = vrot.slane %v2666, %v2670
      %v2672 = vlaneseq
      %v2673 = vshrl.u32 %v2672, 7
      %v2674 = vsub.s32 1, %v2673
      %v2675 = vrot.slane %v2666, %v2674
      %v2710 = vunpack.c.l.b16 %v2634
      %v2711 = vunpack.c.h.b16 %v2634
      %v2712 = vunpack.c.l.b16 %v2635
      %v2713 = vunpack.c.h.b16 %v2635
      %v2714 = vunpack.c.l.b16 %v2636
      %v2715 = vunpack.c.h.b16 %v2636
      %v2716 = vunpack.c.l.b16 %v2637
      %v2717 = vunpack.c.h.b16 %v2637
      %v2718 = vunpack.c.l.b16 %v2638
      %v2719 = vunpack.c.h.b16 %v2638
      %v2720 = vunpack.c.l.b16 %v2639
      %v2721 = vunpack.c.h.b16 %v2639
      %v2722 = vunpack.c.l.b16 %v2640
      %v2723 = vunpack.c.h.b16 %v2640
      %v2724 = vunpack.c.l.b16 %v2641
      %v2725 = vunpack.c.h.b16 %v2641
      %v2726 = vunpack.c.l.b16 %v2642
      %v2727 = vunpack.c.h.b16 %v2642
      %v2728 = vunpack.c.l.b16 %v2643
      %v2729 = vunpack.c.h.b16 %v2643
      %v2730 = vunpack.c.l.b16 %v2644
      %v2731 = vunpack.c.h.b16 %v2644
      %v2732 = vunpack.c.l.b16 %v2645
      %v2733 = vunpack.c.h.b16 %v2645
      %v2734 = vunpack.c.l.b16 %v2646
      %v2735 = vunpack.c.h.b16 %v2646
      %v2736 = vunpack.c.l.b16 %v2647
      %v2737 = vunpack.c.h.b16 %v2647
      %v2738 = vunpack.c.l.b16 %v2648
      %v2739 = vunpack.c.h.b16 %v2648
      %v2740 = vunpack.c.l.b16 %v2649
      %v2741 = vunpack.c.h.b16 %v2649
      %v2742 = vunpack.c.l.b16 %v2650
      %v2743 = vunpack.c.h.b16 %v2650
      %v2744 = vunpack.c.l.b16 %v2651
      %v2745 = vunpack.c.h.b16 %v2651
      %v2746 = vunpack.c.l.b16 %v2652
      %v2747 = vunpack.c.h.b16 %v2652
      %v2748 = vunpack.c.l.b16 %v2653
      %v2749 = vunpack.c.h.b16 %v2653
      %v2750 = vunpack.c.l.b16 %v2654
      %v2751 = vunpack.c.h.b16 %v2654
      %v2752 = vunpack.c.l.b16 %v2655
      %v2753 = vunpack.c.h.b16 %v2655
      %v2754 = vunpack.c.l.b16 %v2656
      %v2755 = vunpack.c.h.b16 %v2656
      %v2756 = vunpack.c.l.b16 %v2657
      %v2757 = vunpack.c.h.b16 %v2657
      %v2758 = vunpack.c.l.b16 %v2658
      %v2759 = vunpack.c.h.b16 %v2658
      %v2760 = vunpack.c.l.b16 %v2659
      %v2761 = vunpack.c.h.b16 %v2659
      %v2762 = vunpack.c.l.b16 %v2660
      %v2763 = vunpack.c.h.b16 %v2660
      %v2764 = vunpack.c.l.b16 %v2661
      %v2765 = vunpack.c.h.b16 %v2661
      %v2766 = vunpack.c.l.b16 %v2662
      %v2767 = vunpack.c.h.b16 %v2662
      %v2768 = vunpack.c.l.b16 %v2663
      %v2769 = vunpack.c.h.b16 %v2663
      %v2770 = vunpack.c.l.b16 %v2664
      %v2771 = vunpack.c.h.b16 %v2664
      %v2772 = vunpack.c.l.b16 %v2665
      %v2773 = vunpack.c.h.b16 %v2665
      %v2774 = vpack.c.b16 %v2712, %v2710
      %v2775 = vpack.c.b16 %v2713, %v2711
      %v2776 = vpack.c.b16 %v2716, %v2714
      %v2777 = vpack.c.b16 %v2717, %v2715
      %v2778 = vpack.c.b16 %v2720, %v2718
      %v2779 = vpack.c.b16 %v2721, %v2719
      %v2780 = vpack.c.b16 %v2724, %v2722
      %v2781 = vpack.c.b16 %v2725, %v2723
      %v2782 = vpack.c.b16 %v2728, %v2726
      %v2783 = vpack.c.b16 %v2729, %v2727
      %v2784 = vpack.c.b16 %v2732, %v2730
      %v2785 = vpack.c.b16 %v2733, %v2731
      %v2786 = vpack.c.b16 %v2736, %v2734
      %v2787 = vpack.c.b16 %v2737, %v2735
      %v2788 = vpack.c.b16 %v2740, %v2738
      %v2789 = vpack.c.b16 %v2741, %v2739
      %v2790 = vpack.c.b16 %v2744, %v2742
      %v2791 = vpack.c.b16 %v2745, %v2743
      %v2792 = vpack.c.b16 %v2748, %v2746
      %v2793 = vpack.c.b16 %v2749, %v2747
      %v2794 = vpack.c.b16 %v2752, %v2750
      %v2795 = vpack.c.b16 %v2753, %v2751
      %v2796 = vpack.c.b16 %v2756, %v2754
      %v2797 = vpack.c.b16 %v2757, %v2755
      %v2798 = vpack.c.b16 %v2760, %v2758
      %v2799 = vpack.c.b16 %v2761, %v2759
      %v2800 = vpack.c.b16 %v2764, %v2762
      %v2801 = vpack.c.b16 %v2765, %v2763
      %v2802 = vpack.c.b16 %v2768, %v2766
      %v2803 = vpack.c.b16 %v2769, %v2767
      %v2804 = vpack.c.b16 %v2772, %v2770
      %v2805 = vpack.c.b16 %v2773, %v2771
      %2838 = vmatprep.subr.bf16.mxu0 %v2775
      %2839 = vmatpush1.bf16.msra.mxu0 %v2774
      %2840 = vmatprep.subr.bf16.mxu0 %v2777
      %2841 = vmatpush1.bf16.msra.mxu0 %v2776
      %2842 = vmatprep.subr.bf16.mxu0 %v2779
      %2843 = vmatpush1.bf16.msra.mxu0 %v2778
      %2844 = vmatprep.subr.bf16.mxu0 %v2781
      %2845 = vmatpush1.bf16.msra.mxu0 %v2780
      %2846 = vmatprep.subr.bf16.mxu0 %v2783
      %2847 = vmatpush1.bf16.msra.mxu0 %v2782
      %2848 = vmatprep.subr.bf16.mxu0 %v2785
      %2849 = vmatpush1.bf16.msra.mxu0 %v2784
      %2850 = vmatprep.subr.bf16.mxu0 %v2787
      %2851 = vmatpush1.bf16.msra.mxu0 %v2786
      %2852 = vmatprep.subr.bf16.mxu0 %v2789
      %2853 = vmatpush1.bf16.msra.mxu0 %v2788
      %2854 = vmatprep.subr.bf16.mxu0 %v2791
      %2855 = vmatpush1.bf16.msra.mxu0 %v2790
      %2856 = vmatprep.subr.bf16.mxu0 %v2793
      %2857 = vmatpush1.bf16.msra.mxu0 %v2792
      %2858 = vmatprep.subr.bf16.mxu0 %v2795
      %2859 = vmatpush1.bf16.msra.mxu0 %v2794
      %2860 = vmatprep.subr.bf16.mxu0 %v2797
      %2861 = vmatpush1.bf16.msra.mxu0 %v2796
      %2862 = vmatprep.subr.bf16.mxu0 %v2799
      %2863 = vmatpush1.bf16.msra.mxu0 %v2798
      %2864 = vmatprep.subr.bf16.mxu0 %v2801
      %2865 = vmatpush1.bf16.msra.mxu0 %v2800
      %2866 = vmatprep.subr.bf16.mxu0 %v2803
      %2867 = vmatpush1.bf16.msra.mxu0 %v2802
      %2868 = vmatprep.subr.bf16.mxu0 %v2805
      %2869 = vmatpush1.bf16.msra.mxu0 %v2804
      %2870 = vmatprep.mubr.bf16.mxu0 %v2619
      %2871 = vmatmul.mubr.bf16.gmra.mrb[0].mxu0 %v2618
      %v2872 = vpop.f32.mrb[0].mxu0
      %v2873 = vadd.f32 %v2671, %v2872
      %v2874 = vpop.f32.mrb[0].mxu0
      %v2875 = vadd.f32 %v2675, %v2874
      %v2876 = vpop.f32.mrb[0].mxu0
      %v2877 = vadd.f32 %v2671, %v2876
      %v2878 = vpop.f32.mrb[0].mxu0
      %v2879 = vadd.f32 %v2675, %v2878
      %2880 = vmatprep.mubr.bf16.mxu0 %v2621
      %2881 = vmatmul.mubr.bf16.gmra.mrb[0].mxu0 %v2620
      %v2882 = vpop.f32.mrb[0].mxu0
      %v2883 = vadd.f32 %v2671, %v2882
      %v2884 = vpop.f32.mrb[0].mxu0
      %v2885 = vadd.f32 %v2675, %v2884
      %v2886 = vpop.f32.mrb[0].mxu0
      %v2887 = vadd.f32 %v2671, %v2886
      %v2888 = vpop.f32.mrb[0].mxu0
      %v2889 = vadd.f32 %v2675, %v2888
      %2890 = vmatprep.mubr.bf16.mxu0 %v2623
      %2891 = vmatmul.mubr.bf16.gmra.mrb[0].mxu0 %v2622
      %v2892 = vpop.f32.mrb[0].mxu0
      %v2893 = vadd.f32 %v2671, %v2892
      %v2894 = vpop.f32.mrb[0].mxu0
      %v2895 = vadd.f32 %v2675, %v2894
      %v2896 = vpop.f32.mrb[0].mxu0
      %v2897 = vadd.f32 %v2671, %v2896
      %v2898 = vpop.f32.mrb[0].mxu0
      %v2899 = vadd.f32 %v2675, %v2898
      %2900 = vmatprep.mubr.bf16.mxu0 %v2625
      %2901 = vmatmul.mubr.bf16.gmra.mrb[0].mxu0 %v2624
      %v2902 = vpop.f32.mrb[0].mxu0
      %v2903 = vadd.f32 %v2671, %v2902
      %v2904 = vpop.f32.mrb[0].mxu0
      %v2905 = vadd.f32 %v2675, %v2904
      %v2906 = vpop.f32.mrb[0].mxu0
      %v2907 = vadd.f32 %v2671, %v2906
      %v2908 = vpop.f32.mrb[0].mxu0
      %v2909 = vadd.f32 %v2675, %v2908
      %2910 = vmatprep.mubr.bf16.mxu0 %v2627
      %2911 = vmatmul.mubr.bf16.gmra.mrb[0].mxu0 %v2626
      %v2912 = vpop.f32.mrb[0].mxu0
      %v2913 = vadd.f32 %v2671, %v2912
      %v2914 = vpop.f32.mrb[0].mxu0
      %v2915 = vadd.f32 %v2675, %v2914
      %v2916 = vpop.f32.mrb[0].mxu0
      %v2917 = vadd.f32 %v2671, %v2916
      %v2918 = vpop.f32.mrb[0].mxu0
      %v2919 = vadd.f32 %v2675, %v2918
      %2920 = vmatprep.mubr.bf16.mxu0 %v2629
      %2921 = vmatmul.mubr.bf16.gmra.mrb[0].mxu0 %v2628
      %v2922 = vpop.f32.mrb[0].mxu0
      %v2923 = vadd.f32 %v2671, %v2922
      %v2924 = vpop.f32.mrb[0].mxu0
      %v2925 = vadd.f32 %v2675, %v2924
      %v2926 = vpop.f32.mrb[0].mxu0
      %v2927 = vadd.f32 %v2671, %v2926
      %v2928 = vpop.f32.mrb[0].mxu0
      %v2929 = vadd.f32 %v2675, %v2928
      %2930 = vmatprep.mubr.bf16.mxu0 %v2631
      %2931 = vmatmul.mubr.bf16.gmra.mrb[0].mxu0 %v2630
      %v2932 = vpop.f32.mrb[0].mxu0
      %v2933 = vadd.f32 %v2671, %v2932
      %v2934 = vpop.f32.mrb[0].mxu0
      %v2935 = vadd.f32 %v2675, %v2934
      %v2936 = vpop.f32.mrb[0].mxu0
      %v2937 = vadd.f32 %v2671, %v2936
      %v2938 = vpop.f32.mrb[0].mxu0
      %v2939 = vadd.f32 %v2675, %v2938
      %2940 = vmatprep.mubr.bf16.mxu0 %v2633
      %2941 = vmatmul.mubr.bf16.gmra.mrb[0].mxu0 %v2632
      %v2942 = vpop.f32.mrb[0].mxu0
      %v2943 = vadd.f32 %v2671, %v2942
      %v2944 = vpop.f32.mrb[0].mxu0
      %v2945 = vadd.f32 %v2675, %v2944
      %v2946 = vpop.f32.mrb[0].mxu0
      %v2947 = vadd.f32 %v2671, %v2946
      %v2948 = vpop.f32.mrb[0].mxu0
      %v2949 = vadd.f32 %v2675, %v2948
      %2950 = vdwg.mxu0
      %v2951 = vadd.f32 %v442, %v2873
      %v2952 = vadd.f32 %v443, %v2875
      %v2953 = vadd.f32 %v444, %v2877
      %v2954 = vadd.f32 %v445, %v2879
      %v2955 = vadd.f32 %v446, %v2883
      %v2956 = vadd.f32 %v447, %v2885
      %v2957 = vadd.f32 %v448, %v2887
      %v2958 = vadd.f32 %v449, %v2889
      %v2959 = vadd.f32 %v450, %v2893
      %v2960 = vadd.f32 %v451, %v2895
      %v2961 = vadd.f32 %v452, %v2897
      %v2962 = vadd.f32 %v453, %v2899
      %v2963 = vadd.f32 %v454, %v2903
      %v2964 = vadd.f32 %v455, %v2905
      %v2965 = vadd.f32 %v456, %v2907
      %v2966 = vadd.f32 %v457, %v2909
      %v2967 = vadd.f32 %v458, %v2913
      %v2968 = vadd.f32 %v459, %v2915
      %v2969 = vadd.f32 %v460, %v2917
      %v2970 = vadd.f32 %v461, %v2919
      %v2971 = vadd.f32 %v462, %v2923
      %v2972 = vadd.f32 %v463, %v2925
      %v2973 = vadd.f32 %v464, %v2927
      %v2974 = vadd.f32 %v465, %v2929
      %v2975 = vadd.f32 %v466, %v2933
      %v2976 = vadd.f32 %v467, %v2935
      %v2977 = vadd.f32 %v468, %v2937
      %v2978 = vadd.f32 %v469, %v2939
      %v2979 = vadd.f32 %v470, %v2943
      %v2980 = vadd.f32 %v471, %v2945
      %v2981 = vadd.f32 %v472, %v2947
      %v2982 = vadd.f32 %v473, %v2949
      %v2983 = vld [vmem:[%s7] sm:$0x3]
      %v2984 = vld [vmem:[%s8] sm:$0x3]
      %v2985 = vadd.f32 %v2951, %v2952
      %2986 = vadd.xlane.f32.xlu0 %v2985
      %v2987 = vpop.xlane.xlu0 %2986
      %v2988 = vadd.f32 %v2953, %v2954
      %2989 = vadd.xlane.f32.xlu0 %v2988
      %v2990 = vpop.xlane.xlu0 %2989
      %v2991 = vadd.f32 %v2955, %v2956
      %2992 = vadd.xlane.f32.xlu0 %v2991
      %v2993 = vpop.xlane.xlu0 %2992
      %v2994 = vadd.f32 %v2957, %v2958
      %2995 = vadd.xlane.f32.xlu0 %v2994
      %v2996 = vpop.xlane.xlu0 %2995
      %v2997 = vadd.f32 %v2959, %v2960
      %2998 = vadd.xlane.f32.xlu0 %v2997
      %v2999 = vpop.xlane.xlu0 %2998
      %v3000 = vadd.f32 %v2961, %v2962
      %3001 = vadd.xlane.f32.xlu0 %v3000
      %v3002 = vpop.xlane.xlu0 %3001
      %v3003 = vadd.f32 %v2963, %v2964
      %3004 = vadd.xlane.f32.xlu0 %v3003
      %v3005 = vpop.xlane.xlu0 %3004
      %v3006 = vadd.f32 %v2965, %v2966
      %3007 = vadd.xlane.f32.xlu0 %v3006
      %v3008 = vpop.xlane.xlu0 %3007
      %v3009 = vadd.f32 %v2967, %v2968
      %3010 = vadd.xlane.f32.xlu0 %v3009
      %v3011 = vpop.xlane.xlu0 %3010
      %v3012 = vadd.f32 %v2969, %v2970
      %3013 = vadd.xlane.f32.xlu0 %v3012
      %v3014 = vpop.xlane.xlu0 %3013
      %v3015 = vadd.f32 %v2971, %v2972
      %3016 = vadd.xlane.f32.xlu0 %v3015
      %v3017 = vpop.xlane.xlu0 %3016
      %v3018 = vadd.f32 %v2973, %v2974
      %3019 = vadd.xlane.f32.xlu0 %v3018
      %v3020 = vpop.xlane.xlu0 %3019
      %v3021 = vadd.f32 %v2975, %v2976
      %3022 = vadd.xlane.f32.xlu0 %v3021
      %v3023 = vpop.xlane.xlu0 %3022
      %v3024 = vadd.f32 %v2977, %v2978
      %3025 = vadd.xlane.f32.xlu0 %v3024
      %v3026 = vpop.xlane.xlu0 %3025
      %v3027 = vadd.f32 %v2979, %v2980
      %3028 = vadd.xlane.f32.xlu0 %v3027
      %v3029 = vpop.xlane.xlu0 %3028
      %v3030 = vadd.f32 %v2981, %v2982
      %3031 = vadd.xlane.f32.xlu0 %v3030
      %v3032 = vpop.xlane.xlu0 %3031
      %v3033 = vmul.f32 %v2987, %v524
      %v3034 = vmul.f32 %v2990, %v524
      %v3035 = vmul.f32 %v2993, %v524
      %v3036 = vmul.f32 %v2996, %v524
      %v3037 = vmul.f32 %v2999, %v524
      %v3038 = vmul.f32 %v3002, %v524
      %v3039 = vmul.f32 %v3005, %v524
      %v3040 = vmul.f32 %v3008, %v524
      %v3041 = vmul.f32 %v3011, %v524
      %v3042 = vmul.f32 %v3014, %v524
      %v3043 = vmul.f32 %v3017, %v524
      %v3044 = vmul.f32 %v3020, %v524
      %v3045 = vmul.f32 %v3023, %v524
      %v3046 = vmul.f32 %v3026, %v524
      %v3047 = vmul.f32 %v3029, %v524
      %v3048 = vmul.f32 %v3032, %v524
      %v3049 = vsub.f32 %v2951, %v3033
      %v3050 = vsub.f32 %v2952, %v3033
      %v3051 = vsub.f32 %v2953, %v3034
      %v3052 = vsub.f32 %v2954, %v3034
      %v3053 = vsub.f32 %v2955, %v3035
      %v3054 = vsub.f32 %v2956, %v3035
      %v3055 = vsub.f32 %v2957, %v3036
      %v3056 = vsub.f32 %v2958, %v3036
      %v3057 = vsub.f32 %v2959, %v3037
      %v3058 = vsub.f32 %v2960, %v3037
      %v3059 = vsub.f32 %v2961, %v3038
      %v3060 = vsub.f32 %v2962, %v3038
      %v3061 = vsub.f32 %v2963, %v3039
      %v3062 = vsub.f32 %v2964, %v3039
      %v3063 = vsub.f32 %v2965, %v3040
      %v3064 = vsub.f32 %v2966, %v3040
      %v3065 = vsub.f32 %v2967, %v3041
      %v3066 = vsub.f32 %v2968, %v3041
      %v3067 = vsub.f32 %v2969, %v3042
      %v3068 = vsub.f32 %v2970, %v3042
      %v3069 = vsub.f32 %v2971, %v3043
      %v3070 = vsub.f32 %v2972, %v3043
      %v3071 = vsub.f32 %v2973, %v3044
      %v3072 = vsub.f32 %v2974, %v3044
      %v3073 = vsub.f32 %v2975, %v3045
      %v3074 = vsub.f32 %v2976, %v3045
      %v3075 = vsub.f32 %v2977, %v3046
      %v3076 = vsub.f32 %v2978, %v3046
      %v3077 = vsub.f32 %v2979, %v3047
      %v3078 = vsub.f32 %v2980, %v3047
      %v3079 = vsub.f32 %v2981, %v3048
      %v3080 = vsub.f32 %v2982, %v3048
      %v3081 = vmul.f32 %v3049, %v3049
      %v3082 = vmul.f32 %v3050, %v3050
      %v3083 = vmul.f32 %v3051, %v3051
      %v3084 = vmul.f32 %v3052, %v3052
      %v3085 = vmul.f32 %v3053, %v3053
      %v3086 = vmul.f32 %v3054, %v3054
      %v3087 = vmul.f32 %v3055, %v3055
      %v3088 = vmul.f32 %v3056, %v3056
      %v3089 = vmul.f32 %v3057, %v3057
      %v3090 = vmul.f32 %v3058, %v3058
      %v3091 = vmul.f32 %v3059, %v3059
      %v3092 = vmul.f32 %v3060, %v3060
      %v3093 = vmul.f32 %v3061, %v3061
      %v3094 = vmul.f32 %v3062, %v3062
      %v3095 = vmul.f32 %v3063, %v3063
      %v3096 = vmul.f32 %v3064, %v3064
      %v3097 = vmul.f32 %v3065, %v3065
      %v3098 = vmul.f32 %v3066, %v3066
      %v3099 = vmul.f32 %v3067, %v3067
      %v3100 = vmul.f32 %v3068, %v3068
      %v3101 = vmul.f32 %v3069, %v3069
      %v3102 = vmul.f32 %v3070, %v3070
      %v3103 = vmul.f32 %v3071, %v3071
      %v3104 = vmul.f32 %v3072, %v3072
      %v3105 = vmul.f32 %v3073, %v3073
      %v3106 = vmul.f32 %v3074, %v3074
      %v3107 = vmul.f32 %v3075, %v3075
      %v3108 = vmul.f32 %v3076, %v3076
      %v3109 = vmul.f32 %v3077, %v3077
      %v3110 = vmul.f32 %v3078, %v3078
      %v3111 = vmul.f32 %v3079, %v3079
      %v3112 = vmul.f32 %v3080, %v3080
      %v3113 = vadd.f32 %v3081, %v3082
      %3114 = vadd.xlane.f32.xlu0 %v3113
      %v3115 = vpop.xlane.xlu0 %3114
      %v3116 = vadd.f32 %v3083, %v3084
      %3117 = vadd.xlane.f32.xlu0 %v3116
      %v3118 = vpop.xlane.xlu0 %3117
      %v3119 = vadd.f32 %v3085, %v3086
      %3120 = vadd.xlane.f32.xlu0 %v3119
      %v3121 = vpop.xlane.xlu0 %3120
      %v3122 = vadd.f32 %v3087, %v3088
      %3123 = vadd.xlane.f32.xlu0 %v3122
      %v3124 = vpop.xlane.xlu0 %3123
      %v3125 = vadd.f32 %v3089, %v3090
      %3126 = vadd.xlane.f32.xlu0 %v3125
      %v3127 = vpop.xlane.xlu0 %3126
      %v3128 = vadd.f32 %v3091, %v3092
      %3129 = vadd.xlane.f32.xlu0 %v3128
      %v3130 = vpop.xlane.xlu0 %3129
      %v3131 = vadd.f32 %v3093, %v3094
      %3132 = vadd.xlane.f32.xlu0 %v3131
      %v3133 = vpop.xlane.xlu0 %3132
      %v3134 = vadd.f32 %v3095, %v3096
      %3135 = vadd.xlane.f32.xlu0 %v3134
      %v3136 = vpop.xlane.xlu0 %3135
      %v3137 = vadd.f32 %v3097, %v3098
      %3138 = vadd.xlane.f32.xlu0 %v3137
      %v3139 = vpop.xlane.xlu0 %3138
      %v3140 = vadd.f32 %v3099, %v3100
      %3141 = vadd.xlane.f32.xlu0 %v3140
      %v3142 = vpop.xlane.xlu0 %3141
      %v3143 = vadd.f32 %v3101, %v3102
      %3144 = vadd.xlane.f32.xlu0 %v3143
      %v3145 = vpop.xlane.xlu0 %3144
      %v3146 = vadd.f32 %v3103, %v3104
      %3147 = vadd.xlane.f32.xlu0 %v3146
      %v3148 = vpop.xlane.xlu0 %3147
      %v3149 = vadd.f32 %v3105, %v3106
      %3150 = vadd.xlane.f32.xlu0 %v3149
      %v3151 = vpop.xlane.xlu0 %3150
      %v3152 = vadd.f32 %v3107, %v3108
      %3153 = vadd.xlane.f32.xlu0 %v3152
      %v3154 = vpop.xlane.xlu0 %3153
      %v3155 = vadd.f32 %v3109, %v3110
      %3156 = vadd.xlane.f32.xlu0 %v3155
      %v3157 = vpop.xlane.xlu0 %3156
      %v3158 = vadd.f32 %v3111, %v3112
      %3159 = vadd.xlane.f32.xlu0 %v3158
      %v3160 = vpop.xlane.xlu0 %3159
      %v3161 = vmul.f32 %v3115, %v524
      %v3162 = vmul.f32 %v3118, %v524
      %v3163 = vmul.f32 %v3121, %v524
      %v3164 = vmul.f32 %v3124, %v524
      %v3165 = vmul.f32 %v3127, %v524
      %v3166 = vmul.f32 %v3130, %v524
      %v3167 = vmul.f32 %v3133, %v524
      %v3168 = vmul.f32 %v3136, %v524
      %v3169 = vmul.f32 %v3139, %v524
      %v3170 = vmul.f32 %v3142, %v524
      %v3171 = vmul.f32 %v3145, %v524
      %v3172 = vmul.f32 %v3148, %v524
      %v3173 = vmul.f32 %v3151, %v524
      %v3174 = vmul.f32 %v3154, %v524
      %v3175 = vmul.f32 %v3157, %v524
      %v3176 = vmul.f32 %v3160, %v524
      %v3177 = vadd.f32 %v3161, 1e-06
      %v3178 = vadd.f32 %v3162, 1e-06
      %v3179 = vadd.f32 %v3163, 1e-06
      %v3180 = vadd.f32 %v3164, 1e-06
      %v3181 = vadd.f32 %v3165, 1e-06
      %v3182 = vadd.f32 %v3166, 1e-06
      %v3183 = vadd.f32 %v3167, 1e-06
      %v3184 = vadd.f32 %v3168, 1e-06
      %v3185 = vadd.f32 %v3169, 1e-06
      %v3186 = vadd.f32 %v3170, 1e-06
      %v3187 = vadd.f32 %v3171, 1e-06
      %v3188 = vadd.f32 %v3172, 1e-06
      %v3189 = vadd.f32 %v3173, 1e-06
      %v3190 = vadd.f32 %v3174, 1e-06
      %v3191 = vadd.f32 %v3175, 1e-06
      %v3192 = vadd.f32 %v3176, 1e-06
      %v3193 = vrsqrt.pop %v3177
      %v3194 = vrsqrt.pop %v3178
      %v3195 = vrsqrt.pop %v3179
      %v3196 = vrsqrt.pop %v3180
      %v3197 = vrsqrt.pop %v3181
      %v3198 = vrsqrt.pop %v3182
      %v3199 = vrsqrt.pop %v3183
      %v3200 = vrsqrt.pop %v3184
      %v3201 = vrsqrt.pop %v3185
      %v3202 = vrsqrt.pop %v3186
      %v3203 = vrsqrt.pop %v3187
      %v3204 = vrsqrt.pop %v3188
      %v3205 = vrsqrt.pop %v3189
      %v3206 = vrsqrt.pop %v3190
      %v3207 = vrsqrt.pop %v3191
      %v3208 = vrsqrt.pop %v3192
      %v3209 = vmul.f32 %v3049, %v3193
      %v3210 = vmul.f32 %v3050, %v3193
      %v3211 = vmul.f32 %v3051, %v3194
      %v3212 = vmul.f32 %v3052, %v3194
      %v3213 = vmul.f32 %v3053, %v3195
      %v3214 = vmul.f32 %v3054, %v3195
      %v3215 = vmul.f32 %v3055, %v3196
      %v3216 = vmul.f32 %v3056, %v3196
      %v3217 = vmul.f32 %v3057, %v3197
      %v3218 = vmul.f32 %v3058, %v3197
      %v3219 = vmul.f32 %v3059, %v3198
      %v3220 = vmul.f32 %v3060, %v3198
      %v3221 = vmul.f32 %v3061, %v3199
      %v3222 = vmul.f32 %v3062, %v3199
      %v3223 = vmul.f32 %v3063, %v3200
      %v3224 = vmul.f32 %v3064, %v3200
      %v3225 = vmul.f32 %v3065, %v3201
      %v3226 = vmul.f32 %v3066, %v3201
      %v3227 = vmul.f32 %v3067, %v3202
      %v3228 = vmul.f32 %v3068, %v3202
      %v3229 = vmul.f32 %v3069, %v3203
      %v3230 = vmul.f32 %v3070, %v3203
      %v3231 = vmul.f32 %v3071, %v3204
      %v3232 = vmul.f32 %v3072, %v3204
      %v3233 = vmul.f32 %v3073, %v3205
      %v3234 = vmul.f32 %v3074, %v3205
      %v3235 = vmul.f32 %v3075, %v3206
      %v3236 = vmul.f32 %v3076, %v3206
      %v3237 = vmul.f32 %v3077, %v3207
      %v3238 = vmul.f32 %v3078, %v3207
      %v3239 = vmul.f32 %v3079, %v3208
      %v3240 = vmul.f32 %v3080, %v3208
      %v3242 = vlaneseq
      %v3243 = vshrl.u32 %v3242, 7
      %v3244 = vsub.s32 0, %v3243
      %v3245 = vrot.slane %v2983, %v3244
      %v3246 = vlaneseq
      %v3247 = vshrl.u32 %v3246, 7
      %v3248 = vsub.s32 1, %v3247
      %v3249 = vrot.slane %v2983, %v3248
      %v3252 = vmul.f32 %v3209, %v3245
      %v3253 = vmul.f32 %v3210, %v3249
      %v3254 = vmul.f32 %v3211, %v3245
      %v3255 = vmul.f32 %v3212, %v3249
      %v3256 = vmul.f32 %v3213, %v3245
      %v3257 = vmul.f32 %v3214, %v3249
      %v3258 = vmul.f32 %v3215, %v3245
      %v3259 = vmul.f32 %v3216, %v3249
      %v3260 = vmul.f32 %v3217, %v3245
      %v3261 = vmul.f32 %v3218, %v3249
      %v3262 = vmul.f32 %v3219, %v3245
      %v3263 = vmul.f32 %v3220, %v3249
      %v3264 = vmul.f32 %v3221, %v3245
      %v3265 = vmul.f32 %v3222, %v3249
      %v3266 = vmul.f32 %v3223, %v3245
      %v3267 = vmul.f32 %v3224, %v3249
      %v3268 = vmul.f32 %v3225, %v3245
      %v3269 = vmul.f32 %v3226, %v3249
      %v3270 = vmul.f32 %v3227, %v3245
      %v3271 = vmul.f32 %v3228, %v3249
      %v3272 = vmul.f32 %v3229, %v3245
      %v3273 = vmul.f32 %v3230, %v3249
      %v3274 = vmul.f32 %v3231, %v3245
      %v3275 = vmul.f32 %v3232, %v3249
      %v3276 = vmul.f32 %v3233, %v3245
      %v3277 = vmul.f32 %v3234, %v3249
      %v3278 = vmul.f32 %v3235, %v3245
      %v3279 = vmul.f32 %v3236, %v3249
      %v3280 = vmul.f32 %v3237, %v3245
      %v3281 = vmul.f32 %v3238, %v3249
      %v3282 = vmul.f32 %v3239, %v3245
      %v3283 = vmul.f32 %v3240, %v3249
      %v3285 = vlaneseq
      %v3286 = vshrl.u32 %v3285, 7
      %v3287 = vsub.s32 0, %v3286
      %v3288 = vrot.slane %v2984, %v3287
      %v3289 = vlaneseq
      %v3290 = vshrl.u32 %v3289, 7
      %v3291 = vsub.s32 1, %v3290
      %v3292 = vrot.slane %v2984, %v3291
      %v3295 = vadd.f32 %v3252, %v3288
      %v3296 = vadd.f32 %v3253, %v3292
      %v3297 = vadd.f32 %v3254, %v3288
      %v3298 = vadd.f32 %v3255, %v3292
      %v3299 = vadd.f32 %v3256, %v3288
      %v3300 = vadd.f32 %v3257, %v3292
      %v3301 = vadd.f32 %v3258, %v3288
      %v3302 = vadd.f32 %v3259, %v3292
      %v3303 = vadd.f32 %v3260, %v3288
      %v3304 = vadd.f32 %v3261, %v3292
      %v3305 = vadd.f32 %v3262, %v3288
      %v3306 = vadd.f32 %v3263, %v3292
      %v3307 = vadd.f32 %v3264, %v3288
      %v3308 = vadd.f32 %v3265, %v3292
      %v3309 = vadd.f32 %v3266, %v3288
      %v3310 = vadd.f32 %v3267, %v3292
      %v3311 = vadd.f32 %v3268, %v3288
      %v3312 = vadd.f32 %v3269, %v3292
      %v3313 = vadd.f32 %v3270, %v3288
      %v3314 = vadd.f32 %v3271, %v3292
      %v3315 = vadd.f32 %v3272, %v3288
      %v3316 = vadd.f32 %v3273, %v3292
      %v3317 = vadd.f32 %v3274, %v3288
      %v3318 = vadd.f32 %v3275, %v3292
      %v3319 = vadd.f32 %v3276, %v3288
      %v3320 = vadd.f32 %v3277, %v3292
      %v3321 = vadd.f32 %v3278, %v3288
      %v3322 = vadd.f32 %v3279, %v3292
      %v3323 = vadd.f32 %v3280, %v3288
      %v3324 = vadd.f32 %v3281, %v3292
      %v3325 = vadd.f32 %v3282, %v3288
      %v3326 = vadd.f32 %v3283, %v3292
      %v3327 = vpack.c.bf16 %v3297, %v3295
      %v3328 = vpack.c.bf16 %v3298, %v3296
      %v3329 = vpack.c.bf16 %v3301, %v3299
      %v3330 = vpack.c.bf16 %v3302, %v3300
      %v3331 = vpack.c.bf16 %v3305, %v3303
      %v3332 = vpack.c.bf16 %v3306, %v3304
      %v3333 = vpack.c.bf16 %v3309, %v3307
      %v3334 = vpack.c.bf16 %v3310, %v3308
      %v3335 = vpack.c.bf16 %v3313, %v3311
      %v3336 = vpack.c.bf16 %v3314, %v3312
      %v3337 = vpack.c.bf16 %v3317, %v3315
      %v3338 = vpack.c.bf16 %v3318, %v3316
      %v3339 = vpack.c.bf16 %v3321, %v3319
      %v3340 = vpack.c.bf16 %v3322, %v3320
      %v3341 = vpack.c.bf16 %v3325, %v3323
      %v3342 = vpack.c.bf16 %v3326, %v3324
      %v3343 = vld [vmem:[%s9] sm:$0xff]
      %v3344 = vld [vmem:[%s9 + $0x8] sm:$0xff]
      %v3345 = vld [vmem:[%s9 + $0x10] sm:$0xff]
      %v3346 = vld [vmem:[%s9 + $0x18] sm:$0xff]
      %v3347 = vld [vmem:[%s9 + $0x20] sm:$0xff]
      %v3348 = vld [vmem:[%s9 + $0x28] sm:$0xff]
      %v3349 = vld [vmem:[%s9 + $0x30] sm:$0xff]
      %v3350 = vld [vmem:[%s9 + $0x38] sm:$0xff]
      %v3351 = vld [vmem:[%s9 + $0x40] sm:$0xff]
      %v3352 = vld [vmem:[%s9 + $0x48] sm:$0xff]
      %v3353 = vld [vmem:[%s9 + $0x50] sm:$0xff]
      %v3354 = vld [vmem:[%s9 + $0x58] sm:$0xff]
      %v3355 = vld [vmem:[%s9 + $0x60] sm:$0xff]
      %v3356 = vld [vmem:[%s9 + $0x68] sm:$0xff]
      %v3357 = vld [vmem:[%s9 + $0x70] sm:$0xff]
      %v3358 = vld [vmem:[%s9 + $0x78] sm:$0xff]
      %v3359 = vld [vmem:[%s9 + $0x80] sm:$0xff]
      %v3360 = vld [vmem:[%s9 + $0x88] sm:$0xff]
      %v3361 = vld [vmem:[%s9 + $0x90] sm:$0xff]
      %v3362 = vld [vmem:[%s9 + $0x98] sm:$0xff]
      %v3363 = vld [vmem:[%s9 + $0xa0] sm:$0xff]
      %v3364 = vld [vmem:[%s9 + $0xa8] sm:$0xff]
      %v3365 = vld [vmem:[%s9 + $0xb0] sm:$0xff]
      %v3366 = vld [vmem:[%s9 + $0xb8] sm:$0xff]
      %v3367 = vld [vmem:[%s9 + $0xc0] sm:$0xff]
      %v3368 = vld [vmem:[%s9 + $0xc8] sm:$0xff]
      %v3369 = vld [vmem:[%s9 + $0xd0] sm:$0xff]
      %v3370 = vld [vmem:[%s9 + $0xd8] sm:$0xff]
      %v3371 = vld [vmem:[%s9 + $0xe0] sm:$0xff]
      %v3372 = vld [vmem:[%s9 + $0xe8] sm:$0xff]
      %v3373 = vld [vmem:[%s9 + $0xf0] sm:$0xff]
      %v3374 = vld [vmem:[%s9 + $0xf8] sm:$0xff]
      %v3375 = vld [vmem:[%s9 + $0x100] sm:$0xff]
      %v3376 = vld [vmem:[%s9 + $0x108] sm:$0xff]
      %v3377 = vld [vmem:[%s9 + $0x110] sm:$0xff]
      %v3378 = vld [vmem:[%s9 + $0x118] sm:$0xff]
      %v3379 = vld [vmem:[%s9 + $0x120] sm:$0xff]
      %v3380 = vld [vmem:[%s9 + $0x128] sm:$0xff]
      %v3381 = vld [vmem:[%s9 + $0x130] sm:$0xff]
      %v3382 = vld [vmem:[%s9 + $0x138] sm:$0xff]
      %v3383 = vld [vmem:[%s9 + $0x140] sm:$0xff]
      %v3384 = vld [vmem:[%s9 + $0x148] sm:$0xff]
      %v3385 = vld [vmem:[%s9 + $0x150] sm:$0xff]
      %v3386 = vld [vmem:[%s9 + $0x158] sm:$0xff]
      %v3387 = vld [vmem:[%s9 + $0x160] sm:$0xff]
      %v3388 = vld [vmem:[%s9 + $0x168] sm:$0xff]
      %v3389 = vld [vmem:[%s9 + $0x170] sm:$0xff]
      %v3390 = vld [vmem:[%s9 + $0x178] sm:$0xff]
      %v3391 = vld [vmem:[%s9 + $0x180] sm:$0xff]
      %v3392 = vld [vmem:[%s9 + $0x188] sm:$0xff]
      %v3393 = vld [vmem:[%s9 + $0x190] sm:$0xff]
      %v3394 = vld [vmem:[%s9 + $0x198] sm:$0xff]
      %v3395 = vld [vmem:[%s9 + $0x1a0] sm:$0xff]
      %v3396 = vld [vmem:[%s9 + $0x1a8] sm:$0xff]
      %v3397 = vld [vmem:[%s9 + $0x1b0] sm:$0xff]
      %v3398 = vld [vmem:[%s9 + $0x1b8] sm:$0xff]
      %v3399 = vld [vmem:[%s9 + $0x1c0] sm:$0xff]
      %v3400 = vld [vmem:[%s9 + $0x1c8] sm:$0xff]
      %v3401 = vld [vmem:[%s9 + $0x1d0] sm:$0xff]
      %v3402 = vld [vmem:[%s9 + $0x1d8] sm:$0xff]
      %v3403 = vld [vmem:[%s9 + $0x1e0] sm:$0xff]
      %v3404 = vld [vmem:[%s9 + $0x1e8] sm:$0xff]
      %v3405 = vld [vmem:[%s9 + $0x1f0] sm:$0xff]
      %v3406 = vld [vmem:[%s9 + $0x1f8] sm:$0xff]
      %v3407 = vld [vmem:[%s9 + $0x200] sm:$0xff]
      %v3408 = vld [vmem:[%s9 + $0x208] sm:$0xff]
      %v3409 = vld [vmem:[%s9 + $0x210] sm:$0xff]
      %v3410 = vld [vmem:[%s9 + $0x218] sm:$0xff]
      %v3411 = vld [vmem:[%s9 + $0x220] sm:$0xff]
      %v3412 = vld [vmem:[%s9 + $0x228] sm:$0xff]
      %v3413 = vld [vmem:[%s9 + $0x230] sm:$0xff]
      %v3414 = vld [vmem:[%s9 + $0x238] sm:$0xff]
      %v3415 = vld [vmem:[%s9 + $0x240] sm:$0xff]
      %v3416 = vld [vmem:[%s9 + $0x248] sm:$0xff]
      %v3417 = vld [vmem:[%s9 + $0x250] sm:$0xff]
      %v3418 = vld [vmem:[%s9 + $0x258] sm:$0xff]
      %v3419 = vld [vmem:[%s9 + $0x260] sm:$0xff]
      %v3420 = vld [vmem:[%s9 + $0x268] sm:$0xff]
      %v3421 = vld [vmem:[%s9 + $0x270] sm:$0xff]
      %v3422 = vld [vmem:[%s9 + $0x278] sm:$0xff]
      %v3423 = vld [vmem:[%s9 + $0x280] sm:$0xff]
      %v3424 = vld [vmem:[%s9 + $0x288] sm:$0xff]
      %v3425 = vld [vmem:[%s9 + $0x290] sm:$0xff]
      %v3426 = vld [vmem:[%s9 + $0x298] sm:$0xff]
      %v3427 = vld [vmem:[%s9 + $0x2a0] sm:$0xff]
      %v3428 = vld [vmem:[%s9 + $0x2a8] sm:$0xff]
      %v3429 = vld [vmem:[%s9 + $0x2b0] sm:$0xff]
      %v3430 = vld [vmem:[%s9 + $0x2b8] sm:$0xff]
      %v3431 = vld [vmem:[%s9 + $0x2c0] sm:$0xff]
      %v3432 = vld [vmem:[%s9 + $0x2c8] sm:$0xff]
      %v3433 = vld [vmem:[%s9 + $0x2d0] sm:$0xff]
      %v3434 = vld [vmem:[%s9 + $0x2d8] sm:$0xff]
      %v3435 = vld [vmem:[%s9 + $0x2e0] sm:$0xff]
      %v3436 = vld [vmem:[%s9 + $0x2e8] sm:$0xff]
      %v3437 = vld [vmem:[%s9 + $0x2f0] sm:$0xff]
      %v3438 = vld [vmem:[%s9 + $0x2f8] sm:$0xff]
      %v3439 = vld [vmem:[%s9 + $0x300] sm:$0xff]
      %v3440 = vld [vmem:[%s9 + $0x308] sm:$0xff]
      %v3441 = vld [vmem:[%s9 + $0x310] sm:$0xff]
      %v3442 = vld [vmem:[%s9 + $0x318] sm:$0xff]
      %v3443 = vld [vmem:[%s9 + $0x320] sm:$0xff]
      %v3444 = vld [vmem:[%s9 + $0x328] sm:$0xff]
      %v3445 = vld [vmem:[%s9 + $0x330] sm:$0xff]
      %v3446 = vld [vmem:[%s9 + $0x338] sm:$0xff]
      %v3447 = vld [vmem:[%s9 + $0x340] sm:$0xff]
      %v3448 = vld [vmem:[%s9 + $0x348] sm:$0xff]
      %v3449 = vld [vmem:[%s9 + $0x350] sm:$0xff]
      %v3450 = vld [vmem:[%s9 + $0x358] sm:$0xff]
      %v3451 = vld [vmem:[%s9 + $0x360] sm:$0xff]
      %v3452 = vld [vmem:[%s9 + $0x368] sm:$0xff]
      %v3453 = vld [vmem:[%s9 + $0x370] sm:$0xff]
      %v3454 = vld [vmem:[%s9 + $0x378] sm:$0xff]
      %v3455 = vld [vmem:[%s9 + $0x380] sm:$0xff]
      %v3456 = vld [vmem:[%s9 + $0x388] sm:$0xff]
      %v3457 = vld [vmem:[%s9 + $0x390] sm:$0xff]
      %v3458 = vld [vmem:[%s9 + $0x398] sm:$0xff]
      %v3459 = vld [vmem:[%s9 + $0x3a0] sm:$0xff]
      %v3460 = vld [vmem:[%s9 + $0x3a8] sm:$0xff]
      %v3461 = vld [vmem:[%s9 + $0x3b0] sm:$0xff]
      %v3462 = vld [vmem:[%s9 + $0x3b8] sm:$0xff]
      %v3463 = vld [vmem:[%s9 + $0x3c0] sm:$0xff]
      %v3464 = vld [vmem:[%s9 + $0x3c8] sm:$0xff]
      %v3465 = vld [vmem:[%s9 + $0x3d0] sm:$0xff]
      %v3466 = vld [vmem:[%s9 + $0x3d8] sm:$0xff]
      %v3467 = vld [vmem:[%s9 + $0x3e0] sm:$0xff]
      %v3468 = vld [vmem:[%s9 + $0x3e8] sm:$0xff]
      %v3469 = vld [vmem:[%s9 + $0x3f0] sm:$0xff]
      %v3470 = vld [vmem:[%s9 + $0x3f8] sm:$0xff]
      %v3471 = vld [vmem:[%s10] sm:$0xff]
      %v3473 = vlaneseq
      %v3474 = vshrl.u32 %v3473, 7
      %v3475 = vsub.s32 0, %v3474
      %v3476 = vrot.slane %v3471, %v3475
      %v3477 = vlaneseq
      %v3478 = vshrl.u32 %v3477, 7
      %v3479 = vsub.s32 1, %v3478
      %v3480 = vrot.slane %v3471, %v3479
      %v3481 = vlaneseq
      %v3482 = vshrl.u32 %v3481, 7
      %v3483 = vsub.s32 2, %v3482
      %v3484 = vrot.slane %v3471, %v3483
      %v3485 = vlaneseq
      %v3486 = vshrl.u32 %v3485, 7
      %v3487 = vsub.s32 3, %v3486
      %v3488 = vrot.slane %v3471, %v3487
      %v3489 = vlaneseq
      %v3490 = vshrl.u32 %v3489, 7
      %v3491 = vsub.s32 4, %v3490
      %v3492 = vrot.slane %v3471, %v3491
      %v3493 = vlaneseq
      %v3494 = vshrl.u32 %v3493, 7
      %v3495 = vsub.s32 5, %v3494
      %v3496 = vrot.slane %v3471, %v3495
      %v3497 = vlaneseq
      %v3498 = vshrl.u32 %v3497, 7
      %v3499 = vsub.s32 6, %v3498
      %v3500 = vrot.slane %v3471, %v3499
      %v3501 = vlaneseq
      %v3502 = vshrl.u32 %v3501, 7
      %v3503 = vsub.s32 7, %v3502
      %v3504 = vrot.slane %v3471, %v3503
      %v3641 = vunpack.c.l.b16 %v3343
      %v3642 = vunpack.c.h.b16 %v3343
      %v3643 = vunpack.c.l.b16 %v3344
      %v3644 = vunpack.c.h.b16 %v3344
      %v3645 = vunpack.c.l.b16 %v3345
      %v3646 = vunpack.c.h.b16 %v3345
      %v3647 = vunpack.c.l.b16 %v3346
      %v3648 = vunpack.c.h.b16 %v3346
      %v3649 = vunpack.c.l.b16 %v3347
      %v3650 = vunpack.c.h.b16 %v3347
      %v3651 = vunpack.c.l.b16 %v3348
      %v3652 = vunpack.c.h.b16 %v3348
      %v3653 = vunpack.c.l.b16 %v3349
      %v3654 = vunpack.c.h.b16 %v3349
      %v3655 = vunpack.c.l.b16 %v3350
      %v3656 = vunpack.c.h.b16 %v3350
      %v3657 = vunpack.c.l.b16 %v3351
      %v3658 = vunpack.c.h.b16 %v3351
      %v3659 = vunpack.c.l.b16 %v3352
      %v3660 = vunpack.c.h.b16 %v3352
      %v3661 = vunpack.c.l.b16 %v3353
      %v3662 = vunpack.c.h.b16 %v3353
      %v3663 = vunpack.c.l.b16 %v3354
      %v3664 = vunpack.c.h.b16 %v3354
      %v3665 = vunpack.c.l.b16 %v3355
      %v3666 = vunpack.c.h.b16 %v3355
      %v3667 = vunpack.c.l.b16 %v3356
      %v3668 = vunpack.c.h.b16 %v3356
      %v3669 = vunpack.c.l.b16 %v3357
      %v3670 = vunpack.c.h.b16 %v3357
      %v3671 = vunpack.c.l.b16 %v3358
      %v3672 = vunpack.c.h.b16 %v3358
      %v3673 = vunpack.c.l.b16 %v3359
      %v3674 = vunpack.c.h.b16 %v3359
      %v3675 = vunpack.c.l.b16 %v3360
      %v3676 = vunpack.c.h.b16 %v3360
      %v3677 = vunpack.c.l.b16 %v3361
      %v3678 = vunpack.c.h.b16 %v3361
      %v3679 = vunpack.c.l.b16 %v3362
      %v3680 = vunpack.c.h.b16 %v3362
      %v3681 = vunpack.c.l.b16 %v3363
      %v3682 = vunpack.c.h.b16 %v3363
      %v3683 = vunpack.c.l.b16 %v3364
      %v3684 = vunpack.c.h.b16 %v3364
      %v3685 = vunpack.c.l.b16 %v3365
      %v3686 = vunpack.c.h.b16 %v3365
      %v3687 = vunpack.c.l.b16 %v3366
      %v3688 = vunpack.c.h.b16 %v3366
      %v3689 = vunpack.c.l.b16 %v3367
      %v3690 = vunpack.c.h.b16 %v3367
      %v3691 = vunpack.c.l.b16 %v3368
      %v3692 = vunpack.c.h.b16 %v3368
      %v3693 = vunpack.c.l.b16 %v3369
      %v3694 = vunpack.c.h.b16 %v3369
      %v3695 = vunpack.c.l.b16 %v3370
      %v3696 = vunpack.c.h.b16 %v3370
      %v3697 = vunpack.c.l.b16 %v3371
      %v3698 = vunpack.c.h.b16 %v3371
      %v3699 = vunpack.c.l.b16 %v3372
      %v3700 = vunpack.c.h.b16 %v3372
      %v3701 = vunpack.c.l.b16 %v3373
      %v3702 = vunpack.c.h.b16 %v3373
      %v3703 = vunpack.c.l.b16 %v3374
      %v3704 = vunpack.c.h.b16 %v3374
      %v3705 = vunpack.c.l.b16 %v3375
      %v3706 = vunpack.c.h.b16 %v3375
      %v3707 = vunpack.c.l.b16 %v3376
      %v3708 = vunpack.c.h.b16 %v3376
      %v3709 = vunpack.c.l.b16 %v3377
      %v3710 = vunpack.c.h.b16 %v3377
      %v3711 = vunpack.c.l.b16 %v3378
      %v3712 = vunpack.c.h.b16 %v3378
      %v3713 = vunpack.c.l.b16 %v3379
      %v3714 = vunpack.c.h.b16 %v3379
      %v3715 = vunpack.c.l.b16 %v3380
      %v3716 = vunpack.c.h.b16 %v3380
      %v3717 = vunpack.c.l.b16 %v3381
      %v3718 = vunpack.c.h.b16 %v3381
      %v3719 = vunpack.c.l.b16 %v3382
      %v3720 = vunpack.c.h.b16 %v3382
      %v3721 = vunpack.c.l.b16 %v3383
      %v3722 = vunpack.c.h.b16 %v3383
      %v3723 = vunpack.c.l.b16 %v3384
      %v3724 = vunpack.c.h.b16 %v3384
      %v3725 = vunpack.c.l.b16 %v3385
      %v3726 = vunpack.c.h.b16 %v3385
      %v3727 = vunpack.c.l.b16 %v3386
      %v3728 = vunpack.c.h.b16 %v3386
      %v3729 = vunpack.c.l.b16 %v3387
      %v3730 = vunpack.c.h.b16 %v3387
      %v3731 = vunpack.c.l.b16 %v3388
      %v3732 = vunpack.c.h.b16 %v3388
      %v3733 = vunpack.c.l.b16 %v3389
      %v3734 = vunpack.c.h.b16 %v3389
      %v3735 = vunpack.c.l.b16 %v3390
      %v3736 = vunpack.c.h.b16 %v3390
      %v3737 = vunpack.c.l.b16 %v3391
      %v3738 = vunpack.c.h.b16 %v3391
      %v3739 = vunpack.c.l.b16 %v3392
      %v3740 = vunpack.c.h.b16 %v3392
      %v3741 = vunpack.c.l.b16 %v3393
      %v3742 = vunpack.c.h.b16 %v3393
      %v3743 = vunpack.c.l.b16 %v3394
      %v3744 = vunpack.c.h.b16 %v3394
      %v3745 = vunpack.c.l.b16 %v3395
      %v3746 = vunpack.c.h.b16 %v3395
      %v3747 = vunpack.c.l.b16 %v3396
      %v3748 = vunpack.c.h.b16 %v3396
      %v3749 = vunpack.c.l.b16 %v3397
      %v3750 = vunpack.c.h.b16 %v3397
      %v3751 = vunpack.c.l.b16 %v3398
      %v3752 = vunpack.c.h.b16 %v3398
      %v3753 = vunpack.c.l.b16 %v3399
      %v3754 = vunpack.c.h.b16 %v3399
      %v3755 = vunpack.c.l.b16 %v3400
      %v3756 = vunpack.c.h.b16 %v3400
      %v3757 = vunpack.c.l.b16 %v3401
      %v3758 = vunpack.c.h.b16 %v3401
      %v3759 = vunpack.c.l.b16 %v3402
      %v3760 = vunpack.c.h.b16 %v3402
      %v3761 = vunpack.c.l.b16 %v3403
      %v3762 = vunpack.c.h.b16 %v3403
      %v3763 = vunpack.c.l.b16 %v3404
      %v3764 = vunpack.c.h.b16 %v3404
      %v3765 = vunpack.c.l.b16 %v3405
      %v3766 = vunpack.c.h.b16 %v3405
      %v3767 = vunpack.c.l.b16 %v3406
      %v3768 = vunpack.c.h.b16 %v3406
      %v3769 = vunpack.c.l.b16 %v3407
      %v3770 = vunpack.c.h.b16 %v3407
      %v3771 = vunpack.c.l.b16 %v3408
      %v3772 = vunpack.c.h.b16 %v3408
      %v3773 = vunpack.c.l.b16 %v3409
      %v3774 = vunpack.c.h.b16 %v3409
      %v3775 = vunpack.c.l.b16 %v3410
      %v3776 = vunpack.c.h.b16 %v3410
      %v3777 = vunpack.c.l.b16 %v3411
      %v3778 = vunpack.c.h.b16 %v3411
      %v3779 = vunpack.c.l.b16 %v3412
      %v3780 = vunpack.c.h.b16 %v3412
      %v3781 = vunpack.c.l.b16 %v3413
      %v3782 = vunpack.c.h.b16 %v3413
      %v3783 = vunpack.c.l.b16 %v3414
      %v3784 = vunpack.c.h.b16 %v3414
      %v3785 = vunpack.c.l.b16 %v3415
      %v3786 = vunpack.c.h.b16 %v3415
      %v3787 = vunpack.c.l.b16 %v3416
      %v3788 = vunpack.c.h.b16 %v3416
      %v3789 = vunpack.c.l.b16 %v3417
      %v3790 = vunpack.c.h.b16 %v3417
      %v3791 = vunpack.c.l.b16 %v3418
      %v3792 = vunpack.c.h.b16 %v3418
      %v3793 = vunpack.c.l.b16 %v3419
      %v3794 = vunpack.c.h.b16 %v3419
      %v3795 = vunpack.c.l.b16 %v3420
      %v3796 = vunpack.c.h.b16 %v3420
      %v3797 = vunpack.c.l.b16 %v3421
      %v3798 = vunpack.c.h.b16 %v3421
      %v3799 = vunpack.c.l.b16 %v3422
      %v3800 = vunpack.c.h.b16 %v3422
      %v3801 = vunpack.c.l.b16 %v3423
      %v3802 = vunpack.c.h.b16 %v3423
      %v3803 = vunpack.c.l.b16 %v3424
      %v3804 = vunpack.c.h.b16 %v3424
      %v3805 = vunpack.c.l.b16 %v3425
      %v3806 = vunpack.c.h.b16 %v3425
      %v3807 = vunpack.c.l.b16 %v3426
      %v3808 = vunpack.c.h.b16 %v3426
      %v3809 = vunpack.c.l.b16 %v3427
      %v3810 = vunpack.c.h.b16 %v3427
      %v3811 = vunpack.c.l.b16 %v3428
      %v3812 = vunpack.c.h.b16 %v3428
      %v3813 = vunpack.c.l.b16 %v3429
      %v3814 = vunpack.c.h.b16 %v3429
      %v3815 = vunpack.c.l.b16 %v3430
      %v3816 = vunpack.c.h.b16 %v3430
      %v3817 = vunpack.c.l.b16 %v3431
      %v3818 = vunpack.c.h.b16 %v3431
      %v3819 = vunpack.c.l.b16 %v3432
      %v3820 = vunpack.c.h.b16 %v3432
      %v3821 = vunpack.c.l.b16 %v3433
      %v3822 = vunpack.c.h.b16 %v3433
      %v3823 = vunpack.c.l.b16 %v3434
      %v3824 = vunpack.c.h.b16 %v3434
      %v3825 = vunpack.c.l.b16 %v3435
      %v3826 = vunpack.c.h.b16 %v3435
      %v3827 = vunpack.c.l.b16 %v3436
      %v3828 = vunpack.c.h.b16 %v3436
      %v3829 = vunpack.c.l.b16 %v3437
      %v3830 = vunpack.c.h.b16 %v3437
      %v3831 = vunpack.c.l.b16 %v3438
      %v3832 = vunpack.c.h.b16 %v3438
      %v3833 = vunpack.c.l.b16 %v3439
      %v3834 = vunpack.c.h.b16 %v3439
      %v3835 = vunpack.c.l.b16 %v3440
      %v3836 = vunpack.c.h.b16 %v3440
      %v3837 = vunpack.c.l.b16 %v3441
      %v3838 = vunpack.c.h.b16 %v3441
      %v3839 = vunpack.c.l.b16 %v3442
      %v3840 = vunpack.c.h.b16 %v3442
      %v3841 = vunpack.c.l.b16 %v3443
      %v3842 = vunpack.c.h.b16 %v3443
      %v3843 = vunpack.c.l.b16 %v3444
      %v3844 = vunpack.c.h.b16 %v3444
      %v3845 = vunpack.c.l.b16 %v3445
      %v3846 = vunpack.c.h.b16 %v3445
      %v3847 = vunpack.c.l.b16 %v3446
      %v3848 = vunpack.c.h.b16 %v3446
      %v3849 = vunpack.c.l.b16 %v3447
      %v3850 = vunpack.c.h.b16 %v3447
      %v3851 = vunpack.c.l.b16 %v3448
      %v3852 = vunpack.c.h.b16 %v3448
      %v3853 = vunpack.c.l.b16 %v3449
      %v3854 = vunpack.c.h.b16 %v3449
      %v3855 = vunpack.c.l.b16 %v3450
      %v3856 = vunpack.c.h.b16 %v3450
      %v3857 = vunpack.c.l.b16 %v3451
      %v3858 = vunpack.c.h.b16 %v3451
      %v3859 = vunpack.c.l.b16 %v3452
      %v3860 = vunpack.c.h.b16 %v3452
      %v3861 = vunpack.c.l.b16 %v3453
      %v3862 = vunpack.c.h.b16 %v3453
      %v3863 = vunpack.c.l.b16 %v3454
      %v3864 = vunpack.c.h.b16 %v3454
      %v3865 = vunpack.c.l.b16 %v3455
      %v3866 = vunpack.c.h.b16 %v3455
      %v3867 = vunpack.c.l.b16 %v3456
      %v3868 = vunpack.c.h.b16 %v3456
      %v3869 = vunpack.c.l.b16 %v3457
      %v3870 = vunpack.c.h.b16 %v3457
      %v3871 = vunpack.c.l.b16 %v3458
      %v3872 = vunpack.c.h.b16 %v3458
      %v3873 = vunpack.c.l.b16 %v3459
      %v3874 = vunpack.c.h.b16 %v3459
      %v3875 = vunpack.c.l.b16 %v3460
      %v3876 = vunpack.c.h.b16 %v3460
      %v3877 = vunpack.c.l.b16 %v3461
      %v3878 = vunpack.c.h.b16 %v3461
      %v3879 = vunpack.c.l.b16 %v3462
      %v3880 = vunpack.c.h.b16 %v3462
      %v3881 = vunpack.c.l.b16 %v3463
      %v3882 = vunpack.c.h.b16 %v3463
      %v3883 = vunpack.c.l.b16 %v3464
      %v3884 = vunpack.c.h.b16 %v3464
      %v3885 = vunpack.c.l.b16 %v3465
      %v3886 = vunpack.c.h.b16 %v3465
      %v3887 = vunpack.c.l.b16 %v3466
      %v3888 = vunpack.c.h.b16 %v3466
      %v3889 = vunpack.c.l.b16 %v3467
      %v3890 = vunpack.c.h.b16 %v3467
      %v3891 = vunpack.c.l.b16 %v3468
      %v3892 = vunpack.c.h.b16 %v3468
      %v3893 = vunpack.c.l.b16 %v3469
      %v3894 = vunpack.c.h.b16 %v3469
      %v3895 = vunpack.c.l.b16 %v3470
      %v3896 = vunpack.c.h.b16 %v3470
      %v3897 = vpack.c.b16 %v3649, %v3641
      %v3898 = vpack.c.b16 %v3650, %v3642
      %v3899 = vpack.c.b16 %v3651, %v3643
      %v3900 = vpack.c.b16 %v3652, %v3644
      %v3901 = vpack.c.b16 %v3653, %v3645
      %v3902 = vpack.c.b16 %v3654, %v3646
      %v3903 = vpack.c.b16 %v3655, %v3647
      %v3904 = vpack.c.b16 %v3656, %v3648
      %v3905 = vpack.c.b16 %v3665, %v3657
      %v3906 = vpack.c.b16 %v3666, %v3658
      %v3907 = vpack.c.b16 %v3667, %v3659
      %v3908 = vpack.c.b16 %v3668, %v3660
      %v3909 = vpack.c.b16 %v3669, %v3661
      %v3910 = vpack.c.b16 %v3670, %v3662
      %v3911 = vpack.c.b16 %v3671, %v3663
      %v3912 = vpack.c.b16 %v3672, %v3664
      %v3913 = vpack.c.b16 %v3681, %v3673
      %v3914 = vpack.c.b16 %v3682, %v3674
      %v3915 = vpack.c.b16 %v3683, %v3675
      %v3916 = vpack.c.b16 %v3684, %v3676
      %v3917 = vpack.c.b16 %v3685, %v3677
      %v3918 = vpack.c.b16 %v3686, %v3678
      %v3919 = vpack.c.b16 %v3687, %v3679
      %v3920 = vpack.c.b16 %v3688, %v3680
      %v3921 = vpack.c.b16 %v3697, %v3689
      %v3922 = vpack.c.b16 %v3698, %v3690
      %v3923 = vpack.c.b16 %v3699, %v3691
      %v3924 = vpack.c.b16 %v3700, %v3692
      %v3925 = vpack.c.b16 %v3701, %v3693
      %v3926 = vpack.c.b16 %v3702, %v3694
      %v3927 = vpack.c.b16 %v3703, %v3695
      %v3928 = vpack.c.b16 %v3704, %v3696
      %v3929 = vpack.c.b16 %v3713, %v3705
      %v3930 = vpack.c.b16 %v3714, %v3706
      %v3931 = vpack.c.b16 %v3715, %v3707
      %v3932 = vpack.c.b16 %v3716, %v3708
      %v3933 = vpack.c.b16 %v3717, %v3709
      %v3934 = vpack.c.b16 %v3718, %v3710
      %v3935 = vpack.c.b16 %v3719, %v3711
      %v3936 = vpack.c.b16 %v3720, %v3712
      %v3937 = vpack.c.b16 %v3729, %v3721
      %v3938 = vpack.c.b16 %v3730, %v3722
      %v3939 = vpack.c.b16 %v3731, %v3723
      %v3940 = vpack.c.b16 %v3732, %v3724
      %v3941 = vpack.c.b16 %v3733, %v3725
      %v3942 = vpack.c.b16 %v3734, %v3726
      %v3943 = vpack.c.b16 %v3735, %v3727
      %v3944 = vpack.c.b16 %v3736, %v3728
      %v3945 = vpack.c.b16 %v3745, %v3737
      %v3946 = vpack.c.b16 %v3746, %v3738
      %v3947 = vpack.c.b16 %v3747, %v3739
      %v3948 = vpack.c.b16 %v3748, %v3740
      %v3949 = vpack.c.b16 %v3749, %v3741
      %v3950 = vpack.c.b16 %v3750, %v3742
      %v3951 = vpack.c.b16 %v3751, %v3743
      %v3952 = vpack.c.b16 %v3752, %v3744
      %v3953 = vpack.c.b16 %v3761, %v3753
      %v3954 = vpack.c.b16 %v3762, %v3754
      %v3955 = vpack.c.b16 %v3763, %v3755
      %v3956 = vpack.c.b16 %v3764, %v3756
      %v3957 = vpack.c.b16 %v3765, %v3757
      %v3958 = vpack.c.b16 %v3766, %v3758
      %v3959 = vpack.c.b16 %v3767, %v3759
      %v3960 = vpack.c.b16 %v3768, %v3760
      %v3961 = vpack.c.b16 %v3777, %v3769
      %v3962 = vpack.c.b16 %v3778, %v3770
      %v3963 = vpack.c.b16 %v3779, %v3771
      %v3964 = vpack.c.b16 %v3780, %v3772
      %v3965 = vpack.c.b16 %v3781, %v3773
      %v3966 = vpack.c.b16 %v3782, %v3774
      %v3967 = vpack.c.b16 %v3783, %v3775
      %v3968 = vpack.c.b16 %v3784, %v3776
      %v3969 = vpack.c.b16 %v3793, %v3785
      %v3970 = vpack.c.b16 %v3794, %v3786
      %v3971 = vpack.c.b16 %v3795, %v3787
      %v3972 = vpack.c.b16 %v3796, %v3788
      %v3973 = vpack.c.b16 %v3797, %v3789
      %v3974 = vpack.c.b16 %v3798, %v3790
      %v3975 = vpack.c.b16 %v3799, %v3791
      %v3976 = vpack.c.b16 %v3800, %v3792
      %v3977 = vpack.c.b16 %v3809, %v3801
      %v3978 = vpack.c.b16 %v3810, %v3802
      %v3979 = vpack.c.b16 %v3811, %v3803
      %v3980 = vpack.c.b16 %v3812, %v3804
      %v3981 = vpack.c.b16 %v3813, %v3805
      %v3982 = vpack.c.b16 %v3814, %v3806
      %v3983 = vpack.c.b16 %v3815, %v3807
      %v3984 = vpack.c.b16 %v3816, %v3808
      %v3985 = vpack.c.b16 %v3825, %v3817
      %v3986 = vpack.c.b16 %v3826, %v3818
      %v3987 = vpack.c.b16 %v3827, %v3819
      %v3988 = vpack.c.b16 %v3828, %v3820
      %v3989 = vpack.c.b16 %v3829, %v3821
      %v3990 = vpack.c.b16 %v3830, %v3822
      %v3991 = vpack.c.b16 %v3831, %v3823
      %v3992 = vpack.c.b16 %v3832, %v3824
      %v3993 = vpack.c.b16 %v3841, %v3833
      %v3994 = vpack.c.b16 %v3842, %v3834
      %v3995 = vpack.c.b16 %v3843, %v3835
      %v3996 = vpack.c.b16 %v3844, %v3836
      %v3997 = vpack.c.b16 %v3845, %v3837
      %v3998 = vpack.c.b16 %v3846, %v3838
      %v3999 = vpack.c.b16 %v3847, %v3839
      %v4000 = vpack.c.b16 %v3848, %v3840
      %v4001 = vpack.c.b16 %v3857, %v3849
      %v4002 = vpack.c.b16 %v3858, %v3850
      %v4003 = vpack.c.b16 %v3859, %v3851
      %v4004 = vpack.c.b16 %v3860, %v3852
      %v4005 = vpack.c.b16 %v3861, %v3853
      %v4006 = vpack.c.b16 %v3862, %v3854
      %v4007 = vpack.c.b16 %v3863, %v3855
      %v4008 = vpack.c.b16 %v3864, %v3856
      %v4009 = vpack.c.b16 %v3873, %v3865
      %v4010 = vpack.c.b16 %v3874, %v3866
      %v4011 = vpack.c.b16 %v3875, %v3867
      %v4012 = vpack.c.b16 %v3876, %v3868
      %v4013 = vpack.c.b16 %v3877, %v3869
      %v4014 = vpack.c.b16 %v3878, %v3870
      %v4015 = vpack.c.b16 %v3879, %v3871
      %v4016 = vpack.c.b16 %v3880, %v3872
      %v4017 = vpack.c.b16 %v3889, %v3881
      %v4018 = vpack.c.b16 %v3890, %v3882
      %v4019 = vpack.c.b16 %v3891, %v3883
      %v4020 = vpack.c.b16 %v3892, %v3884
      %v4021 = vpack.c.b16 %v3893, %v3885
      %v4022 = vpack.c.b16 %v3894, %v3886
      %v4023 = vpack.c.b16 %v3895, %v3887
      %v4024 = vpack.c.b16 %v3896, %v3888
      %4153 = vmatprep.subr.bf16.mxu0 %v3898
      %4154 = vmatpush1.bf16.msra.mxu0 %v3897
      %4155 = vmatprep.subr.bf16.mxu0 %v3906
      %4156 = vmatpush1.bf16.msra.mxu0 %v3905
      %4157 = vmatprep.subr.bf16.mxu0 %v3914
      %4158 = vmatpush1.bf16.msra.mxu0 %v3913
      %4159 = vmatprep.subr.bf16.mxu0 %v3922
      %4160 = vmatpush1.bf16.msra.mxu0 %v3921
      %4161 = vmatprep.subr.bf16.mxu0 %v3930
      %4162 = vmatpush1.bf16.msra.mxu0 %v3929
      %4163 = vmatprep.subr.bf16.mxu0 %v3938
      %4164 = vmatpush1.bf16.msra.mxu0 %v3937
      %4165 = vmatprep.subr.bf16.mxu0 %v3946
      %4166 = vmatpush1.bf16.msra.mxu0 %v3945
      %4167 = vmatprep.subr.bf16.mxu0 %v3954
      %4168 = vmatpush1.bf16.msra.mxu0 %v3953
      %4169 = vmatprep.subr.bf16.mxu0 %v3962
      %4170 = vmatpush1.bf16.msra.mxu0 %v3961
      %4171 = vmatprep.subr.bf16.mxu0 %v3970
      %4172 = vmatpush1.bf16.msra.mxu0 %v3969
      %4173 = vmatprep.subr.bf16.mxu0 %v3978
      %4174 = vmatpush1.bf16.msra.mxu0 %v3977
      %4175 = vmatprep.subr.bf16.mxu0 %v3986
      %4176 = vmatpush1.bf16.msra.mxu0 %v3985
      %4177 = vmatprep.subr.bf16.mxu0 %v3994
      %4178 = vmatpush1.bf16.msra.mxu0 %v3993
      %4179 = vmatprep.subr.bf16.mxu0 %v4002
      %4180 = vmatpush1.bf16.msra.mxu0 %v4001
      %4181 = vmatprep.subr.bf16.mxu0 %v4010
      %4182 = vmatpush1.bf16.msra.mxu0 %v4009
      %4183 = vmatprep.subr.bf16.mxu0 %v4018
      %4184 = vmatpush1.bf16.msra.mxu0 %v4017
      %4185 = vmatprep.mubr.bf16.mxu0 %v3328
      %4186 = vmatmul.mubr.bf16.gmra.mrb[0].mxu0 %v3327
      %v4187 = vpop.f32.mrb[0].mxu0
      %v4188 = vadd.f32 %v3476, %v4187
      %v4189 = vpop.f32.mrb[0].mxu0
      %v4190 = vadd.f32 %v3480, %v4189
      %v4191 = vpop.f32.mrb[0].mxu0
      %v4192 = vadd.f32 %v3476, %v4191
      %v4193 = vpop.f32.mrb[0].mxu0
      %v4194 = vadd.f32 %v3480, %v4193
      %4195 = vmatprep.mubr.bf16.mxu0 %v3330
      %4196 = vmatmul.mubr.bf16.gmra.mrb[0].mxu0 %v3329
      %v4197 = vpop.f32.mrb[0].mxu0
      %v4198 = vadd.f32 %v3476, %v4197
      %v4199 = vpop.f32.mrb[0].mxu0
      %v4200 = vadd.f32 %v3480, %v4199
      %v4201 = vpop.f32.mrb[0].mxu0
      %v4202 = vadd.f32 %v3476, %v4201
      %v4203 = vpop.f32.mrb[0].mxu0
      %v4204 = vadd.f32 %v3480, %v4203
      %4205 = vmatprep.mubr.bf16.mxu0 %v3332
      %4206 = vmatmul.mubr.bf16.gmra.mrb[0].mxu0 %v3331
      %v4207 = vpop.f32.mrb[0].mxu0
      %v4208 = vadd.f32 %v3476, %v4207
      %v4209 = vpop.f32.mrb[0].mxu0
      %v4210 = vadd.f32 %v3480, %v4209
      %v4211 = vpop.f32.mrb[0].mxu0
      %v4212 = vadd.f32 %v3476, %v4211
      %v4213 = vpop.f32.mrb[0].mxu0
      %v4214 = vadd.f32 %v3480, %v4213
      %4215 = vmatprep.mubr.bf16.mxu0 %v3334
      %4216 = vmatmul.mubr.bf16.gmra.mrb[0].mxu0 %v3333
      %v4217 = vpop.f32.mrb[0].mxu0
      %v4218 = vadd.f32 %v3476, %v4217
      %v4219 = vpop.f32.mrb[0].mxu0
      %v4220 = vadd.f32 %v3480, %v4219
      %v4221 = vpop.f32.mrb[0].mxu0
      %v4222 = vadd.f32 %v3476, %v4221
      %v4223 = vpop.f32.mrb[0].mxu0
      %v4224 = vadd.f32 %v3480, %v4223
      %4225 = vmatprep.mubr.bf16.mxu0 %v3336
      %4226 = vmatmul.mubr.bf16.gmra.mrb[0].mxu0 %v3335
      %v4227 = vpop.f32.mrb[0].mxu0
      %v4228 = vadd.f32 %v3476, %v4227
      %v4229 = vpop.f32.mrb[0].mxu0
      %v4230 = vadd.f32 %v3480, %v4229
      %v4231 = vpop.f32.mrb[0].mxu0
      %v4232 = vadd.f32 %v3476, %v4231
      %v4233 = vpop.f32.mrb[0].mxu0
      %v4234 = vadd.f32 %v3480, %v4233
      %4235 = vmatprep.mubr.bf16.mxu0 %v3338
      %4236 = vmatmul.mubr.bf16.gmra.mrb[0].mxu0 %v3337
      %v4237 = vpop.f32.mrb[0].mxu0
      %v4238 = vadd.f32 %v3476, %v4237
      %v4239 = vpop.f32.mrb[0].mxu0
      %v4240 = vadd.f32 %v3480, %v4239
      %v4241 = vpop.f32.mrb[0].mxu0
      %v4242 = vadd.f32 %v3476, %v4241
      %v4243 = vpop.f32.mrb[0].mxu0
      %v4244 = vadd.f32 %v3480, %v4243
      %4245 = vmatprep.mubr.bf16.mxu0 %v3340
      %4246 = vmatmul.mubr.bf16.gmra.mrb[0].mxu0 %v3339
      %v4247 = vpop.f32.mrb[0].mxu0
      %v4248 = vadd.f32 %v3476, %v4247
      %v4249 = vpop.f32.mrb[0].mxu0
      %v4250 = vadd.f32 %v3480, %v4249
      %v4251 = vpop.f32.mrb[0].mxu0
      %v4252 = vadd.f32 %v3476, %v4251
      %v4253 = vpop.f32.mrb[0].mxu0
      %v4254 = vadd.f32 %v3480, %v4253
      %4255 = vmatprep.mubr.bf16.mxu0 %v3342
      %4256 = vmatmul.mubr.bf16.gmra.mrb[0].mxu0 %v3341
      %v4257 = vpop.f32.mrb[0].mxu0
      %v4258 = vadd.f32 %v3476, %v4257
      %v4259 = vpop.f32.mrb[0].mxu0
      %v4260 = vadd.f32 %v3480, %v4259
      %v4261 = vpop.f32.mrb[0].mxu0
      %v4262 = vadd.f32 %v3476, %v4261
      %v4263 = vpop.f32.mrb[0].mxu0
      %v4264 = vadd.f32 %v3480, %v4263
      %4265 = vdwg.mxu0
      %4266 = vmatprep.subr.bf16.mxu0 %v3900
      %4267 = vmatpush1.bf16.msra.mxu0 %v3899
      %4268 = vmatprep.subr.bf16.mxu0 %v3908
      %4269 = vmatpush1.bf16.msra.mxu0 %v3907
      %4270 = vmatprep.subr.bf16.mxu0 %v3916
      %4271 = vmatpush1.bf16.msra.mxu0 %v3915
      %4272 = vmatprep.subr.bf16.mxu0 %v3924
      %4273 = vmatpush1.bf16.msra.mxu0 %v3923
      %4274 = vmatprep.subr.bf16.mxu0 %v3932
      %4275 = vmatpush1.bf16.msra.mxu0 %v3931
      %4276 = vmatprep.subr.bf16.mxu0 %v3940
      %4277 = vmatpush1.bf16.msra.mxu0 %v3939
      %4278 = vmatprep.subr.bf16.mxu0 %v3948
      %4279 = vmatpush1.bf16.msra.mxu0 %v3947
      %4280 = vmatprep.subr.bf16.mxu0 %v3956
      %4281 = vmatpush1.bf16.msra.mxu0 %v3955
      %4282 = vmatprep.subr.bf16.mxu0 %v3964
      %4283 = vmatpush1.bf16.msra.mxu0 %v3963
      %4284 = vmatprep.subr.bf16.mxu0 %v3972
      %4285 = vmatpush1.bf16.msra.mxu0 %v3971
      %4286 = vmatprep.subr.bf16.mxu0 %v3980
      %4287 = vmatpush1.bf16.msra.mxu0 %v3979
      %4288 = vmatprep.subr.bf16.mxu0 %v3988
      %4289 = vmatpush1.bf16.msra.mxu0 %v3987
      %4290 = vmatprep.subr.bf16.mxu0 %v3996
      %4291 = vmatpush1.bf16.msra.mxu0 %v3995
      %4292 = vmatprep.subr.bf16.mxu0 %v4004
      %4293 = vmatpush1.bf16.msra.mxu0 %v4003
      %4294 = vmatprep.subr.bf16.mxu0 %v4012
      %4295 = vmatpush1.bf16.msra.mxu0 %v4011
      %4296 = vmatprep.subr.bf16.mxu0 %v4020
      %4297 = vmatpush1.bf16.msra.mxu0 %v4019
      %4298 = vmatprep.mubr.bf16.mxu0 %v3328
      %4299 = vmatmul.mubr.bf16.gmra.mrb[0].mxu0 %v3327
      %v4300 = vpop.f32.mrb[0].mxu0
      %v4301 = vadd.f32 %v3484, %v4300
      %v4302 = vpop.f32.mrb[0].mxu0
      %v4303 = vadd.f32 %v3488, %v4302
      %v4304 = vpop.f32.mrb[0].mxu0
      %v4305 = vadd.f32 %v3484, %v4304
      %v4306 = vpop.f32.mrb[0].mxu0
      %v4307 = vadd.f32 %v3488, %v4306
      %4308 = vmatprep.mubr.bf16.mxu0 %v3330
      %4309 = vmatmul.mubr.bf16.gmra.mrb[0].mxu0 %v3329
      %v4310 = vpop.f32.mrb[0].mxu0
      %v4311 = vadd.f32 %v3484, %v4310
      %v4312 = vpop.f32.mrb[0].mxu0
      %v4313 = vadd.f32 %v3488, %v4312
      %v4314 = vpop.f32.mrb[0].mxu0
      %v4315 = vadd.f32 %v3484, %v4314
      %v4316 = vpop.f32.mrb[0].mxu0
      %v4317 = vadd.f32 %v3488, %v4316
      %4318 = vmatprep.mubr.bf16.mxu0 %v3332
      %4319 = vmatmul.mubr.bf16.gmra.mrb[0].mxu0 %v3331
      %v4320 = vpop.f32.mrb[0].mxu0
      %v4321 = vadd.f32 %v3484, %v4320
      %v4322 = vpop.f32.mrb[0].mxu0
      %v4323 = vadd.f32 %v3488, %v4322
      %v4324 = vpop.f32.mrb[0].mxu0
      %v4325 = vadd.f32 %v3484, %v4324
      %v4326 = vpop.f32.mrb[0].mxu0
      %v4327 = vadd.f32 %v3488, %v4326
      %4328 = vmatprep.mubr.bf16.mxu0 %v3334
      %4329 = vmatmul.mubr.bf16.gmra.mrb[0].mxu0 %v3333
      %v4330 = vpop.f32.mrb[0].mxu0
      %v4331 = vadd.f32 %v3484, %v4330
      %v4332 = vpop.f32.mrb[0].mxu0
      %v4333 = vadd.f32 %v3488, %v4332
      %v4334 = vpop.f32.mrb[0].mxu0
      %v4335 = vadd.f32 %v3484, %v4334
      %v4336 = vpop.f32.mrb[0].mxu0
      %v4337 = vadd.f32 %v3488, %v4336
      %4338 = vmatprep.mubr.bf16.mxu0 %v3336
      %4339 = vmatmul.mubr.bf16.gmra.mrb[0].mxu0 %v3335
      %v4340 = vpop.f32.mrb[0].mxu0
      %v4341 = vadd.f32 %v3484, %v4340
      %v4342 = vpop.f32.mrb[0].mxu0
      %v4343 = vadd.f32 %v3488, %v4342
      %v4344 = vpop.f32.mrb[0].mxu0
      %v4345 = vadd.f32 %v3484, %v4344
      %v4346 = vpop.f32.mrb[0].mxu0
      %v4347 = vadd.f32 %v3488, %v4346
      %4348 = vmatprep.mubr.bf16.mxu0 %v3338
      %4349 = vmatmul.mubr.bf16.gmra.mrb[0].mxu0 %v3337
      %v4350 = vpop.f32.mrb[0].mxu0
      %v4351 = vadd.f32 %v3484, %v4350
      %v4352 = vpop.f32.mrb[0].mxu0
      %v4353 = vadd.f32 %v3488, %v4352
      %v4354 = vpop.f32.mrb[0].mxu0
      %v4355 = vadd.f32 %v3484, %v4354
      %v4356 = vpop.f32.mrb[0].mxu0
      %v4357 = vadd.f32 %v3488, %v4356
      %4358 = vmatprep.mubr.bf16.mxu0 %v3340
      %4359 = vmatmul.mubr.bf16.gmra.mrb[0].mxu0 %v3339
      %v4360 = vpop.f32.mrb[0].mxu0
      %v4361 = vadd.f32 %v3484, %v4360
      %v4362 = vpop.f32.mrb[0].mxu0
      %v4363 = vadd.f32 %v3488, %v4362
      %v4364 = vpop.f32.mrb[0].mxu0
      %v4365 = vadd.f32 %v3484, %v4364
      %v4366 = vpop.f32.mrb[0].mxu0
      %v4367 = vadd.f32 %v3488, %v4366
      %4368 = vmatprep.mubr.bf16.mxu0 %v3342
      %4369 = vmatmul.mubr.bf16.gmra.mrb[0].mxu0 %v3341
      %v4370 = vpop.f32.mrb[0].mxu0
      %v4371 = vadd.f32 %v3484, %v4370
      %v4372 = vpop.f32.mrb[0].mxu0
      %v4373 = vadd.f32 %v3488, %v4372
      %v4374 = vpop.f32.mrb[0].mxu0
      %v4375 = vadd.f32 %v3484, %v4374
      %v4376 = vpop.f32.mrb[0].mxu0
      %v4377 = vadd.f32 %v3488, %v4376
      %4378 = vdwg.mxu0
      %4379 = vmatprep.subr.bf16.mxu0 %v3902
      %4380 = vmatpush1.bf16.msra.mxu0 %v3901
      %4381 = vmatprep.subr.bf16.mxu0 %v3910
      %4382 = vmatpush1.bf16.msra.mxu0 %v3909
      %4383 = vmatprep.subr.bf16.mxu0 %v3918
      %4384 = vmatpush1.bf16.msra.mxu0 %v3917
      %4385 = vmatprep.subr.bf16.mxu0 %v3926
      %4386 = vmatpush1.bf16.msra.mxu0 %v3925
      %4387 = vmatprep.subr.bf16.mxu0 %v3934
      %4388 = vmatpush1.bf16.msra.mxu0 %v3933
      %4389 = vmatprep.subr.bf16.mxu0 %v3942
      %4390 = vmatpush1.bf16.msra.mxu0 %v3941
      %4391 = vmatprep.subr.bf16.mxu0 %v3950
      %4392 = vmatpush1.bf16.msra.mxu0 %v3949
      %4393 = vmatprep.subr.bf16.mxu0 %v3958
      %4394 = vmatpush1.bf16.msra.mxu0 %v3957
      %4395 = vmatprep.subr.bf16.mxu0 %v3966
      %4396 = vmatpush1.bf16.msra.mxu0 %v3965
      %4397 = vmatprep.subr.bf16.mxu0 %v3974
      %4398 = vmatpush1.bf16.msra.mxu0 %v3973
      %4399 = vmatprep.subr.bf16.mxu0 %v3982
      %4400 = vmatpush1.bf16.msra.mxu0 %v3981
      %4401 = vmatprep.subr.bf16.mxu0 %v3990
      %4402 = vmatpush1.bf16.msra.mxu0 %v3989
      %4403 = vmatprep.subr.bf16.mxu0 %v3998
      %4404 = vmatpush1.bf16.msra.mxu0 %v3997
      %4405 = vmatprep.subr.bf16.mxu0 %v4006
      %4406 = vmatpush1.bf16.msra.mxu0 %v4005
      %4407 = vmatprep.subr.bf16.mxu0 %v4014
      %4408 = vmatpush1.bf16.msra.mxu0 %v4013
      %4409 = vmatprep.subr.bf16.mxu0 %v4022
      %4410 = vmatpush1.bf16.msra.mxu0 %v4021
      %4411 = vmatprep.mubr.bf16.mxu0 %v3328
      %4412 = vmatmul.mubr.bf16.gmra.mrb[0].mxu0 %v3327
      %v4413 = vpop.f32.mrb[0].mxu0
      %v4414 = vadd.f32 %v3492, %v4413
      %v4415 = vpop.f32.mrb[0].mxu0
      %v4416 = vadd.f32 %v3496, %v4415
      %v4417 = vpop.f32.mrb[0].mxu0
      %v4418 = vadd.f32 %v3492, %v4417
      %v4419 = vpop.f32.mrb[0].mxu0
      %v4420 = vadd.f32 %v3496, %v4419
      %4421 = vmatprep.mubr.bf16.mxu0 %v3330
      %4422 = vmatmul.mubr.bf16.gmra.mrb[0].mxu0 %v3329
      %v4423 = vpop.f32.mrb[0].mxu0
      %v4424 = vadd.f32 %v3492, %v4423
      %v4425 = vpop.f32.mrb[0].mxu0
      %v4426 = vadd.f32 %v3496, %v4425
      %v4427 = vpop.f32.mrb[0].mxu0
      %v4428 = vadd.f32 %v3492, %v4427
      %v4429 = vpop.f32.mrb[0].mxu0
      %v4430 = vadd.f32 %v3496, %v4429
      %4431 = vmatprep.mubr.bf16.mxu0 %v3332
      %4432 = vmatmul.mubr.bf16.gmra.mrb[0].mxu0 %v3331
      %v4433 = vpop.f32.mrb[0].mxu0
      %v4434 = vadd.f32 %v3492, %v4433
      %v4435 = vpop.f32.mrb[0].mxu0
      %v4436 = vadd.f32 %v3496, %v4435
      %v4437 = vpop.f32.mrb[0].mxu0
      %v4438 = vadd.f32 %v3492, %v4437
      %v4439 = vpop.f32.mrb[0].mxu0
      %v4440 = vadd.f32 %v3496, %v4439
      %4441 = vmatprep.mubr.bf16.mxu0 %v3334
      %4442 = vmatmul.mubr.bf16.gmra.mrb[0].mxu0 %v3333
      %v4443 = vpop.f32.mrb[0].mxu0
      %v4444 = vadd.f32 %v3492, %v4443
      %v4445 = vpop.f32.mrb[0].mxu0
      %v4446 = vadd.f32 %v3496, %v4445
      %v4447 = vpop.f32.mrb[0].mxu0
      %v4448 = vadd.f32 %v3492, %v4447
      %v4449 = vpop.f32.mrb[0].mxu0
      %v4450 = vadd.f32 %v3496, %v4449
      %4451 = vmatprep.mubr.bf16.mxu0 %v3336
      %4452 = vmatmul.mubr.bf16.gmra.mrb[0].mxu0 %v3335
      %v4453 = vpop.f32.mrb[0].mxu0
      %v4454 = vadd.f32 %v3492, %v4453
      %v4455 = vpop.f32.mrb[0].mxu0
      %v4456 = vadd.f32 %v3496, %v4455
      %v4457 = vpop.f32.mrb[0].mxu0
      %v4458 = vadd.f32 %v3492, %v4457
      %v4459 = vpop.f32.mrb[0].mxu0
      %v4460 = vadd.f32 %v3496, %v4459
      %4461 = vmatprep.mubr.bf16.mxu0 %v3338
      %4462 = vmatmul.mubr.bf16.gmra.mrb[0].mxu0 %v3337
      %v4463 = vpop.f32.mrb[0].mxu0
      %v4464 = vadd.f32 %v3492, %v4463
      %v4465 = vpop.f32.mrb[0].mxu0
      %v4466 = vadd.f32 %v3496, %v4465
      %v4467 = vpop.f32.mrb[0].mxu0
      %v4468 = vadd.f32 %v3492, %v4467
      %v4469 = vpop.f32.mrb[0].mxu0
      %v4470 = vadd.f32 %v3496, %v4469
      %4471 = vmatprep.mubr.bf16.mxu0 %v3340
      %4472 = vmatmul.mubr.bf16.gmra.mrb[0].mxu0 %v3339
      %v4473 = vpop.f32.mrb[0].mxu0
      %v4474 = vadd.f32 %v3492, %v4473
      %v4475 = vpop.f32.mrb[0].mxu0
      %v4476 = vadd.f32 %v3496, %v4475
      %v4477 = vpop.f32.mrb[0].mxu0
      %v4478 = vadd.f32 %v3492, %v4477
      %v4479 = vpop.f32.mrb[0].mxu0
      %v4480 = vadd.f32 %v3496, %v4479
      %4481 = vmatprep.mubr.bf16.mxu0 %v3342
      %4482 = vmatmul.mubr.bf16.gmra.mrb[0].mxu0 %v3341
      %v4483 = vpop.f32.mrb[0].mxu0
      %v4484 = vadd.f32 %v3492, %v4483
      %v4485 = vpop.f32.mrb[0].mxu0
      %v4486 = vadd.f32 %v3496, %v4485
      %v4487 = vpop.f32.mrb[0].mxu0
      %v4488 = vadd.f32 %v3492, %v4487
      %v4489 = vpop.f32.mrb[0].mxu0
      %v4490 = vadd.f32 %v3496, %v4489
      %4491 = vdwg.mxu0
      %4492 = vmatprep.subr.bf16.mxu0 %v3904
      %4493 = vmatpush1.bf16.msra.mxu0 %v3903
      %4494 = vmatprep.subr.bf16.mxu0 %v3912
      %4495 = vmatpush1.bf16.msra.mxu0 %v3911
      %4496 = vmatprep.subr.bf16.mxu0 %v3920
      %4497 = vmatpush1.bf16.msra.mxu0 %v3919
      %4498 = vmatprep.subr.bf16.mxu0 %v3928
      %4499 = vmatpush1.bf16.msra.mxu0 %v3927
      %4500 = vmatprep.subr.bf16.mxu0 %v3936
      %4501 = vmatpush1.bf16.msra.mxu0 %v3935
      %4502 = vmatprep.subr.bf16.mxu0 %v3944
      %4503 = vmatpush1.bf16.msra.mxu0 %v3943
      %4504 = vmatprep.subr.bf16.mxu0 %v3952
      %4505 = vmatpush1.bf16.msra.mxu0 %v3951
      %4506 = vmatprep.subr.bf16.mxu0 %v3960
      %4507 = vmatpush1.bf16.msra.mxu0 %v3959
      %4508 = vmatprep.subr.bf16.mxu0 %v3968
      %4509 = vmatpush1.bf16.msra.mxu0 %v3967
      %4510 = vmatprep.subr.bf16.mxu0 %v3976
      %4511 = vmatpush1.bf16.msra.mxu0 %v3975
      %4512 = vmatprep.subr.bf16.mxu0 %v3984
      %4513 = vmatpush1.bf16.msra.mxu0 %v3983
      %4514 = vmatprep.subr.bf16.mxu0 %v3992
      %4515 = vmatpush1.bf16.msra.mxu0 %v3991
      %4516 = vmatprep.subr.bf16.mxu0 %v4000
      %4517 = vmatpush1.bf16.msra.mxu0 %v3999
      %4518 = vmatprep.subr.bf16.mxu0 %v4008
      %4519 = vmatpush1.bf16.msra.mxu0 %v4007
      %4520 = vmatprep.subr.bf16.mxu0 %v4016
      %4521 = vmatpush1.bf16.msra.mxu0 %v4015
      %4522 = vmatprep.subr.bf16.mxu0 %v4024
      %4523 = vmatpush1.bf16.msra.mxu0 %v4023
      %4524 = vmatprep.mubr.bf16.mxu0 %v3328
      %4525 = vmatmul.mubr.bf16.gmra.mrb[0].mxu0 %v3327
      %v4526 = vpop.f32.mrb[0].mxu0
      %v4527 = vadd.f32 %v3500, %v4526
      %v4528 = vpop.f32.mrb[0].mxu0
      %v4529 = vadd.f32 %v3504, %v4528
      %v4530 = vpop.f32.mrb[0].mxu0
      %v4531 = vadd.f32 %v3500, %v4530
      %v4532 = vpop.f32.mrb[0].mxu0
      %v4533 = vadd.f32 %v3504, %v4532
      %4534 = vmatprep.mubr.bf16.mxu0 %v3330
      %4535 = vmatmul.mubr.bf16.gmra.mrb[0].mxu0 %v3329
      %v4536 = vpop.f32.mrb[0].mxu0
      %v4537 = vadd.f32 %v3500, %v4536
      %v4538 = vpop.f32.mrb[0].mxu0
      %v4539 = vadd.f32 %v3504, %v4538
      %v4540 = vpop.f32.mrb[0].mxu0
      %v4541 = vadd.f32 %v3500, %v4540
      %v4542 = vpop.f32.mrb[0].mxu0
      %v4543 = vadd.f32 %v3504, %v4542
      %4544 = vmatprep.mubr.bf16.mxu0 %v3332
      %4545 = vmatmul.mubr.bf16.gmra.mrb[0].mxu0 %v3331
      %v4546 = vpop.f32.mrb[0].mxu0
      %v4547 = vadd.f32 %v3500, %v4546
      %v4548 = vpop.f32.mrb[0].mxu0
      %v4549 = vadd.f32 %v3504, %v4548
      %v4550 = vpop.f32.mrb[0].mxu0
      %v4551 = vadd.f32 %v3500, %v4550
      %v4552 = vpop.f32.mrb[0].mxu0
      %v4553 = vadd.f32 %v3504, %v4552
      %4554 = vmatprep.mubr.bf16.mxu0 %v3334
      %4555 = vmatmul.mubr.bf16.gmra.mrb[0].mxu0 %v3333
      %v4556 = vpop.f32.mrb[0].mxu0
      %v4557 = vadd.f32 %v3500, %v4556
      %v4558 = vpop.f32.mrb[0].mxu0
      %v4559 = vadd.f32 %v3504, %v4558
      %v4560 = vpop.f32.mrb[0].mxu0
      %v4561 = vadd.f32 %v3500, %v4560
      %v4562 = vpop.f32.mrb[0].mxu0
      %v4563 = vadd.f32 %v3504, %v4562
      %4564 = vmatprep.mubr.bf16.mxu0 %v3336
      %4565 = vmatmul.mubr.bf16.gmra.mrb[0].mxu0 %v3335
      %v4566 = vpop.f32.mrb[0].mxu0
      %v4567 = vadd.f32 %v3500, %v4566
      %v4568 = vpop.f32.mrb[0].mxu0
      %v4569 = vadd.f32 %v3504, %v4568
      %v4570 = vpop.f32.mrb[0].mxu0
      %v4571 = vadd.f32 %v3500, %v4570
      %v4572 = vpop.f32.mrb[0].mxu0
      %v4573 = vadd.f32 %v3504, %v4572
      %4574 = vmatprep.mubr.bf16.mxu0 %v3338
      %4575 = vmatmul.mubr.bf16.gmra.mrb[0].mxu0 %v3337
      %v4576 = vpop.f32.mrb[0].mxu0
      %v4577 = vadd.f32 %v3500, %v4576
      %v4578 = vpop.f32.mrb[0].mxu0
      %v4579 = vadd.f32 %v3504, %v4578
      %v4580 = vpop.f32.mrb[0].mxu0
      %v4581 = vadd.f32 %v3500, %v4580
      %v4582 = vpop.f32.mrb[0].mxu0
      %v4583 = vadd.f32 %v3504, %v4582
      %4584 = vmatprep.mubr.bf16.mxu0 %v3340
      %4585 = vmatmul.mubr.bf16.gmra.mrb[0].mxu0 %v3339
      %v4586 = vpop.f32.mrb[0].mxu0
      %v4587 = vadd.f32 %v3500, %v4586
      %v4588 = vpop.f32.mrb[0].mxu0
      %v4589 = vadd.f32 %v3504, %v4588
      %v4590 = vpop.f32.mrb[0].mxu0
      %v4591 = vadd.f32 %v3500, %v4590
      %v4592 = vpop.f32.mrb[0].mxu0
      %v4593 = vadd.f32 %v3504, %v4592
      %4594 = vmatprep.mubr.bf16.mxu0 %v3342
      %4595 = vmatmul.mubr.bf16.gmra.mrb[0].mxu0 %v3341
      %v4596 = vpop.f32.mrb[0].mxu0
      %v4597 = vadd.f32 %v3500, %v4596
      %v4598 = vpop.f32.mrb[0].mxu0
      %v4599 = vadd.f32 %v3504, %v4598
      %v4600 = vpop.f32.mrb[0].mxu0
      %v4601 = vadd.f32 %v3500, %v4600
      %v4602 = vpop.f32.mrb[0].mxu0
      %v4603 = vadd.f32 %v3504, %v4602
      %4604 = vdwg.mxu0
      %v4605 = vmul.f32 %v4188, 0.5
      %v4606 = vmul.f32 %v4190, 0.5
      %v4607 = vmul.f32 %v4301, 0.5
      %v4608 = vmul.f32 %v4303, 0.5
      %v4609 = vmul.f32 %v4414, 0.5
      %v4610 = vmul.f32 %v4416, 0.5
      %v4611 = vmul.f32 %v4527, 0.5
      %v4612 = vmul.f32 %v4529, 0.5
      %v4613 = vmul.f32 %v4192, 0.5
      %v4614 = vmul.f32 %v4194, 0.5
      %v4615 = vmul.f32 %v4305, 0.5
      %v4616 = vmul.f32 %v4307, 0.5
      %v4617 = vmul.f32 %v4418, 0.5
      %v4618 = vmul.f32 %v4420, 0.5
      %v4619 = vmul.f32 %v4531, 0.5
      %v4620 = vmul.f32 %v4533, 0.5
      %v4621 = vmul.f32 %v4198, 0.5
      %v4622 = vmul.f32 %v4200, 0.5
      %v4623 = vmul.f32 %v4311, 0.5
      %v4624 = vmul.f32 %v4313, 0.5
      %v4625 = vmul.f32 %v4424, 0.5
      %v4626 = vmul.f32 %v4426, 0.5
      %v4627 = vmul.f32 %v4537, 0.5
      %v4628 = vmul.f32 %v4539, 0.5
      %v4629 = vmul.f32 %v4202, 0.5
      %v4630 = vmul.f32 %v4204, 0.5
      %v4631 = vmul.f32 %v4315, 0.5
      %v4632 = vmul.f32 %v4317, 0.5
      %v4633 = vmul.f32 %v4428, 0.5
      %v4634 = vmul.f32 %v4430, 0.5
      %v4635 = vmul.f32 %v4541, 0.5
      %v4636 = vmul.f32 %v4543, 0.5
      %v4637 = vmul.f32 %v4208, 0.5
      %v4638 = vmul.f32 %v4210, 0.5
      %v4639 = vmul.f32 %v4321, 0.5
      %v4640 = vmul.f32 %v4323, 0.5
      %v4641 = vmul.f32 %v4434, 0.5
      %v4642 = vmul.f32 %v4436, 0.5
      %v4643 = vmul.f32 %v4547, 0.5
      %v4644 = vmul.f32 %v4549, 0.5
      %v4645 = vmul.f32 %v4212, 0.5
      %v4646 = vmul.f32 %v4214, 0.5
      %v4647 = vmul.f32 %v4325, 0.5
      %v4648 = vmul.f32 %v4327, 0.5
      %v4649 = vmul.f32 %v4438, 0.5
      %v4650 = vmul.f32 %v4440, 0.5
      %v4651 = vmul.f32 %v4551, 0.5
      %v4652 = vmul.f32 %v4553, 0.5
      %v4653 = vmul.f32 %v4218, 0.5
      %v4654 = vmul.f32 %v4220, 0.5
      %v4655 = vmul.f32 %v4331, 0.5
      %v4656 = vmul.f32 %v4333, 0.5
      %v4657 = vmul.f32 %v4444, 0.5
      %v4658 = vmul.f32 %v4446, 0.5
      %v4659 = vmul.f32 %v4557, 0.5
      %v4660 = vmul.f32 %v4559, 0.5
      %v4661 = vmul.f32 %v4222, 0.5
      %v4662 = vmul.f32 %v4224, 0.5
      %v4663 = vmul.f32 %v4335, 0.5
      %v4664 = vmul.f32 %v4337, 0.5
      %v4665 = vmul.f32 %v4448, 0.5
      %v4666 = vmul.f32 %v4450, 0.5
      %v4667 = vmul.f32 %v4561, 0.5
      %v4668 = vmul.f32 %v4563, 0.5
      %v4669 = vmul.f32 %v4228, 0.5
      %v4670 = vmul.f32 %v4230, 0.5
      %v4671 = vmul.f32 %v4341, 0.5
      %v4672 = vmul.f32 %v4343, 0.5
      %v4673 = vmul.f32 %v4454, 0.5
      %v4674 = vmul.f32 %v4456, 0.5
      %v4675 = vmul.f32 %v4567, 0.5
      %v4676 = vmul.f32 %v4569, 0.5
      %v4677 = vmul.f32 %v4232, 0.5
      %v4678 = vmul.f32 %v4234, 0.5
      %v4679 = vmul.f32 %v4345, 0.5
      %v4680 = vmul.f32 %v4347, 0.5
      %v4681 = vmul.f32 %v4458, 0.5
      %v4682 = vmul.f32 %v4460, 0.5
      %v4683 = vmul.f32 %v4571, 0.5
      %v4684 = vmul.f32 %v4573, 0.5
      %v4685 = vmul.f32 %v4238, 0.5
      %v4686 = vmul.f32 %v4240, 0.5
      %v4687 = vmul.f32 %v4351, 0.5
      %v4688 = vmul.f32 %v4353, 0.5
      %v4689 = vmul.f32 %v4464, 0.5
      %v4690 = vmul.f32 %v4466, 0.5
      %v4691 = vmul.f32 %v4577, 0.5
      %v4692 = vmul.f32 %v4579, 0.5
      %v4693 = vmul.f32 %v4242, 0.5
      %v4694 = vmul.f32 %v4244, 0.5
      %v4695 = vmul.f32 %v4355, 0.5
      %v4696 = vmul.f32 %v4357, 0.5
      %v4697 = vmul.f32 %v4468, 0.5
      %v4698 = vmul.f32 %v4470, 0.5
      %v4699 = vmul.f32 %v4581, 0.5
      %v4700 = vmul.f32 %v4583, 0.5
      %v4701 = vmul.f32 %v4248, 0.5
      %v4702 = vmul.f32 %v4250, 0.5
      %v4703 = vmul.f32 %v4361, 0.5
      %v4704 = vmul.f32 %v4363, 0.5
      %v4705 = vmul.f32 %v4474, 0.5
      %v4706 = vmul.f32 %v4476, 0.5
      %v4707 = vmul.f32 %v4587, 0.5
      %v4708 = vmul.f32 %v4589, 0.5
      %v4709 = vmul.f32 %v4252, 0.5
      %v4710 = vmul.f32 %v4254, 0.5
      %v4711 = vmul.f32 %v4365, 0.5
      %v4712 = vmul.f32 %v4367, 0.5
      %v4713 = vmul.f32 %v4478, 0.5
      %v4714 = vmul.f32 %v4480, 0.5
      %v4715 = vmul.f32 %v4591, 0.5
      %v4716 = vmul.f32 %v4593, 0.5
      %v4717 = vmul.f32 %v4258, 0.5
      %v4718 = vmul.f32 %v4260, 0.5
      %v4719 = vmul.f32 %v4371, 0.5
      %v4720 = vmul.f32 %v4373, 0.5
      %v4721 = vmul.f32 %v4484, 0.5
      %v4722 = vmul.f32 %v4486, 0.5
      %v4723 = vmul.f32 %v4597, 0.5
      %v4724 = vmul.f32 %v4599, 0.5
      %v4725 = vmul.f32 %v4262, 0.5
      %v4726 = vmul.f32 %v4264, 0.5
      %v4727 = vmul.f32 %v4375, 0.5
      %v4728 = vmul.f32 %v4377, 0.5
      %v4729 = vmul.f32 %v4488, 0.5
      %v4730 = vmul.f32 %v4490, 0.5
      %v4731 = vmul.f32 %v4601, 0.5
      %v4732 = vmul.f32 %v4603, 0.5
      %v4733 = vmul.f32 %v4188, 0.044715
      %v4734 = vmul.f32 %v4190, 0.044715
      %v4735 = vmul.f32 %v4301, 0.044715
      %v4736 = vmul.f32 %v4303, 0.044715
      %v4737 = vmul.f32 %v4414, 0.044715
      %v4738 = vmul.f32 %v4416, 0.044715
      %v4739 = vmul.f32 %v4527, 0.044715
      %v4740 = vmul.f32 %v4529, 0.044715
      %v4741 = vmul.f32 %v4192, 0.044715
      %v4742 = vmul.f32 %v4194, 0.044715
      %v4743 = vmul.f32 %v4305, 0.044715
      %v4744 = vmul.f32 %v4307, 0.044715
      %v4745 = vmul.f32 %v4418, 0.044715
      %v4746 = vmul.f32 %v4420, 0.044715
      %v4747 = vmul.f32 %v4531, 0.044715
      %v4748 = vmul.f32 %v4533, 0.044715
      %v4749 = vmul.f32 %v4198, 0.044715
      %v4750 = vmul.f32 %v4200, 0.044715
      %v4751 = vmul.f32 %v4311, 0.044715
      %v4752 = vmul.f32 %v4313, 0.044715
      %v4753 = vmul.f32 %v4424, 0.044715
      %v4754 = vmul.f32 %v4426, 0.044715
      %v4755 = vmul.f32 %v4537, 0.044715
      %v4756 = vmul.f32 %v4539, 0.044715
      %v4757 = vmul.f32 %v4202, 0.044715
      %v4758 = vmul.f32 %v4204, 0.044715
      %v4759 = vmul.f32 %v4315, 0.044715
      %v4760 = vmul.f32 %v4317, 0.044715
      %v4761 = vmul.f32 %v4428, 0.044715
      %v4762 = vmul.f32 %v4430, 0.044715
      %v4763 = vmul.f32 %v4541, 0.044715
      %v4764 = vmul.f32 %v4543, 0.044715
      %v4765 = vmul.f32 %v4208, 0.044715
      %v4766 = vmul.f32 %v4210, 0.044715
      %v4767 = vmul.f32 %v4321, 0.044715
      %v4768 = vmul.f32 %v4323, 0.044715
      %v4769 = vmul.f32 %v4434, 0.044715
      %v4770 = vmul.f32 %v4436, 0.044715
      %v4771 = vmul.f32 %v4547, 0.044715
      %v4772 = vmul.f32 %v4549, 0.044715
      %v4773 = vmul.f32 %v4212, 0.044715
      %v4774 = vmul.f32 %v4214, 0.044715
      %v4775 = vmul.f32 %v4325, 0.044715
      %v4776 = vmul.f32 %v4327, 0.044715
      %v4777 = vmul.f32 %v4438, 0.044715
      %v4778 = vmul.f32 %v4440, 0.044715
      %v4779 = vmul.f32 %v4551, 0.044715
      %v4780 = vmul.f32 %v4553, 0.044715
      %v4781 = vmul.f32 %v4218, 0.044715
      %v4782 = vmul.f32 %v4220, 0.044715
      %v4783 = vmul.f32 %v4331, 0.044715
      %v4784 = vmul.f32 %v4333, 0.044715
      %v4785 = vmul.f32 %v4444, 0.044715
      %v4786 = vmul.f32 %v4446, 0.044715
      %v4787 = vmul.f32 %v4557, 0.044715
      %v4788 = vmul.f32 %v4559, 0.044715
      %v4789 = vmul.f32 %v4222, 0.044715
      %v4790 = vmul.f32 %v4224, 0.044715
      %v4791 = vmul.f32 %v4335, 0.044715
      %v4792 = vmul.f32 %v4337, 0.044715
      %v4793 = vmul.f32 %v4448, 0.044715
      %v4794 = vmul.f32 %v4450, 0.044715
      %v4795 = vmul.f32 %v4561, 0.044715
      %v4796 = vmul.f32 %v4563, 0.044715
      %v4797 = vmul.f32 %v4228, 0.044715
      %v4798 = vmul.f32 %v4230, 0.044715
      %v4799 = vmul.f32 %v4341, 0.044715
      %v4800 = vmul.f32 %v4343, 0.044715
      %v4801 = vmul.f32 %v4454, 0.044715
      %v4802 = vmul.f32 %v4456, 0.044715
      %v4803 = vmul.f32 %v4567, 0.044715
      %v4804 = vmul.f32 %v4569, 0.044715
      %v4805 = vmul.f32 %v4232, 0.044715
      %v4806 = vmul.f32 %v4234, 0.044715
      %v4807 = vmul.f32 %v4345, 0.044715
      %v4808 = vmul.f32 %v4347, 0.044715
      %v4809 = vmul.f32 %v4458, 0.044715
      %v4810 = vmul.f32 %v4460, 0.044715
      %v4811 = vmul.f32 %v4571, 0.044715
      %v4812 = vmul.f32 %v4573, 0.044715
      %v4813 = vmul.f32 %v4238, 0.044715
      %v4814 = vmul.f32 %v4240, 0.044715
      %v4815 = vmul.f32 %v4351, 0.044715
      %v4816 = vmul.f32 %v4353, 0.044715
      %v4817 = vmul.f32 %v4464, 0.044715
      %v4818 = vmul.f32 %v4466, 0.044715
      %v4819 = vmul.f32 %v4577, 0.044715
      %v4820 = vmul.f32 %v4579, 0.044715
      %v4821 = vmul.f32 %v4242, 0.044715
      %v4822 = vmul.f32 %v4244, 0.044715
      %v4823 = vmul.f32 %v4355, 0.044715
      %v4824 = vmul.f32 %v4357, 0.044715
      %v4825 = vmul.f32 %v4468, 0.044715
      %v4826 = vmul.f32 %v4470, 0.044715
      %v4827 = vmul.f32 %v4581, 0.044715
      %v4828 = vmul.f32 %v4583, 0.044715
      %v4829 = vmul.f32 %v4248, 0.044715
      %v4830 = vmul.f32 %v4250, 0.044715
      %v4831 = vmul.f32 %v4361, 0.044715
      %v4832 = vmul.f32 %v4363, 0.044715
      %v4833 = vmul.f32 %v4474, 0.044715
      %v4834 = vmul.f32 %v4476, 0.044715
      %v4835 = vmul.f32 %v4587, 0.044715
      %v4836 = vmul.f32 %v4589, 0.044715
      %v4837 = vmul.f32 %v4252, 0.044715
      %v4838 = vmul.f32 %v4254, 0.044715
      %v4839 = vmul.f32 %v4365, 0.044715
      %v4840 = vmul.f32 %v4367, 0.044715
      %v4841 = vmul.f32 %v4478, 0.044715
      %v4842 = vmul.f32 %v4480, 0.044715
      %v4843 = vmul.f32 %v4591, 0.044715
      %v4844 = vmul.f32 %v4593, 0.044715
      %v4845 = vmul.f32 %v4258, 0.044715
      %v4846 = vmul.f32 %v4260, 0.044715
      %v4847 = vmul.f32 %v4371, 0.044715
      %v4848 = vmul.f32 %v4373, 0.044715
      %v4849 = vmul.f32 %v4484, 0.044715
      %v4850 = vmul.f32 %v4486, 0.044715
      %v4851 = vmul.f32 %v4597, 0.044715
      %v4852 = vmul.f32 %v4599, 0.044715
      %v4853 = vmul.f32 %v4262, 0.044715
      %v4854 = vmul.f32 %v4264, 0.044715
      %v4855 = vmul.f32 %v4375, 0.044715
      %v4856 = vmul.f32 %v4377, 0.044715
      %v4857 = vmul.f32 %v4488, 0.044715
      %v4858 = vmul.f32 %v4490, 0.044715
      %v4859 = vmul.f32 %v4601, 0.044715
      %v4860 = vmul.f32 %v4603, 0.044715
      %v4861 = vmul.f32 %v4733, %v4188
      %v4862 = vmul.f32 %v4734, %v4190
      %v4863 = vmul.f32 %v4735, %v4301
      %v4864 = vmul.f32 %v4736, %v4303
      %v4865 = vmul.f32 %v4737, %v4414
      %v4866 = vmul.f32 %v4738, %v4416
      %v4867 = vmul.f32 %v4739, %v4527
      %v4868 = vmul.f32 %v4740, %v4529
      %v4869 = vmul.f32 %v4741, %v4192
      %v4870 = vmul.f32 %v4742, %v4194
      %v4871 = vmul.f32 %v4743, %v4305
      %v4872 = vmul.f32 %v4744, %v4307
      %v4873 = vmul.f32 %v4745, %v4418
      %v4874 = vmul.f32 %v4746, %v4420
      %v4875 = vmul.f32 %v4747, %v4531
      %v4876 = vmul.f32 %v4748, %v4533
      %v4877 = vmul.f32 %v4749, %v4198
      %v4878 = vmul.f32 %v4750, %v4200
      %v4879 = vmul.f32 %v4751, %v4311
      %v4880 = vmul.f32 %v4752, %v4313
      %v4881 = vmul.f32 %v4753, %v4424
      %v4882 = vmul.f32 %v4754, %v4426
      %v4883 = vmul.f32 %v4755, %v4537
      %v4884 = vmul.f32 %v4756, %v4539
      %v4885 = vmul.f32 %v4757, %v4202
      %v4886 = vmul.f32 %v4758, %v4204
      %v4887 = vmul.f32 %v4759, %v4315
      %v4888 = vmul.f32 %v4760, %v4317
      %v4889 = vmul.f32 %v4761, %v4428
      %v4890 = vmul.f32 %v4762, %v4430
      %v4891 = vmul.f32 %v4763, %v4541
      %v4892 = vmul.f32 %v4764, %v4543
      %v4893 = vmul.f32 %v4765, %v4208
      %v4894 = vmul.f32 %v4766, %v4210
      %v4895 = vmul.f32 %v4767, %v4321
      %v4896 = vmul.f32 %v4768, %v4323
      %v4897 = vmul.f32 %v4769, %v4434
      %v4898 = vmul.f32 %v4770, %v4436
      %v4899 = vmul.f32 %v4771, %v4547
      %v4900 = vmul.f32 %v4772, %v4549
      %v4901 = vmul.f32 %v4773, %v4212
      %v4902 = vmul.f32 %v4774, %v4214
      %v4903 = vmul.f32 %v4775, %v4325
      %v4904 = vmul.f32 %v4776, %v4327
      %v4905 = vmul.f32 %v4777, %v4438
      %v4906 = vmul.f32 %v4778, %v4440
      %v4907 = vmul.f32 %v4779, %v4551
      %v4908 = vmul.f32 %v4780, %v4553
      %v4909 = vmul.f32 %v4781, %v4218
      %v4910 = vmul.f32 %v4782, %v4220
      %v4911 = vmul.f32 %v4783, %v4331
      %v4912 = vmul.f32 %v4784, %v4333
      %v4913 = vmul.f32 %v4785, %v4444
      %v4914 = vmul.f32 %v4786, %v4446
      %v4915 = vmul.f32 %v4787, %v4557
      %v4916 = vmul.f32 %v4788, %v4559
      %v4917 = vmul.f32 %v4789, %v4222
      %v4918 = vmul.f32 %v4790, %v4224
      %v4919 = vmul.f32 %v4791, %v4335
      %v4920 = vmul.f32 %v4792, %v4337
      %v4921 = vmul.f32 %v4793, %v4448
      %v4922 = vmul.f32 %v4794, %v4450
      %v4923 = vmul.f32 %v4795, %v4561
      %v4924 = vmul.f32 %v4796, %v4563
      %v4925 = vmul.f32 %v4797, %v4228
      %v4926 = vmul.f32 %v4798, %v4230
      %v4927 = vmul.f32 %v4799, %v4341
      %v4928 = vmul.f32 %v4800, %v4343
      %v4929 = vmul.f32 %v4801, %v4454
      %v4930 = vmul.f32 %v4802, %v4456
      %v4931 = vmul.f32 %v4803, %v4567
      %v4932 = vmul.f32 %v4804, %v4569
      %v4933 = vmul.f32 %v4805, %v4232
      %v4934 = vmul.f32 %v4806, %v4234
      %v4935 = vmul.f32 %v4807, %v4345
      %v4936 = vmul.f32 %v4808, %v4347
      %v4937 = vmul.f32 %v4809, %v4458
      %v4938 = vmul.f32 %v4810, %v4460
      %v4939 = vmul.f32 %v4811, %v4571
      %v4940 = vmul.f32 %v4812, %v4573
      %v4941 = vmul.f32 %v4813, %v4238
      %v4942 = vmul.f32 %v4814, %v4240
      %v4943 = vmul.f32 %v4815, %v4351
      %v4944 = vmul.f32 %v4816, %v4353
      %v4945 = vmul.f32 %v4817, %v4464
      %v4946 = vmul.f32 %v4818, %v4466
      %v4947 = vmul.f32 %v4819, %v4577
      %v4948 = vmul.f32 %v4820, %v4579
      %v4949 = vmul.f32 %v4821, %v4242
      %v4950 = vmul.f32 %v4822, %v4244
      %v4951 = vmul.f32 %v4823, %v4355
      %v4952 = vmul.f32 %v4824, %v4357
      %v4953 = vmul.f32 %v4825, %v4468
      %v4954 = vmul.f32 %v4826, %v4470
      %v4955 = vmul.f32 %v4827, %v4581
      %v4956 = vmul.f32 %v4828, %v4583
      %v4957 = vmul.f32 %v4829, %v4248
      %v4958 = vmul.f32 %v4830, %v4250
      %v4959 = vmul.f32 %v4831, %v4361
      %v4960 = vmul.f32 %v4832, %v4363
      %v4961 = vmul.f32 %v4833, %v4474
      %v4962 = vmul.f32 %v4834, %v4476
      %v4963 = vmul.f32 %v4835, %v4587
      %v4964 = vmul.f32 %v4836, %v4589
      %v4965 = vmul.f32 %v4837, %v4252
      %v4966 = vmul.f32 %v4838, %v4254
      %v4967 = vmul.f32 %v4839, %v4365
      %v4968 = vmul.f32 %v4840, %v4367
      %v4969 = vmul.f32 %v4841, %v4478
      %v4970 = vmul.f32 %v4842, %v4480
      %v4971 = vmul.f32 %v4843, %v4591
      %v4972 = vmul.f32 %v4844, %v4593
      %v4973 = vmul.f32 %v4845, %v4258
      %v4974 = vmul.f32 %v4846, %v4260
      %v4975 = vmul.f32 %v4847, %v4371
      %v4976 = vmul.f32 %v4848, %v4373
      %v4977 = vmul.f32 %v4849, %v4484
      %v4978 = vmul.f32 %v4850, %v4486
      %v4979 = vmul.f32 %v4851, %v4597
      %v4980 = vmul.f32 %v4852, %v4599
      %v4981 = vmul.f32 %v4853, %v4262
      %v4982 = vmul.f32 %v4854, %v4264
      %v4983 = vmul.f32 %v4855, %v4375
      %v4984 = vmul.f32 %v4856, %v4377
      %v4985 = vmul.f32 %v4857, %v4488
      %v4986 = vmul.f32 %v4858, %v4490
      %v4987 = vmul.f32 %v4859, %v4601
      %v4988 = vmul.f32 %v4860, %v4603
      %v4989 = vmul.f32 %v4861, %v4188
      %v4990 = vmul.f32 %v4862, %v4190
      %v4991 = vmul.f32 %v4863, %v4301
      %v4992 = vmul.f32 %v4864, %v4303
      %v4993 = vmul.f32 %v4865, %v4414
      %v4994 = vmul.f32 %v4866, %v4416
      %v4995 = vmul.f32 %v4867, %v4527
      %v4996 = vmul.f32 %v4868, %v4529
      %v4997 = vmul.f32 %v4869, %v4192
      %v4998 = vmul.f32 %v4870, %v4194
      %v4999 = vmul.f32 %v4871, %v4305
      %v5000 = vmul.f32 %v4872, %v4307
      %v5001 = vmul.f32 %v4873, %v4418
      %v5002 = vmul.f32 %v4874, %v4420
      %v5003 = vmul.f32 %v4875, %v4531
      %v5004 = vmul.f32 %v4876, %v4533
      %v5005 = vmul.f32 %v4877, %v4198
      %v5006 = vmul.f32 %v4878, %v4200
      %v5007 = vmul.f32 %v4879, %v4311
      %v5008 = vmul.f32 %v4880, %v4313
      %v5009 = vmul.f32 %v4881, %v4424
      %v5010 = vmul.f32 %v4882, %v4426
      %v5011 = vmul.f32 %v4883, %v4537
      %v5012 = vmul.f32 %v4884, %v4539
      %v5013 = vmul.f32 %v4885, %v4202
      %v5014 = vmul.f32 %v4886, %v4204
      %v5015 = vmul.f32 %v4887, %v4315
      %v5016 = vmul.f32 %v4888, %v4317
      %v5017 = vmul.f32 %v4889, %v4428
      %v5018 = vmul.f32 %v4890, %v4430
      %v5019 = vmul.f32 %v4891, %v4541
      %v5020 = vmul.f32 %v4892, %v4543
      %v5021 = vmul.f32 %v4893, %v4208
      %v5022 = vmul.f32 %v4894, %v4210
      %v5023 = vmul.f32 %v4895, %v4321
      %v5024 = vmul.f32 %v4896, %v4323
      %v5025 = vmul.f32 %v4897, %v4434
      %v5026 = vmul.f32 %v4898, %v4436
      %v5027 = vmul.f32 %v4899, %v4547
      %v5028 = vmul.f32 %v4900, %v4549
      %v5029 = vmul.f32 %v4901, %v4212
      %v5030 = vmul.f32 %v4902, %v4214
      %v5031 = vmul.f32 %v4903, %v4325
      %v5032 = vmul.f32 %v4904, %v4327
      %v5033 = vmul.f32 %v4905, %v4438
      %v5034 = vmul.f32 %v4906, %v4440
      %v5035 = vmul.f32 %v4907, %v4551
      %v5036 = vmul.f32 %v4908, %v4553
      %v5037 = vmul.f32 %v4909, %v4218
      %v5038 = vmul.f32 %v4910, %v4220
      %v5039 = vmul.f32 %v4911, %v4331
      %v5040 = vmul.f32 %v4912, %v4333
      %v5041 = vmul.f32 %v4913, %v4444
      %v5042 = vmul.f32 %v4914, %v4446
      %v5043 = vmul.f32 %v4915, %v4557
      %v5044 = vmul.f32 %v4916, %v4559
      %v5045 = vmul.f32 %v4917, %v4222
      %v5046 = vmul.f32 %v4918, %v4224
      %v5047 = vmul.f32 %v4919, %v4335
      %v5048 = vmul.f32 %v4920, %v4337
      %v5049 = vmul.f32 %v4921, %v4448
      %v5050 = vmul.f32 %v4922, %v4450
      %v5051 = vmul.f32 %v4923, %v4561
      %v5052 = vmul.f32 %v4924, %v4563
      %v5053 = vmul.f32 %v4925, %v4228
      %v5054 = vmul.f32 %v4926, %v4230
      %v5055 = vmul.f32 %v4927, %v4341
      %v5056 = vmul.f32 %v4928, %v4343
      %v5057 = vmul.f32 %v4929, %v4454
      %v5058 = vmul.f32 %v4930, %v4456
      %v5059 = vmul.f32 %v4931, %v4567
      %v5060 = vmul.f32 %v4932, %v4569
      %v5061 = vmul.f32 %v4933, %v4232
      %v5062 = vmul.f32 %v4934, %v4234
      %v5063 = vmul.f32 %v4935, %v4345
      %v5064 = vmul.f32 %v4936, %v4347
      %v5065 = vmul.f32 %v4937, %v4458
      %v5066 = vmul.f32 %v4938, %v4460
      %v5067 = vmul.f32 %v4939, %v4571
      %v5068 = vmul.f32 %v4940, %v4573
      %v5069 = vmul.f32 %v4941, %v4238
      %v5070 = vmul.f32 %v4942, %v4240
      %v5071 = vmul.f32 %v4943, %v4351
      %v5072 = vmul.f32 %v4944, %v4353
      %v5073 = vmul.f32 %v4945, %v4464
      %v5074 = vmul.f32 %v4946, %v4466
      %v5075 = vmul.f32 %v4947, %v4577
      %v5076 = vmul.f32 %v4948, %v4579
      %v5077 = vmul.f32 %v4949, %v4242
      %v5078 = vmul.f32 %v4950, %v4244
      %v5079 = vmul.f32 %v4951, %v4355
      %v5080 = vmul.f32 %v4952, %v4357
      %v5081 = vmul.f32 %v4953, %v4468
      %v5082 = vmul.f32 %v4954, %v4470
      %v5083 = vmul.f32 %v4955, %v4581
      %v5084 = vmul.f32 %v4956, %v4583
      %v5085 = vmul.f32 %v4957, %v4248
      %v5086 = vmul.f32 %v4958, %v4250
      %v5087 = vmul.f32 %v4959, %v4361
      %v5088 = vmul.f32 %v4960, %v4363
      %v5089 = vmul.f32 %v4961, %v4474
      %v5090 = vmul.f32 %v4962, %v4476
      %v5091 = vmul.f32 %v4963, %v4587
      %v5092 = vmul.f32 %v4964, %v4589
      %v5093 = vmul.f32 %v4965, %v4252
      %v5094 = vmul.f32 %v4966, %v4254
      %v5095 = vmul.f32 %v4967, %v4365
      %v5096 = vmul.f32 %v4968, %v4367
      %v5097 = vmul.f32 %v4969, %v4478
      %v5098 = vmul.f32 %v4970, %v4480
      %v5099 = vmul.f32 %v4971, %v4591
      %v5100 = vmul.f32 %v4972, %v4593
      %v5101 = vmul.f32 %v4973, %v4258
      %v5102 = vmul.f32 %v4974, %v4260
      %v5103 = vmul.f32 %v4975, %v4371
      %v5104 = vmul.f32 %v4976, %v4373
      %v5105 = vmul.f32 %v4977, %v4484
      %v5106 = vmul.f32 %v4978, %v4486
      %v5107 = vmul.f32 %v4979, %v4597
      %v5108 = vmul.f32 %v4980, %v4599
      %v5109 = vmul.f32 %v4981, %v4262
      %v5110 = vmul.f32 %v4982, %v4264
      %v5111 = vmul.f32 %v4983, %v4375
      %v5112 = vmul.f32 %v4984, %v4377
      %v5113 = vmul.f32 %v4985, %v4488
      %v5114 = vmul.f32 %v4986, %v4490
      %v5115 = vmul.f32 %v4987, %v4601
      %v5116 = vmul.f32 %v4988, %v4603
      %v5117 = vadd.f32 %v4188, %v4989
      %v5118 = vadd.f32 %v4190, %v4990
      %v5119 = vadd.f32 %v4301, %v4991
      %v5120 = vadd.f32 %v4303, %v4992
      %v5121 = vadd.f32 %v4414, %v4993
      %v5122 = vadd.f32 %v4416, %v4994
      %v5123 = vadd.f32 %v4527, %v4995
      %v5124 = vadd.f32 %v4529, %v4996
      %v5125 = vadd.f32 %v4192, %v4997
      %v5126 = vadd.f32 %v4194, %v4998
      %v5127 = vadd.f32 %v4305, %v4999
      %v5128 = vadd.f32 %v4307, %v5000
      %v5129 = vadd.f32 %v4418, %v5001
      %v5130 = vadd.f32 %v4420, %v5002
      %v5131 = vadd.f32 %v4531, %v5003
      %v5132 = vadd.f32 %v4533, %v5004
      %v5133 = vadd.f32 %v4198, %v5005
      %v5134 = vadd.f32 %v4200, %v5006
      %v5135 = vadd.f32 %v4311, %v5007
      %v5136 = vadd.f32 %v4313, %v5008
      %v5137 = vadd.f32 %v4424, %v5009
      %v5138 = vadd.f32 %v4426, %v5010
      %v5139 = vadd.f32 %v4537, %v5011
      %v5140 = vadd.f32 %v4539, %v5012
      %v5141 = vadd.f32 %v4202, %v5013
      %v5142 = vadd.f32 %v4204, %v5014
      %v5143 = vadd.f32 %v4315, %v5015
      %v5144 = vadd.f32 %v4317, %v5016
      %v5145 = vadd.f32 %v4428, %v5017
      %v5146 = vadd.f32 %v4430, %v5018
      %v5147 = vadd.f32 %v4541, %v5019
      %v5148 = vadd.f32 %v4543, %v5020
      %v5149 = vadd.f32 %v4208, %v5021
      %v5150 = vadd.f32 %v4210, %v5022
      %v5151 = vadd.f32 %v4321, %v5023
      %v5152 = vadd.f32 %v4323, %v5024
      %v5153 = vadd.f32 %v4434, %v5025
      %v5154 = vadd.f32 %v4436, %v5026
      %v5155 = vadd.f32 %v4547, %v5027
      %v5156 = vadd.f32 %v4549, %v5028
      %v5157 = vadd.f32 %v4212, %v5029
      %v5158 = vadd.f32 %v4214, %v5030
      %v5159 = vadd.f32 %v4325, %v5031
      %v5160 = vadd.f32 %v4327, %v5032
      %v5161 = vadd.f32 %v4438, %v5033
      %v5162 = vadd.f32 %v4440, %v5034
      %v5163 = vadd.f32 %v4551, %v5035
      %v5164 = vadd.f32 %v4553, %v5036
      %v5165 = vadd.f32 %v4218, %v5037
      %v5166 = vadd.f32 %v4220, %v5038
      %v5167 = vadd.f32 %v4331, %v5039
      %v5168 = vadd.f32 %v4333, %v5040
      %v5169 = vadd.f32 %v4444, %v5041
      %v5170 = vadd.f32 %v4446, %v5042
      %v5171 = vadd.f32 %v4557, %v5043
      %v5172 = vadd.f32 %v4559, %v5044
      %v5173 = vadd.f32 %v4222, %v5045
      %v5174 = vadd.f32 %v4224, %v5046
      %v5175 = vadd.f32 %v4335, %v5047
      %v5176 = vadd.f32 %v4337, %v5048
      %v5177 = vadd.f32 %v4448, %v5049
      %v5178 = vadd.f32 %v4450, %v5050
      %v5179 = vadd.f32 %v4561, %v5051
      %v5180 = vadd.f32 %v4563, %v5052
      %v5181 = vadd.f32 %v4228, %v5053
      %v5182 = vadd.f32 %v4230, %v5054
      %v5183 = vadd.f32 %v4341, %v5055
      %v5184 = vadd.f32 %v4343, %v5056
      %v5185 = vadd.f32 %v4454, %v5057
      %v5186 = vadd.f32 %v4456, %v5058
      %v5187 = vadd.f32 %v4567, %v5059
      %v5188 = vadd.f32 %v4569, %v5060
      %v5189 = vadd.f32 %v4232, %v5061
      %v5190 = vadd.f32 %v4234, %v5062
      %v5191 = vadd.f32 %v4345, %v5063
      %v5192 = vadd.f32 %v4347, %v5064
      %v5193 = vadd.f32 %v4458, %v5065
      %v5194 = vadd.f32 %v4460, %v5066
      %v5195 = vadd.f32 %v4571, %v5067
      %v5196 = vadd.f32 %v4573, %v5068
      %v5197 = vadd.f32 %v4238, %v5069
      %v5198 = vadd.f32 %v4240, %v5070
      %v5199 = vadd.f32 %v4351, %v5071
      %v5200 = vadd.f32 %v4353, %v5072
      %v5201 = vadd.f32 %v4464, %v5073
      %v5202 = vadd.f32 %v4466, %v5074
      %v5203 = vadd.f32 %v4577, %v5075
      %v5204 = vadd.f32 %v4579, %v5076
      %v5205 = vadd.f32 %v4242, %v5077
      %v5206 = vadd.f32 %v4244, %v5078
      %v5207 = vadd.f32 %v4355, %v5079
      %v5208 = vadd.f32 %v4357, %v5080
      %v5209 = vadd.f32 %v4468, %v5081
      %v5210 = vadd.f32 %v4470, %v5082
      %v5211 = vadd.f32 %v4581, %v5083
      %v5212 = vadd.f32 %v4583, %v5084
      %v5213 = vadd.f32 %v4248, %v5085
      %v5214 = vadd.f32 %v4250, %v5086
      %v5215 = vadd.f32 %v4361, %v5087
      %v5216 = vadd.f32 %v4363, %v5088
      %v5217 = vadd.f32 %v4474, %v5089
      %v5218 = vadd.f32 %v4476, %v5090
      %v5219 = vadd.f32 %v4587, %v5091
      %v5220 = vadd.f32 %v4589, %v5092
      %v5221 = vadd.f32 %v4252, %v5093
      %v5222 = vadd.f32 %v4254, %v5094
      %v5223 = vadd.f32 %v4365, %v5095
      %v5224 = vadd.f32 %v4367, %v5096
      %v5225 = vadd.f32 %v4478, %v5097
      %v5226 = vadd.f32 %v4480, %v5098
      %v5227 = vadd.f32 %v4591, %v5099
      %v5228 = vadd.f32 %v4593, %v5100
      %v5229 = vadd.f32 %v4258, %v5101
      %v5230 = vadd.f32 %v4260, %v5102
      %v5231 = vadd.f32 %v4371, %v5103
      %v5232 = vadd.f32 %v4373, %v5104
      %v5233 = vadd.f32 %v4484, %v5105
      %v5234 = vadd.f32 %v4486, %v5106
      %v5235 = vadd.f32 %v4597, %v5107
      %v5236 = vadd.f32 %v4599, %v5108
      %v5237 = vadd.f32 %v4262, %v5109
      %v5238 = vadd.f32 %v4264, %v5110
      %v5239 = vadd.f32 %v4375, %v5111
      %v5240 = vadd.f32 %v4377, %v5112
      %v5241 = vadd.f32 %v4488, %v5113
      %v5242 = vadd.f32 %v4490, %v5114
      %v5243 = vadd.f32 %v4601, %v5115
      %v5244 = vadd.f32 %v4603, %v5116
      %v5245 = vmul.f32 %v5117, 0.7978846
      %v5246 = vmul.f32 %v5118, 0.7978846
      %v5247 = vmul.f32 %v5119, 0.7978846
      %v5248 = vmul.f32 %v5120, 0.7978846
      %v5249 = vmul.f32 %v5121, 0.7978846
      %v5250 = vmul.f32 %v5122, 0.7978846
      %v5251 = vmul.f32 %v5123, 0.7978846
      %v5252 = vmul.f32 %v5124, 0.7978846
      %v5253 = vmul.f32 %v5125, 0.7978846
      %v5254 = vmul.f32 %v5126, 0.7978846
      %v5255 = vmul.f32 %v5127, 0.7978846
      %v5256 = vmul.f32 %v5128, 0.7978846
      %v5257 = vmul.f32 %v5129, 0.7978846
      %v5258 = vmul.f32 %v5130, 0.7978846
      %v5259 = vmul.f32 %v5131, 0.7978846
      %v5260 = vmul.f32 %v5132, 0.7978846
      %v5261 = vmul.f32 %v5133, 0.7978846
      %v5262 = vmul.f32 %v5134, 0.7978846
      %v5263 = vmul.f32 %v5135, 0.7978846
      %v5264 = vmul.f32 %v5136, 0.7978846
      %v5265 = vmul.f32 %v5137, 0.7978846
      %v5266 = vmul.f32 %v5138, 0.7978846
      %v5267 = vmul.f32 %v5139, 0.7978846
      %v5268 = vmul.f32 %v5140, 0.7978846
      %v5269 = vmul.f32 %v5141, 0.7978846
      %v5270 = vmul.f32 %v5142, 0.7978846
      %v5271 = vmul.f32 %v5143, 0.7978846
      %v5272 = vmul.f32 %v5144, 0.7978846
      %v5273 = vmul.f32 %v5145, 0.7978846
      %v5274 = vmul.f32 %v5146, 0.7978846
      %v5275 = vmul.f32 %v5147, 0.7978846
      %v5276 = vmul.f32 %v5148, 0.7978846
      %v5277 = vmul.f32 %v5149, 0.7978846
      %v5278 = vmul.f32 %v5150, 0.7978846
      %v5279 = vmul.f32 %v5151, 0.7978846
      %v5280 = vmul.f32 %v5152, 0.7978846
      %v5281 = vmul.f32 %v5153, 0.7978846
      %v5282 = vmul.f32 %v5154, 0.7978846
      %v5283 = vmul.f32 %v5155, 0.7978846
      %v5284 = vmul.f32 %v5156, 0.7978846
      %v5285 = vmul.f32 %v5157, 0.7978846
      %v5286 = vmul.f32 %v5158, 0.7978846
      %v5287 = vmul.f32 %v5159, 0.7978846
      %v5288 = vmul.f32 %v5160, 0.7978846
      %v5289 = vmul.f32 %v5161, 0.7978846
      %v5290 = vmul.f32 %v5162, 0.7978846
      %v5291 = vmul.f32 %v5163, 0.7978846
      %v5292 = vmul.f32 %v5164, 0.7978846
      %v5293 = vmul.f32 %v5165, 0.7978846
      %v5294 = vmul.f32 %v5166, 0.7978846
      %v5295 = vmul.f32 %v5167, 0.7978846
      %v5296 = vmul.f32 %v5168, 0.7978846
      %v5297 = vmul.f32 %v5169, 0.7978846
      %v5298 = vmul.f32 %v5170, 0.7978846
      %v5299 = vmul.f32 %v5171, 0.7978846
      %v5300 = vmul.f32 %v5172, 0.7978846
      %v5301 = vmul.f32 %v5173, 0.7978846
      %v5302 = vmul.f32 %v5174, 0.7978846
      %v5303 = vmul.f32 %v5175, 0.7978846
      %v5304 = vmul.f32 %v5176, 0.7978846
      %v5305 = vmul.f32 %v5177, 0.7978846
      %v5306 = vmul.f32 %v5178, 0.7978846
      %v5307 = vmul.f32 %v5179, 0.7978846
      %v5308 = vmul.f32 %v5180, 0.7978846
      %v5309 = vmul.f32 %v5181, 0.7978846
      %v5310 = vmul.f32 %v5182, 0.7978846
      %v5311 = vmul.f32 %v5183, 0.7978846
      %v5312 = vmul.f32 %v5184, 0.7978846
      %v5313 = vmul.f32 %v5185, 0.7978846
      %v5314 = vmul.f32 %v5186, 0.7978846
      %v5315 = vmul.f32 %v5187, 0.7978846
      %v5316 = vmul.f32 %v5188, 0.7978846
      %v5317 = vmul.f32 %v5189, 0.7978846
      %v5318 = vmul.f32 %v5190, 0.7978846
      %v5319 = vmul.f32 %v5191, 0.7978846
      %v5320 = vmul.f32 %v5192, 0.7978846
      %v5321 = vmul.f32 %v5193, 0.7978846
      %v5322 = vmul.f32 %v5194, 0.7978846
      %v5323 = vmul.f32 %v5195, 0.7978846
      %v5324 = vmul.f32 %v5196, 0.7978846
      %v5325 = vmul.f32 %v5197, 0.7978846
      %v5326 = vmul.f32 %v5198, 0.7978846
      %v5327 = vmul.f32 %v5199, 0.7978846
      %v5328 = vmul.f32 %v5200, 0.7978846
      %v5329 = vmul.f32 %v5201, 0.7978846
      %v5330 = vmul.f32 %v5202, 0.7978846
      %v5331 = vmul.f32 %v5203, 0.7978846
      %v5332 = vmul.f32 %v5204, 0.7978846
      %v5333 = vmul.f32 %v5205, 0.7978846
      %v5334 = vmul.f32 %v5206, 0.7978846
      %v5335 = vmul.f32 %v5207, 0.7978846
      %v5336 = vmul.f32 %v5208, 0.7978846
      %v5337 = vmul.f32 %v5209, 0.7978846
      %v5338 = vmul.f32 %v5210, 0.7978846
      %v5339 = vmul.f32 %v5211, 0.7978846
      %v5340 = vmul.f32 %v5212, 0.7978846
      %v5341 = vmul.f32 %v5213, 0.7978846
      %v5342 = vmul.f32 %v5214, 0.7978846
      %v5343 = vmul.f32 %v5215, 0.7978846
      %v5344 = vmul.f32 %v5216, 0.7978846
      %v5345 = vmul.f32 %v5217, 0.7978846
      %v5346 = vmul.f32 %v5218, 0.7978846
      %v5347 = vmul.f32 %v5219, 0.7978846
      %v5348 = vmul.f32 %v5220, 0.7978846
      %v5349 = vmul.f32 %v5221, 0.7978846
      %v5350 = vmul.f32 %v5222, 0.7978846
      %v5351 = vmul.f32 %v5223, 0.7978846
      %v5352 = vmul.f32 %v5224, 0.7978846
      %v5353 = vmul.f32 %v5225, 0.7978846
      %v5354 = vmul.f32 %v5226, 0.7978846
      %v5355 = vmul.f32 %v5227, 0.7978846
      %v5356 = vmul.f32 %v5228, 0.7978846
      %v5357 = vmul.f32 %v5229, 0.7978846
      %v5358 = vmul.f32 %v5230, 0.7978846
      %v5359 = vmul.f32 %v5231, 0.7978846
      %v5360 = vmul.f32 %v5232, 0.7978846
      %v5361 = vmul.f32 %v5233, 0.7978846
      %v5362 = vmul.f32 %v5234, 0.7978846
      %v5363 = vmul.f32 %v5235, 0.7978846
      %v5364 = vmul.f32 %v5236, 0.7978846
      %v5365 = vmul.f32 %v5237, 0.7978846
      %v5366 = vmul.f32 %v5238, 0.7978846
      %v5367 = vmul.f32 %v5239, 0.7978846
      %v5368 = vmul.f32 %v5240, 0.7978846
      %v5369 = vmul.f32 %v5241, 0.7978846
      %v5370 = vmul.f32 %v5242, 0.7978846
      %v5371 = vmul.f32 %v5243, 0.7978846
      %v5372 = vmul.f32 %v5244, 0.7978846
      %v5373 = vtanh.pop %v5245
      %v5374 = vtanh.pop %v5246
      %v5375 = vtanh.pop %v5247
      %v5376 = vtanh.pop %v5248
      %v5377 = vtanh.pop %v5249
      %v5378 = vtanh.pop %v5250
      %v5379 = vtanh.pop %v5251
      %v5380 = vtanh.pop %v5252
      %v5381 = vtanh.pop %v5253
      %v5382 = vtanh.pop %v5254
      %v5383 = vtanh.pop %v5255
      %v5384 = vtanh.pop %v5256
      %v5385 = vtanh.pop %v5257
      %v5386 = vtanh.pop %v5258
      %v5387 = vtanh.pop %v5259
      %v5388 = vtanh.pop %v5260
      %v5389 = vtanh.pop %v5261
      %v5390 = vtanh.pop %v5262
      %v5391 = vtanh.pop %v5263
      %v5392 = vtanh.pop %v5264
      %v5393 = vtanh.pop %v5265
      %v5394 = vtanh.pop %v5266
      %v5395 = vtanh.pop %v5267
      %v5396 = vtanh.pop %v5268
      %v5397 = vtanh.pop %v5269
      %v5398 = vtanh.pop %v5270
      %v5399 = vtanh.pop %v5271
      %v5400 = vtanh.pop %v5272
      %v5401 = vtanh.pop %v5273
      %v5402 = vtanh.pop %v5274
      %v5403 = vtanh.pop %v5275
      %v5404 = vtanh.pop %v5276
      %v5405 = vtanh.pop %v5277
      %v5406 = vtanh.pop %v5278
      %v5407 = vtanh.pop %v5279
      %v5408 = vtanh.pop %v5280
      %v5409 = vtanh.pop %v5281
      %v5410 = vtanh.pop %v5282
      %v5411 = vtanh.pop %v5283
      %v5412 = vtanh.pop %v5284
      %v5413 = vtanh.pop %v5285
      %v5414 = vtanh.pop %v5286
      %v5415 = vtanh.pop %v5287
      %v5416 = vtanh.pop %v5288
      %v5417 = vtanh.pop %v5289
      %v5418 = vtanh.pop %v5290
      %v5419 = vtanh.pop %v5291
      %v5420 = vtanh.pop %v5292
      %v5421 = vtanh.pop %v5293
      %v5422 = vtanh.pop %v5294
      %v5423 = vtanh.pop %v5295
      %v5424 = vtanh.pop %v5296
      %v5425 = vtanh.pop %v5297
      %v5426 = vtanh.pop %v5298
      %v5427 = vtanh.pop %v5299
      %v5428 = vtanh.pop %v5300
      %v5429 = vtanh.pop %v5301
      %v5430 = vtanh.pop %v5302
      %v5431 = vtanh.pop %v5303
      %v5432 = vtanh.pop %v5304
      %v5433 = vtanh.pop %v5305
      %v5434 = vtanh.pop %v5306
      %v5435 = vtanh.pop %v5307
      %v5436 = vtanh.pop %v5308
      %v5437 = vtanh.pop %v5309
      %v5438 = vtanh.pop %v5310
      %v5439 = vtanh.pop %v5311
      %v5440 = vtanh.pop %v5312
      %v5441 = vtanh.pop %v5313
      %v5442 = vtanh.pop %v5314
      %v5443 = vtanh.pop %v5315
      %v5444 = vtanh.pop %v5316
      %v5445 = vtanh.pop %v5317
      %v5446 = vtanh.pop %v5318
      %v5447 = vtanh.pop %v5319
      %v5448 = vtanh.pop %v5320
      %v5449 = vtanh.pop %v5321
      %v5450 = vtanh.pop %v5322
      %v5451 = vtanh.pop %v5323
      %v5452 = vtanh.pop %v5324
      %v5453 = vtanh.pop %v5325
      %v5454 = vtanh.pop %v5326
      %v5455 = vtanh.pop %v5327
      %v5456 = vtanh.pop %v5328
      %v5457 = vtanh.pop %v5329
      %v5458 = vtanh.pop %v5330
      %v5459 = vtanh.pop %v5331
      %v5460 = vtanh.pop %v5332
      %v5461 = vtanh.pop %v5333
      %v5462 = vtanh.pop %v5334
      %v5463 = vtanh.pop %v5335
      %v5464 = vtanh.pop %v5336
      %v5465 = vtanh.pop %v5337
      %v5466 = vtanh.pop %v5338
      %v5467 = vtanh.pop %v5339
      %v5468 = vtanh.pop %v5340
      %v5469 = vtanh.pop %v5341
      %v5470 = vtanh.pop %v5342
      %v5471 = vtanh.pop %v5343
      %v5472 = vtanh.pop %v5344
      %v5473 = vtanh.pop %v5345
      %v5474 = vtanh.pop %v5346
      %v5475 = vtanh.pop %v5347
      %v5476 = vtanh.pop %v5348
      %v5477 = vtanh.pop %v5349
      %v5478 = vtanh.pop %v5350
      %v5479 = vtanh.pop %v5351
      %v5480 = vtanh.pop %v5352
      %v5481 = vtanh.pop %v5353
      %v5482 = vtanh.pop %v5354
      %v5483 = vtanh.pop %v5355
      %v5484 = vtanh.pop %v5356
      %v5485 = vtanh.pop %v5357
      %v5486 = vtanh.pop %v5358
      %v5487 = vtanh.pop %v5359
      %v5488 = vtanh.pop %v5360
      %v5489 = vtanh.pop %v5361
      %v5490 = vtanh.pop %v5362
      %v5491 = vtanh.pop %v5363
      %v5492 = vtanh.pop %v5364
      %v5493 = vtanh.pop %v5365
      %v5494 = vtanh.pop %v5366
      %v5495 = vtanh.pop %v5367
      %v5496 = vtanh.pop %v5368
      %v5497 = vtanh.pop %v5369
      %v5498 = vtanh.pop %v5370
      %v5499 = vtanh.pop %v5371
      %v5500 = vtanh.pop %v5372
      %v5501 = vadd.f32 %v5373, 1.0
      %v5502 = vadd.f32 %v5374, 1.0
      %v5503 = vadd.f32 %v5375, 1.0
      %v5504 = vadd.f32 %v5376, 1.0
      %v5505 = vadd.f32 %v5377, 1.0
      %v5506 = vadd.f32 %v5378, 1.0
      %v5507 = vadd.f32 %v5379, 1.0
      %v5508 = vadd.f32 %v5380, 1.0
      %v5509 = vadd.f32 %v5381, 1.0
      %v5510 = vadd.f32 %v5382, 1.0
      %v5511 = vadd.f32 %v5383, 1.0
      %v5512 = vadd.f32 %v5384, 1.0
      %v5513 = vadd.f32 %v5385, 1.0
      %v5514 = vadd.f32 %v5386, 1.0
      %v5515 = vadd.f32 %v5387, 1.0
      %v5516 = vadd.f32 %v5388, 1.0
      %v5517 = vadd.f32 %v5389, 1.0
      %v5518 = vadd.f32 %v5390, 1.0
      %v5519 = vadd.f32 %v5391, 1.0
      %v5520 = vadd.f32 %v5392, 1.0
      %v5521 = vadd.f32 %v5393, 1.0
      %v5522 = vadd.f32 %v5394, 1.0
      %v5523 = vadd.f32 %v5395, 1.0
      %v5524 = vadd.f32 %v5396, 1.0
      %v5525 = vadd.f32 %v5397, 1.0
      %v5526 = vadd.f32 %v5398, 1.0
      %v5527 = vadd.f32 %v5399, 1.0
      %v5528 = vadd.f32 %v5400, 1.0
      %v5529 = vadd.f32 %v5401, 1.0
      %v5530 = vadd.f32 %v5402, 1.0
      %v5531 = vadd.f32 %v5403, 1.0
      %v5532 = vadd.f32 %v5404, 1.0
      %v5533 = vadd.f32 %v5405, 1.0
      %v5534 = vadd.f32 %v5406, 1.0
      %v5535 = vadd.f32 %v5407, 1.0
      %v5536 = vadd.f32 %v5408, 1.0
      %v5537 = vadd.f32 %v5409, 1.0
      %v5538 = vadd.f32 %v5410, 1.0
      %v5539 = vadd.f32 %v5411, 1.0
      %v5540 = vadd.f32 %v5412, 1.0
      %v5541 = vadd.f32 %v5413, 1.0
      %v5542 = vadd.f32 %v5414, 1.0
      %v5543 = vadd.f32 %v5415, 1.0
      %v5544 = vadd.f32 %v5416, 1.0
      %v5545 = vadd.f32 %v5417, 1.0
      %v5546 = vadd.f32 %v5418, 1.0
      %v5547 = vadd.f32 %v5419, 1.0
      %v5548 = vadd.f32 %v5420, 1.0
      %v5549 = vadd.f32 %v5421, 1.0
      %v5550 = vadd.f32 %v5422, 1.0
      %v5551 = vadd.f32 %v5423, 1.0
      %v5552 = vadd.f32 %v5424, 1.0
      %v5553 = vadd.f32 %v5425, 1.0
      %v5554 = vadd.f32 %v5426, 1.0
      %v5555 = vadd.f32 %v5427, 1.0
      %v5556 = vadd.f32 %v5428, 1.0
      %v5557 = vadd.f32 %v5429, 1.0
      %v5558 = vadd.f32 %v5430, 1.0
      %v5559 = vadd.f32 %v5431, 1.0
      %v5560 = vadd.f32 %v5432, 1.0
      %v5561 = vadd.f32 %v5433, 1.0
      %v5562 = vadd.f32 %v5434, 1.0
      %v5563 = vadd.f32 %v5435, 1.0
      %v5564 = vadd.f32 %v5436, 1.0
      %v5565 = vadd.f32 %v5437, 1.0
      %v5566 = vadd.f32 %v5438, 1.0
      %v5567 = vadd.f32 %v5439, 1.0
      %v5568 = vadd.f32 %v5440, 1.0
      %v5569 = vadd.f32 %v5441, 1.0
      %v5570 = vadd.f32 %v5442, 1.0
      %v5571 = vadd.f32 %v5443, 1.0
      %v5572 = vadd.f32 %v5444, 1.0
      %v5573 = vadd.f32 %v5445, 1.0
      %v5574 = vadd.f32 %v5446, 1.0
      %v5575 = vadd.f32 %v5447, 1.0
      %v5576 = vadd.f32 %v5448, 1.0
      %v5577 = vadd.f32 %v5449, 1.0
      %v5578 = vadd.f32 %v5450, 1.0
      %v5579 = vadd.f32 %v5451, 1.0
      %v5580 = vadd.f32 %v5452, 1.0
      %v5581 = vadd.f32 %v5453, 1.0
      %v5582 = vadd.f32 %v5454, 1.0
      %v5583 = vadd.f32 %v5455, 1.0
      %v5584 = vadd.f32 %v5456, 1.0
      %v5585 = vadd.f32 %v5457, 1.0
      %v5586 = vadd.f32 %v5458, 1.0
      %v5587 = vadd.f32 %v5459, 1.0
      %v5588 = vadd.f32 %v5460, 1.0
      %v5589 = vadd.f32 %v5461, 1.0
      %v5590 = vadd.f32 %v5462, 1.0
      %v5591 = vadd.f32 %v5463, 1.0
      %v5592 = vadd.f32 %v5464, 1.0
      %v5593 = vadd.f32 %v5465, 1.0
      %v5594 = vadd.f32 %v5466, 1.0
      %v5595 = vadd.f32 %v5467, 1.0
      %v5596 = vadd.f32 %v5468, 1.0
      %v5597 = vadd.f32 %v5469, 1.0
      %v5598 = vadd.f32 %v5470, 1.0
      %v5599 = vadd.f32 %v5471, 1.0
      %v5600 = vadd.f32 %v5472, 1.0
      %v5601 = vadd.f32 %v5473, 1.0
      %v5602 = vadd.f32 %v5474, 1.0
      %v5603 = vadd.f32 %v5475, 1.0
      %v5604 = vadd.f32 %v5476, 1.0
      %v5605 = vadd.f32 %v5477, 1.0
      %v5606 = vadd.f32 %v5478, 1.0
      %v5607 = vadd.f32 %v5479, 1.0
      %v5608 = vadd.f32 %v5480, 1.0
      %v5609 = vadd.f32 %v5481, 1.0
      %v5610 = vadd.f32 %v5482, 1.0
      %v5611 = vadd.f32 %v5483, 1.0
      %v5612 = vadd.f32 %v5484, 1.0
      %v5613 = vadd.f32 %v5485, 1.0
      %v5614 = vadd.f32 %v5486, 1.0
      %v5615 = vadd.f32 %v5487, 1.0
      %v5616 = vadd.f32 %v5488, 1.0
      %v5617 = vadd.f32 %v5489, 1.0
      %v5618 = vadd.f32 %v5490, 1.0
      %v5619 = vadd.f32 %v5491, 1.0
      %v5620 = vadd.f32 %v5492, 1.0
      %v5621 = vadd.f32 %v5493, 1.0
      %v5622 = vadd.f32 %v5494, 1.0
      %v5623 = vadd.f32 %v5495, 1.0
      %v5624 = vadd.f32 %v5496, 1.0
      %v5625 = vadd.f32 %v5497, 1.0
      %v5626 = vadd.f32 %v5498, 1.0
      %v5627 = vadd.f32 %v5499, 1.0
      %v5628 = vadd.f32 %v5500, 1.0
      %v5629 = vmul.f32 %v4605, %v5501
      %v5630 = vmul.f32 %v4606, %v5502
      %v5631 = vmul.f32 %v4607, %v5503
      %v5632 = vmul.f32 %v4608, %v5504
      %v5633 = vmul.f32 %v4609, %v5505
      %v5634 = vmul.f32 %v4610, %v5506
      %v5635 = vmul.f32 %v4611, %v5507
      %v5636 = vmul.f32 %v4612, %v5508
      %v5637 = vmul.f32 %v4613, %v5509
      %v5638 = vmul.f32 %v4614, %v5510
      %v5639 = vmul.f32 %v4615, %v5511
      %v5640 = vmul.f32 %v4616, %v5512
      %v5641 = vmul.f32 %v4617, %v5513
      %v5642 = vmul.f32 %v4618, %v5514
      %v5643 = vmul.f32 %v4619, %v5515
      %v5644 = vmul.f32 %v4620, %v5516
      %v5645 = vmul.f32 %v4621, %v5517
      %v5646 = vmul.f32 %v4622, %v5518
      %v5647 = vmul.f32 %v4623, %v5519
      %v5648 = vmul.f32 %v4624, %v5520
      %v5649 = vmul.f32 %v4625, %v5521
      %v5650 = vmul.f32 %v4626, %v5522
      %v5651 = vmul.f32 %v4627, %v5523
      %v5652 = vmul.f32 %v4628, %v5524
      %v5653 = vmul.f32 %v4629, %v5525
      %v5654 = vmul.f32 %v4630, %v5526
      %v5655 = vmul.f32 %v4631, %v5527
      %v5656 = vmul.f32 %v4632, %v5528
      %v5657 = vmul.f32 %v4633, %v5529
      %v5658 = vmul.f32 %v4634, %v5530
      %v5659 = vmul.f32 %v4635, %v5531
      %v5660 = vmul.f32 %v4636, %v5532
      %v5661 = vmul.f32 %v4637, %v5533
      %v5662 = vmul.f32 %v4638, %v5534
      %v5663 = vmul.f32 %v4639, %v5535
      %v5664 = vmul.f32 %v4640, %v5536
      %v5665 = vmul.f32 %v4641, %v5537
      %v5666 = vmul.f32 %v4642, %v5538
      %v5667 = vmul.f32 %v4643, %v5539
      %v5668 = vmul.f32 %v4644, %v5540
      %v5669 = vmul.f32 %v4645, %v5541
      %v5670 = vmul.f32 %v4646, %v5542
      %v5671 = vmul.f32 %v4647, %v5543
      %v5672 = vmul.f32 %v4648, %v5544
      %v5673 = vmul.f32 %v4649, %v5545
      %v5674 = vmul.f32 %v4650, %v5546
      %v5675 = vmul.f32 %v4651, %v5547
      %v5676 = vmul.f32 %v4652, %v5548
      %v5677 = vmul.f32 %v4653, %v5549
      %v5678 = vmul.f32 %v4654, %v5550
      %v5679 = vmul.f32 %v4655, %v5551
      %v5680 = vmul.f32 %v4656, %v5552
      %v5681 = vmul.f32 %v4657, %v5553
      %v5682 = vmul.f32 %v4658, %v5554
      %v5683 = vmul.f32 %v4659, %v5555
      %v5684 = vmul.f32 %v4660, %v5556
      %v5685 = vmul.f32 %v4661, %v5557
      %v5686 = vmul.f32 %v4662, %v5558
      %v5687 = vmul.f32 %v4663, %v5559
      %v5688 = vmul.f32 %v4664, %v5560
      %v5689 = vmul.f32 %v4665, %v5561
      %v5690 = vmul.f32 %v4666, %v5562
      %v5691 = vmul.f32 %v4667, %v5563
      %v5692 = vmul.f32 %v4668, %v5564
      %v5693 = vmul.f32 %v4669, %v5565
      %v5694 = vmul.f32 %v4670, %v5566
      %v5695 = vmul.f32 %v4671, %v5567
      %v5696 = vmul.f32 %v4672, %v5568
      %v5697 = vmul.f32 %v4673, %v5569
      %v5698 = vmul.f32 %v4674, %v5570
      %v5699 = vmul.f32 %v4675, %v5571
      %v5700 = vmul.f32 %v4676, %v5572
      %v5701 = vmul.f32 %v4677, %v5573
      %v5702 = vmul.f32 %v4678, %v5574
      %v5703 = vmul.f32 %v4679, %v5575
      %v5704 = vmul.f32 %v4680, %v5576
      %v5705 = vmul.f32 %v4681, %v5577
      %v5706 = vmul.f32 %v4682, %v5578
      %v5707 = vmul.f32 %v4683, %v5579
      %v5708 = vmul.f32 %v4684, %v5580
      %v5709 = vmul.f32 %v4685, %v5581
      %v5710 = vmul.f32 %v4686, %v5582
      %v5711 = vmul.f32 %v4687, %v5583
      %v5712 = vmul.f32 %v4688, %v5584
      %v5713 = vmul.f32 %v4689, %v5585
      %v5714 = vmul.f32 %v4690, %v5586
      %v5715 = vmul.f32 %v4691, %v5587
      %v5716 = vmul.f32 %v4692, %v5588
      %v5717 = vmul.f32 %v4693, %v5589
      %v5718 = vmul.f32 %v4694, %v5590
      %v5719 = vmul.f32 %v4695, %v5591
      %v5720 = vmul.f32 %v4696, %v5592
      %v5721 = vmul.f32 %v4697, %v5593
      %v5722 = vmul.f32 %v4698, %v5594
      %v5723 = vmul.f32 %v4699, %v5595
      %v5724 = vmul.f32 %v4700, %v5596
      %v5725 = vmul.f32 %v4701, %v5597
      %v5726 = vmul.f32 %v4702, %v5598
      %v5727 = vmul.f32 %v4703, %v5599
      %v5728 = vmul.f32 %v4704, %v5600
      %v5729 = vmul.f32 %v4705, %v5601
      %v5730 = vmul.f32 %v4706, %v5602
      %v5731 = vmul.f32 %v4707, %v5603
      %v5732 = vmul.f32 %v4708, %v5604
      %v5733 = vmul.f32 %v4709, %v5605
      %v5734 = vmul.f32 %v4710, %v5606
      %v5735 = vmul.f32 %v4711, %v5607
      %v5736 = vmul.f32 %v4712, %v5608
      %v5737 = vmul.f32 %v4713, %v5609
      %v5738 = vmul.f32 %v4714, %v5610
      %v5739 = vmul.f32 %v4715, %v5611
      %v5740 = vmul.f32 %v4716, %v5612
      %v5741 = vmul.f32 %v4717, %v5613
      %v5742 = vmul.f32 %v4718, %v5614
      %v5743 = vmul.f32 %v4719, %v5615
      %v5744 = vmul.f32 %v4720, %v5616
      %v5745 = vmul.f32 %v4721, %v5617
      %v5746 = vmul.f32 %v4722, %v5618
      %v5747 = vmul.f32 %v4723, %v5619
      %v5748 = vmul.f32 %v4724, %v5620
      %v5749 = vmul.f32 %v4725, %v5621
      %v5750 = vmul.f32 %v4726, %v5622
      %v5751 = vmul.f32 %v4727, %v5623
      %v5752 = vmul.f32 %v4728, %v5624
      %v5753 = vmul.f32 %v4729, %v5625
      %v5754 = vmul.f32 %v4730, %v5626
      %v5755 = vmul.f32 %v4731, %v5627
      %v5756 = vmul.f32 %v4732, %v5628
      %v5757 = vpack.c.bf16 %v5637, %v5629
      %v5758 = vpack.c.bf16 %v5638, %v5630
      %v5759 = vpack.c.bf16 %v5639, %v5631
      %v5760 = vpack.c.bf16 %v5640, %v5632
      %v5761 = vpack.c.bf16 %v5641, %v5633
      %v5762 = vpack.c.bf16 %v5642, %v5634
      %v5763 = vpack.c.bf16 %v5643, %v5635
      %v5764 = vpack.c.bf16 %v5644, %v5636
      %v5765 = vpack.c.bf16 %v5653, %v5645
      %v5766 = vpack.c.bf16 %v5654, %v5646
      %v5767 = vpack.c.bf16 %v5655, %v5647
      %v5768 = vpack.c.bf16 %v5656, %v5648
      %v5769 = vpack.c.bf16 %v5657, %v5649
      %v5770 = vpack.c.bf16 %v5658, %v5650
      %v5771 = vpack.c.bf16 %v5659, %v5651
      %v5772 = vpack.c.bf16 %v5660, %v5652
      %v5773 = vpack.c.bf16 %v5669, %v5661
      %v5774 = vpack.c.bf16 %v5670, %v5662
      %v5775 = vpack.c.bf16 %v5671, %v5663
      %v5776 = vpack.c.bf16 %v5672, %v5664
      %v5777 = vpack.c.bf16 %v5673, %v5665
      %v5778 = vpack.c.bf16 %v5674, %v5666
      %v5779 = vpack.c.bf16 %v5675, %v5667
      %v5780 = vpack.c.bf16 %v5676, %v5668
      %v5781 = vpack.c.bf16 %v5685, %v5677
      %v5782 = vpack.c.bf16 %v5686, %v5678
      %v5783 = vpack.c.bf16 %v5687, %v5679
      %v5784 = vpack.c.bf16 %v5688, %v5680
      %v5785 = vpack.c.bf16 %v5689, %v5681
      %v5786 = vpack.c.bf16 %v5690, %v5682
      %v5787 = vpack.c.bf16 %v5691, %v5683
      %v5788 = vpack.c.bf16 %v5692, %v5684
      %v5789 = vpack.c.bf16 %v5701, %v5693
      %v5790 = vpack.c.bf16 %v5702, %v5694
      %v5791 = vpack.c.bf16 %v5703, %v5695
      %v5792 = vpack.c.bf16 %v5704, %v5696
      %v5793 = vpack.c.bf16 %v5705, %v5697
      %v5794 = vpack.c.bf16 %v5706, %v5698
      %v5795 = vpack.c.bf16 %v5707, %v5699
      %v5796 = vpack.c.bf16 %v5708, %v5700
      %v5797 = vpack.c.bf16 %v5717, %v5709
      %v5798 = vpack.c.bf16 %v5718, %v5710
      %v5799 = vpack.c.bf16 %v5719, %v5711
      %v5800 = vpack.c.bf16 %v5720, %v5712
      %v5801 = vpack.c.bf16 %v5721, %v5713
      %v5802 = vpack.c.bf16 %v5722, %v5714
      %v5803 = vpack.c.bf16 %v5723, %v5715
      %v5804 = vpack.c.bf16 %v5724, %v5716
      %v5805 = vpack.c.bf16 %v5733, %v5725
      %v5806 = vpack.c.bf16 %v5734, %v5726
      %v5807 = vpack.c.bf16 %v5735, %v5727
      %v5808 = vpack.c.bf16 %v5736, %v5728
      %v5809 = vpack.c.bf16 %v5737, %v5729
      %v5810 = vpack.c.bf16 %v5738, %v5730
      %v5811 = vpack.c.bf16 %v5739, %v5731
      %v5812 = vpack.c.bf16 %v5740, %v5732
      %v5813 = vpack.c.bf16 %v5749, %v5741
      %v5814 = vpack.c.bf16 %v5750, %v5742
      %v5815 = vpack.c.bf16 %v5751, %v5743
      %v5816 = vpack.c.bf16 %v5752, %v5744
      %v5817 = vpack.c.bf16 %v5753, %v5745
      %v5818 = vpack.c.bf16 %v5754, %v5746
      %v5819 = vpack.c.bf16 %v5755, %v5747
      %v5820 = vpack.c.bf16 %v5756, %v5748
      %v5821 = vld [vmem:[%s11] sm:$0xff]
      %v5822 = vld [vmem:[%s11 + $0x8] sm:$0xff]
      %v5823 = vld [vmem:[%s11 + $0x10] sm:$0xff]
      %v5824 = vld [vmem:[%s11 + $0x18] sm:$0xff]
      %v5825 = vld [vmem:[%s11 + $0x20] sm:$0xff]
      %v5826 = vld [vmem:[%s11 + $0x28] sm:$0xff]
      %v5827 = vld [vmem:[%s11 + $0x30] sm:$0xff]
      %v5828 = vld [vmem:[%s11 + $0x38] sm:$0xff]
      %v5829 = vld [vmem:[%s11 + $0x40] sm:$0xff]
      %v5830 = vld [vmem:[%s11 + $0x48] sm:$0xff]
      %v5831 = vld [vmem:[%s11 + $0x50] sm:$0xff]
      %v5832 = vld [vmem:[%s11 + $0x58] sm:$0xff]
      %v5833 = vld [vmem:[%s11 + $0x60] sm:$0xff]
      %v5834 = vld [vmem:[%s11 + $0x68] sm:$0xff]
      %v5835 = vld [vmem:[%s11 + $0x70] sm:$0xff]
      %v5836 = vld [vmem:[%s11 + $0x78] sm:$0xff]
      %v5837 = vld [vmem:[%s11 + $0x80] sm:$0xff]
      %v5838 = vld [vmem:[%s11 + $0x88] sm:$0xff]
      %v5839 = vld [vmem:[%s11 + $0x90] sm:$0xff]
      %v5840 = vld [vmem:[%s11 + $0x98] sm:$0xff]
      %v5841 = vld [vmem:[%s11 + $0xa0] sm:$0xff]
      %v5842 = vld [vmem:[%s11 + $0xa8] sm:$0xff]
      %v5843 = vld [vmem:[%s11 + $0xb0] sm:$0xff]
      %v5844 = vld [vmem:[%s11 + $0xb8] sm:$0xff]
      %v5845 = vld [vmem:[%s11 + $0xc0] sm:$0xff]
      %v5846 = vld [vmem:[%s11 + $0xc8] sm:$0xff]
      %v5847 = vld [vmem:[%s11 + $0xd0] sm:$0xff]
      %v5848 = vld [vmem:[%s11 + $0xd8] sm:$0xff]
      %v5849 = vld [vmem:[%s11 + $0xe0] sm:$0xff]
      %v5850 = vld [vmem:[%s11 + $0xe8] sm:$0xff]
      %v5851 = vld [vmem:[%s11 + $0xf0] sm:$0xff]
      %v5852 = vld [vmem:[%s11 + $0xf8] sm:$0xff]
      %v5853 = vld [vmem:[%s11 + $0x100] sm:$0xff]
      %v5854 = vld [vmem:[%s11 + $0x108] sm:$0xff]
      %v5855 = vld [vmem:[%s11 + $0x110] sm:$0xff]
      %v5856 = vld [vmem:[%s11 + $0x118] sm:$0xff]
      %v5857 = vld [vmem:[%s11 + $0x120] sm:$0xff]
      %v5858 = vld [vmem:[%s11 + $0x128] sm:$0xff]
      %v5859 = vld [vmem:[%s11 + $0x130] sm:$0xff]
      %v5860 = vld [vmem:[%s11 + $0x138] sm:$0xff]
      %v5861 = vld [vmem:[%s11 + $0x140] sm:$0xff]
      %v5862 = vld [vmem:[%s11 + $0x148] sm:$0xff]
      %v5863 = vld [vmem:[%s11 + $0x150] sm:$0xff]
      %v5864 = vld [vmem:[%s11 + $0x158] sm:$0xff]
      %v5865 = vld [vmem:[%s11 + $0x160] sm:$0xff]
      %v5866 = vld [vmem:[%s11 + $0x168] sm:$0xff]
      %v5867 = vld [vmem:[%s11 + $0x170] sm:$0xff]
      %v5868 = vld [vmem:[%s11 + $0x178] sm:$0xff]
      %v5869 = vld [vmem:[%s11 + $0x180] sm:$0xff]
      %v5870 = vld [vmem:[%s11 + $0x188] sm:$0xff]
      %v5871 = vld [vmem:[%s11 + $0x190] sm:$0xff]
      %v5872 = vld [vmem:[%s11 + $0x198] sm:$0xff]
      %v5873 = vld [vmem:[%s11 + $0x1a0] sm:$0xff]
      %v5874 = vld [vmem:[%s11 + $0x1a8] sm:$0xff]
      %v5875 = vld [vmem:[%s11 + $0x1b0] sm:$0xff]
      %v5876 = vld [vmem:[%s11 + $0x1b8] sm:$0xff]
      %v5877 = vld [vmem:[%s11 + $0x1c0] sm:$0xff]
      %v5878 = vld [vmem:[%s11 + $0x1c8] sm:$0xff]
      %v5879 = vld [vmem:[%s11 + $0x1d0] sm:$0xff]
      %v5880 = vld [vmem:[%s11 + $0x1d8] sm:$0xff]
      %v5881 = vld [vmem:[%s11 + $0x1e0] sm:$0xff]
      %v5882 = vld [vmem:[%s11 + $0x1e8] sm:$0xff]
      %v5883 = vld [vmem:[%s11 + $0x1f0] sm:$0xff]
      %v5884 = vld [vmem:[%s11 + $0x1f8] sm:$0xff]
      %v5885 = vld [vmem:[%s11 + $0x200] sm:$0xff]
      %v5886 = vld [vmem:[%s11 + $0x208] sm:$0xff]
      %v5887 = vld [vmem:[%s11 + $0x210] sm:$0xff]
      %v5888 = vld [vmem:[%s11 + $0x218] sm:$0xff]
      %v5889 = vld [vmem:[%s11 + $0x220] sm:$0xff]
      %v5890 = vld [vmem:[%s11 + $0x228] sm:$0xff]
      %v5891 = vld [vmem:[%s11 + $0x230] sm:$0xff]
      %v5892 = vld [vmem:[%s11 + $0x238] sm:$0xff]
      %v5893 = vld [vmem:[%s11 + $0x240] sm:$0xff]
      %v5894 = vld [vmem:[%s11 + $0x248] sm:$0xff]
      %v5895 = vld [vmem:[%s11 + $0x250] sm:$0xff]
      %v5896 = vld [vmem:[%s11 + $0x258] sm:$0xff]
      %v5897 = vld [vmem:[%s11 + $0x260] sm:$0xff]
      %v5898 = vld [vmem:[%s11 + $0x268] sm:$0xff]
      %v5899 = vld [vmem:[%s11 + $0x270] sm:$0xff]
      %v5900 = vld [vmem:[%s11 + $0x278] sm:$0xff]
      %v5901 = vld [vmem:[%s11 + $0x280] sm:$0xff]
      %v5902 = vld [vmem:[%s11 + $0x288] sm:$0xff]
      %v5903 = vld [vmem:[%s11 + $0x290] sm:$0xff]
      %v5904 = vld [vmem:[%s11 + $0x298] sm:$0xff]
      %v5905 = vld [vmem:[%s11 + $0x2a0] sm:$0xff]
      %v5906 = vld [vmem:[%s11 + $0x2a8] sm:$0xff]
      %v5907 = vld [vmem:[%s11 + $0x2b0] sm:$0xff]
      %v5908 = vld [vmem:[%s11 + $0x2b8] sm:$0xff]
      %v5909 = vld [vmem:[%s11 + $0x2c0] sm:$0xff]
      %v5910 = vld [vmem:[%s11 + $0x2c8] sm:$0xff]
      %v5911 = vld [vmem:[%s11 + $0x2d0] sm:$0xff]
      %v5912 = vld [vmem:[%s11 + $0x2d8] sm:$0xff]
      %v5913 = vld [vmem:[%s11 + $0x2e0] sm:$0xff]
      %v5914 = vld [vmem:[%s11 + $0x2e8] sm:$0xff]
      %v5915 = vld [vmem:[%s11 + $0x2f0] sm:$0xff]
      %v5916 = vld [vmem:[%s11 + $0x2f8] sm:$0xff]
      %v5917 = vld [vmem:[%s11 + $0x300] sm:$0xff]
      %v5918 = vld [vmem:[%s11 + $0x308] sm:$0xff]
      %v5919 = vld [vmem:[%s11 + $0x310] sm:$0xff]
      %v5920 = vld [vmem:[%s11 + $0x318] sm:$0xff]
      %v5921 = vld [vmem:[%s11 + $0x320] sm:$0xff]
      %v5922 = vld [vmem:[%s11 + $0x328] sm:$0xff]
      %v5923 = vld [vmem:[%s11 + $0x330] sm:$0xff]
      %v5924 = vld [vmem:[%s11 + $0x338] sm:$0xff]
      %v5925 = vld [vmem:[%s11 + $0x340] sm:$0xff]
      %v5926 = vld [vmem:[%s11 + $0x348] sm:$0xff]
      %v5927 = vld [vmem:[%s11 + $0x350] sm:$0xff]
      %v5928 = vld [vmem:[%s11 + $0x358] sm:$0xff]
      %v5929 = vld [vmem:[%s11 + $0x360] sm:$0xff]
      %v5930 = vld [vmem:[%s11 + $0x368] sm:$0xff]
      %v5931 = vld [vmem:[%s11 + $0x370] sm:$0xff]
      %v5932 = vld [vmem:[%s11 + $0x378] sm:$0xff]
      %v5933 = vld [vmem:[%s11 + $0x380] sm:$0xff]
      %v5934 = vld [vmem:[%s11 + $0x388] sm:$0xff]
      %v5935 = vld [vmem:[%s11 + $0x390] sm:$0xff]
      %v5936 = vld [vmem:[%s11 + $0x398] sm:$0xff]
      %v5937 = vld [vmem:[%s11 + $0x3a0] sm:$0xff]
      %v5938 = vld [vmem:[%s11 + $0x3a8] sm:$0xff]
      %v5939 = vld [vmem:[%s11 + $0x3b0] sm:$0xff]
      %v5940 = vld [vmem:[%s11 + $0x3b8] sm:$0xff]
      %v5941 = vld [vmem:[%s11 + $0x3c0] sm:$0xff]
      %v5942 = vld [vmem:[%s11 + $0x3c8] sm:$0xff]
      %v5943 = vld [vmem:[%s11 + $0x3d0] sm:$0xff]
      %v5944 = vld [vmem:[%s11 + $0x3d8] sm:$0xff]
      %v5945 = vld [vmem:[%s11 + $0x3e0] sm:$0xff]
      %v5946 = vld [vmem:[%s11 + $0x3e8] sm:$0xff]
      %v5947 = vld [vmem:[%s11 + $0x3f0] sm:$0xff]
      %v5948 = vld [vmem:[%s11 + $0x3f8] sm:$0xff]
      %v5949 = vld [vmem:[%s12] sm:$0x3]
      %v5951 = vlaneseq
      %v5952 = vshrl.u32 %v5951, 7
      %v5953 = vsub.s32 0, %v5952
      %v5954 = vrot.slane %v5949, %v5953
      %v5955 = vlaneseq
      %v5956 = vshrl.u32 %v5955, 7
      %v5957 = vsub.s32 1, %v5956
      %v5958 = vrot.slane %v5949, %v5957
      %v6089 = vunpack.c.l.b16 %v5821
      %v6090 = vunpack.c.h.b16 %v5821
      %v6091 = vunpack.c.l.b16 %v5822
      %v6092 = vunpack.c.h.b16 %v5822
      %v6093 = vunpack.c.l.b16 %v5823
      %v6094 = vunpack.c.h.b16 %v5823
      %v6095 = vunpack.c.l.b16 %v5824
      %v6096 = vunpack.c.h.b16 %v5824
      %v6097 = vunpack.c.l.b16 %v5825
      %v6098 = vunpack.c.h.b16 %v5825
      %v6099 = vunpack.c.l.b16 %v5826
      %v6100 = vunpack.c.h.b16 %v5826
      %v6101 = vunpack.c.l.b16 %v5827
      %v6102 = vunpack.c.h.b16 %v5827
      %v6103 = vunpack.c.l.b16 %v5828
      %v6104 = vunpack.c.h.b16 %v5828
      %v6105 = vunpack.c.l.b16 %v5829
      %v6106 = vunpack.c.h.b16 %v5829
      %v6107 = vunpack.c.l.b16 %v5830
      %v6108 = vunpack.c.h.b16 %v5830
      %v6109 = vunpack.c.l.b16 %v5831
      %v6110 = vunpack.c.h.b16 %v5831
      %v6111 = vunpack.c.l.b16 %v5832
      %v6112 = vunpack.c.h.b16 %v5832
      %v6113 = vunpack.c.l.b16 %v5833
      %v6114 = vunpack.c.h.b16 %v5833
      %v6115 = vunpack.c.l.b16 %v5834
      %v6116 = vunpack.c.h.b16 %v5834
      %v6117 = vunpack.c.l.b16 %v5835
      %v6118 = vunpack.c.h.b16 %v5835
      %v6119 = vunpack.c.l.b16 %v5836
      %v6120 = vunpack.c.h.b16 %v5836
      %v6121 = vunpack.c.l.b16 %v5837
      %v6122 = vunpack.c.h.b16 %v5837
      %v6123 = vunpack.c.l.b16 %v5838
      %v6124 = vunpack.c.h.b16 %v5838
      %v6125 = vunpack.c.l.b16 %v5839
      %v6126 = vunpack.c.h.b16 %v5839
      %v6127 = vunpack.c.l.b16 %v5840
      %v6128 = vunpack.c.h.b16 %v5840
      %v6129 = vunpack.c.l.b16 %v5841
      %v6130 = vunpack.c.h.b16 %v5841
      %v6131 = vunpack.c.l.b16 %v5842
      %v6132 = vunpack.c.h.b16 %v5842
      %v6133 = vunpack.c.l.b16 %v5843
      %v6134 = vunpack.c.h.b16 %v5843
      %v6135 = vunpack.c.l.b16 %v5844
      %v6136 = vunpack.c.h.b16 %v5844
      %v6137 = vunpack.c.l.b16 %v5845
      %v6138 = vunpack.c.h.b16 %v5845
      %v6139 = vunpack.c.l.b16 %v5846
      %v6140 = vunpack.c.h.b16 %v5846
      %v6141 = vunpack.c.l.b16 %v5847
      %v6142 = vunpack.c.h.b16 %v5847
      %v6143 = vunpack.c.l.b16 %v5848
      %v6144 = vunpack.c.h.b16 %v5848
      %v6145 = vunpack.c.l.b16 %v5849
      %v6146 = vunpack.c.h.b16 %v5849
      %v6147 = vunpack.c.l.b16 %v5850
      %v6148 = vunpack.c.h.b16 %v5850
      %v6149 = vunpack.c.l.b16 %v5851
      %v6150 = vunpack.c.h.b16 %v5851
      %v6151 = vunpack.c.l.b16 %v5852
      %v6152 = vunpack.c.h.b16 %v5852
      %v6153 = vunpack.c.l.b16 %v5853
      %v6154 = vunpack.c.h.b16 %v5853
      %v6155 = vunpack.c.l.b16 %v5854
      %v6156 = vunpack.c.h.b16 %v5854
      %v6157 = vunpack.c.l.b16 %v5855
      %v6158 = vunpack.c.h.b16 %v5855
      %v6159 = vunpack.c.l.b16 %v5856
      %v6160 = vunpack.c.h.b16 %v5856
      %v6161 = vunpack.c.l.b16 %v5857
      %v6162 = vunpack.c.h.b16 %v5857
      %v6163 = vunpack.c.l.b16 %v5858
      %v6164 = vunpack.c.h.b16 %v5858
      %v6165 = vunpack.c.l.b16 %v5859
      %v6166 = vunpack.c.h.b16 %v5859
      %v6167 = vunpack.c.l.b16 %v5860
      %v6168 = vunpack.c.h.b16 %v5860
      %v6169 = vunpack.c.l.b16 %v5861
      %v6170 = vunpack.c.h.b16 %v5861
      %v6171 = vunpack.c.l.b16 %v5862
      %v6172 = vunpack.c.h.b16 %v5862
      %v6173 = vunpack.c.l.b16 %v5863
      %v6174 = vunpack.c.h.b16 %v5863
      %v6175 = vunpack.c.l.b16 %v5864
      %v6176 = vunpack.c.h.b16 %v5864
      %v6177 = vunpack.c.l.b16 %v5865
      %v6178 = vunpack.c.h.b16 %v5865
      %v6179 = vunpack.c.l.b16 %v5866
      %v6180 = vunpack.c.h.b16 %v5866
      %v6181 = vunpack.c.l.b16 %v5867
      %v6182 = vunpack.c.h.b16 %v5867
      %v6183 = vunpack.c.l.b16 %v5868
      %v6184 = vunpack.c.h.b16 %v5868
      %v6185 = vunpack.c.l.b16 %v5869
      %v6186 = vunpack.c.h.b16 %v5869
      %v6187 = vunpack.c.l.b16 %v5870
      %v6188 = vunpack.c.h.b16 %v5870
      %v6189 = vunpack.c.l.b16 %v5871
      %v6190 = vunpack.c.h.b16 %v5871
      %v6191 = vunpack.c.l.b16 %v5872
      %v6192 = vunpack.c.h.b16 %v5872
      %v6193 = vunpack.c.l.b16 %v5873
      %v6194 = vunpack.c.h.b16 %v5873
      %v6195 = vunpack.c.l.b16 %v5874
      %v6196 = vunpack.c.h.b16 %v5874
      %v6197 = vunpack.c.l.b16 %v5875
      %v6198 = vunpack.c.h.b16 %v5875
      %v6199 = vunpack.c.l.b16 %v5876
      %v6200 = vunpack.c.h.b16 %v5876
      %v6201 = vunpack.c.l.b16 %v5877
      %v6202 = vunpack.c.h.b16 %v5877
      %v6203 = vunpack.c.l.b16 %v5878
      %v6204 = vunpack.c.h.b16 %v5878
      %v6205 = vunpack.c.l.b16 %v5879
      %v6206 = vunpack.c.h.b16 %v5879
      %v6207 = vunpack.c.l.b16 %v5880
      %v6208 = vunpack.c.h.b16 %v5880
      %v6209 = vunpack.c.l.b16 %v5881
      %v6210 = vunpack.c.h.b16 %v5881
      %v6211 = vunpack.c.l.b16 %v5882
      %v6212 = vunpack.c.h.b16 %v5882
      %v6213 = vunpack.c.l.b16 %v5883
      %v6214 = vunpack.c.h.b16 %v5883
      %v6215 = vunpack.c.l.b16 %v5884
      %v6216 = vunpack.c.h.b16 %v5884
      %v6217 = vunpack.c.l.b16 %v5885
      %v6218 = vunpack.c.h.b16 %v5885
      %v6219 = vunpack.c.l.b16 %v5886
      %v6220 = vunpack.c.h.b16 %v5886
      %v6221 = vunpack.c.l.b16 %v5887
      %v6222 = vunpack.c.h.b16 %v5887
      %v6223 = vunpack.c.l.b16 %v5888
      %v6224 = vunpack.c.h.b16 %v5888
      %v6225 = vunpack.c.l.b16 %v5889
      %v6226 = vunpack.c.h.b16 %v5889
      %v6227 = vunpack.c.l.b16 %v5890
      %v6228 = vunpack.c.h.b16 %v5890
      %v6229 = vunpack.c.l.b16 %v5891
      %v6230 = vunpack.c.h.b16 %v5891
      %v6231 = vunpack.c.l.b16 %v5892
      %v6232 = vunpack.c.h.b16 %v5892
      %v6233 = vunpack.c.l.b16 %v5893
      %v6234 = vunpack.c.h.b16 %v5893
      %v6235 = vunpack.c.l.b16 %v5894
      %v6236 = vunpack.c.h.b16 %v5894
      %v6237 = vunpack.c.l.b16 %v5895
      %v6238 = vunpack.c.h.b16 %v5895
      %v6239 = vunpack.c.l.b16 %v5896
      %v6240 = vunpack.c.h.b16 %v5896
      %v6241 = vunpack.c.l.b16 %v5897
      %v6242 = vunpack.c.h.b16 %v5897
      %v6243 = vunpack.c.l.b16 %v5898
      %v6244 = vunpack.c.h.b16 %v5898
      %v6245 = vunpack.c.l.b16 %v5899
      %v6246 = vunpack.c.h.b16 %v5899
      %v6247 = vunpack.c.l.b16 %v5900
      %v6248 = vunpack.c.h.b16 %v5900
      %v6249 = vunpack.c.l.b16 %v5901
      %v6250 = vunpack.c.h.b16 %v5901
      %v6251 = vunpack.c.l.b16 %v5902
      %v6252 = vunpack.c.h.b16 %v5902
      %v6253 = vunpack.c.l.b16 %v5903
      %v6254 = vunpack.c.h.b16 %v5903
      %v6255 = vunpack.c.l.b16 %v5904
      %v6256 = vunpack.c.h.b16 %v5904
      %v6257 = vunpack.c.l.b16 %v5905
      %v6258 = vunpack.c.h.b16 %v5905
      %v6259 = vunpack.c.l.b16 %v5906
      %v6260 = vunpack.c.h.b16 %v5906
      %v6261 = vunpack.c.l.b16 %v5907
      %v6262 = vunpack.c.h.b16 %v5907
      %v6263 = vunpack.c.l.b16 %v5908
      %v6264 = vunpack.c.h.b16 %v5908
      %v6265 = vunpack.c.l.b16 %v5909
      %v6266 = vunpack.c.h.b16 %v5909
      %v6267 = vunpack.c.l.b16 %v5910
      %v6268 = vunpack.c.h.b16 %v5910
      %v6269 = vunpack.c.l.b16 %v5911
      %v6270 = vunpack.c.h.b16 %v5911
      %v6271 = vunpack.c.l.b16 %v5912
      %v6272 = vunpack.c.h.b16 %v5912
      %v6273 = vunpack.c.l.b16 %v5913
      %v6274 = vunpack.c.h.b16 %v5913
      %v6275 = vunpack.c.l.b16 %v5914
      %v6276 = vunpack.c.h.b16 %v5914
      %v6277 = vunpack.c.l.b16 %v5915
      %v6278 = vunpack.c.h.b16 %v5915
      %v6279 = vunpack.c.l.b16 %v5916
      %v6280 = vunpack.c.h.b16 %v5916
      %v6281 = vunpack.c.l.b16 %v5917
      %v6282 = vunpack.c.h.b16 %v5917
      %v6283 = vunpack.c.l.b16 %v5918
      %v6284 = vunpack.c.h.b16 %v5918
      %v6285 = vunpack.c.l.b16 %v5919
      %v6286 = vunpack.c.h.b16 %v5919
      %v6287 = vunpack.c.l.b16 %v5920
      %v6288 = vunpack.c.h.b16 %v5920
      %v6289 = vunpack.c.l.b16 %v5921
      %v6290 = vunpack.c.h.b16 %v5921
      %v6291 = vunpack.c.l.b16 %v5922
      %v6292 = vunpack.c.h.b16 %v5922
      %v6293 = vunpack.c.l.b16 %v5923
      %v6294 = vunpack.c.h.b16 %v5923
      %v6295 = vunpack.c.l.b16 %v5924
      %v6296 = vunpack.c.h.b16 %v5924
      %v6297 = vunpack.c.l.b16 %v5925
      %v6298 = vunpack.c.h.b16 %v5925
      %v6299 = vunpack.c.l.b16 %v5926
      %v6300 = vunpack.c.h.b16 %v5926
      %v6301 = vunpack.c.l.b16 %v5927
      %v6302 = vunpack.c.h.b16 %v5927
      %v6303 = vunpack.c.l.b16 %v5928
      %v6304 = vunpack.c.h.b16 %v5928
      %v6305 = vunpack.c.l.b16 %v5929
      %v6306 = vunpack.c.h.b16 %v5929
      %v6307 = vunpack.c.l.b16 %v5930
      %v6308 = vunpack.c.h.b16 %v5930
      %v6309 = vunpack.c.l.b16 %v5931
      %v6310 = vunpack.c.h.b16 %v5931
      %v6311 = vunpack.c.l.b16 %v5932
      %v6312 = vunpack.c.h.b16 %v5932
      %v6313 = vunpack.c.l.b16 %v5933
      %v6314 = vunpack.c.h.b16 %v5933
      %v6315 = vunpack.c.l.b16 %v5934
      %v6316 = vunpack.c.h.b16 %v5934
      %v6317 = vunpack.c.l.b16 %v5935
      %v6318 = vunpack.c.h.b16 %v5935
      %v6319 = vunpack.c.l.b16 %v5936
      %v6320 = vunpack.c.h.b16 %v5936
      %v6321 = vunpack.c.l.b16 %v5937
      %v6322 = vunpack.c.h.b16 %v5937
      %v6323 = vunpack.c.l.b16 %v5938
      %v6324 = vunpack.c.h.b16 %v5938
      %v6325 = vunpack.c.l.b16 %v5939
      %v6326 = vunpack.c.h.b16 %v5939
      %v6327 = vunpack.c.l.b16 %v5940
      %v6328 = vunpack.c.h.b16 %v5940
      %v6329 = vunpack.c.l.b16 %v5941
      %v6330 = vunpack.c.h.b16 %v5941
      %v6331 = vunpack.c.l.b16 %v5942
      %v6332 = vunpack.c.h.b16 %v5942
      %v6333 = vunpack.c.l.b16 %v5943
      %v6334 = vunpack.c.h.b16 %v5943
      %v6335 = vunpack.c.l.b16 %v5944
      %v6336 = vunpack.c.h.b16 %v5944
      %v6337 = vunpack.c.l.b16 %v5945
      %v6338 = vunpack.c.h.b16 %v5945
      %v6339 = vunpack.c.l.b16 %v5946
      %v6340 = vunpack.c.h.b16 %v5946
      %v6341 = vunpack.c.l.b16 %v5947
      %v6342 = vunpack.c.h.b16 %v5947
      %v6343 = vunpack.c.l.b16 %v5948
      %v6344 = vunpack.c.h.b16 %v5948
      %v6345 = vpack.c.b16 %v6091, %v6089
      %v6346 = vpack.c.b16 %v6092, %v6090
      %v6347 = vpack.c.b16 %v6095, %v6093
      %v6348 = vpack.c.b16 %v6096, %v6094
      %v6349 = vpack.c.b16 %v6099, %v6097
      %v6350 = vpack.c.b16 %v6100, %v6098
      %v6351 = vpack.c.b16 %v6103, %v6101
      %v6352 = vpack.c.b16 %v6104, %v6102
      %v6353 = vpack.c.b16 %v6107, %v6105
      %v6354 = vpack.c.b16 %v6108, %v6106
      %v6355 = vpack.c.b16 %v6111, %v6109
      %v6356 = vpack.c.b16 %v6112, %v6110
      %v6357 = vpack.c.b16 %v6115, %v6113
      %v6358 = vpack.c.b16 %v6116, %v6114
      %v6359 = vpack.c.b16 %v6119, %v6117
      %v6360 = vpack.c.b16 %v6120, %v6118
      %v6361 = vpack.c.b16 %v6123, %v6121
      %v6362 = vpack.c.b16 %v6124, %v6122
      %v6363 = vpack.c.b16 %v6127, %v6125
      %v6364 = vpack.c.b16 %v6128, %v6126
      %v6365 = vpack.c.b16 %v6131, %v6129
      %v6366 = vpack.c.b16 %v6132, %v6130
      %v6367 = vpack.c.b16 %v6135, %v6133
      %v6368 = vpack.c.b16 %v6136, %v6134
      %v6369 = vpack.c.b16 %v6139, %v6137
      %v6370 = vpack.c.b16 %v6140, %v6138
      %v6371 = vpack.c.b16 %v6143, %v6141
      %v6372 = vpack.c.b16 %v6144, %v6142
      %v6373 = vpack.c.b16 %v6147, %v6145
      %v6374 = vpack.c.b16 %v6148, %v6146
      %v6375 = vpack.c.b16 %v6151, %v6149
      %v6376 = vpack.c.b16 %v6152, %v6150
      %v6377 = vpack.c.b16 %v6155, %v6153
      %v6378 = vpack.c.b16 %v6156, %v6154
      %v6379 = vpack.c.b16 %v6159, %v6157
      %v6380 = vpack.c.b16 %v6160, %v6158
      %v6381 = vpack.c.b16 %v6163, %v6161
      %v6382 = vpack.c.b16 %v6164, %v6162
      %v6383 = vpack.c.b16 %v6167, %v6165
      %v6384 = vpack.c.b16 %v6168, %v6166
      %v6385 = vpack.c.b16 %v6171, %v6169
      %v6386 = vpack.c.b16 %v6172, %v6170
      %v6387 = vpack.c.b16 %v6175, %v6173
      %v6388 = vpack.c.b16 %v6176, %v6174
      %v6389 = vpack.c.b16 %v6179, %v6177
      %v6390 = vpack.c.b16 %v6180, %v6178
      %v6391 = vpack.c.b16 %v6183, %v6181
      %v6392 = vpack.c.b16 %v6184, %v6182
      %v6393 = vpack.c.b16 %v6187, %v6185
      %v6394 = vpack.c.b16 %v6188, %v6186
      %v6395 = vpack.c.b16 %v6191, %v6189
      %v6396 = vpack.c.b16 %v6192, %v6190
      %v6397 = vpack.c.b16 %v6195, %v6193
      %v6398 = vpack.c.b16 %v6196, %v6194
      %v6399 = vpack.c.b16 %v6199, %v6197
      %v6400 = vpack.c.b16 %v6200, %v6198
      %v6401 = vpack.c.b16 %v6203, %v6201
      %v6402 = vpack.c.b16 %v6204, %v6202
      %v6403 = vpack.c.b16 %v6207, %v6205
      %v6404 = vpack.c.b16 %v6208, %v6206
      %v6405 = vpack.c.b16 %v6211, %v6209
      %v6406 = vpack.c.b16 %v6212, %v6210
      %v6407 = vpack.c.b16 %v6215, %v6213
      %v6408 = vpack.c.b16 %v6216, %v6214
      %v6409 = vpack.c.b16 %v6219, %v6217
      %v6410 = vpack.c.b16 %v6220, %v6218
      %v6411 = vpack.c.b16 %v6223, %v6221
      %v6412 = vpack.c.b16 %v6224, %v6222
      %v6413 = vpack.c.b16 %v6227, %v6225
      %v6414 = vpack.c.b16 %v6228, %v6226
      %v6415 = vpack.c.b16 %v6231, %v6229
      %v6416 = vpack.c.b16 %v6232, %v6230
      %v6417 = vpack.c.b16 %v6235, %v6233
      %v6418 = vpack.c.b16 %v6236, %v6234
      %v6419 = vpack.c.b16 %v6239, %v6237
      %v6420 = vpack.c.b16 %v6240, %v6238
      %v6421 = vpack.c.b16 %v6243, %v6241
      %v6422 = vpack.c.b16 %v6244, %v6242
      %v6423 = vpack.c.b16 %v6247, %v6245
      %v6424 = vpack.c.b16 %v6248, %v6246
      %v6425 = vpack.c.b16 %v6251, %v6249
      %v6426 = vpack.c.b16 %v6252, %v6250
      %v6427 = vpack.c.b16 %v6255, %v6253
      %v6428 = vpack.c.b16 %v6256, %v6254
      %v6429 = vpack.c.b16 %v6259, %v6257
      %v6430 = vpack.c.b16 %v6260, %v6258
      %v6431 = vpack.c.b16 %v6263, %v6261
      %v6432 = vpack.c.b16 %v6264, %v6262
      %v6433 = vpack.c.b16 %v6267, %v6265
      %v6434 = vpack.c.b16 %v6268, %v6266
      %v6435 = vpack.c.b16 %v6271, %v6269
      %v6436 = vpack.c.b16 %v6272, %v6270
      %v6437 = vpack.c.b16 %v6275, %v6273
      %v6438 = vpack.c.b16 %v6276, %v6274
      %v6439 = vpack.c.b16 %v6279, %v6277
      %v6440 = vpack.c.b16 %v6280, %v6278
      %v6441 = vpack.c.b16 %v6283, %v6281
      %v6442 = vpack.c.b16 %v6284, %v6282
      %v6443 = vpack.c.b16 %v6287, %v6285
      %v6444 = vpack.c.b16 %v6288, %v6286
      %v6445 = vpack.c.b16 %v6291, %v6289
      %v6446 = vpack.c.b16 %v6292, %v6290
      %v6447 = vpack.c.b16 %v6295, %v6293
      %v6448 = vpack.c.b16 %v6296, %v6294
      %v6449 = vpack.c.b16 %v6299, %v6297
      %v6450 = vpack.c.b16 %v6300, %v6298
      %v6451 = vpack.c.b16 %v6303, %v6301
      %v6452 = vpack.c.b16 %v6304, %v6302
      %v6453 = vpack.c.b16 %v6307, %v6305
      %v6454 = vpack.c.b16 %v6308, %v6306
      %v6455 = vpack.c.b16 %v6311, %v6309
      %v6456 = vpack.c.b16 %v6312, %v6310
      %v6457 = vpack.c.b16 %v6315, %v6313
      %v6458 = vpack.c.b16 %v6316, %v6314
      %v6459 = vpack.c.b16 %v6319, %v6317
      %v6460 = vpack.c.b16 %v6320, %v6318
      %v6461 = vpack.c.b16 %v6323, %v6321
      %v6462 = vpack.c.b16 %v6324, %v6322
      %v6463 = vpack.c.b16 %v6327, %v6325
      %v6464 = vpack.c.b16 %v6328, %v6326
      %v6465 = vpack.c.b16 %v6331, %v6329
      %v6466 = vpack.c.b16 %v6332, %v6330
      %v6467 = vpack.c.b16 %v6335, %v6333
      %v6468 = vpack.c.b16 %v6336, %v6334
      %v6469 = vpack.c.b16 %v6339, %v6337
      %v6470 = vpack.c.b16 %v6340, %v6338
      %v6471 = vpack.c.b16 %v6343, %v6341
      %v6472 = vpack.c.b16 %v6344, %v6342
      %6601 = vmatprep.subr.bf16.mxu0 %v6346
      %6602 = vmatpush1.bf16.msra.mxu0 %v6345
      %6603 = vmatprep.subr.bf16.mxu0 %v6348
      %6604 = vmatpush1.bf16.msra.mxu0 %v6347
      %6605 = vmatprep.subr.bf16.mxu0 %v6350
      %6606 = vmatpush1.bf16.msra.mxu0 %v6349
      %6607 = vmatprep.subr.bf16.mxu0 %v6352
      %6608 = vmatpush1.bf16.msra.mxu0 %v6351
      %6609 = vmatprep.subr.bf16.mxu0 %v6354
      %6610 = vmatpush1.bf16.msra.mxu0 %v6353
      %6611 = vmatprep.subr.bf16.mxu0 %v6356
      %6612 = vmatpush1.bf16.msra.mxu0 %v6355
      %6613 = vmatprep.subr.bf16.mxu0 %v6358
      %6614 = vmatpush1.bf16.msra.mxu0 %v6357
      %6615 = vmatprep.subr.bf16.mxu0 %v6360
      %6616 = vmatpush1.bf16.msra.mxu0 %v6359
      %6617 = vmatprep.subr.bf16.mxu0 %v6362
      %6618 = vmatpush1.bf16.msra.mxu0 %v6361
      %6619 = vmatprep.subr.bf16.mxu0 %v6364
      %6620 = vmatpush1.bf16.msra.mxu0 %v6363
      %6621 = vmatprep.subr.bf16.mxu0 %v6366
      %6622 = vmatpush1.bf16.msra.mxu0 %v6365
      %6623 = vmatprep.subr.bf16.mxu0 %v6368
      %6624 = vmatpush1.bf16.msra.mxu0 %v6367
      %6625 = vmatprep.subr.bf16.mxu0 %v6370
      %6626 = vmatpush1.bf16.msra.mxu0 %v6369
      %6627 = vmatprep.subr.bf16.mxu0 %v6372
      %6628 = vmatpush1.bf16.msra.mxu0 %v6371
      %6629 = vmatprep.subr.bf16.mxu0 %v6374
      %6630 = vmatpush1.bf16.msra.mxu0 %v6373
      %6631 = vmatprep.subr.bf16.mxu0 %v6376
      %6632 = vmatpush1.bf16.msra.mxu0 %v6375
      %6633 = vmatprep.mubr.bf16.mxu0 %v5758
      %6634 = vmatmul.mubr.bf16.gmra.mrb[0].mxu0 %v5757
      %v6635 = vpop.f32.mrb[0].mxu0
      %v6636 = vadd.f32 %v5954, %v6635
      %v6637 = vpop.f32.mrb[0].mxu0
      %v6638 = vadd.f32 %v5958, %v6637
      %v6639 = vpop.f32.mrb[0].mxu0
      %v6640 = vadd.f32 %v5954, %v6639
      %v6641 = vpop.f32.mrb[0].mxu0
      %v6642 = vadd.f32 %v5958, %v6641
      %6643 = vmatprep.mubr.bf16.mxu0 %v5766
      %6644 = vmatmul.mubr.bf16.gmra.mrb[0].mxu0 %v5765
      %v6645 = vpop.f32.mrb[0].mxu0
      %v6646 = vadd.f32 %v5954, %v6645
      %v6647 = vpop.f32.mrb[0].mxu0
      %v6648 = vadd.f32 %v5958, %v6647
      %v6649 = vpop.f32.mrb[0].mxu0
      %v6650 = vadd.f32 %v5954, %v6649
      %v6651 = vpop.f32.mrb[0].mxu0
      %v6652 = vadd.f32 %v5958, %v6651
      %6653 = vmatprep.mubr.bf16.mxu0 %v5774
      %6654 = vmatmul.mubr.bf16.gmra.mrb[0].mxu0 %v5773
      %v6655 = vpop.f32.mrb[0].mxu0
      %v6656 = vadd.f32 %v5954, %v6655
      %v6657 = vpop.f32.mrb[0].mxu0
      %v6658 = vadd.f32 %v5958, %v6657
      %v6659 = vpop.f32.mrb[0].mxu0
      %v6660 = vadd.f32 %v5954, %v6659
      %v6661 = vpop.f32.mrb[0].mxu0
      %v6662 = vadd.f32 %v5958, %v6661
      %6663 = vmatprep.mubr.bf16.mxu0 %v5782
      %6664 = vmatmul.mubr.bf16.gmra.mrb[0].mxu0 %v5781
      %v6665 = vpop.f32.mrb[0].mxu0
      %v6666 = vadd.f32 %v5954, %v6665
      %v6667 = vpop.f32.mrb[0].mxu0
      %v6668 = vadd.f32 %v5958, %v6667
      %v6669 = vpop.f32.mrb[0].mxu0
      %v6670 = vadd.f32 %v5954, %v6669
      %v6671 = vpop.f32.mrb[0].mxu0
      %v6672 = vadd.f32 %v5958, %v6671
      %6673 = vmatprep.mubr.bf16.mxu0 %v5790
      %6674 = vmatmul.mubr.bf16.gmra.mrb[0].mxu0 %v5789
      %v6675 = vpop.f32.mrb[0].mxu0
      %v6676 = vadd.f32 %v5954, %v6675
      %v6677 = vpop.f32.mrb[0].mxu0
      %v6678 = vadd.f32 %v5958, %v6677
      %v6679 = vpop.f32.mrb[0].mxu0
      %v6680 = vadd.f32 %v5954, %v6679
      %v6681 = vpop.f32.mrb[0].mxu0
      %v6682 = vadd.f32 %v5958, %v6681
      %6683 = vmatprep.mubr.bf16.mxu0 %v5798
      %6684 = vmatmul.mubr.bf16.gmra.mrb[0].mxu0 %v5797
      %v6685 = vpop.f32.mrb[0].mxu0
      %v6686 = vadd.f32 %v5954, %v6685
      %v6687 = vpop.f32.mrb[0].mxu0
      %v6688 = vadd.f32 %v5958, %v6687
      %v6689 = vpop.f32.mrb[0].mxu0
      %v6690 = vadd.f32 %v5954, %v6689
      %v6691 = vpop.f32.mrb[0].mxu0
      %v6692 = vadd.f32 %v5958, %v6691
      %6693 = vmatprep.mubr.bf16.mxu0 %v5806
      %6694 = vmatmul.mubr.bf16.gmra.mrb[0].mxu0 %v5805
      %v6695 = vpop.f32.mrb[0].mxu0
      %v6696 = vadd.f32 %v5954, %v6695
      %v6697 = vpop.f32.mrb[0].mxu0
      %v6698 = vadd.f32 %v5958, %v6697
      %v6699 = vpop.f32.mrb[0].mxu0
      %v6700 = vadd.f32 %v5954, %v6699
      %v6701 = vpop.f32.mrb[0].mxu0
      %v6702 = vadd.f32 %v5958, %v6701
      %6703 = vmatprep.mubr.bf16.mxu0 %v5814
      %6704 = vmatmul.mubr.bf16.gmra.mrb[0].mxu0 %v5813
      %v6705 = vpop.f32.mrb[0].mxu0
      %v6706 = vadd.f32 %v5954, %v6705
      %v6707 = vpop.f32.mrb[0].mxu0
      %v6708 = vadd.f32 %v5958, %v6707
      %v6709 = vpop.f32.mrb[0].mxu0
      %v6710 = vadd.f32 %v5954, %v6709
      %v6711 = vpop.f32.mrb[0].mxu0
      %v6712 = vadd.f32 %v5958, %v6711
      %6713 = vdwg.mxu0
      %6714 = vmatprep.subr.bf16.mxu0 %v6378
      %6715 = vmatpush1.bf16.msra.mxu0 %v6377
      %6716 = vmatprep.subr.bf16.mxu0 %v6380
      %6717 = vmatpush1.bf16.msra.mxu0 %v6379
      %6718 = vmatprep.subr.bf16.mxu0 %v6382
      %6719 = vmatpush1.bf16.msra.mxu0 %v6381
      %6720 = vmatprep.subr.bf16.mxu0 %v6384
      %6721 = vmatpush1.bf16.msra.mxu0 %v6383
      %6722 = vmatprep.subr.bf16.mxu0 %v6386
      %6723 = vmatpush1.bf16.msra.mxu0 %v6385
      %6724 = vmatprep.subr.bf16.mxu0 %v6388
      %6725 = vmatpush1.bf16.msra.mxu0 %v6387
      %6726 = vmatprep.subr.bf16.mxu0 %v6390
      %6727 = vmatpush1.bf16.msra.mxu0 %v6389
      %6728 = vmatprep.subr.bf16.mxu0 %v6392
      %6729 = vmatpush1.bf16.msra.mxu0 %v6391
      %6730 = vmatprep.subr.bf16.mxu0 %v6394
      %6731 = vmatpush1.bf16.msra.mxu0 %v6393
      %6732 = vmatprep.subr.bf16.mxu0 %v6396
      %6733 = vmatpush1.bf16.msra.mxu0 %v6395
      %6734 = vmatprep.subr.bf16.mxu0 %v6398
      %6735 = vmatpush1.bf16.msra.mxu0 %v6397
      %6736 = vmatprep.subr.bf16.mxu0 %v6400
      %6737 = vmatpush1.bf16.msra.mxu0 %v6399
      %6738 = vmatprep.subr.bf16.mxu0 %v6402
      %6739 = vmatpush1.bf16.msra.mxu0 %v6401
      %6740 = vmatprep.subr.bf16.mxu0 %v6404
      %6741 = vmatpush1.bf16.msra.mxu0 %v6403
      %6742 = vmatprep.subr.bf16.mxu0 %v6406
      %6743 = vmatpush1.bf16.msra.mxu0 %v6405
      %6744 = vmatprep.subr.bf16.mxu0 %v6408
      %6745 = vmatpush1.bf16.msra.mxu0 %v6407
      %6746 = vmatprep.mubr.bf16.mxu0 %v5760
      %6747 = vmatmul.mubr.bf16.gmra.mrb[0].mxu0 %v5759
      %v6748 = vpop.f32.mrb[0].mxu0
      %v6749 = vadd.f32 %v6636, %v6748
      %v6750 = vpop.f32.mrb[0].mxu0
      %v6751 = vadd.f32 %v6638, %v6750
      %v6752 = vpop.f32.mrb[0].mxu0
      %v6753 = vadd.f32 %v6640, %v6752
      %v6754 = vpop.f32.mrb[0].mxu0
      %v6755 = vadd.f32 %v6642, %v6754
      %6756 = vmatprep.mubr.bf16.mxu0 %v5768
      %6757 = vmatmul.mubr.bf16.gmra.mrb[0].mxu0 %v5767
      %v6758 = vpop.f32.mrb[0].mxu0
      %v6759 = vadd.f32 %v6646, %v6758
      %v6760 = vpop.f32.mrb[0].mxu0
      %v6761 = vadd.f32 %v6648, %v6760
      %v6762 = vpop.f32.mrb[0].mxu0
      %v6763 = vadd.f32 %v6650, %v6762
      %v6764 = vpop.f32.mrb[0].mxu0
      %v6765 = vadd.f32 %v6652, %v6764
      %6766 = vmatprep.mubr.bf16.mxu0 %v5776
      %6767 = vmatmul.mubr.bf16.gmra.mrb[0].mxu0 %v5775
      %v6768 = vpop.f32.mrb[0].mxu0
      %v6769 = vadd.f32 %v6656, %v6768
      %v6770 = vpop.f32.mrb[0].mxu0
      %v6771 = vadd.f32 %v6658, %v6770
      %v6772 = vpop.f32.mrb[0].mxu0
      %v6773 = vadd.f32 %v6660, %v6772
      %v6774 = vpop.f32.mrb[0].mxu0
      %v6775 = vadd.f32 %v6662, %v6774
      %6776 = vmatprep.mubr.bf16.mxu0 %v5784
      %6777 = vmatmul.mubr.bf16.gmra.mrb[0].mxu0 %v5783
      %v6778 = vpop.f32.mrb[0].mxu0
      %v6779 = vadd.f32 %v6666, %v6778
      %v6780 = vpop.f32.mrb[0].mxu0
      %v6781 = vadd.f32 %v6668, %v6780
      %v6782 = vpop.f32.mrb[0].mxu0
      %v6783 = vadd.f32 %v6670, %v6782
      %v6784 = vpop.f32.mrb[0].mxu0
      %v6785 = vadd.f32 %v6672, %v6784
      %6786 = vmatprep.mubr.bf16.mxu0 %v5792
      %6787 = vmatmul.mubr.bf16.gmra.mrb[0].mxu0 %v5791
      %v6788 = vpop.f32.mrb[0].mxu0
      %v6789 = vadd.f32 %v6676, %v6788
      %v6790 = vpop.f32.mrb[0].mxu0
      %v6791 = vadd.f32 %v6678, %v6790
      %v6792 = vpop.f32.mrb[0].mxu0
      %v6793 = vadd.f32 %v6680, %v6792
      %v6794 = vpop.f32.mrb[0].mxu0
      %v6795 = vadd.f32 %v6682, %v6794
      %6796 = vmatprep.mubr.bf16.mxu0 %v5800
      %6797 = vmatmul.mubr.bf16.gmra.mrb[0].mxu0 %v5799
      %v6798 = vpop.f32.mrb[0].mxu0
      %v6799 = vadd.f32 %v6686, %v6798
      %v6800 = vpop.f32.mrb[0].mxu0
      %v6801 = vadd.f32 %v6688, %v6800
      %v6802 = vpop.f32.mrb[0].mxu0
      %v6803 = vadd.f32 %v6690, %v6802
      %v6804 = vpop.f32.mrb[0].mxu0
      %v6805 = vadd.f32 %v6692, %v6804
      %6806 = vmatprep.mubr.bf16.mxu0 %v5808
      %6807 = vmatmul.mubr.bf16.gmra.mrb[0].mxu0 %v5807
      %v6808 = vpop.f32.mrb[0].mxu0
      %v6809 = vadd.f32 %v6696, %v6808
      %v6810 = vpop.f32.mrb[0].mxu0
      %v6811 = vadd.f32 %v6698, %v6810
      %v6812 = vpop.f32.mrb[0].mxu0
      %v6813 = vadd.f32 %v6700, %v6812
      %v6814 = vpop.f32.mrb[0].mxu0
      %v6815 = vadd.f32 %v6702, %v6814
      %6816 = vmatprep.mubr.bf16.mxu0 %v5816
      %6817 = vmatmul.mubr.bf16.gmra.mrb[0].mxu0 %v5815
      %v6818 = vpop.f32.mrb[0].mxu0
      %v6819 = vadd.f32 %v6706, %v6818
      %v6820 = vpop.f32.mrb[0].mxu0
      %v6821 = vadd.f32 %v6708, %v6820
      %v6822 = vpop.f32.mrb[0].mxu0
      %v6823 = vadd.f32 %v6710, %v6822
      %v6824 = vpop.f32.mrb[0].mxu0
      %v6825 = vadd.f32 %v6712, %v6824
      %6826 = vdwg.mxu0
      %6827 = vmatprep.subr.bf16.mxu0 %v6410
      %6828 = vmatpush1.bf16.msra.mxu0 %v6409
      %6829 = vmatprep.subr.bf16.mxu0 %v6412
      %6830 = vmatpush1.bf16.msra.mxu0 %v6411
      %6831 = vmatprep.subr.bf16.mxu0 %v6414
      %6832 = vmatpush1.bf16.msra.mxu0 %v6413
      %6833 = vmatprep.subr.bf16.mxu0 %v6416
      %6834 = vmatpush1.bf16.msra.mxu0 %v6415
      %6835 = vmatprep.subr.bf16.mxu0 %v6418
      %6836 = vmatpush1.bf16.msra.mxu0 %v6417
      %6837 = vmatprep.subr.bf16.mxu0 %v6420
      %6838 = vmatpush1.bf16.msra.mxu0 %v6419
      %6839 = vmatprep.subr.bf16.mxu0 %v6422
      %6840 = vmatpush1.bf16.msra.mxu0 %v6421
      %6841 = vmatprep.subr.bf16.mxu0 %v6424
      %6842 = vmatpush1.bf16.msra.mxu0 %v6423
      %6843 = vmatprep.subr.bf16.mxu0 %v6426
      %6844 = vmatpush1.bf16.msra.mxu0 %v6425
      %6845 = vmatprep.subr.bf16.mxu0 %v6428
      %6846 = vmatpush1.bf16.msra.mxu0 %v6427
      %6847 = vmatprep.subr.bf16.mxu0 %v6430
      %6848 = vmatpush1.bf16.msra.mxu0 %v6429
      %6849 = vmatprep.subr.bf16.mxu0 %v6432
      %6850 = vmatpush1.bf16.msra.mxu0 %v6431
      %6851 = vmatprep.subr.bf16.mxu0 %v6434
      %6852 = vmatpush1.bf16.msra.mxu0 %v6433
      %6853 = vmatprep.subr.bf16.mxu0 %v6436
      %6854 = vmatpush1.bf16.msra.mxu0 %v6435
      %6855 = vmatprep.subr.bf16.mxu0 %v6438
      %6856 = vmatpush1.bf16.msra.mxu0 %v6437
      %6857 = vmatprep.subr.bf16.mxu0 %v6440
      %6858 = vmatpush1.bf16.msra.mxu0 %v6439
      %6859 = vmatprep.mubr.bf16.mxu0 %v5762
      %6860 = vmatmul.mubr.bf16.gmra.mrb[0].mxu0 %v5761
      %v6861 = vpop.f32.mrb[0].mxu0
      %v6862 = vadd.f32 %v6749, %v6861
      %v6863 = vpop.f32.mrb[0].mxu0
      %v6864 = vadd.f32 %v6751, %v6863
      %v6865 = vpop.f32.mrb[0].mxu0
      %v6866 = vadd.f32 %v6753, %v6865
      %v6867 = vpop.f32.mrb[0].mxu0
      %v6868 = vadd.f32 %v6755, %v6867
      %6869 = vmatprep.mubr.bf16.mxu0 %v5770
      %6870 = vmatmul.mubr.bf16.gmra.mrb[0].mxu0 %v5769
      %v6871 = vpop.f32.mrb[0].mxu0
      %v6872 = vadd.f32 %v6759, %v6871
      %v6873 = vpop.f32.mrb[0].mxu0
      %v6874 = vadd.f32 %v6761, %v6873
      %v6875 = vpop.f32.mrb[0].mxu0
      %v6876 = vadd.f32 %v6763, %v6875
      %v6877 = vpop.f32.mrb[0].mxu0
      %v6878 = vadd.f32 %v6765, %v6877
      %6879 = vmatprep.mubr.bf16.mxu0 %v5778
      %6880 = vmatmul.mubr.bf16.gmra.mrb[0].mxu0 %v5777
      %v6881 = vpop.f32.mrb[0].mxu0
      %v6882 = vadd.f32 %v6769, %v6881
      %v6883 = vpop.f32.mrb[0].mxu0
      %v6884 = vadd.f32 %v6771, %v6883
      %v6885 = vpop.f32.mrb[0].mxu0
      %v6886 = vadd.f32 %v6773, %v6885
      %v6887 = vpop.f32.mrb[0].mxu0
      %v6888 = vadd.f32 %v6775, %v6887
      %6889 = vmatprep.mubr.bf16.mxu0 %v5786
      %6890 = vmatmul.mubr.bf16.gmra.mrb[0].mxu0 %v5785
      %v6891 = vpop.f32.mrb[0].mxu0
      %v6892 = vadd.f32 %v6779, %v6891
      %v6893 = vpop.f32.mrb[0].mxu0
      %v6894 = vadd.f32 %v6781, %v6893
      %v6895 = vpop.f32.mrb[0].mxu0
      %v6896 = vadd.f32 %v6783, %v6895
      %v6897 = vpop.f32.mrb[0].mxu0
      %v6898 = vadd.f32 %v6785, %v6897
      %6899 = vmatprep.mubr.bf16.mxu0 %v5794
      %6900 = vmatmul.mubr.bf16.gmra.mrb[0].mxu0 %v5793
      %v6901 = vpop.f32.mrb[0].mxu0
      %v6902 = vadd.f32 %v6789, %v6901
      %v6903 = vpop.f32.mrb[0].mxu0
      %v6904 = vadd.f32 %v6791, %v6903
      %v6905 = vpop.f32.mrb[0].mxu0
      %v6906 = vadd.f32 %v6793, %v6905
      %v6907 = vpop.f32.mrb[0].mxu0
      %v6908 = vadd.f32 %v6795, %v6907
      %6909 = vmatprep.mubr.bf16.mxu0 %v5802
      %6910 = vmatmul.mubr.bf16.gmra.mrb[0].mxu0 %v5801
      %v6911 = vpop.f32.mrb[0].mxu0
      %v6912 = vadd.f32 %v6799, %v6911
      %v6913 = vpop.f32.mrb[0].mxu0
      %v6914 = vadd.f32 %v6801, %v6913
      %v6915 = vpop.f32.mrb[0].mxu0
      %v6916 = vadd.f32 %v6803, %v6915
      %v6917 = vpop.f32.mrb[0].mxu0
      %v6918 = vadd.f32 %v6805, %v6917
      %6919 = vmatprep.mubr.bf16.mxu0 %v5810
      %6920 = vmatmul.mubr.bf16.gmra.mrb[0].mxu0 %v5809
      %v6921 = vpop.f32.mrb[0].mxu0
      %v6922 = vadd.f32 %v6809, %v6921
      %v6923 = vpop.f32.mrb[0].mxu0
      %v6924 = vadd.f32 %v6811, %v6923
      %v6925 = vpop.f32.mrb[0].mxu0
      %v6926 = vadd.f32 %v6813, %v6925
      %v6927 = vpop.f32.mrb[0].mxu0
      %v6928 = vadd.f32 %v6815, %v6927
      %6929 = vmatprep.mubr.bf16.mxu0 %v5818
      %6930 = vmatmul.mubr.bf16.gmra.mrb[0].mxu0 %v5817
      %v6931 = vpop.f32.mrb[0].mxu0
      %v6932 = vadd.f32 %v6819, %v6931
      %v6933 = vpop.f32.mrb[0].mxu0
      %v6934 = vadd.f32 %v6821, %v6933
      %v6935 = vpop.f32.mrb[0].mxu0
      %v6936 = vadd.f32 %v6823, %v6935
      %v6937 = vpop.f32.mrb[0].mxu0
      %v6938 = vadd.f32 %v6825, %v6937
      %6939 = vdwg.mxu0
      %6940 = vmatprep.subr.bf16.mxu0 %v6442
      %6941 = vmatpush1.bf16.msra.mxu0 %v6441
      %6942 = vmatprep.subr.bf16.mxu0 %v6444
      %6943 = vmatpush1.bf16.msra.mxu0 %v6443
      %6944 = vmatprep.subr.bf16.mxu0 %v6446
      %6945 = vmatpush1.bf16.msra.mxu0 %v6445
      %6946 = vmatprep.subr.bf16.mxu0 %v6448
      %6947 = vmatpush1.bf16.msra.mxu0 %v6447
      %6948 = vmatprep.subr.bf16.mxu0 %v6450
      %6949 = vmatpush1.bf16.msra.mxu0 %v6449
      %6950 = vmatprep.subr.bf16.mxu0 %v6452
      %6951 = vmatpush1.bf16.msra.mxu0 %v6451
      %6952 = vmatprep.subr.bf16.mxu0 %v6454
      %6953 = vmatpush1.bf16.msra.mxu0 %v6453
      %6954 = vmatprep.subr.bf16.mxu0 %v6456
      %6955 = vmatpush1.bf16.msra.mxu0 %v6455
      %6956 = vmatprep.subr.bf16.mxu0 %v6458
      %6957 = vmatpush1.bf16.msra.mxu0 %v6457
      %6958 = vmatprep.subr.bf16.mxu0 %v6460
      %6959 = vmatpush1.bf16.msra.mxu0 %v6459
      %6960 = vmatprep.subr.bf16.mxu0 %v6462
      %6961 = vmatpush1.bf16.msra.mxu0 %v6461
      %6962 = vmatprep.subr.bf16.mxu0 %v6464
      %6963 = vmatpush1.bf16.msra.mxu0 %v6463
      %6964 = vmatprep.subr.bf16.mxu0 %v6466
      %6965 = vmatpush1.bf16.msra.mxu0 %v6465
      %6966 = vmatprep.subr.bf16.mxu0 %v6468
      %6967 = vmatpush1.bf16.msra.mxu0 %v6467
      %6968 = vmatprep.subr.bf16.mxu0 %v6470
      %6969 = vmatpush1.bf16.msra.mxu0 %v6469
      %6970 = vmatprep.subr.bf16.mxu0 %v6472
      %6971 = vmatpush1.bf16.msra.mxu0 %v6471
      %6972 = vmatprep.mubr.bf16.mxu0 %v5764
      %6973 = vmatmul.mubr.bf16.gmra.mrb[0].mxu0 %v5763
      %v6974 = vpop.f32.mrb[0].mxu0
      %v6975 = vadd.f32 %v6862, %v6974
      %v6976 = vpop.f32.mrb[0].mxu0
      %v6977 = vadd.f32 %v6864, %v6976
      %v6978 = vpop.f32.mrb[0].mxu0
      %v6979 = vadd.f32 %v6866, %v6978
      %v6980 = vpop.f32.mrb[0].mxu0
      %v6981 = vadd.f32 %v6868, %v6980
      %6982 = vmatprep.mubr.bf16.mxu0 %v5772
      %6983 = vmatmul.mubr.bf16.gmra.mrb[0].mxu0 %v5771
      %v6984 = vpop.f32.mrb[0].mxu0
      %v6985 = vadd.f32 %v6872, %v6984
      %v6986 = vpop.f32.mrb[0].mxu0
      %v6987 = vadd.f32 %v6874, %v6986
      %v6988 = vpop.f32.mrb[0].mxu0
      %v6989 = vadd.f32 %v6876, %v6988
      %v6990 = vpop.f32.mrb[0].mxu0
      %v6991 = vadd.f32 %v6878, %v6990
      %6992 = vmatprep.mubr.bf16.mxu0 %v5780
      %6993 = vmatmul.mubr.bf16.gmra.mrb[0].mxu0 %v5779
      %v6994 = vpop.f32.mrb[0].mxu0
      %v6995 = vadd.f32 %v6882, %v6994
      %v6996 = vpop.f32.mrb[0].mxu0
      %v6997 = vadd.f32 %v6884, %v6996
      %v6998 = vpop.f32.mrb[0].mxu0
      %v6999 = vadd.f32 %v6886, %v6998
      %v7000 = vpop.f32.mrb[0].mxu0
      %v7001 = vadd.f32 %v6888, %v7000
      %7002 = vmatprep.mubr.bf16.mxu0 %v5788
      %7003 = vmatmul.mubr.bf16.gmra.mrb[0].mxu0 %v5787
      %v7004 = vpop.f32.mrb[0].mxu0
      %v7005 = vadd.f32 %v6892, %v7004
      %v7006 = vpop.f32.mrb[0].mxu0
      %v7007 = vadd.f32 %v6894, %v7006
      %v7008 = vpop.f32.mrb[0].mxu0
      %v7009 = vadd.f32 %v6896, %v7008
      %v7010 = vpop.f32.mrb[0].mxu0
      %v7011 = vadd.f32 %v6898, %v7010
      %7012 = vmatprep.mubr.bf16.mxu0 %v5796
      %7013 = vmatmul.mubr.bf16.gmra.mrb[0].mxu0 %v5795
      %v7014 = vpop.f32.mrb[0].mxu0
      %v7015 = vadd.f32 %v6902, %v7014
      %v7016 = vpop.f32.mrb[0].mxu0
      %v7017 = vadd.f32 %v6904, %v7016
      %v7018 = vpop.f32.mrb[0].mxu0
      %v7019 = vadd.f32 %v6906, %v7018
      %v7020 = vpop.f32.mrb[0].mxu0
      %v7021 = vadd.f32 %v6908, %v7020
      %7022 = vmatprep.mubr.bf16.mxu0 %v5804
      %7023 = vmatmul.mubr.bf16.gmra.mrb[0].mxu0 %v5803
      %v7024 = vpop.f32.mrb[0].mxu0
      %v7025 = vadd.f32 %v6912, %v7024
      %v7026 = vpop.f32.mrb[0].mxu0
      %v7027 = vadd.f32 %v6914, %v7026
      %v7028 = vpop.f32.mrb[0].mxu0
      %v7029 = vadd.f32 %v6916, %v7028
      %v7030 = vpop.f32.mrb[0].mxu0
      %v7031 = vadd.f32 %v6918, %v7030
      %7032 = vmatprep.mubr.bf16.mxu0 %v5812
      %7033 = vmatmul.mubr.bf16.gmra.mrb[0].mxu0 %v5811
      %v7034 = vpop.f32.mrb[0].mxu0
      %v7035 = vadd.f32 %v6922, %v7034
      %v7036 = vpop.f32.mrb[0].mxu0
      %v7037 = vadd.f32 %v6924, %v7036
      %v7038 = vpop.f32.mrb[0].mxu0
      %v7039 = vadd.f32 %v6926, %v7038
      %v7040 = vpop.f32.mrb[0].mxu0
      %v7041 = vadd.f32 %v6928, %v7040
      %7042 = vmatprep.mubr.bf16.mxu0 %v5820
      %7043 = vmatmul.mubr.bf16.gmra.mrb[0].mxu0 %v5819
      %v7044 = vpop.f32.mrb[0].mxu0
      %v7045 = vadd.f32 %v6932, %v7044
      %v7046 = vpop.f32.mrb[0].mxu0
      %v7047 = vadd.f32 %v6934, %v7046
      %v7048 = vpop.f32.mrb[0].mxu0
      %v7049 = vadd.f32 %v6936, %v7048
      %v7050 = vpop.f32.mrb[0].mxu0
      %v7051 = vadd.f32 %v6938, %v7050
      %7052 = vdwg.mxu0
      %v7053 = vadd.f32 %v2951, %v6975
      %v7054 = vadd.f32 %v2952, %v6977
      %v7055 = vadd.f32 %v2953, %v6979
      %v7056 = vadd.f32 %v2954, %v6981
      %v7057 = vadd.f32 %v2955, %v6985
      %v7058 = vadd.f32 %v2956, %v6987
      %v7059 = vadd.f32 %v2957, %v6989
      %v7060 = vadd.f32 %v2958, %v6991
      %v7061 = vadd.f32 %v2959, %v6995
      %v7062 = vadd.f32 %v2960, %v6997
      %v7063 = vadd.f32 %v2961, %v6999
      %v7064 = vadd.f32 %v2962, %v7001
      %v7065 = vadd.f32 %v2963, %v7005
      %v7066 = vadd.f32 %v2964, %v7007
      %v7067 = vadd.f32 %v2965, %v7009
      %v7068 = vadd.f32 %v2966, %v7011
      %v7069 = vadd.f32 %v2967, %v7015
      %v7070 = vadd.f32 %v2968, %v7017
      %v7071 = vadd.f32 %v2969, %v7019
      %v7072 = vadd.f32 %v2970, %v7021
      %v7073 = vadd.f32 %v2971, %v7025
      %v7074 = vadd.f32 %v2972, %v7027
      %v7075 = vadd.f32 %v2973, %v7029
      %v7076 = vadd.f32 %v2974, %v7031
      %v7077 = vadd.f32 %v2975, %v7035
      %v7078 = vadd.f32 %v2976, %v7037
      %v7079 = vadd.f32 %v2977, %v7039
      %v7080 = vadd.f32 %v2978, %v7041
      %v7081 = vadd.f32 %v2979, %v7045
      %v7082 = vadd.f32 %v2980, %v7047
      %v7083 = vadd.f32 %v2981, %v7049
      %v7084 = vadd.f32 %v2982, %v7051
      %7085 = vst [vmem:[%s440] sm:$0xff] %v7053
      %7086 = vst [vmem:[%s440 + $0x8] sm:$0xff] %v7054
      %7087 = vst [vmem:[%s440 + $0x10] sm:$0xff] %v7055
      %7088 = vst [vmem:[%s440 + $0x18] sm:$0xff] %v7056
      %7089 = vst [vmem:[%s440 + $0x20] sm:$0xff] %v7057
      %7090 = vst [vmem:[%s440 + $0x28] sm:$0xff] %v7058
      %7091 = vst [vmem:[%s440 + $0x30] sm:$0xff] %v7059
      %7092 = vst [vmem:[%s440 + $0x38] sm:$0xff] %v7060
      %7093 = vst [vmem:[%s440 + $0x40] sm:$0xff] %v7061
      %7094 = vst [vmem:[%s440 + $0x48] sm:$0xff] %v7062
      %7095 = vst [vmem:[%s440 + $0x50] sm:$0xff] %v7063
      %7096 = vst [vmem:[%s440 + $0x58] sm:$0xff] %v7064
      %7097 = vst [vmem:[%s440 + $0x60] sm:$0xff] %v7065
      %7098 = vst [vmem:[%s440 + $0x68] sm:$0xff] %v7066
      %7099 = vst [vmem:[%s440 + $0x70] sm:$0xff] %v7067
      %7100 = vst [vmem:[%s440 + $0x78] sm:$0xff] %v7068
      %7101 = vst [vmem:[%s440 + $0x80] sm:$0xff] %v7069
      %7102 = vst [vmem:[%s440 + $0x88] sm:$0xff] %v7070
      %7103 = vst [vmem:[%s440 + $0x90] sm:$0xff] %v7071
      %7104 = vst [vmem:[%s440 + $0x98] sm:$0xff] %v7072
      %7105 = vst [vmem:[%s440 + $0xa0] sm:$0xff] %v7073
      %7106 = vst [vmem:[%s440 + $0xa8] sm:$0xff] %v7074
      %7107 = vst [vmem:[%s440 + $0xb0] sm:$0xff] %v7075
      %7108 = vst [vmem:[%s440 + $0xb8] sm:$0xff] %v7076
      %7109 = vst [vmem:[%s440 + $0xc0] sm:$0xff] %v7077
      %7110 = vst [vmem:[%s440 + $0xc8] sm:$0xff] %v7078
      %7111 = vst [vmem:[%s440 + $0xd0] sm:$0xff] %v7079
      %7112 = vst [vmem:[%s440 + $0xd8] sm:$0xff] %v7080
      %7113 = vst [vmem:[%s440 + $0xe0] sm:$0xff] %v7081
      %7114 = vst [vmem:[%s440 + $0xe8] sm:$0xff] %v7082
      %7115 = vst [vmem:[%s440 + $0xf0] sm:$0xff] %v7083
      %7116 = vst [vmem:[%s440 + $0xf8] sm:$0xff] %v7084
      %p7117 = scmp.lt.s32.totalorder %s24, 1
      %s7118 = scalar_select %p7117, %s24, 1
      %s7119 = smul.addr %s7118, 32
      %s7120 = smul.addr %s7119, 8
      %s7121 = scalar_lea.vmem %s13, %s7120
      // Predicated region
      $region73: #{ast_forward.5} parent=71 // pred_check
        %p7122 = pneg %p320
      $region74: #{ast_forward.5} parent=71 // pred_check_branch
        %7124 = sbr.rel (%p7122) target = $region76
      $region75: #{ast_forward.5} parent=71 // pred_region
        _
      $region76: #{ast_forward.5} parent=71 // pred_fallthru
        _
    $region72: #{ast_forward.5} parent=5 // pred_fallthru
      _
    %p7125 = scmp.le.s32.totalorder 2, %s19
    // Predicated region
    $region77: #{ast_forward.5} parent=5 // pred_check
      %p7126 = pneg %p7125
    $region78: #{ast_forward.5} parent=5 // pred_check_branch
      %7128 = sbr.rel (%p7126) target = $region80
    $region79: #{ast_forward.5} parent=5 // pred_region
      %s7129 = ssub.s32 %s19, 2
      // Predicated region
      $region81: #{ast_forward.5} parent=79 // pred_check
        %p7130 = pneg %p326
      $region82: #{ast_forward.5} parent=79 // pred_check_branch
        %7132 = sbr.rel (%p7130) target = $region84
      $region83: #{ast_forward.5} parent=79 // pred_region
        %p7133 = scmp.lt.s32.totalorder %s25, 1
        %s7134 = scalar_select %p7133, %s25, 1
        %s7135 = smul.addr %s7134, 32
        %s7136 = smul.addr %s7135, 8
        %s7137 = scalar_lea.vmem %s13, %s7136
      $region84: #{ast_forward.5} parent=79 // pred_fallthru
        _
    $region80: #{ast_forward.5} parent=5 // pred_fallthru
      _
  $region6: #{ast_forward.5} parent=0 // loop_footer
    %s23 = sadd.s32 1, %s19
  $region7: #{ast_forward.5} parent=0 // loop_footer_branch
    %18 = sbr.rel target = $region3
  $region8: #{ast_forward.5} parent=0 // loop_exit
    _

</llo_original>
